<compile_context>
chip_gen: v7x
topology: tpu7x:2x2x1
jax: 0.10.0
libtpu: 0.0.40
codegen_flags: <defaults>
</compile_context>

<pallas_src>
import jax
import jax.numpy as jnp
from jax import lax
from jax.experimental import pallas as pl
from jax.experimental.pallas import tpu as pltpu

LEAKY_SLOPE = 0.2
BN_EPS = 1e-5


# ----------------------------- Pallas kernels ------------------------------

def _make_conv_stats_kernel(H, W, Cin, Cout, fuse_affine):
    """conv3x3 (single im2col matmul) + optional fused input affine+LeakyReLU
    + per-batch-element BN partial stats.  One grid step == one batch element."""

    def kernel(*refs):
        if fuse_affine:
            (x_ref, scale_ref, shift_ref, w_ref,
             y_ref, sum_ref, ssq_ref, pad_ref, col_ref) = refs
        else:
            (x_ref, w_ref,
             y_ref, sum_ref, ssq_ref, pad_ref, col_ref) = refs

        x = x_ref[0]                                            # (H, W, Cin)
        if fuse_affine:
            # BN affine of the *previous* conv output + LeakyReLU(0.2),
            # fused into this conv's input path (saves a full HBM round trip).
            t = x * scale_ref[...][None] + shift_ref[...][None]
            x = jnp.where(t >= 0, t, LEAKY_SLOPE * t)

        # Zero-padded halo lives only in VMEM scratch (no jnp.pad HBM copy).
        pad_ref[...] = jnp.zeros_like(pad_ref)
        pad_ref[1:H + 1, 1:W + 1, :] = x

        # im2col: 9 shifted taps placed side-by-side along the contraction axis
        # so the MXU sees one (H*W, 9*Cin) x (9*Cin, Cout) matmul instead of 9
        # tiny K=Cin matmuls.
        for dy in range(3):
            for dx in range(3):
                t_idx = dy * 3 + dx
                tap = pad_ref[dy:dy + H, dx:dx + W, :]          # (H, W, Cin)
                col_ref[:, t_idx * Cin:(t_idx + 1) * Cin] = tap.reshape(H * W, Cin)

        acc = jnp.dot(col_ref[...], w_ref[...],
                      preferred_element_type=jnp.float32)       # (H*W, Cout)
        # TODO(synk): cast matmul operands to bf16 on v6e/v7x for ~3x MXU
        # throughput (kept f32 here to stay faithful to the f32 PyTorch conv).

        # Per-grid-step BN partials (reduced to mean/var outside; keeps this
        # grid axis fully "parallel" so both v7x TensorCores can shard it).
        sum_ref[0] = jnp.sum(acc, axis=0, keepdims=True)
        ssq_ref[0] = jnp.sum(acc * acc, axis=0, keepdims=True)

        y_ref[0] = acc.reshape(H, W, Cout)

    return kernel


def _affine_act_pool_kernel(x_ref, scale_ref, shift_ref, o_ref):
    # Fused BN affine + LeakyReLU(0.2) + 2x2/stride-2 max pool.
    # x_ref: (1, Ho, 2, Wo, 2, C)   scale/shift: (1, C)   o_ref: (1, Ho, Wo, C)
    x = x_ref[0]
    t = x * scale_ref[...] + shift_ref[...]
    y = jnp.where(t >= 0, t, LEAKY_SLOPE * t)
    m = jnp.max(y, axis=3)                                      # pool W pairs
    o_ref[0] = jnp.max(m, axis=1)                               # pool H pairs


# ------------------------------- wrappers -----------------------------------

def _conv_layer(x, w9, scale=None, shift=None):
    """Fused conv3x3 (+ optional input affine/activation) + BN partial stats.

    x     : (B, H, W, Cin) f32
    w9    : (9*Cin, Cout) f32 (HWIO weight flattened tap-major)
    scale : (Cin,) or None — per-channel affine applied to x *before* the conv
    Returns y (B, H, W, Cout), sum_part (B, 1, Cout), ssq_part (B, 1, Cout).
    """
    B, H, W, Cin = x.shape
    Cout = w9.shape[1]
    fuse_affine = scale is not None

    kernel = _make_conv_stats_kernel(H, W, Cin, Cout, fuse_affine)

    in_specs = [pl.BlockSpec((1, H, W, Cin), lambda i: (i, 0, 0, 0))]
    args = [x]
    if fuse_affine:
        in_specs += [pl.BlockSpec((1, Cin), lambda i: (0, 0)),
                     pl.BlockSpec((1, Cin), lambda i: (0, 0))]
        args += [scale.reshape(1, Cin), shift.reshape(1, Cin)]
    in_specs += [pl.BlockSpec((9 * Cin, Cout), lambda i: (0, 0))]
    args += [w9]

    # TODO(synk): at production spatial sizes, add an H row-strip grid axis with
    # a 1-row halo so each block fits v7x's 64 MiB VMEM and gives >B parallelism.
    return pl.pallas_call(
        kernel,
        out_shape=(jax.ShapeDtypeStruct((B, H, W, Cout), jnp.float32),
                   jax.ShapeDtypeStruct((B, 1, Cout), jnp.float32),
                   jax.ShapeDtypeStruct((B, 1, Cout), jnp.float32)),
        grid=(B,),
        in_specs=in_specs,
        out_specs=(pl.BlockSpec((1, H, W, Cout), lambda i: (i, 0, 0, 0)),
                   pl.BlockSpec((1, 1, Cout), lambda i: (i, 0, 0)),
                   pl.BlockSpec((1, 1, Cout), lambda i: (i, 0, 0))),
        scratch_shapes=[pltpu.VMEM((H + 2, W + 2, Cin), jnp.float32),
                        pltpu.VMEM((H * W, 9 * Cin), jnp.float32)],
        compiler_params=pltpu.CompilerParams(dimension_semantics=("parallel",)),
    )(*args)


def _affine_act_pool(y, scale, shift):
    """Fused per-channel affine + LeakyReLU + 2x2 maxpool.  y: (B, H, W, C)."""
    B, H, W, C = y.shape
    Ho, Wo = H // 2, W // 2
    y6 = y.reshape(B, Ho, 2, Wo, 2, C)              # free view, contiguous data
    return pl.pallas_call(
        _affine_act_pool_kernel,
        out_shape=jax.ShapeDtypeStruct((B, Ho, Wo, C), jnp.float32),
        grid=(B,),
        in_specs=[pl.BlockSpec((1, Ho, 2, Wo, 2, C),
                               lambda i: (i, 0, 0, 0, 0, 0)),
                  pl.BlockSpec((1, C), lambda i: (0, 0)),
                  pl.BlockSpec((1, C), lambda i: (0, 0))],
        out_specs=pl.BlockSpec((1, Ho, Wo, C), lambda i: (i, 0, 0, 0)),
        compiler_params=pltpu.CompilerParams(dimension_semantics=("parallel",)),
    )(y6, scale.reshape(1, C), shift.reshape(1, C))


def _bn_scale_shift(sum_part, ssq_part, count, gamma, beta, bias, use_bn):
    """Fold training-mode BN (or, with BN off, the deferred conv bias) into a
    single per-channel (scale, shift) pair consumed by the next fused kernel."""
    if not use_bn:
        return jnp.ones_like(bias), bias
    s = jnp.sum(sum_part[:, 0, :], axis=0)                      # (C,)
    q = jnp.sum(ssq_part[:, 0, :], axis=0)                      # (C,)
    mean = s / count
    var = jnp.maximum(q / count - mean * mean, 0.0)             # biased variance
    scale = gamma * lax.rsqrt(var + BN_EPS)
    shift = beta - mean * scale
    return scale, shift


def contracting_block_forward(x_nchw, params, use_bn=True, use_dropout=False):
    """Pallas ContractingBlock forward.  Input/output NCHW (PyTorch layout)."""
    # TODO(synk): nn.Dropout (training-mode RNG mask) not implemented; only the
    # default use_dropout=False path is supported.
    assert not use_dropout
    x = jnp.transpose(x_nchw, (0, 2, 3, 1)).astype(jnp.float32)     # NCHW->NHWC
    B, H, W, Cin = x.shape
    C2 = params["conv1_w"].shape[-1]
    n = float(B * H * W)

    w1 = params["conv1_w"].reshape(9 * Cin, C2).astype(jnp.float32)
    w2 = params["conv2_w"].reshape(9 * C2, C2).astype(jnp.float32)

    # K1: conv1 + BN1 partial stats (bias dropped under BN / deferred to shift1).
    y1, s1, q1 = _conv_layer(x, w1)
    scale1, shift1 = _bn_scale_shift(s1, q1, n, params["bn_gamma"],
                                     params["bn_beta"], params["conv1_b"], use_bn)

    # K2: BN1 affine + LeakyReLU fused into conv2's input + BN2 partial stats.
    y2, s2, q2 = _conv_layer(y1, w2, scale1, shift1)
    scale2, shift2 = _bn_scale_shift(s2, q2, n, params["bn_gamma"],
                                     params["bn_beta"], params["conv2_b"], use_bn)

    # K3: BN2 affine + LeakyReLU + 2x2 max pool.
    out = _affine_act_pool(y2, scale2, shift2)
    return jnp.transpose(out, (0, 3, 1, 2))                         # NHWC->NCHW


# --------------------------- pure-JAX reference ------------------------------

def reference_forward(x_nchw, params, use_bn=True):
    x = jnp.transpose(x_nchw, (0, 2, 3, 1)).astype(jnp.float32)
    for i in (1, 2):
        x = lax.conv_general_dilated(
            x, params[f"conv{i}_w"], (1, 1), "SAME",
            dimension_numbers=("NHWC", "HWIO", "NHWC"),
            precision=lax.Precision.HIGHEST) + params[f"conv{i}_b"]
        if use_bn:
            mean = jnp.mean(x, axis=(0, 1, 2))
            var = jnp.mean((x - mean) ** 2, axis=(0, 1, 2))
            x = params["bn_gamma"] * (x - mean) * lax.rsqrt(var + BN_EPS) + params["bn_beta"]
        x = jnp.where(x >= 0, x, LEAKY_SLOPE * x)
    B, H, W, C = x.shape
    x = x.reshape(B, H // 2, 2, W // 2, 2, C).max(axis=(2, 4))
    return jnp.transpose(x, (0, 3, 1, 2))


# ------------------------------------ main -----------------------------------

if __name__ == "__main__":
    key = jax.random.PRNGKey(0)
    B, C, H, W = 2, 4, 16, 16
    C2 = 2 * C
    ks = jax.random.split(key, 7)

    def uinit(k, shape, fan_in):
        bound = 1.0 / (fan_in ** 0.5)
        return jax.random.uniform(k, shape, jnp.float32, -bound, bound)

    x = jax.random.normal(ks[0], (B, C, H, W), jnp.float32)
    params = {
        "conv1_w": uinit(ks[1], (3, 3, C, C2), 9 * C),     # HWIO
        "conv1_b": uinit(ks[2], (C2,), 9 * C),
        "conv2_w": uinit(ks[3], (3, 3, C2, C2), 9 * C2),
        "conv2_b": uinit(ks[4], (C2,), 9 * C2),
        "bn_gamma": jax.random.uniform(ks[5], (C2,), jnp.float32, 0.8, 1.2),
        "bn_beta": jax.random.uniform(ks[6], (C2,), jnp.float32, -0.1, 0.1),
    }

    fwd = jax.jit(contracting_block_forward)
    out = jax.block_until_ready(fwd(x, params))
    ref = reference_forward(x, params)

    assert out.shape == (B, C2, H // 2, W // 2), out.shape
    assert bool(jnp.all(jnp.isfinite(out)))
    err = float(jnp.max(jnp.abs(out - ref)))
    assert bool(jnp.allclose(out, ref, rtol=1e-3, atol=1e-3)), err
    print("KERNEL_OK")
</pallas_src>

<mosaic_0001>
module attributes {stable_mosaic.version = 11 : i64} {
  func.func @kernel(%arg0: i32, %arg1: memref<1x16x16x4xf32, #tpu.memory_space<vmem>>, %arg2: memref<36x8xf32, #tpu.memory_space<vmem>>, %arg3: memref<1x16x16x8xf32, #tpu.memory_space<vmem>>, %arg4: memref<1x1x8xf32, #tpu.memory_space<vmem>>, %arg5: memref<1x1x8xf32, #tpu.memory_space<vmem>>, %arg6: memref<18x18x4xf32, #tpu.memory_space<vmem>>, %arg7: memref<256x36xf32, #tpu.memory_space<vmem>>) attributes {dimension_semantics = [#tpu.dimension_semantics<parallel>], iteration_bounds = array<i64: 2>, scalar_prefetch = 0 : i64, scratch_operands = 2 : i64, tpu.core_type = #tpu.core_type<tc>, window_params = [{transform_indices = @transform_0, window_bounds = array<i64: 1, 16, 16, 4>}, {pipeline_mode = #tpu.pipeline_mode<synchronous>, transform_indices = @transform_1, window_bounds = array<i64: 36, 8>}, {transform_indices = @transform_2, window_bounds = array<i64: 1, 16, 16, 8>}, {transform_indices = @transform_3, window_bounds = array<i64: 1, 1, 8>}, {transform_indices = @transform_4, window_bounds = array<i64: 1, 1, 8>}]} {
    %c0 = arith.constant 0 : index
    %c0_0 = arith.constant 0 : index
    %c0_1 = arith.constant 0 : index
    %c0_2 = arith.constant 0 : index
    %0 = vector.load %arg1[%c0, %c0_0, %c0_1, %c0_2] : memref<1x16x16x4xf32, #tpu.memory_space<vmem>>, vector<1x16x16x4xf32>
    %1 = vector.shape_cast %0 : vector<1x16x16x4xf32> to vector<16x16x4xf32>
    %cst = arith.constant 0.000000e+00 : f32
    %2 = vector.broadcast %cst : f32 to vector<18x18x4xf32>
    %c0_3 = arith.constant 0 : index
    %c0_4 = arith.constant 0 : index
    %c0_5 = arith.constant 0 : index
    %3 = vector.load %arg6[%c0_3, %c0_4, %c0_5] : memref<18x18x4xf32, #tpu.memory_space<vmem>>, vector<18x18x4xf32>
    tpu.vector_store %arg6[%c0_3, %c0_4, %c0_5], %2 {strides = array<i32>} : memref<18x18x4xf32, #tpu.memory_space<vmem>>, vector<18x18x4xf32>,
    %c1 = arith.constant 1 : index
    %c1_6 = arith.constant 1 : index
    %c0_7 = arith.constant 0 : index
    %4 = vector.load %arg6[%c1, %c1_6, %c0_7] : memref<18x18x4xf32, #tpu.memory_space<vmem>>, vector<16x16x4xf32>
    tpu.vector_store %arg6[%c1, %c1_6, %c0_7], %1 {strides = array<i32>} : memref<18x18x4xf32, #tpu.memory_space<vmem>>, vector<16x16x4xf32>,
    %c0_8 = arith.constant 0 : index
    %c0_9 = arith.constant 0 : index
    %c0_10 = arith.constant 0 : index
    %5 = vector.load %arg6[%c0_8, %c0_9, %c0_10] : memref<18x18x4xf32, #tpu.memory_space<vmem>>, vector<16x16x4xf32>
    %6 = vector.shape_cast %5 : vector<16x16x4xf32> to vector<256x4xf32>
    %c0_11 = arith.constant 0 : index
    %c0_12 = arith.constant 0 : index
    %7 = vector.load %arg7[%c0_11, %c0_12] : memref<256x36xf32, #tpu.memory_space<vmem>>, vector<256x4xf32>
    tpu.vector_store %arg7[%c0_11, %c0_12], %6 {strides = array<i32>} : memref<256x36xf32, #tpu.memory_space<vmem>>, vector<256x4xf32>,
    %c0_13 = arith.constant 0 : index
    %c1_14 = arith.constant 1 : index
    %c0_15 = arith.constant 0 : index
    %8 = vector.load %arg6[%c0_13, %c1_14, %c0_15] : memref<18x18x4xf32, #tpu.memory_space<vmem>>, vector<16x16x4xf32>
    %9 = vector.shape_cast %8 : vector<16x16x4xf32> to vector<256x4xf32>
    %c0_16 = arith.constant 0 : index
    %c4 = arith.constant 4 : index
    %10 = vector.load %arg7[%c0_16, %c4] : memref<256x36xf32, #tpu.memory_space<vmem>>, vector<256x4xf32>
    tpu.vector_store %arg7[%c0_16, %c4], %9 {strides = array<i32>} : memref<256x36xf32, #tpu.memory_space<vmem>>, vector<256x4xf32>,
    %c0_17 = arith.constant 0 : index
    %c2 = arith.constant 2 : index
    %c0_18 = arith.constant 0 : index
    %11 = vector.load %arg6[%c0_17, %c2, %c0_18] : memref<18x18x4xf32, #tpu.memory_space<vmem>>, vector<16x16x4xf32>
    %12 = vector.shape_cast %11 : vector<16x16x4xf32> to vector<256x4xf32>
    %c0_19 = arith.constant 0 : index
    %c8 = arith.constant 8 : index
    %13 = vector.load %arg7[%c0_19, %c8] : memref<256x36xf32, #tpu.memory_space<vmem>>, vector<256x4xf32>
    tpu.vector_store %arg7[%c0_19, %c8], %12 {strides = array<i32>} : memref<256x36xf32, #tpu.memory_space<vmem>>, vector<256x4xf32>,
    %c1_20 = arith.constant 1 : index
    %c0_21 = arith.constant 0 : index
    %c0_22 = arith.constant 0 : index
    %14 = vector.load %arg6[%c1_20, %c0_21, %c0_22] : memref<18x18x4xf32, #tpu.memory_space<vmem>>, vector<16x16x4xf32>
    %15 = vector.shape_cast %14 : vector<16x16x4xf32> to vector<256x4xf32>
    %c0_23 = arith.constant 0 : index
    %c12 = arith.constant 12 : index
    %16 = vector.load %arg7[%c0_23, %c12] : memref<256x36xf32, #tpu.memory_space<vmem>>, vector<256x4xf32>
    tpu.vector_store %arg7[%c0_23, %c12], %15 {strides = array<i32>} : memref<256x36xf32, #tpu.memory_space<vmem>>, vector<256x4xf32>,
    %c1_24 = arith.constant 1 : index
    %c1_25 = arith.constant 1 : index
    %c0_26 = arith.constant 0 : index
    %17 = vector.load %arg6[%c1_24, %c1_25, %c0_26] : memref<18x18x4xf32, #tpu.memory_space<vmem>>, vector<16x16x4xf32>
    %18 = vector.shape_cast %17 : vector<16x16x4xf32> to vector<256x4xf32>
    %c0_27 = arith.constant 0 : index
    %c16 = arith.constant 16 : index
    %19 = vector.load %arg7[%c0_27, %c16] : memref<256x36xf32, #tpu.memory_space<vmem>>, vector<256x4xf32>
    tpu.vector_store %arg7[%c0_27, %c16], %18 {strides = array<i32>} : memref<256x36xf32, #tpu.memory_space<vmem>>, vector<256x4xf32>,
    %c1_28 = arith.constant 1 : index
    %c2_29 = arith.constant 2 : index
    %c0_30 = arith.constant 0 : index
    %20 = vector.load %arg6[%c1_28, %c2_29, %c0_30] : memref<18x18x4xf32, #tpu.memory_space<vmem>>, vector<16x16x4xf32>
    %21 = vector.shape_cast %20 : vector<16x16x4xf32> to vector<256x4xf32>
    %c0_31 = arith.constant 0 : index
    %c20 = arith.constant 20 : index
    %22 = vector.load %arg7[%c0_31, %c20] : memref<256x36xf32, #tpu.memory_space<vmem>>, vector<256x4xf32>
    tpu.vector_store %arg7[%c0_31, %c20], %21 {strides = array<i32>} : memref<256x36xf32, #tpu.memory_space<vmem>>, vector<256x4xf32>,
    %c2_32 = arith.constant 2 : index
    %c0_33 = arith.constant 0 : index
    %c0_34 = arith.constant 0 : index
    %23 = vector.load %arg6[%c2_32, %c0_33, %c0_34] : memref<18x18x4xf32, #tpu.memory_space<vmem>>, vector<16x16x4xf32>
    %24 = vector.shape_cast %23 : vector<16x16x4xf32> to vector<256x4xf32>
    %c0_35 = arith.constant 0 : index
    %c24 = arith.constant 24 : index
    %25 = vector.load %arg7[%c0_35, %c24] : memref<256x36xf32, #tpu.memory_space<vmem>>, vector<256x4xf32>
    tpu.vector_store %arg7[%c0_35, %c24], %24 {strides = array<i32>} : memref<256x36xf32, #tpu.memory_space<vmem>>, vector<256x4xf32>,
    %c2_36 = arith.constant 2 : index
    %c1_37 = arith.constant 1 : index
    %c0_38 = arith.constant 0 : index
    %26 = vector.load %arg6[%c2_36, %c1_37, %c0_38] : memref<18x18x4xf32, #tpu.memory_space<vmem>>, vector<16x16x4xf32>
    %27 = vector.shape_cast %26 : vector<16x16x4xf32> to vector<256x4xf32>
    %c0_39 = arith.constant 0 : index
    %c28 = arith.constant 28 : index
    %28 = vector.load %arg7[%c0_39, %c28] : memref<256x36xf32, #tpu.memory_space<vmem>>, vector<256x4xf32>
    tpu.vector_store %arg7[%c0_39, %c28], %27 {strides = array<i32>} : memref<256x36xf32, #tpu.memory_space<vmem>>, vector<256x4xf32>,
    %c2_40 = arith.constant 2 : index
    %c2_41 = arith.constant 2 : index
    %c0_42 = arith.constant 0 : index
    %29 = vector.load %arg6[%c2_40, %c2_41, %c0_42] : memref<18x18x4xf32, #tpu.memory_space<vmem>>, vector<16x16x4xf32>
    %30 = vector.shape_cast %29 : vector<16x16x4xf32> to vector<256x4xf32>
    %c0_43 = arith.constant 0 : index
    %c32 = arith.constant 32 : index
    %31 = vector.load %arg7[%c0_43, %c32] : memref<256x36xf32, #tpu.memory_space<vmem>>, vector<256x4xf32>
    tpu.vector_store %arg7[%c0_43, %c32], %30 {strides = array<i32>} : memref<256x36xf32, #tpu.memory_space<vmem>>, vector<256x4xf32>,
    %c0_44 = arith.constant 0 : index
    %c0_45 = arith.constant 0 : index
    %32 = vector.load %arg7[%c0_44, %c0_45] : memref<256x36xf32, #tpu.memory_space<vmem>>, vector<256x36xf32>
    %c0_46 = arith.constant 0 : index
    %c0_47 = arith.constant 0 : index
    %33 = vector.load %arg2[%c0_46, %c0_47] : memref<36x8xf32, #tpu.memory_space<vmem>>, vector<36x8xf32>
    %cst_48 = arith.constant dense<0.000000e+00> : vector<256x8xf32>
    %34 = tpu.matmul %32, %33, %cst_48 {dimension_numbers = #tpu.dot_dimension_numbers<[1], [0], [0], [1], [0, 0, 1, 1], [], []>} : vector<256x36xf32>, vector<36x8xf32>, vector<256x8xf32> -> vector<256x8xf32>
    %cst_49 = arith.constant dense<0.000000e+00> : vector<8xf32>
    %35 = vector.multi_reduction <add>, %34, %cst_49 [0] : vector<256x8xf32> to vector<8xf32>
    %36 = vector.shape_cast %35 : vector<8xf32> to vector<1x8xf32>
    %c0_50 = arith.constant 0 : index
    %c0_51 = arith.constant 0 : index
    %c0_52 = arith.constant 0 : index
    %37 = vector.load %arg4[%c0_50, %c0_51, %c0_52] : memref<1x1x8xf32, #tpu.memory_space<vmem>>, vector<1x1x8xf32>
    %38 = vector.shape_cast %37 : vector<1x1x8xf32> to vector<1x8xf32>
    %39 = vector.shape_cast %36 : vector<1x8xf32> to vector<1x1x8xf32>
    tpu.vector_store %arg4[%c0_50, %c0_51, %c0_52], %39 {strides = array<i32>} : memref<1x1x8xf32, #tpu.memory_space<vmem>>, vector<1x1x8xf32>,
    %40 = arith.mulf %34, %34 : vector<256x8xf32>
    %cst_53 = arith.constant dense<0.000000e+00> : vector<8xf32>
    %41 = vector.multi_reduction <add>, %40, %cst_53 [0] : vector<256x8xf32> to vector<8xf32>
    %42 = vector.shape_cast %41 : vector<8xf32> to vector<1x8xf32>
    %c0_54 = arith.constant 0 : index
    %c0_55 = arith.constant 0 : index
    %c0_56 = arith.constant 0 : index
    %43 = vector.load %arg5[%c0_54, %c0_55, %c0_56] : memref<1x1x8xf32, #tpu.memory_space<vmem>>, vector<1x1x8xf32>
    %44 = vector.shape_cast %43 : vector<1x1x8xf32> to vector<1x8xf32>
    %45 = vector.shape_cast %42 : vector<1x8xf32> to vector<1x1x8xf32>
    tpu.vector_store %arg5[%c0_54, %c0_55, %c0_56], %45 {strides = array<i32>} : memref<1x1x8xf32, #tpu.memory_space<vmem>>, vector<1x1x8xf32>,
    %46 = vector.shape_cast %34 : vector<256x8xf32> to vector<16x16x8xf32>
    %c0_57 = arith.constant 0 : index
    %c0_58 = arith.constant 0 : index
    %c0_59 = arith.constant 0 : index
    %c0_60 = arith.constant 0 : index
    %47 = vector.load %arg3[%c0_57, %c0_58, %c0_59, %c0_60] : memref<1x16x16x8xf32, #tpu.memory_space<vmem>>, vector<1x16x16x8xf32>
    %48 = vector.shape_cast %47 : vector<1x16x16x8xf32> to vector<16x16x8xf32>
    %49 = vector.shape_cast %46 : vector<16x16x8xf32> to vector<1x16x16x8xf32>
    tpu.vector_store %arg3[%c0_57, %c0_58, %c0_59, %c0_60], %49 {strides = array<i32>} : memref<1x16x16x8xf32, #tpu.memory_space<vmem>>, vector<1x16x16x8xf32>,
    return
  }
  func.func @transform_0(%arg0: i32) -> (i32, i32, i32, i32) {
    %c0_i32 = arith.constant 0 : i32
    %c0_i32_0 = arith.constant 0 : i32
    %c0_i32_1 = arith.constant 0 : i32
    %c0_i32_2 = arith.constant 0 : i32
    return %arg0, %c0_i32, %c0_i32_0, %c0_i32_1 : i32, i32, i32, i32
  }
  func.func @transform_1(%arg0: i32) -> (i32, i32) {
    %c0_i32 = arith.constant 0 : i32
    %c0_i32_0 = arith.constant 0 : i32
    %c0_i32_1 = arith.constant 0 : i32
    return %c0_i32, %c0_i32_0 : i32, i32
  }
  func.func @transform_2(%arg0: i32) -> (i32, i32, i32, i32) {
    %c0_i32 = arith.constant 0 : i32
    %c0_i32_0 = arith.constant 0 : i32
    %c0_i32_1 = arith.constant 0 : i32
    %c0_i32_2 = arith.constant 0 : i32
    return %arg0, %c0_i32, %c0_i32_0, %c0_i32_1 : i32, i32, i32, i32
  }
  func.func @transform_3(%arg0: i32) -> (i32, i32, i32) {
    %c0_i32 = arith.constant 0 : i32
    %c0_i32_0 = arith.constant 0 : i32
    %c0_i32_1 = arith.constant 0 : i32
    return %arg0, %c0_i32, %c0_i32_0 : i32, i32, i32
  }
  func.func @transform_4(%arg0: i32) -> (i32, i32, i32) {
    %c0_i32 = arith.constant 0 : i32
    %c0_i32_0 = arith.constant 0 : i32
    %c0_i32_1 = arith.constant 0 : i32
    return %arg0, %c0_i32, %c0_i32_0 : i32, i32, i32
  }
}

module attributes {stable_mosaic.version = 11 : i64} {
  func.func @kernel(%arg0: i32, %arg1: memref<1x16x16x8xf32, #tpu.memory_space<vmem>>, %arg2: memref<1x8xf32, #tpu.memory_space<vmem>>, %arg3: memref<1x8xf32, #tpu.memory_space<vmem>>, %arg4: memref<72x8xf32, #tpu.memory_space<vmem>>, %arg5: memref<1x16x16x8xf32, #tpu.memory_space<vmem>>, %arg6: memref<1x1x8xf32, #tpu.memory_space<vmem>>, %arg7: memref<1x1x8xf32, #tpu.memory_space<vmem>>, %arg8: memref<18x18x8xf32, #tpu.memory_space<vmem>>, %arg9: memref<256x72xf32, #tpu.memory_space<vmem>>) attributes {dimension_semantics = [#tpu.dimension_semantics<parallel>], iteration_bounds = array<i64: 2>, scalar_prefetch = 0 : i64, scratch_operands = 2 : i64, tpu.core_type = #tpu.core_type<tc>, window_params = [{transform_indices = @transform_0, window_bounds = array<i64: 1, 16, 16, 8>}, {pipeline_mode = #tpu.pipeline_mode<synchronous>, transform_indices = @transform_1, window_bounds = array<i64: 1, 8>}, {pipeline_mode = #tpu.pipeline_mode<synchronous>, transform_indices = @transform_2, window_bounds = array<i64: 1, 8>}, {pipeline_mode = #tpu.pipeline_mode<synchronous>, transform_indices = @transform_3, window_bounds = array<i64: 72, 8>}, {transform_indices = @transform_4, window_bounds = array<i64: 1, 16, 16, 8>}, {transform_indices = @transform_5, window_bounds = array<i64: 1, 1, 8>}, {transform_indices = @transform_6, window_bounds = array<i64: 1, 1, 8>}]} {
    %c0 = arith.constant 0 : index
    %c0_0 = arith.constant 0 : index
    %c0_1 = arith.constant 0 : index
    %c0_2 = arith.constant 0 : index
    %0 = vector.load %arg1[%c0, %c0_0, %c0_1, %c0_2] : memref<1x16x16x8xf32, #tpu.memory_space<vmem>>, vector<1x16x16x8xf32>
    %1 = vector.shape_cast %0 : vector<1x16x16x8xf32> to vector<16x16x8xf32>
    %c0_3 = arith.constant 0 : index
    %c0_4 = arith.constant 0 : index
    %2 = vector.load %arg2[%c0_3, %c0_4] : memref<1x8xf32, #tpu.memory_space<vmem>>, vector<1x8xf32>
    %3 = vector.shape_cast %2 : vector<1x8xf32> to vector<1x1x8xf32>
    %4 = vector.broadcast %3 : vector<1x1x8xf32> to vector<16x16x8xf32>
    %5 = arith.mulf %1, %4 : vector<16x16x8xf32>
    %c0_5 = arith.constant 0 : index
    %c0_6 = arith.constant 0 : index
    %6 = vector.load %arg3[%c0_5, %c0_6] : memref<1x8xf32, #tpu.memory_space<vmem>>, vector<1x8xf32>
    %7 = vector.shape_cast %6 : vector<1x8xf32> to vector<1x1x8xf32>
    %8 = vector.broadcast %7 : vector<1x1x8xf32> to vector<16x16x8xf32>
    %9 = arith.addf %5, %8 : vector<16x16x8xf32>
    %cst = arith.constant 0.000000e+00 : f32
    %10 = vector.broadcast %cst : f32 to vector<16x16x8xf32>
    %11 = arith.cmpf oge, %9, %10 : vector<16x16x8xf32>
    %cst_7 = arith.constant 2.000000e-01 : f32
    %12 = vector.broadcast %cst_7 : f32 to vector<16x16x8xf32>
    %13 = arith.mulf %12, %9 : vector<16x16x8xf32>
    %14 = arith.select %11, %9, %13 : vector<16x16x8xi1>, vector<16x16x8xf32>
    %cst_8 = arith.constant 0.000000e+00 : f32
    %15 = vector.broadcast %cst_8 : f32 to vector<18x18x8xf32>
    %c0_9 = arith.constant 0 : index
    %c0_10 = arith.constant 0 : index
    %c0_11 = arith.constant 0 : index
    %16 = vector.load %arg8[%c0_9, %c0_10, %c0_11] : memref<18x18x8xf32, #tpu.memory_space<vmem>>, vector<18x18x8xf32>
    tpu.vector_store %arg8[%c0_9, %c0_10, %c0_11], %15 {strides = array<i32>} : memref<18x18x8xf32, #tpu.memory_space<vmem>>, vector<18x18x8xf32>,
    %c1 = arith.constant 1 : index
    %c1_12 = arith.constant 1 : index
    %c0_13 = arith.constant 0 : index
    %17 = vector.load %arg8[%c1, %c1_12, %c0_13] : memref<18x18x8xf32, #tpu.memory_space<vmem>>, vector<16x16x8xf32>
    tpu.vector_store %arg8[%c1, %c1_12, %c0_13], %14 {strides = array<i32>} : memref<18x18x8xf32, #tpu.memory_space<vmem>>, vector<16x16x8xf32>,
    %c0_14 = arith.constant 0 : index
    %c0_15 = arith.constant 0 : index
    %c0_16 = arith.constant 0 : index
    %18 = vector.load %arg8[%c0_14, %c0_15, %c0_16] : memref<18x18x8xf32, #tpu.memory_space<vmem>>, vector<16x16x8xf32>
    %19 = vector.shape_cast %18 : vector<16x16x8xf32> to vector<256x8xf32>
    %c0_17 = arith.constant 0 : index
    %c0_18 = arith.constant 0 : index
    %20 = vector.load %arg9[%c0_17, %c0_18] : memref<256x72xf32, #tpu.memory_space<vmem>>, vector<256x8xf32>
    tpu.vector_store %arg9[%c0_17, %c0_18], %19 {strides = array<i32>} : memref<256x72xf32, #tpu.memory_space<vmem>>, vector<256x8xf32>,
    %c0_19 = arith.constant 0 : index
    %c1_20 = arith.constant 1 : index
    %c0_21 = arith.constant 0 : index
    %21 = vector.load %arg8[%c0_19, %c1_20, %c0_21] : memref<18x18x8xf32, #tpu.memory_space<vmem>>, vector<16x16x8xf32>
    %22 = vector.shape_cast %21 : vector<16x16x8xf32> to vector<256x8xf32>
    %c0_22 = arith.constant 0 : index
    %c8 = arith.constant 8 : index
    %23 = vector.load %arg9[%c0_22, %c8] : memref<256x72xf32, #tpu.memory_space<vmem>>, vector<256x8xf32>
    tpu.vector_store %arg9[%c0_22, %c8], %22 {strides = array<i32>} : memref<256x72xf32, #tpu.memory_space<vmem>>, vector<256x8xf32>,
    %c0_23 = arith.constant 0 : index
    %c2 = arith.constant 2 : index
    %c0_24 = arith.constant 0 : index
    %24 = vector.load %arg8[%c0_23, %c2, %c0_24] : memref<18x18x8xf32, #tpu.memory_space<vmem>>, vector<16x16x8xf32>
    %25 = vector.shape_cast %24 : vector<16x16x8xf32> to vector<256x8xf32>
    %c0_25 = arith.constant 0 : index
    %c16 = arith.constant 16 : index
    %26 = vector.load %arg9[%c0_25, %c16] : memref<256x72xf32, #tpu.memory_space<vmem>>, vector<256x8xf32>
    tpu.vector_store %arg9[%c0_25, %c16], %25 {strides = array<i32>} : memref<256x72xf32, #tpu.memory_space<vmem>>, vector<256x8xf32>,
    %c1_26 = arith.constant 1 : index
    %c0_27 = arith.constant 0 : index
    %c0_28 = arith.constant 0 : index
    %27 = vector.load %arg8[%c1_26, %c0_27, %c0_28] : memref<18x18x8xf32, #tpu.memory_space<vmem>>, vector<16x16x8xf32>
    %28 = vector.shape_cast %27 : vector<16x16x8xf32> to vector<256x8xf32>
    %c0_29 = arith.constant 0 : index
    %c24 = arith.constant 24 : index
    %29 = vector.load %arg9[%c0_29, %c24] : memref<256x72xf32, #tpu.memory_space<vmem>>, vector<256x8xf32>
    tpu.vector_store %arg9[%c0_29, %c24], %28 {strides = array<i32>} : memref<256x72xf32, #tpu.memory_space<vmem>>, vector<256x8xf32>,
    %c1_30 = arith.constant 1 : index
    %c1_31 = arith.constant 1 : index
    %c0_32 = arith.constant 0 : index
    %30 = vector.load %arg8[%c1_30, %c1_31, %c0_32] : memref<18x18x8xf32, #tpu.memory_space<vmem>>, vector<16x16x8xf32>
    %31 = vector.shape_cast %30 : vector<16x16x8xf32> to vector<256x8xf32>
    %c0_33 = arith.constant 0 : index
    %c32 = arith.constant 32 : index
    %32 = vector.load %arg9[%c0_33, %c32] : memref<256x72xf32, #tpu.memory_space<vmem>>, vector<256x8xf32>
    tpu.vector_store %arg9[%c0_33, %c32], %31 {strides = array<i32>} : memref<256x72xf32, #tpu.memory_space<vmem>>, vector<256x8xf32>,
    %c1_34 = arith.constant 1 : index
    %c2_35 = arith.constant 2 : index
    %c0_36 = arith.constant 0 : index
    %33 = vector.load %arg8[%c1_34, %c2_35, %c0_36] : memref<18x18x8xf32, #tpu.memory_space<vmem>>, vector<16x16x8xf32>
    %34 = vector.shape_cast %33 : vector<16x16x8xf32> to vector<256x8xf32>
    %c0_37 = arith.constant 0 : index
    %c40 = arith.constant 40 : index
    %35 = vector.load %arg9[%c0_37, %c40] : memref<256x72xf32, #tpu.memory_space<vmem>>, vector<256x8xf32>
    tpu.vector_store %arg9[%c0_37, %c40], %34 {strides = array<i32>} : memref<256x72xf32, #tpu.memory_space<vmem>>, vector<256x8xf32>,
    %c2_38 = arith.constant 2 : index
    %c0_39 = arith.constant 0 : index
    %c0_40 = arith.constant 0 : index
    %36 = vector.load %arg8[%c2_38, %c0_39, %c0_40] : memref<18x18x8xf32, #tpu.memory_space<vmem>>, vector<16x16x8xf32>
    %37 = vector.shape_cast %36 : vector<16x16x8xf32> to vector<256x8xf32>
    %c0_41 = arith.constant 0 : index
    %c48 = arith.constant 48 : index
    %38 = vector.load %arg9[%c0_41, %c48] : memref<256x72xf32, #tpu.memory_space<vmem>>, vector<256x8xf32>
    tpu.vector_store %arg9[%c0_41, %c48], %37 {strides = array<i32>} : memref<256x72xf32, #tpu.memory_space<vmem>>, vector<256x8xf32>,
    %c2_42 = arith.constant 2 : index
    %c1_43 = arith.constant 1 : index
    %c0_44 = arith.constant 0 : index
    %39 = vector.load %arg8[%c2_42, %c1_43, %c0_44] : memref<18x18x8xf32, #tpu.memory_space<vmem>>, vector<16x16x8xf32>
    %40 = vector.shape_cast %39 : vector<16x16x8xf32> to vector<256x8xf32>
    %c0_45 = arith.constant 0 : index
    %c56 = arith.constant 56 : index
    %41 = vector.load %arg9[%c0_45, %c56] : memref<256x72xf32, #tpu.memory_space<vmem>>, vector<256x8xf32>
    tpu.vector_store %arg9[%c0_45, %c56], %40 {strides = array<i32>} : memref<256x72xf32, #tpu.memory_space<vmem>>, vector<256x8xf32>,
    %c2_46 = arith.constant 2 : index
    %c2_47 = arith.constant 2 : index
    %c0_48 = arith.constant 0 : index
    %42 = vector.load %arg8[%c2_46, %c2_47, %c0_48] : memref<18x18x8xf32, #tpu.memory_space<vmem>>, vector<16x16x8xf32>
    %43 = vector.shape_cast %42 : vector<16x16x8xf32> to vector<256x8xf32>
    %c0_49 = arith.constant 0 : index
    %c64 = arith.constant 64 : index
    %44 = vector.load %arg9[%c0_49, %c64] : memref<256x72xf32, #tpu.memory_space<vmem>>, vector<256x8xf32>
    tpu.vector_store %arg9[%c0_49, %c64], %43 {strides = array<i32>} : memref<256x72xf32, #tpu.memory_space<vmem>>, vector<256x8xf32>,
    %c0_50 = arith.constant 0 : index
    %c0_51 = arith.constant 0 : index
    %45 = vector.load %arg9[%c0_50, %c0_51] : memref<256x72xf32, #tpu.memory_space<vmem>>, vector<256x72xf32>
    %c0_52 = arith.constant 0 : index
    %c0_53 = arith.constant 0 : index
    %46 = vector.load %arg4[%c0_52, %c0_53] : memref<72x8xf32, #tpu.memory_space<vmem>>, vector<72x8xf32>
    %cst_54 = arith.constant dense<0.000000e+00> : vector<256x8xf32>
    %47 = tpu.matmul %45, %46, %cst_54 {dimension_numbers = #tpu.dot_dimension_numbers<[1], [0], [0], [1], [0, 0, 1, 1], [], []>} : vector<256x72xf32>, vector<72x8xf32>, vector<256x8xf32> -> vector<256x8xf32>
    %cst_55 = arith.constant dense<0.000000e+00> : vector<8xf32>
    %48 = vector.multi_reduction <add>, %47, %cst_55 [0] : vector<256x8xf32> to vector<8xf32>
    %49 = vector.shape_cast %48 : vector<8xf32> to vector<1x8xf32>
    %c0_56 = arith.constant 0 : index
    %c0_57 = arith.constant 0 : index
    %c0_58 = arith.constant 0 : index
    %50 = vector.load %arg6[%c0_56, %c0_57, %c0_58] : memref<1x1x8xf32, #tpu.memory_space<vmem>>, vector<1x1x8xf32>
    %51 = vector.shape_cast %50 : vector<1x1x8xf32> to vector<1x8xf32>
    %52 = vector.shape_cast %49 : vector<1x8xf32> to vector<1x1x8xf32>
    tpu.vector_store %arg6[%c0_56, %c0_57, %c0_58], %52 {strides = array<i32>} : memref<1x1x8xf32, #tpu.memory_space<vmem>>, vector<1x1x8xf32>,
    %53 = arith.mulf %47, %47 : vector<256x8xf32>
    %cst_59 = arith.constant dense<0.000000e+00> : vector<8xf32>
    %54 = vector.multi_reduction <add>, %53, %cst_59 [0] : vector<256x8xf32> to vector<8xf32>
    %55 = vector.shape_cast %54 : vector<8xf32> to vector<1x8xf32>
    %c0_60 = arith.constant 0 : index
    %c0_61 = arith.constant 0 : index
    %c0_62 = arith.constant 0 : index
    %56 = vector.load %arg7[%c0_60, %c0_61, %c0_62] : memref<1x1x8xf32, #tpu.memory_space<vmem>>, vector<1x1x8xf32>
    %57 = vector.shape_cast %56 : vector<1x1x8xf32> to vector<1x8xf32>
    %58 = vector.shape_cast %55 : vector<1x8xf32> to vector<1x1x8xf32>
    tpu.vector_store %arg7[%c0_60, %c0_61, %c0_62], %58 {strides = array<i32>} : memref<1x1x8xf32, #tpu.memory_space<vmem>>, vector<1x1x8xf32>,
    %59 = vector.shape_cast %47 : vector<256x8xf32> to vector<16x16x8xf32>
    %c0_63 = arith.constant 0 : index
    %c0_64 = arith.constant 0 : index
    %c0_65 = arith.constant 0 : index
    %c0_66 = arith.constant 0 : index
    %60 = vector.load %arg5[%c0_63, %c0_64, %c0_65, %c0_66] : memref<1x16x16x8xf32, #tpu.memory_space<vmem>>, vector<1x16x16x8xf32>
    %61 = vector.shape_cast %60 : vector<1x16x16x8xf32> to vector<16x16x8xf32>
    %62 = vector.shape_cast %59 : vector<16x16x8xf32> to vector<1x16x16x8xf32>
    tpu.vector_store %arg5[%c0_63, %c0_64, %c0_65, %c0_66], %62 {strides = array<i32>} : memref<1x16x16x8xf32, #tpu.memory_space<vmem>>, vector<1x16x16x8xf32>,
    return
  }
  func.func @transform_0(%arg0: i32) -> (i32, i32, i32, i32) {
    %c0_i32 = arith.constant 0 : i32
    %c0_i32_0 = arith.constant 0 : i32
    %c0_i32_1 = arith.constant 0 : i32
    %c0_i32_2 = arith.constant 0 : i32
    return %arg0, %c0_i32, %c0_i32_0, %c0_i32_1 : i32, i32, i32, i32
  }
  func.func @transform_1(%arg0: i32) -> (i32, i32) {
    %c0_i32 = arith.constant 0 : i32
    %c0_i32_0 = arith.constant 0 : i32
    %c0_i32_1 = arith.constant 0 : i32
    return %c0_i32, %c0_i32_0 : i32, i32
  }
  func.func @transform_2(%arg0: i32) -> (i32, i32) {
    %c0_i32 = arith.constant 0 : i32
    %c0_i32_0 = arith.constant 0 : i32
    %c0_i32_1 = arith.constant 0 : i32
    return %c0_i32, %c0_i32_0 : i32, i32
  }
  func.func @transform_3(%arg0: i32) -> (i32, i32) {
    %c0_i32 = arith.constant 0 : i32
    %c0_i32_0 = arith.constant 0 : i32
    %c0_i32_1 = arith.constant 0 : i32
    return %c0_i32, %c0_i32_0 : i32, i32
  }
  func.func @transform_4(%arg0: i32) -> (i32, i32, i32, i32) {
    %c0_i32 = arith.constant 0 : i32
    %c0_i32_0 = arith.constant 0 : i32
    %c0_i32_1 = arith.constant 0 : i32
    %c0_i32_2 = arith.constant 0 : i32
    return %arg0, %c0_i32, %c0_i32_0, %c0_i32_1 : i32, i32, i32, i32
  }
  func.func @transform_5(%arg0: i32) -> (i32, i32, i32) {
    %c0_i32 = arith.constant 0 : i32
    %c0_i32_0 = arith.constant 0 : i32
    %c0_i32_1 = arith.constant 0 : i32
    return %arg0, %c0_i32, %c0_i32_0 : i32, i32, i32
  }
  func.func @transform_6(%arg0: i32) -> (i32, i32, i32) {
    %c0_i32 = arith.constant 0 : i32
    %c0_i32_0 = arith.constant 0 : i32
    %c0_i32_1 = arith.constant 0 : i32
    return %arg0, %c0_i32, %c0_i32_0 : i32, i32, i32
  }
}

module attributes {stable_mosaic.version = 11 : i64} {
  func.func @_affine_act_pool_kernel(%arg0: i32, %arg1: memref<1x8x2x8x2x8xf32, #tpu.memory_space<vmem>>, %arg2: memref<1x8xf32, #tpu.memory_space<vmem>>, %arg3: memref<1x8xf32, #tpu.memory_space<vmem>>, %arg4: memref<1x8x8x8xf32, #tpu.memory_space<vmem>>) attributes {dimension_semantics = [#tpu.dimension_semantics<parallel>], iteration_bounds = array<i64: 2>, scalar_prefetch = 0 : i64, scratch_operands = 0 : i64, tpu.core_type = #tpu.core_type<tc>, window_params = [{transform_indices = @transform_0, window_bounds = array<i64: 1, 8, 2, 8, 2, 8>}, {pipeline_mode = #tpu.pipeline_mode<synchronous>, transform_indices = @transform_1, window_bounds = array<i64: 1, 8>}, {pipeline_mode = #tpu.pipeline_mode<synchronous>, transform_indices = @transform_2, window_bounds = array<i64: 1, 8>}, {transform_indices = @transform_3, window_bounds = array<i64: 1, 8, 8, 8>}]} {
    %c0 = arith.constant 0 : index
    %c0_0 = arith.constant 0 : index
    %c0_1 = arith.constant 0 : index
    %c0_2 = arith.constant 0 : index
    %c0_3 = arith.constant 0 : index
    %c0_4 = arith.constant 0 : index
    %0 = vector.load %arg1[%c0, %c0_0, %c0_1, %c0_2, %c0_3, %c0_4] : memref<1x8x2x8x2x8xf32, #tpu.memory_space<vmem>>, vector<1x8x2x8x2x8xf32>
    %1 = vector.shape_cast %0 : vector<1x8x2x8x2x8xf32> to vector<8x2x8x2x8xf32>
    %c0_5 = arith.constant 0 : index
    %c0_6 = arith.constant 0 : index
    %2 = vector.load %arg2[%c0_5, %c0_6] : memref<1x8xf32, #tpu.memory_space<vmem>>, vector<1x8xf32>
    %3 = vector.shape_cast %2 : vector<1x8xf32> to vector<1x1x1x1x8xf32>
    %4 = vector.broadcast %3 : vector<1x1x1x1x8xf32> to vector<8x2x8x2x8xf32>
    %5 = arith.mulf %1, %4 : vector<8x2x8x2x8xf32>
    %c0_7 = arith.constant 0 : index
    %c0_8 = arith.constant 0 : index
    %6 = vector.load %arg3[%c0_7, %c0_8] : memref<1x8xf32, #tpu.memory_space<vmem>>, vector<1x8xf32>
    %7 = vector.shape_cast %6 : vector<1x8xf32> to vector<1x1x1x1x8xf32>
    %8 = vector.broadcast %7 : vector<1x1x1x1x8xf32> to vector<8x2x8x2x8xf32>
    %9 = arith.addf %5, %8 : vector<8x2x8x2x8xf32>
    %cst = arith.constant 0.000000e+00 : f32
    %10 = vector.broadcast %cst : f32 to vector<8x2x8x2x8xf32>
    %11 = arith.cmpf oge, %9, %10 : vector<8x2x8x2x8xf32>
    %cst_9 = arith.constant 2.000000e-01 : f32
    %12 = vector.broadcast %cst_9 : f32 to vector<8x2x8x2x8xf32>
    %13 = arith.mulf %12, %9 : vector<8x2x8x2x8xf32>
    %14 = arith.select %11, %9, %13 : vector<8x2x8x2x8xi1>, vector<8x2x8x2x8xf32>
    %cst_10 = arith.constant dense<0xFF800000> : vector<8x2x8x8xf32>
    %15 = vector.multi_reduction <maximumf>, %14, %cst_10 [3] : vector<8x2x8x2x8xf32> to vector<8x2x8x8xf32>
    %cst_11 = arith.constant dense<0xFF800000> : vector<8x8x8xf32>
    %16 = vector.multi_reduction <maximumf>, %15, %cst_11 [1] : vector<8x2x8x8xf32> to vector<8x8x8xf32>
    %c0_12 = arith.constant 0 : index
    %c0_13 = arith.constant 0 : index
    %c0_14 = arith.constant 0 : index
    %c0_15 = arith.constant 0 : index
    %17 = vector.load %arg4[%c0_12, %c0_13, %c0_14, %c0_15] : memref<1x8x8x8xf32, #tpu.memory_space<vmem>>, vector<1x8x8x8xf32>
    %18 = vector.shape_cast %17 : vector<1x8x8x8xf32> to vector<8x8x8xf32>
    %19 = vector.shape_cast %16 : vector<8x8x8xf32> to vector<1x8x8x8xf32>
    tpu.vector_store %arg4[%c0_12, %c0_13, %c0_14, %c0_15], %19 {strides = array<i32>} : memref<1x8x8x8xf32, #tpu.memory_space<vmem>>, vector<1x8x8x8xf32>,
    return
  }
  func.func @transform_0(%arg0: i32) -> (i32, i32, i32, i32, i32, i32) {
    %c0_i32 = arith.constant 0 : i32
    %c0_i32_0 = arith.constant 0 : i32
    %c0_i32_1 = arith.constant 0 : i32
    %c0_i32_2 = arith.constant 0 : i32
    %c0_i32_3 = arith.constant 0 : i32
    %c0_i32_4 = arith.constant 0 : i32
    return %arg0, %c0_i32, %c0_i32_0, %c0_i32_1, %c0_i32_2, %c0_i32_3 : i32, i32, i32, i32, i32, i32
  }
  func.func @transform_1(%arg0: i32) -> (i32, i32) {
    %c0_i32 = arith.constant 0 : i32
    %c0_i32_0 = arith.constant 0 : i32
    %c0_i32_1 = arith.constant 0 : i32
    return %c0_i32, %c0_i32_0 : i32, i32
  }
  func.func @transform_2(%arg0: i32) -> (i32, i32) {
    %c0_i32 = arith.constant 0 : i32
    %c0_i32_0 = arith.constant 0 : i32
    %c0_i32_1 = arith.constant 0 : i32
    return %c0_i32, %c0_i32_0 : i32, i32
  }
  func.func @transform_3(%arg0: i32) -> (i32, i32, i32, i32) {
    %c0_i32 = arith.constant 0 : i32
    %c0_i32_0 = arith.constant 0 : i32
    %c0_i32_1 = arith.constant 0 : i32
    %c0_i32_2 = arith.constant 0 : i32
    return %arg0, %c0_i32, %c0_i32_0, %c0_i32_1 : i32, i32, i32, i32
  }
}

</mosaic_0001>

<llo_original>
// kernel: contracting_block_forward.5
$region0: #{contracting_block_forward.5}
  #allocation0 [shape = 'u32[]', space=smem, size = 0x4, offset = 0x4, fixed_abs, tag = 'smem constant byte address 0x4 - core index']
  #allocation1 [shape = 'u32[144,128]{1,0:T(1,128)}', space=vmem, size = 0x12000, scoped, tag = 'internal scratch']
  %s0 = inlined_call_operand.vmem [shape: f32[2,8,2,8,2,8], index: 0, kind: input, shape index: {}]
  %s1 = inlined_call_operand.vmem [shape: f32[1,8], index: 1, kind: input, shape index: {}]
  %s2 = inlined_call_operand.vmem [shape: f32[1,8], index: 2, kind: input, shape index: {}]
  %s3 = inlined_call_operand.vmem [shape: f32[2,8,8,8], index: 3, kind: output, shape index: {}]
  %s4 = sld [smem:[#allocation0]]
  $region45: #{contracting_block_forward.5} parent=0
    _
  %s6 = ssub.s32 1, %s4
  %s7 = scalar_select 0, %s6, %s4
  loop: start=0, step=1, limit=4
  $region2: #{contracting_block_forward.5} parent=0 // loop_pre_header
    _
  $region3: #{contracting_block_forward.5} parent=0 // loop_header
    %s9 = sphi 0, %s13
    %p10 = scmp.ge.s32.totalorder %s9, 4
    %s19 = sphi 0, %s21
    %s22 = sphi 0, %s19
    %s23 = sphi 0, %s22
    %s39 = sphi 0, %s23
    %s43 = sphi 0, %s43
    %s45 = sphi 0, %s43
    %s46 = sphi 0, %s45
    %s60 = sphi 0, %s46
    %s64 = sphi 0, %s64
    %s66 = sphi 0, %s64
    %s67 = sphi 0, %s66
    %s81 = sphi 0, %s67
    %s87 = sphi 0, %s89
    %s90 = sphi 0, %s87
    %s91 = sphi 0, %s90
    %s107 = sphi 0, %s91
  $region4: #{contracting_block_forward.5} parent=0 // loop_header_branch
    %12 = sbr.rel (%p10) target = $region8
  $region5: #{contracting_block_forward.5} parent=0 // loop_body
    %s14 = ssub.s32 %s9, 1
    %s15 = ssub.s32 %s9, 2
    %s16 = sadd.s32 %s9, 1
    %s17 = ssub.s32 %s9, %s16
    %p18 = scmp.eq.s32.totalorder %s17, 0
    %s20 = sadd.s32 %s19, 1
    %s21 = scalar_select %p18, %s19, %s20
    %p24 = pneg %p18
    %p25 = scmp.eq.s32.totalorder %s9, 1
    %p26 = por %p24, %p25
    %p27 = scmp.ne.s32.totalorder %s19, %s22
    %p28 = scmp.eq.s32.totalorder %s9, 0
    %p29 = por %p27, %p28
    %p30 = scmp.ne.s32.totalorder %s19, %s22
    %p31 = scmp.eq.s32.totalorder %s14, 1
    %p32 = por %p30, %p31
    %p33 = scmp.ne.s32.totalorder %s22, %s23
    %p34 = scmp.eq.s32.totalorder %s14, 0
    %p35 = por %p33, %p34
    %p36 = scmp.ne.s32.totalorder %s22, %s23
    %p37 = scmp.eq.s32.totalorder %s15, 1
    %p38 = por %p36, %p37
    %p40 = scmp.ne.s32.totalorder %s23, %s39
    %p41 = scmp.eq.s32.totalorder %s15, 0
    %p42 = por %p40, %p41
    %s44 = sadd.s32 %s43, 1
    %p47 = scmp.eq.s32.totalorder %s9, 1
    %p48 = scmp.ne.s32.totalorder %s43, %s45
    %p49 = scmp.eq.s32.totalorder %s9, 0
    %p50 = por %p48, %p49
    %p51 = scmp.ne.s32.totalorder %s43, %s45
    %p52 = scmp.eq.s32.totalorder %s14, 1
    %p53 = por %p51, %p52
    %p54 = scmp.ne.s32.totalorder %s45, %s46
    %p55 = scmp.eq.s32.totalorder %s14, 0
    %p56 = por %p54, %p55
    %p57 = scmp.ne.s32.totalorder %s45, %s46
    %p58 = scmp.eq.s32.totalorder %s15, 1
    %p59 = por %p57, %p58
    %p61 = scmp.ne.s32.totalorder %s46, %s60
    %p62 = scmp.eq.s32.totalorder %s15, 0
    %p63 = por %p61, %p62
    %s65 = sadd.s32 %s64, 1
    %p68 = scmp.eq.s32.totalorder %s9, 1
    %p69 = scmp.ne.s32.totalorder %s64, %s66
    %p70 = scmp.eq.s32.totalorder %s9, 0
    %p71 = por %p69, %p70
    %p72 = scmp.ne.s32.totalorder %s64, %s66
    %p73 = scmp.eq.s32.totalorder %s14, 1
    %p74 = por %p72, %p73
    %p75 = scmp.ne.s32.totalorder %s66, %s67
    %p76 = scmp.eq.s32.totalorder %s14, 0
    %p77 = por %p75, %p76
    %p78 = scmp.ne.s32.totalorder %s66, %s67
    %p79 = scmp.eq.s32.totalorder %s15, 1
    %p80 = por %p78, %p79
    %p82 = scmp.ne.s32.totalorder %s67, %s81
    %p83 = scmp.eq.s32.totalorder %s15, 0
    %p84 = por %p82, %p83
    %s85 = ssub.s32 %s9, %s16
    %p86 = scmp.eq.s32.totalorder %s85, 0
    %s88 = sadd.s32 %s87, 1
    %s89 = scalar_select %p86, %s87, %s88
    %p92 = pneg %p86
    %p93 = scmp.eq.s32.totalorder %s9, 1
    %p94 = por %p92, %p93
    %p95 = scmp.ne.s32.totalorder %s87, %s90
    %p96 = scmp.eq.s32.totalorder %s9, 0
    %p97 = por %p95, %p96
    %p98 = scmp.ne.s32.totalorder %s87, %s90
    %p99 = scmp.eq.s32.totalorder %s14, 1
    %p100 = por %p98, %p99
    %p101 = scmp.ne.s32.totalorder %s90, %s91
    %p102 = scmp.eq.s32.totalorder %s14, 0
    %p103 = por %p101, %p102
    %p104 = scmp.ne.s32.totalorder %s90, %s91
    %p105 = scmp.eq.s32.totalorder %s15, 1
    %p106 = por %p104, %p105
    %p108 = scmp.ne.s32.totalorder %s91, %s107
    %p109 = scmp.eq.s32.totalorder %s15, 0
    %p110 = por %p108, %p109
    %p111 = scmp.le.s32.totalorder 1, %s9
    %p112 = scmp.lt.s32.totalorder %s9, 3
    %p113 = pnand %p111, %p112
    %p114 = pneg %p113
    // Predicated region
    $region9: #{contracting_block_forward.5} parent=5 // pred_check
      _
    $region10: #{contracting_block_forward.5} parent=5 // pred_check_branch
      %116 = sbr.rel (%p113) target = $region12
    $region11: #{contracting_block_forward.5} parent=5 // pred_region
      %s117 = ssub.s32 %s9, 1
      // Predicated region
      $region13: #{contracting_block_forward.5} parent=11 // pred_check
        %p118 = pneg %p56
      $region14: #{contracting_block_forward.5} parent=11 // pred_check_branch
        %120 = sbr.rel (%p118) target = $region16
      $region15: #{contracting_block_forward.5} parent=11 // pred_region
        _
      $region16: #{contracting_block_forward.5} parent=11 // pred_fallthru
        _
      // Predicated region
      $region17: #{contracting_block_forward.5} parent=11 // pred_check
        %p121 = pneg %p77
      $region18: #{contracting_block_forward.5} parent=11 // pred_check_branch
        %123 = sbr.rel (%p121) target = $region20
      $region19: #{contracting_block_forward.5} parent=11 // pred_region
        _
      $region20: #{contracting_block_forward.5} parent=11 // pred_fallthru
        _
    $region12: #{contracting_block_forward.5} parent=5 // pred_fallthru
      _
    %p124 = scmp.lt.s32.totalorder %s9, 2
    // Predicated region
    $region21: #{contracting_block_forward.5} parent=5 // pred_check
      %p125 = pneg %p124
    $region22: #{contracting_block_forward.5} parent=5 // pred_check_branch
      %127 = sbr.rel (%p125) target = $region24
    $region23: #{contracting_block_forward.5} parent=5 // pred_region
      // Predicated region
      $region25: #{contracting_block_forward.5} parent=23 // pred_check
        %p128 = pneg %p29
      $region26: #{contracting_block_forward.5} parent=23 // pred_check_branch
        %130 = sbr.rel (%p128) target = $region28
      $region27: #{contracting_block_forward.5} parent=23 // pred_region
        %p131 = scmp.lt.s32.totalorder %s9, 1
        %s132 = scalar_select %p131, %s9, 1
        %s133 = smul.addr %s132, 128
        %s134 = smul.addr %s133, 2
        %s135 = scalar_lea.vmem %s0, %s134
      $region28: #{contracting_block_forward.5} parent=23 // pred_fallthru
        _
    $region24: #{contracting_block_forward.5} parent=5 // pred_fallthru
      _
    %p136 = scmp.le.s32.totalorder 1, %s9
    %p137 = scmp.lt.s32.totalorder %s9, 3
    %p138 = pnand %p136, %p137
    %p139 = pneg %p138
    // Predicated region
    $region29: #{contracting_block_forward.5} parent=5 // pred_check
      _
    $region30: #{contracting_block_forward.5} parent=5 // pred_check_branch
      %141 = sbr.rel (%p138) target = $region32
    $region31: #{contracting_block_forward.5} parent=5 // pred_region
      %s142 = ssub.s32 %s9, 1
      %p143 = scmp.lt.s32.totalorder %s14, 1
      %s144 = scalar_select %p143, %s14, 1
      %s145 = smul.addr %s144, 128
      %s146 = smul.addr %s145, 2
      %s147 = scalar_lea.vmem %s0, %s146
      %p148 = pneg %p35
      %p149 = pneg %p32
      %p150 = pneg %p56
      %p151 = pneg %p53
      %p152 = pneg %p77
      %p153 = pneg %p74
      %p154 = pneg %p103
      %p155 = pneg %p100
      %p156 = scmp.lt.s32.totalorder %s14, 1
      %s157 = scalar_select %p156, %s14, 1
      %s158 = smul.addr %s157, 8
      %s159 = smul.addr %s158, 8
      %s160 = scalar_lea.vmem %s3, %s159
      %p161 = scmp.lt.s32.totalorder %s14, 1
      %s162 = scalar_select %p161, %s14, 1
      %s163 = smul.addr %s162, 128
      %s164 = smul.addr %s163, 2
      %s165 = scalar_lea.vmem %s0, %s164
      %p166 = scmp.lt.s32.totalorder %s14, 1
      %s167 = scalar_select %p166, %s14, 1
      %s168 = smul.addr %s167, 8
      %s169 = smul.addr %s168, 8
      %s170 = scalar_lea.vmem %s3, %s169
      %v171 = vld [vmem:[%s165] sm:$0x3]
      %v172 = vld [vmem:[%s165 + $0x2] sm:$0x3]
      %v173 = vld [vmem:[%s165 + $0x4] sm:$0x3]
      %v174 = vld [vmem:[%s165 + $0x6] sm:$0x3]
      %v175 = vld [vmem:[%s165 + $0x8] sm:$0x3]
      %v176 = vld [vmem:[%s165 + $0xa] sm:$0x3]
      %v177 = vld [vmem:[%s165 + $0xc] sm:$0x3]
      %v178 = vld [vmem:[%s165 + $0xe] sm:$0x3]
      %v179 = vld [vmem:[%s165 + $0x10] sm:$0x3]
      %v180 = vld [vmem:[%s165 + $0x12] sm:$0x3]
      %v181 = vld [vmem:[%s165 + $0x14] sm:$0x3]
      %v182 = vld [vmem:[%s165 + $0x16] sm:$0x3]
      %v183 = vld [vmem:[%s165 + $0x18] sm:$0x3]
      %v184 = vld [vmem:[%s165 + $0x1a] sm:$0x3]
      %v185 = vld [vmem:[%s165 + $0x1c] sm:$0x3]
      %v186 = vld [vmem:[%s165 + $0x1e] sm:$0x3]
      %v187 = vld [vmem:[%s165 + $0x20] sm:$0x3]
      %v188 = vld [vmem:[%s165 + $0x22] sm:$0x3]
      %v189 = vld [vmem:[%s165 + $0x24] sm:$0x3]
      %v190 = vld [vmem:[%s165 + $0x26] sm:$0x3]
      %v191 = vld [vmem:[%s165 + $0x28] sm:$0x3]
      %v192 = vld [vmem:[%s165 + $0x2a] sm:$0x3]
      %v193 = vld [vmem:[%s165 + $0x2c] sm:$0x3]
      %v194 = vld [vmem:[%s165 + $0x2e] sm:$0x3]
      %v195 = vld [vmem:[%s165 + $0x30] sm:$0x3]
      %v196 = vld [vmem:[%s165 + $0x32] sm:$0x3]
      %v197 = vld [vmem:[%s165 + $0x34] sm:$0x3]
      %v198 = vld [vmem:[%s165 + $0x36] sm:$0x3]
      %v199 = vld [vmem:[%s165 + $0x38] sm:$0x3]
      %v200 = vld [vmem:[%s165 + $0x3a] sm:$0x3]
      %v201 = vld [vmem:[%s165 + $0x3c] sm:$0x3]
      %v202 = vld [vmem:[%s165 + $0x3e] sm:$0x3]
      %v203 = vld [vmem:[%s165 + $0x40] sm:$0x3]
      %v204 = vld [vmem:[%s165 + $0x42] sm:$0x3]
      %v205 = vld [vmem:[%s165 + $0x44] sm:$0x3]
      %v206 = vld [vmem:[%s165 + $0x46] sm:$0x3]
      %v207 = vld [vmem:[%s165 + $0x48] sm:$0x3]
      %v208 = vld [vmem:[%s165 + $0x4a] sm:$0x3]
      %v209 = vld [vmem:[%s165 + $0x4c] sm:$0x3]
      %v210 = vld [vmem:[%s165 + $0x4e] sm:$0x3]
      %v211 = vld [vmem:[%s165 + $0x50] sm:$0x3]
      %v212 = vld [vmem:[%s165 + $0x52] sm:$0x3]
      %v213 = vld [vmem:[%s165 + $0x54] sm:$0x3]
      %v214 = vld [vmem:[%s165 + $0x56] sm:$0x3]
      %v215 = vld [vmem:[%s165 + $0x58] sm:$0x3]
      %v216 = vld [vmem:[%s165 + $0x5a] sm:$0x3]
      %v217 = vld [vmem:[%s165 + $0x5c] sm:$0x3]
      %v218 = vld [vmem:[%s165 + $0x5e] sm:$0x3]
      %v219 = vld [vmem:[%s165 + $0x60] sm:$0x3]
      %v220 = vld [vmem:[%s165 + $0x62] sm:$0x3]
      %v221 = vld [vmem:[%s165 + $0x64] sm:$0x3]
      %v222 = vld [vmem:[%s165 + $0x66] sm:$0x3]
      %v223 = vld [vmem:[%s165 + $0x68] sm:$0x3]
      %v224 = vld [vmem:[%s165 + $0x6a] sm:$0x3]
      %v225 = vld [vmem:[%s165 + $0x6c] sm:$0x3]
      %v226 = vld [vmem:[%s165 + $0x6e] sm:$0x3]
      %v227 = vld [vmem:[%s165 + $0x70] sm:$0x3]
      %v228 = vld [vmem:[%s165 + $0x72] sm:$0x3]
      %v229 = vld [vmem:[%s165 + $0x74] sm:$0x3]
      %v230 = vld [vmem:[%s165 + $0x76] sm:$0x3]
      %v231 = vld [vmem:[%s165 + $0x78] sm:$0x3]
      %v232 = vld [vmem:[%s165 + $0x7a] sm:$0x3]
      %v233 = vld [vmem:[%s165 + $0x7c] sm:$0x3]
      %v234 = vld [vmem:[%s165 + $0x7e] sm:$0x3]
      %v235 = vld [vmem:[%s165 + $0x80] sm:$0x3]
      %v236 = vld [vmem:[%s165 + $0x82] sm:$0x3]
      %v237 = vld [vmem:[%s165 + $0x84] sm:$0x3]
      %v238 = vld [vmem:[%s165 + $0x86] sm:$0x3]
      %v239 = vld [vmem:[%s165 + $0x88] sm:$0x3]
      %v240 = vld [vmem:[%s165 + $0x8a] sm:$0x3]
      %v241 = vld [vmem:[%s165 + $0x8c] sm:$0x3]
      %v242 = vld [vmem:[%s165 + $0x8e] sm:$0x3]
      %v243 = vld [vmem:[%s165 + $0x90] sm:$0x3]
      %v244 = vld [vmem:[%s165 + $0x92] sm:$0x3]
      %v245 = vld [vmem:[%s165 + $0x94] sm:$0x3]
      %v246 = vld [vmem:[%s165 + $0x96] sm:$0x3]
      %v247 = vld [vmem:[%s165 + $0x98] sm:$0x3]
      %v248 = vld [vmem:[%s165 + $0x9a] sm:$0x3]
      %v249 = vld [vmem:[%s165 + $0x9c] sm:$0x3]
      %v250 = vld [vmem:[%s165 + $0x9e] sm:$0x3]
      %v251 = vld [vmem:[%s165 + $0xa0] sm:$0x3]
      %v252 = vld [vmem:[%s165 + $0xa2] sm:$0x3]
      %v253 = vld [vmem:[%s165 + $0xa4] sm:$0x3]
      %v254 = vld [vmem:[%s165 + $0xa6] sm:$0x3]
      %v255 = vld [vmem:[%s165 + $0xa8] sm:$0x3]
      %v256 = vld [vmem:[%s165 + $0xaa] sm:$0x3]
      %v257 = vld [vmem:[%s165 + $0xac] sm:$0x3]
      %v258 = vld [vmem:[%s165 + $0xae] sm:$0x3]
      %v259 = vld [vmem:[%s165 + $0xb0] sm:$0x3]
      %v260 = vld [vmem:[%s165 + $0xb2] sm:$0x3]
      %v261 = vld [vmem:[%s165 + $0xb4] sm:$0x3]
      %v262 = vld [vmem:[%s165 + $0xb6] sm:$0x3]
      %v263 = vld [vmem:[%s165 + $0xb8] sm:$0x3]
      %v264 = vld [vmem:[%s165 + $0xba] sm:$0x3]
      %v265 = vld [vmem:[%s165 + $0xbc] sm:$0x3]
      %v266 = vld [vmem:[%s165 + $0xbe] sm:$0x3]
      %v267 = vld [vmem:[%s165 + $0xc0] sm:$0x3]
      %v268 = vld [vmem:[%s165 + $0xc2] sm:$0x3]
      %v269 = vld [vmem:[%s165 + $0xc4] sm:$0x3]
      %v270 = vld [vmem:[%s165 + $0xc6] sm:$0x3]
      %v271 = vld [vmem:[%s165 + $0xc8] sm:$0x3]
      %v272 = vld [vmem:[%s165 + $0xca] sm:$0x3]
      %v273 = vld [vmem:[%s165 + $0xcc] sm:$0x3]
      %v274 = vld [vmem:[%s165 + $0xce] sm:$0x3]
      %v275 = vld [vmem:[%s165 + $0xd0] sm:$0x3]
      %v276 = vld [vmem:[%s165 + $0xd2] sm:$0x3]
      %v277 = vld [vmem:[%s165 + $0xd4] sm:$0x3]
      %v278 = vld [vmem:[%s165 + $0xd6] sm:$0x3]
      %v279 = vld [vmem:[%s165 + $0xd8] sm:$0x3]
      %v280 = vld [vmem:[%s165 + $0xda] sm:$0x3]
      %v281 = vld [vmem:[%s165 + $0xdc] sm:$0x3]
      %v282 = vld [vmem:[%s165 + $0xde] sm:$0x3]
      %v283 = vld [vmem:[%s165 + $0xe0] sm:$0x3]
      %v284 = vld [vmem:[%s165 + $0xe2] sm:$0x3]
      %v285 = vld [vmem:[%s165 + $0xe4] sm:$0x3]
      %v286 = vld [vmem:[%s165 + $0xe6] sm:$0x3]
      %v287 = vld [vmem:[%s165 + $0xe8] sm:$0x3]
      %v288 = vld [vmem:[%s165 + $0xea] sm:$0x3]
      %v289 = vld [vmem:[%s165 + $0xec] sm:$0x3]
      %v290 = vld [vmem:[%s165 + $0xee] sm:$0x3]
      %v291 = vld [vmem:[%s165 + $0xf0] sm:$0x3]
      %v292 = vld [vmem:[%s165 + $0xf2] sm:$0x3]
      %v293 = vld [vmem:[%s165 + $0xf4] sm:$0x3]
      %v294 = vld [vmem:[%s165 + $0xf6] sm:$0x3]
      %v295 = vld [vmem:[%s165 + $0xf8] sm:$0x3]
      %v296 = vld [vmem:[%s165 + $0xfa] sm:$0x3]
      %v297 = vld [vmem:[%s165 + $0xfc] sm:$0x3]
      %v298 = vld [vmem:[%s165 + $0xfe] sm:$0x3]
      %v299 = vld [vmem:[%s1] sm:$0x1]
      %v301 = vlaneseq
      %v302 = vshrl.u32 %v301, 7
      %v303 = vsub.s32 0, %v302
      %v304 = vrot.slane %v299, %v303
      %v306 = vmul.f32 %v171, %v304
      %v307 = vmul.f32 %v172, %v304
      %v308 = vmul.f32 %v173, %v304
      %v309 = vmul.f32 %v174, %v304
      %v310 = vmul.f32 %v175, %v304
      %v311 = vmul.f32 %v176, %v304
      %v312 = vmul.f32 %v177, %v304
      %v313 = vmul.f32 %v178, %v304
      %v314 = vmul.f32 %v179, %v304
      %v315 = vmul.f32 %v180, %v304
      %v316 = vmul.f32 %v181, %v304
      %v317 = vmul.f32 %v182, %v304
      %v318 = vmul.f32 %v183, %v304
      %v319 = vmul.f32 %v184, %v304
      %v320 = vmul.f32 %v185, %v304
      %v321 = vmul.f32 %v186, %v304
      %v322 = vmul.f32 %v187, %v304
      %v323 = vmul.f32 %v188, %v304
      %v324 = vmul.f32 %v189, %v304
      %v325 = vmul.f32 %v190, %v304
      %v326 = vmul.f32 %v191, %v304
      %v327 = vmul.f32 %v192, %v304
      %v328 = vmul.f32 %v193, %v304
      %v329 = vmul.f32 %v194, %v304
      %v330 = vmul.f32 %v195, %v304
      %v331 = vmul.f32 %v196, %v304
      %v332 = vmul.f32 %v197, %v304
      %v333 = vmul.f32 %v198, %v304
      %v334 = vmul.f32 %v199, %v304
      %v335 = vmul.f32 %v200, %v304
      %v336 = vmul.f32 %v201, %v304
      %v337 = vmul.f32 %v202, %v304
      %v338 = vmul.f32 %v203, %v304
      %v339 = vmul.f32 %v204, %v304
      %v340 = vmul.f32 %v205, %v304
      %v341 = vmul.f32 %v206, %v304
      %v342 = vmul.f32 %v207, %v304
      %v343 = vmul.f32 %v208, %v304
      %v344 = vmul.f32 %v209, %v304
      %v345 = vmul.f32 %v210, %v304
      %v346 = vmul.f32 %v211, %v304
      %v347 = vmul.f32 %v212, %v304
      %v348 = vmul.f32 %v213, %v304
      %v349 = vmul.f32 %v214, %v304
      %v350 = vmul.f32 %v215, %v304
      %v351 = vmul.f32 %v216, %v304
      %v352 = vmul.f32 %v217, %v304
      %v353 = vmul.f32 %v218, %v304
      %v354 = vmul.f32 %v219, %v304
      %v355 = vmul.f32 %v220, %v304
      %v356 = vmul.f32 %v221, %v304
      %v357 = vmul.f32 %v222, %v304
      %v358 = vmul.f32 %v223, %v304
      %v359 = vmul.f32 %v224, %v304
      %v360 = vmul.f32 %v225, %v304
      %v361 = vmul.f32 %v226, %v304
      %v362 = vmul.f32 %v227, %v304
      %v363 = vmul.f32 %v228, %v304
      %v364 = vmul.f32 %v229, %v304
      %v365 = vmul.f32 %v230, %v304
      %v366 = vmul.f32 %v231, %v304
      %v367 = vmul.f32 %v232, %v304
      %v368 = vmul.f32 %v233, %v304
      %v369 = vmul.f32 %v234, %v304
      %v370 = vmul.f32 %v235, %v304
      %v371 = vmul.f32 %v236, %v304
      %v372 = vmul.f32 %v237, %v304
      %v373 = vmul.f32 %v238, %v304
      %v374 = vmul.f32 %v239, %v304
      %v375 = vmul.f32 %v240, %v304
      %v376 = vmul.f32 %v241, %v304
      %v377 = vmul.f32 %v242, %v304
      %v378 = vmul.f32 %v243, %v304
      %v379 = vmul.f32 %v244, %v304
      %v380 = vmul.f32 %v245, %v304
      %v381 = vmul.f32 %v246, %v304
      %v382 = vmul.f32 %v247, %v304
      %v383 = vmul.f32 %v248, %v304
      %v384 = vmul.f32 %v249, %v304
      %v385 = vmul.f32 %v250, %v304
      %v386 = vmul.f32 %v251, %v304
      %v387 = vmul.f32 %v252, %v304
      %v388 = vmul.f32 %v253, %v304
      %v389 = vmul.f32 %v254, %v304
      %v390 = vmul.f32 %v255, %v304
      %v391 = vmul.f32 %v256, %v304
      %v392 = vmul.f32 %v257, %v304
      %v393 = vmul.f32 %v258, %v304
      %v394 = vmul.f32 %v259, %v304
      %v395 = vmul.f32 %v260, %v304
      %v396 = vmul.f32 %v261, %v304
      %v397 = vmul.f32 %v262, %v304
      %v398 = vmul.f32 %v263, %v304
      %v399 = vmul.f32 %v264, %v304
      %v400 = vmul.f32 %v265, %v304
      %v401 = vmul.f32 %v266, %v304
      %v402 = vmul.f32 %v267, %v304
      %v403 = vmul.f32 %v268, %v304
      %v404 = vmul.f32 %v269, %v304
      %v405 = vmul.f32 %v270, %v304
      %v406 = vmul.f32 %v271, %v304
      %v407 = vmul.f32 %v272, %v304
      %v408 = vmul.f32 %v273, %v304
      %v409 = vmul.f32 %v274, %v304
      %v410 = vmul.f32 %v275, %v304
      %v411 = vmul.f32 %v276, %v304
      %v412 = vmul.f32 %v277, %v304
      %v413 = vmul.f32 %v278, %v304
      %v414 = vmul.f32 %v279, %v304
      %v415 = vmul.f32 %v280, %v304
      %v416 = vmul.f32 %v281, %v304
      %v417 = vmul.f32 %v282, %v304
      %v418 = vmul.f32 %v283, %v304
      %v419 = vmul.f32 %v284, %v304
      %v420 = vmul.f32 %v285, %v304
      %v421 = vmul.f32 %v286, %v304
      %v422 = vmul.f32 %v287, %v304
      %v423 = vmul.f32 %v288, %v304
      %v424 = vmul.f32 %v289, %v304
      %v425 = vmul.f32 %v290, %v304
      %v426 = vmul.f32 %v291, %v304
      %v427 = vmul.f32 %v292, %v304
      %v428 = vmul.f32 %v293, %v304
      %v429 = vmul.f32 %v294, %v304
      %v430 = vmul.f32 %v295, %v304
      %v431 = vmul.f32 %v296, %v304
      %v432 = vmul.f32 %v297, %v304
      %v433 = vmul.f32 %v298, %v304
      %v434 = vld [vmem:[%s2] sm:$0x1]
      %v436 = vlaneseq
      %v437 = vshrl.u32 %v436, 7
      %v438 = vsub.s32 0, %v437
      %v439 = vrot.slane %v434, %v438
      %v441 = vadd.f32 %v306, %v439
      %v442 = vadd.f32 %v307, %v439
      %v443 = vadd.f32 %v308, %v439
      %v444 = vadd.f32 %v309, %v439
      %v445 = vadd.f32 %v310, %v439
      %v446 = vadd.f32 %v311, %v439
      %v447 = vadd.f32 %v312, %v439
      %v448 = vadd.f32 %v313, %v439
      %v449 = vadd.f32 %v314, %v439
      %v450 = vadd.f32 %v315, %v439
      %v451 = vadd.f32 %v316, %v439
      %v452 = vadd.f32 %v317, %v439
      %v453 = vadd.f32 %v318, %v439
      %v454 = vadd.f32 %v319, %v439
      %v455 = vadd.f32 %v320, %v439
      %v456 = vadd.f32 %v321, %v439
      %v457 = vadd.f32 %v322, %v439
      %v458 = vadd.f32 %v323, %v439
      %v459 = vadd.f32 %v324, %v439
      %v460 = vadd.f32 %v325, %v439
      %v461 = vadd.f32 %v326, %v439
      %v462 = vadd.f32 %v327, %v439
      %v463 = vadd.f32 %v328, %v439
      %v464 = vadd.f32 %v329, %v439
      %v465 = vadd.f32 %v330, %v439
      %v466 = vadd.f32 %v331, %v439
      %v467 = vadd.f32 %v332, %v439
      %v468 = vadd.f32 %v333, %v439
      %v469 = vadd.f32 %v334, %v439
      %v470 = vadd.f32 %v335, %v439
      %v471 = vadd.f32 %v336, %v439
      %v472 = vadd.f32 %v337, %v439
      %v473 = vadd.f32 %v338, %v439
      %v474 = vadd.f32 %v339, %v439
      %v475 = vadd.f32 %v340, %v439
      %v476 = vadd.f32 %v341, %v439
      %v477 = vadd.f32 %v342, %v439
      %v478 = vadd.f32 %v343, %v439
      %v479 = vadd.f32 %v344, %v439
      %v480 = vadd.f32 %v345, %v439
      %v481 = vadd.f32 %v346, %v439
      %v482 = vadd.f32 %v347, %v439
      %v483 = vadd.f32 %v348, %v439
      %v484 = vadd.f32 %v349, %v439
      %v485 = vadd.f32 %v350, %v439
      %v486 = vadd.f32 %v351, %v439
      %v487 = vadd.f32 %v352, %v439
      %v488 = vadd.f32 %v353, %v439
      %v489 = vadd.f32 %v354, %v439
      %v490 = vadd.f32 %v355, %v439
      %v491 = vadd.f32 %v356, %v439
      %v492 = vadd.f32 %v357, %v439
      %v493 = vadd.f32 %v358, %v439
      %v494 = vadd.f32 %v359, %v439
      %v495 = vadd.f32 %v360, %v439
      %v496 = vadd.f32 %v361, %v439
      %v497 = vadd.f32 %v362, %v439
      %v498 = vadd.f32 %v363, %v439
      %v499 = vadd.f32 %v364, %v439
      %v500 = vadd.f32 %v365, %v439
      %v501 = vadd.f32 %v366, %v439
      %v502 = vadd.f32 %v367, %v439
      %v503 = vadd.f32 %v368, %v439
      %v504 = vadd.f32 %v369, %v439
      %v505 = vadd.f32 %v370, %v439
      %v506 = vadd.f32 %v371, %v439
      %v507 = vadd.f32 %v372, %v439
      %v508 = vadd.f32 %v373, %v439
      %v509 = vadd.f32 %v374, %v439
      %v510 = vadd.f32 %v375, %v439
      %v511 = vadd.f32 %v376, %v439
      %v512 = vadd.f32 %v377, %v439
      %v513 = vadd.f32 %v378, %v439
      %v514 = vadd.f32 %v379, %v439
      %v515 = vadd.f32 %v380, %v439
      %v516 = vadd.f32 %v381, %v439
      %v517 = vadd.f32 %v382, %v439
      %v518 = vadd.f32 %v383, %v439
      %v519 = vadd.f32 %v384, %v439
      %v520 = vadd.f32 %v385, %v439
      %v521 = vadd.f32 %v386, %v439
      %v522 = vadd.f32 %v387, %v439
      %v523 = vadd.f32 %v388, %v439
      %v524 = vadd.f32 %v389, %v439
      %v525 = vadd.f32 %v390, %v439
      %v526 = vadd.f32 %v391, %v439
      %v527 = vadd.f32 %v392, %v439
      %v528 = vadd.f32 %v393, %v439
      %v529 = vadd.f32 %v394, %v439
      %v530 = vadd.f32 %v395, %v439
      %v531 = vadd.f32 %v396, %v439
      %v532 = vadd.f32 %v397, %v439
      %v533 = vadd.f32 %v398, %v439
      %v534 = vadd.f32 %v399, %v439
      %v535 = vadd.f32 %v400, %v439
      %v536 = vadd.f32 %v401, %v439
      %v537 = vadd.f32 %v402, %v439
      %v538 = vadd.f32 %v403, %v439
      %v539 = vadd.f32 %v404, %v439
      %v540 = vadd.f32 %v405, %v439
      %v541 = vadd.f32 %v406, %v439
      %v542 = vadd.f32 %v407, %v439
      %v543 = vadd.f32 %v408, %v439
      %v544 = vadd.f32 %v409, %v439
      %v545 = vadd.f32 %v410, %v439
      %v546 = vadd.f32 %v411, %v439
      %v547 = vadd.f32 %v412, %v439
      %v548 = vadd.f32 %v413, %v439
      %v549 = vadd.f32 %v414, %v439
      %v550 = vadd.f32 %v415, %v439
      %v551 = vadd.f32 %v416, %v439
      %v552 = vadd.f32 %v417, %v439
      %v553 = vadd.f32 %v418, %v439
      %v554 = vadd.f32 %v419, %v439
      %v555 = vadd.f32 %v420, %v439
      %v556 = vadd.f32 %v421, %v439
      %v557 = vadd.f32 %v422, %v439
      %v558 = vadd.f32 %v423, %v439
      %v559 = vadd.f32 %v424, %v439
      %v560 = vadd.f32 %v425, %v439
      %v561 = vadd.f32 %v426, %v439
      %v562 = vadd.f32 %v427, %v439
      %v563 = vadd.f32 %v428, %v439
      %v564 = vadd.f32 %v429, %v439
      %v565 = vadd.f32 %v430, %v439
      %v566 = vadd.f32 %v431, %v439
      %v567 = vadd.f32 %v432, %v439
      %v568 = vadd.f32 %v433, %v439
      %vm569 = vcmp.ge.f32.partialorder %v441, 0.0
      %vm570 = vcmp.ge.f32.partialorder %v442, 0.0
      %vm571 = vcmp.ge.f32.partialorder %v443, 0.0
      %vm572 = vcmp.ge.f32.partialorder %v444, 0.0
      %vm573 = vcmp.ge.f32.partialorder %v445, 0.0
      %vm574 = vcmp.ge.f32.partialorder %v446, 0.0
      %vm575 = vcmp.ge.f32.partialorder %v447, 0.0
      %vm576 = vcmp.ge.f32.partialorder %v448, 0.0
      %vm577 = vcmp.ge.f32.partialorder %v449, 0.0
      %vm578 = vcmp.ge.f32.partialorder %v450, 0.0
      %vm579 = vcmp.ge.f32.partialorder %v451, 0.0
      %vm580 = vcmp.ge.f32.partialorder %v452, 0.0
      %vm581 = vcmp.ge.f32.partialorder %v453, 0.0
      %vm582 = vcmp.ge.f32.partialorder %v454, 0.0
      %vm583 = vcmp.ge.f32.partialorder %v455, 0.0
      %vm584 = vcmp.ge.f32.partialorder %v456, 0.0
      %vm585 = vcmp.ge.f32.partialorder %v457, 0.0
      %vm586 = vcmp.ge.f32.partialorder %v458, 0.0
      %vm587 = vcmp.ge.f32.partialorder %v459, 0.0
      %vm588 = vcmp.ge.f32.partialorder %v460, 0.0
      %vm589 = vcmp.ge.f32.partialorder %v461, 0.0
      %vm590 = vcmp.ge.f32.partialorder %v462, 0.0
      %vm591 = vcmp.ge.f32.partialorder %v463, 0.0
      %vm592 = vcmp.ge.f32.partialorder %v464, 0.0
      %vm593 = vcmp.ge.f32.partialorder %v465, 0.0
      %vm594 = vcmp.ge.f32.partialorder %v466, 0.0
      %vm595 = vcmp.ge.f32.partialorder %v467, 0.0
      %vm596 = vcmp.ge.f32.partialorder %v468, 0.0
      %vm597 = vcmp.ge.f32.partialorder %v469, 0.0
      %vm598 = vcmp.ge.f32.partialorder %v470, 0.0
      %vm599 = vcmp.ge.f32.partialorder %v471, 0.0
      %vm600 = vcmp.ge.f32.partialorder %v472, 0.0
      %vm601 = vcmp.ge.f32.partialorder %v473, 0.0
      %vm602 = vcmp.ge.f32.partialorder %v474, 0.0
      %vm603 = vcmp.ge.f32.partialorder %v475, 0.0
      %vm604 = vcmp.ge.f32.partialorder %v476, 0.0
      %vm605 = vcmp.ge.f32.partialorder %v477, 0.0
      %vm606 = vcmp.ge.f32.partialorder %v478, 0.0
      %vm607 = vcmp.ge.f32.partialorder %v479, 0.0
      %vm608 = vcmp.ge.f32.partialorder %v480, 0.0
      %vm609 = vcmp.ge.f32.partialorder %v481, 0.0
      %vm610 = vcmp.ge.f32.partialorder %v482, 0.0
      %vm611 = vcmp.ge.f32.partialorder %v483, 0.0
      %vm612 = vcmp.ge.f32.partialorder %v484, 0.0
      %vm613 = vcmp.ge.f32.partialorder %v485, 0.0
      %vm614 = vcmp.ge.f32.partialorder %v486, 0.0
      %vm615 = vcmp.ge.f32.partialorder %v487, 0.0
      %vm616 = vcmp.ge.f32.partialorder %v488, 0.0
      %vm617 = vcmp.ge.f32.partialorder %v489, 0.0
      %vm618 = vcmp.ge.f32.partialorder %v490, 0.0
      %vm619 = vcmp.ge.f32.partialorder %v491, 0.0
      %vm620 = vcmp.ge.f32.partialorder %v492, 0.0
      %vm621 = vcmp.ge.f32.partialorder %v493, 0.0
      %vm622 = vcmp.ge.f32.partialorder %v494, 0.0
      %vm623 = vcmp.ge.f32.partialorder %v495, 0.0
      %vm624 = vcmp.ge.f32.partialorder %v496, 0.0
      %vm625 = vcmp.ge.f32.partialorder %v497, 0.0
      %vm626 = vcmp.ge.f32.partialorder %v498, 0.0
      %vm627 = vcmp.ge.f32.partialorder %v499, 0.0
      %vm628 = vcmp.ge.f32.partialorder %v500, 0.0
      %vm629 = vcmp.ge.f32.partialorder %v501, 0.0
      %vm630 = vcmp.ge.f32.partialorder %v502, 0.0
      %vm631 = vcmp.ge.f32.partialorder %v503, 0.0
      %vm632 = vcmp.ge.f32.partialorder %v504, 0.0
      %vm633 = vcmp.ge.f32.partialorder %v505, 0.0
      %vm634 = vcmp.ge.f32.partialorder %v506, 0.0
      %vm635 = vcmp.ge.f32.partialorder %v507, 0.0
      %vm636 = vcmp.ge.f32.partialorder %v508, 0.0
      %vm637 = vcmp.ge.f32.partialorder %v509, 0.0
      %vm638 = vcmp.ge.f32.partialorder %v510, 0.0
      %vm639 = vcmp.ge.f32.partialorder %v511, 0.0
      %vm640 = vcmp.ge.f32.partialorder %v512, 0.0
      %vm641 = vcmp.ge.f32.partialorder %v513, 0.0
      %vm642 = vcmp.ge.f32.partialorder %v514, 0.0
      %vm643 = vcmp.ge.f32.partialorder %v515, 0.0
      %vm644 = vcmp.ge.f32.partialorder %v516, 0.0
      %vm645 = vcmp.ge.f32.partialorder %v517, 0.0
      %vm646 = vcmp.ge.f32.partialorder %v518, 0.0
      %vm647 = vcmp.ge.f32.partialorder %v519, 0.0
      %vm648 = vcmp.ge.f32.partialorder %v520, 0.0
      %vm649 = vcmp.ge.f32.partialorder %v521, 0.0
      %vm650 = vcmp.ge.f32.partialorder %v522, 0.0
      %vm651 = vcmp.ge.f32.partialorder %v523, 0.0
      %vm652 = vcmp.ge.f32.partialorder %v524, 0.0
      %vm653 = vcmp.ge.f32.partialorder %v525, 0.0
      %vm654 = vcmp.ge.f32.partialorder %v526, 0.0
      %vm655 = vcmp.ge.f32.partialorder %v527, 0.0
      %vm656 = vcmp.ge.f32.partialorder %v528, 0.0
      %vm657 = vcmp.ge.f32.partialorder %v529, 0.0
      %vm658 = vcmp.ge.f32.partialorder %v530, 0.0
      %vm659 = vcmp.ge.f32.partialorder %v531, 0.0
      %vm660 = vcmp.ge.f32.partialorder %v532, 0.0
      %vm661 = vcmp.ge.f32.partialorder %v533, 0.0
      %vm662 = vcmp.ge.f32.partialorder %v534, 0.0
      %vm663 = vcmp.ge.f32.partialorder %v535, 0.0
      %vm664 = vcmp.ge.f32.partialorder %v536, 0.0
      %vm665 = vcmp.ge.f32.partialorder %v537, 0.0
      %vm666 = vcmp.ge.f32.partialorder %v538, 0.0
      %vm667 = vcmp.ge.f32.partialorder %v539, 0.0
      %vm668 = vcmp.ge.f32.partialorder %v540, 0.0
      %vm669 = vcmp.ge.f32.partialorder %v541, 0.0
      %vm670 = vcmp.ge.f32.partialorder %v542, 0.0
      %vm671 = vcmp.ge.f32.partialorder %v543, 0.0
      %vm672 = vcmp.ge.f32.partialorder %v544, 0.0
      %vm673 = vcmp.ge.f32.partialorder %v545, 0.0
      %vm674 = vcmp.ge.f32.partialorder %v546, 0.0
      %vm675 = vcmp.ge.f32.partialorder %v547, 0.0
      %vm676 = vcmp.ge.f32.partialorder %v548, 0.0
      %vm677 = vcmp.ge.f32.partialorder %v549, 0.0
      %vm678 = vcmp.ge.f32.partialorder %v550, 0.0
      %vm679 = vcmp.ge.f32.partialorder %v551, 0.0
      %vm680 = vcmp.ge.f32.partialorder %v552, 0.0
      %vm681 = vcmp.ge.f32.partialorder %v553, 0.0
      %vm682 = vcmp.ge.f32.partialorder %v554, 0.0
      %vm683 = vcmp.ge.f32.partialorder %v555, 0.0
      %vm684 = vcmp.ge.f32.partialorder %v556, 0.0
      %vm685 = vcmp.ge.f32.partialorder %v557, 0.0
      %vm686 = vcmp.ge.f32.partialorder %v558, 0.0
      %vm687 = vcmp.ge.f32.partialorder %v559, 0.0
      %vm688 = vcmp.ge.f32.partialorder %v560, 0.0
      %vm689 = vcmp.ge.f32.partialorder %v561, 0.0
      %vm690 = vcmp.ge.f32.partialorder %v562, 0.0
      %vm691 = vcmp.ge.f32.partialorder %v563, 0.0
      %vm692 = vcmp.ge.f32.partialorder %v564, 0.0
      %vm693 = vcmp.ge.f32.partialorder %v565, 0.0
      %vm694 = vcmp.ge.f32.partialorder %v566, 0.0
      %vm695 = vcmp.ge.f32.partialorder %v567, 0.0
      %vm696 = vcmp.ge.f32.partialorder %v568, 0.0
      %v697 = vmul.f32 %v441, 0.2
      %v698 = vmul.f32 %v442, 0.2
      %v699 = vmul.f32 %v443, 0.2
      %v700 = vmul.f32 %v444, 0.2
      %v701 = vmul.f32 %v445, 0.2
      %v702 = vmul.f32 %v446, 0.2
      %v703 = vmul.f32 %v447, 0.2
      %v704 = vmul.f32 %v448, 0.2
      %v705 = vmul.f32 %v449, 0.2
      %v706 = vmul.f32 %v450, 0.2
      %v707 = vmul.f32 %v451, 0.2
      %v708 = vmul.f32 %v452, 0.2
      %v709 = vmul.f32 %v453, 0.2
      %v710 = vmul.f32 %v454, 0.2
      %v711 = vmul.f32 %v455, 0.2
      %v712 = vmul.f32 %v456, 0.2
      %v713 = vmul.f32 %v457, 0.2
      %v714 = vmul.f32 %v458, 0.2
      %v715 = vmul.f32 %v459, 0.2
      %v716 = vmul.f32 %v460, 0.2
      %v717 = vmul.f32 %v461, 0.2
      %v718 = vmul.f32 %v462, 0.2
      %v719 = vmul.f32 %v463, 0.2
      %v720 = vmul.f32 %v464, 0.2
      %v721 = vmul.f32 %v465, 0.2
      %v722 = vmul.f32 %v466, 0.2
      %v723 = vmul.f32 %v467, 0.2
      %v724 = vmul.f32 %v468, 0.2
      %v725 = vmul.f32 %v469, 0.2
      %v726 = vmul.f32 %v470, 0.2
      %v727 = vmul.f32 %v471, 0.2
      %v728 = vmul.f32 %v472, 0.2
      %v729 = vmul.f32 %v473, 0.2
      %v730 = vmul.f32 %v474, 0.2
      %v731 = vmul.f32 %v475, 0.2
      %v732 = vmul.f32 %v476, 0.2
      %v733 = vmul.f32 %v477, 0.2
      %v734 = vmul.f32 %v478, 0.2
      %v735 = vmul.f32 %v479, 0.2
      %v736 = vmul.f32 %v480, 0.2
      %v737 = vmul.f32 %v481, 0.2
      %v738 = vmul.f32 %v482, 0.2
      %v739 = vmul.f32 %v483, 0.2
      %v740 = vmul.f32 %v484, 0.2
      %v741 = vmul.f32 %v485, 0.2
      %v742 = vmul.f32 %v486, 0.2
      %v743 = vmul.f32 %v487, 0.2
      %v744 = vmul.f32 %v488, 0.2
      %v745 = vmul.f32 %v489, 0.2
      %v746 = vmul.f32 %v490, 0.2
      %v747 = vmul.f32 %v491, 0.2
      %v748 = vmul.f32 %v492, 0.2
      %v749 = vmul.f32 %v493, 0.2
      %v750 = vmul.f32 %v494, 0.2
      %v751 = vmul.f32 %v495, 0.2
      %v752 = vmul.f32 %v496, 0.2
      %v753 = vmul.f32 %v497, 0.2
      %v754 = vmul.f32 %v498, 0.2
      %v755 = vmul.f32 %v499, 0.2
      %v756 = vmul.f32 %v500, 0.2
      %v757 = vmul.f32 %v501, 0.2
      %v758 = vmul.f32 %v502, 0.2
      %v759 = vmul.f32 %v503, 0.2
      %v760 = vmul.f32 %v504, 0.2
      %v761 = vmul.f32 %v505, 0.2
      %v762 = vmul.f32 %v506, 0.2
      %v763 = vmul.f32 %v507, 0.2
      %v764 = vmul.f32 %v508, 0.2
      %v765 = vmul.f32 %v509, 0.2
      %v766 = vmul.f32 %v510, 0.2
      %v767 = vmul.f32 %v511, 0.2
      %v768 = vmul.f32 %v512, 0.2
      %v769 = vmul.f32 %v513, 0.2
      %v770 = vmul.f32 %v514, 0.2
      %v771 = vmul.f32 %v515, 0.2
      %v772 = vmul.f32 %v516, 0.2
      %v773 = vmul.f32 %v517, 0.2
      %v774 = vmul.f32 %v518, 0.2
      %v775 = vmul.f32 %v519, 0.2
      %v776 = vmul.f32 %v520, 0.2
      %v777 = vmul.f32 %v521, 0.2
      %v778 = vmul.f32 %v522, 0.2
      %v779 = vmul.f32 %v523, 0.2
      %v780 = vmul.f32 %v524, 0.2
      %v781 = vmul.f32 %v525, 0.2
      %v782 = vmul.f32 %v526, 0.2
      %v783 = vmul.f32 %v527, 0.2
      %v784 = vmul.f32 %v528, 0.2
      %v785 = vmul.f32 %v529, 0.2
      %v786 = vmul.f32 %v530, 0.2
      %v787 = vmul.f32 %v531, 0.2
      %v788 = vmul.f32 %v532, 0.2
      %v789 = vmul.f32 %v533, 0.2
      %v790 = vmul.f32 %v534, 0.2
      %v791 = vmul.f32 %v535, 0.2
      %v792 = vmul.f32 %v536, 0.2
      %v793 = vmul.f32 %v537, 0.2
      %v794 = vmul.f32 %v538, 0.2
      %v795 = vmul.f32 %v539, 0.2
      %v796 = vmul.f32 %v540, 0.2
      %v797 = vmul.f32 %v541, 0.2
      %v798 = vmul.f32 %v542, 0.2
      %v799 = vmul.f32 %v543, 0.2
      %v800 = vmul.f32 %v544, 0.2
      %v801 = vmul.f32 %v545, 0.2
      %v802 = vmul.f32 %v546, 0.2
      %v803 = vmul.f32 %v547, 0.2
      %v804 = vmul.f32 %v548, 0.2
      %v805 = vmul.f32 %v549, 0.2
      %v806 = vmul.f32 %v550, 0.2
      %v807 = vmul.f32 %v551, 0.2
      %v808 = vmul.f32 %v552, 0.2
      %v809 = vmul.f32 %v553, 0.2
      %v810 = vmul.f32 %v554, 0.2
      %v811 = vmul.f32 %v555, 0.2
      %v812 = vmul.f32 %v556, 0.2
      %v813 = vmul.f32 %v557, 0.2
      %v814 = vmul.f32 %v558, 0.2
      %v815 = vmul.f32 %v559, 0.2
      %v816 = vmul.f32 %v560, 0.2
      %v817 = vmul.f32 %v561, 0.2
      %v818 = vmul.f32 %v562, 0.2
      %v819 = vmul.f32 %v563, 0.2
      %v820 = vmul.f32 %v564, 0.2
      %v821 = vmul.f32 %v565, 0.2
      %v822 = vmul.f32 %v566, 0.2
      %v823 = vmul.f32 %v567, 0.2
      %v824 = vmul.f32 %v568, 0.2
      %v825 = vsel %vm569, %v441, %v697
      %v826 = vsel %vm570, %v442, %v698
      %v827 = vsel %vm571, %v443, %v699
      %v828 = vsel %vm572, %v444, %v700
      %v829 = vsel %vm573, %v445, %v701
      %v830 = vsel %vm574, %v446, %v702
      %v831 = vsel %vm575, %v447, %v703
      %v832 = vsel %vm576, %v448, %v704
      %v833 = vsel %vm577, %v449, %v705
      %v834 = vsel %vm578, %v450, %v706
      %v835 = vsel %vm579, %v451, %v707
      %v836 = vsel %vm580, %v452, %v708
      %v837 = vsel %vm581, %v453, %v709
      %v838 = vsel %vm582, %v454, %v710
      %v839 = vsel %vm583, %v455, %v711
      %v840 = vsel %vm584, %v456, %v712
      %v841 = vsel %vm585, %v457, %v713
      %v842 = vsel %vm586, %v458, %v714
      %v843 = vsel %vm587, %v459, %v715
      %v844 = vsel %vm588, %v460, %v716
      %v845 = vsel %vm589, %v461, %v717
      %v846 = vsel %vm590, %v462, %v718
      %v847 = vsel %vm591, %v463, %v719
      %v848 = vsel %vm592, %v464, %v720
      %v849 = vsel %vm593, %v465, %v721
      %v850 = vsel %vm594, %v466, %v722
      %v851 = vsel %vm595, %v467, %v723
      %v852 = vsel %vm596, %v468, %v724
      %v853 = vsel %vm597, %v469, %v725
      %v854 = vsel %vm598, %v470, %v726
      %v855 = vsel %vm599, %v471, %v727
      %v856 = vsel %vm600, %v472, %v728
      %v857 = vsel %vm601, %v473, %v729
      %v858 = vsel %vm602, %v474, %v730
      %v859 = vsel %vm603, %v475, %v731
      %v860 = vsel %vm604, %v476, %v732
      %v861 = vsel %vm605, %v477, %v733
      %v862 = vsel %vm606, %v478, %v734
      %v863 = vsel %vm607, %v479, %v735
      %v864 = vsel %vm608, %v480, %v736
      %v865 = vsel %vm609, %v481, %v737
      %v866 = vsel %vm610, %v482, %v738
      %v867 = vsel %vm611, %v483, %v739
      %v868 = vsel %vm612, %v484, %v740
      %v869 = vsel %vm613, %v485, %v741
      %v870 = vsel %vm614, %v486, %v742
      %v871 = vsel %vm615, %v487, %v743
      %v872 = vsel %vm616, %v488, %v744
      %v873 = vsel %vm617, %v489, %v745
      %v874 = vsel %vm618, %v490, %v746
      %v875 = vsel %vm619, %v491, %v747
      %v876 = vsel %vm620, %v492, %v748
      %v877 = vsel %vm621, %v493, %v749
      %v878 = vsel %vm622, %v494, %v750
      %v879 = vsel %vm623, %v495, %v751
      %v880 = vsel %vm624, %v496, %v752
      %v881 = vsel %vm625, %v497, %v753
      %v882 = vsel %vm626, %v498, %v754
      %v883 = vsel %vm627, %v499, %v755
      %v884 = vsel %vm628, %v500, %v756
      %v885 = vsel %vm629, %v501, %v757
      %v886 = vsel %vm630, %v502, %v758
      %v887 = vsel %vm631, %v503, %v759
      %v888 = vsel %vm632, %v504, %v760
      %v889 = vsel %vm633, %v505, %v761
      %v890 = vsel %vm634, %v506, %v762
      %v891 = vsel %vm635, %v507, %v763
      %v892 = vsel %vm636, %v508, %v764
      %v893 = vsel %vm637, %v509, %v765
      %v894 = vsel %vm638, %v510, %v766
      %v895 = vsel %vm639, %v511, %v767
      %v896 = vsel %vm640, %v512, %v768
      %v897 = vsel %vm641, %v513, %v769
      %v898 = vsel %vm642, %v514, %v770
      %v899 = vsel %vm643, %v515, %v771
      %v900 = vsel %vm644, %v516, %v772
      %v901 = vsel %vm645, %v517, %v773
      %v902 = vsel %vm646, %v518, %v774
      %v903 = vsel %vm647, %v519, %v775
      %v904 = vsel %vm648, %v520, %v776
      %v905 = vsel %vm649, %v521, %v777
      %v906 = vsel %vm650, %v522, %v778
      %v907 = vsel %vm651, %v523, %v779
      %v908 = vsel %vm652, %v524, %v780
      %v909 = vsel %vm653, %v525, %v781
      %v910 = vsel %vm654, %v526, %v782
      %v911 = vsel %vm655, %v527, %v783
      %v912 = vsel %vm656, %v528, %v784
      %v913 = vsel %vm657, %v529, %v785
      %v914 = vsel %vm658, %v530, %v786
      %v915 = vsel %vm659, %v531, %v787
      %v916 = vsel %vm660, %v532, %v788
      %v917 = vsel %vm661, %v533, %v789
      %v918 = vsel %vm662, %v534, %v790
      %v919 = vsel %vm663, %v535, %v791
      %v920 = vsel %vm664, %v536, %v792
      %v921 = vsel %vm665, %v537, %v793
      %v922 = vsel %vm666, %v538, %v794
      %v923 = vsel %vm667, %v539, %v795
      %v924 = vsel %vm668, %v540, %v796
      %v925 = vsel %vm669, %v541, %v797
      %v926 = vsel %vm670, %v542, %v798
      %v927 = vsel %vm671, %v543, %v799
      %v928 = vsel %vm672, %v544, %v800
      %v929 = vsel %vm673, %v545, %v801
      %v930 = vsel %vm674, %v546, %v802
      %v931 = vsel %vm675, %v547, %v803
      %v932 = vsel %vm676, %v548, %v804
      %v933 = vsel %vm677, %v549, %v805
      %v934 = vsel %vm678, %v550, %v806
      %v935 = vsel %vm679, %v551, %v807
      %v936 = vsel %vm680, %v552, %v808
      %v937 = vsel %vm681, %v553, %v809
      %v938 = vsel %vm682, %v554, %v810
      %v939 = vsel %vm683, %v555, %v811
      %v940 = vsel %vm684, %v556, %v812
      %v941 = vsel %vm685, %v557, %v813
      %v942 = vsel %vm686, %v558, %v814
      %v943 = vsel %vm687, %v559, %v815
      %v944 = vsel %vm688, %v560, %v816
      %v945 = vsel %vm689, %v561, %v817
      %v946 = vsel %vm690, %v562, %v818
      %v947 = vsel %vm691, %v563, %v819
      %v948 = vsel %vm692, %v564, %v820
      %v949 = vsel %vm693, %v565, %v821
      %v950 = vsel %vm694, %v566, %v822
      %v951 = vsel %vm695, %v567, %v823
      %v952 = vsel %vm696, %v568, %v824
      %vm953 = vcmask 58368
      %v954 = vsel %vm953, %v825, -inf
      %v955 = vrot.slane %v954, 4
      %v956 = vmax.f32 %v954, %v955
      %v957 = vrot.slane %v956, 2
      %v958 = vmax.f32 %v956, %v957
      %v959 = vrot.slane %v958, 1
      %v960 = vmax.f32 %v958, %v959
      %v961 = vsel %vm953, %v826, -inf
      %v962 = vrot.slane %v961, 4
      %v963 = vmax.f32 %v961, %v962
      %v964 = vrot.slane %v963, 2
      %v965 = vmax.f32 %v963, %v964
      %v966 = vrot.slane %v965, 1
      %v967 = vmax.f32 %v965, %v966
      %v968 = vsel %vm953, %v827, -inf
      %v969 = vrot.slane %v968, 4
      %v970 = vmax.f32 %v968, %v969
      %v971 = vrot.slane %v970, 2
      %v972 = vmax.f32 %v970, %v971
      %v973 = vrot.slane %v972, 1
      %v974 = vmax.f32 %v972, %v973
      %v975 = vsel %vm953, %v828, -inf
      %v976 = vrot.slane %v975, 4
      %v977 = vmax.f32 %v975, %v976
      %v978 = vrot.slane %v977, 2
      %v979 = vmax.f32 %v977, %v978
      %v980 = vrot.slane %v979, 1
      %v981 = vmax.f32 %v979, %v980
      %v982 = vsel %vm953, %v829, -inf
      %v983 = vrot.slane %v982, 4
      %v984 = vmax.f32 %v982, %v983
      %v985 = vrot.slane %v984, 2
      %v986 = vmax.f32 %v984, %v985
      %v987 = vrot.slane %v986, 1
      %v988 = vmax.f32 %v986, %v987
      %v989 = vsel %vm953, %v830, -inf
      %v990 = vrot.slane %v989, 4
      %v991 = vmax.f32 %v989, %v990
      %v992 = vrot.slane %v991, 2
      %v993 = vmax.f32 %v991, %v992
      %v994 = vrot.slane %v993, 1
      %v995 = vmax.f32 %v993, %v994
      %v996 = vsel %vm953, %v831, -inf
      %v997 = vrot.slane %v996, 4
      %v998 = vmax.f32 %v996, %v997
      %v999 = vrot.slane %v998, 2
      %v1000 = vmax.f32 %v998, %v999
      %v1001 = vrot.slane %v1000, 1
      %v1002 = vmax.f32 %v1000, %v1001
      %v1003 = vsel %vm953, %v832, -inf
      %v1004 = vrot.slane %v1003, 4
      %v1005 = vmax.f32 %v1003, %v1004
      %v1006 = vrot.slane %v1005, 2
      %v1007 = vmax.f32 %v1005, %v1006
      %v1008 = vrot.slane %v1007, 1
      %v1009 = vmax.f32 %v1007, %v1008
      %v1010 = vsel %vm953, %v833, -inf
      %v1011 = vrot.slane %v1010, 4
      %v1012 = vmax.f32 %v1010, %v1011
      %v1013 = vrot.slane %v1012, 2
      %v1014 = vmax.f32 %v1012, %v1013
      %v1015 = vrot.slane %v1014, 1
      %v1016 = vmax.f32 %v1014, %v1015
      %v1017 = vsel %vm953, %v834, -inf
      %v1018 = vrot.slane %v1017, 4
      %v1019 = vmax.f32 %v1017, %v1018
      %v1020 = vrot.slane %v1019, 2
      %v1021 = vmax.f32 %v1019, %v1020
      %v1022 = vrot.slane %v1021, 1
      %v1023 = vmax.f32 %v1021, %v1022
      %v1024 = vsel %vm953, %v835, -inf
      %v1025 = vrot.slane %v1024, 4
      %v1026 = vmax.f32 %v1024, %v1025
      %v1027 = vrot.slane %v1026, 2
      %v1028 = vmax.f32 %v1026, %v1027
      %v1029 = vrot.slane %v1028, 1
      %v1030 = vmax.f32 %v1028, %v1029
      %v1031 = vsel %vm953, %v836, -inf
      %v1032 = vrot.slane %v1031, 4
      %v1033 = vmax.f32 %v1031, %v1032
      %v1034 = vrot.slane %v1033, 2
      %v1035 = vmax.f32 %v1033, %v1034
      %v1036 = vrot.slane %v1035, 1
      %v1037 = vmax.f32 %v1035, %v1036
      %v1038 = vsel %vm953, %v837, -inf
      %v1039 = vrot.slane %v1038, 4
      %v1040 = vmax.f32 %v1038, %v1039
      %v1041 = vrot.slane %v1040, 2
      %v1042 = vmax.f32 %v1040, %v1041
      %v1043 = vrot.slane %v1042, 1
      %v1044 = vmax.f32 %v1042, %v1043
      %v1045 = vsel %vm953, %v838, -inf
      %v1046 = vrot.slane %v1045, 4
      %v1047 = vmax.f32 %v1045, %v1046
      %v1048 = vrot.slane %v1047, 2
      %v1049 = vmax.f32 %v1047, %v1048
      %v1050 = vrot.slane %v1049, 1
      %v1051 = vmax.f32 %v1049, %v1050
      %v1052 = vsel %vm953, %v839, -inf
      %v1053 = vrot.slane %v1052, 4
      %v1054 = vmax.f32 %v1052, %v1053
      %v1055 = vrot.slane %v1054, 2
      %v1056 = vmax.f32 %v1054, %v1055
      %v1057 = vrot.slane %v1056, 1
      %v1058 = vmax.f32 %v1056, %v1057
      %v1059 = vsel %vm953, %v840, -inf
      %v1060 = vrot.slane %v1059, 4
      %v1061 = vmax.f32 %v1059, %v1060
      %v1062 = vrot.slane %v1061, 2
      %v1063 = vmax.f32 %v1061, %v1062
      %v1064 = vrot.slane %v1063, 1
      %v1065 = vmax.f32 %v1063, %v1064
      %v1066 = vsel %vm953, %v841, -inf
      %v1067 = vrot.slane %v1066, 4
      %v1068 = vmax.f32 %v1066, %v1067
      %v1069 = vrot.slane %v1068, 2
      %v1070 = vmax.f32 %v1068, %v1069
      %v1071 = vrot.slane %v1070, 1
      %v1072 = vmax.f32 %v1070, %v1071
      %v1073 = vsel %vm953, %v842, -inf
      %v1074 = vrot.slane %v1073, 4
      %v1075 = vmax.f32 %v1073, %v1074
      %v1076 = vrot.slane %v1075, 2
      %v1077 = vmax.f32 %v1075, %v1076
      %v1078 = vrot.slane %v1077, 1
      %v1079 = vmax.f32 %v1077, %v1078
      %v1080 = vsel %vm953, %v843, -inf
      %v1081 = vrot.slane %v1080, 4
      %v1082 = vmax.f32 %v1080, %v1081
      %v1083 = vrot.slane %v1082, 2
      %v1084 = vmax.f32 %v1082, %v1083
      %v1085 = vrot.slane %v1084, 1
      %v1086 = vmax.f32 %v1084, %v1085
      %v1087 = vsel %vm953, %v844, -inf
      %v1088 = vrot.slane %v1087, 4
      %v1089 = vmax.f32 %v1087, %v1088
      %v1090 = vrot.slane %v1089, 2
      %v1091 = vmax.f32 %v1089, %v1090
      %v1092 = vrot.slane %v1091, 1
      %v1093 = vmax.f32 %v1091, %v1092
      %v1094 = vsel %vm953, %v845, -inf
      %v1095 = vrot.slane %v1094, 4
      %v1096 = vmax.f32 %v1094, %v1095
      %v1097 = vrot.slane %v1096, 2
      %v1098 = vmax.f32 %v1096, %v1097
      %v1099 = vrot.slane %v1098, 1
      %v1100 = vmax.f32 %v1098, %v1099
      %v1101 = vsel %vm953, %v846, -inf
      %v1102 = vrot.slane %v1101, 4
      %v1103 = vmax.f32 %v1101, %v1102
      %v1104 = vrot.slane %v1103, 2
      %v1105 = vmax.f32 %v1103, %v1104
      %v1106 = vrot.slane %v1105, 1
      %v1107 = vmax.f32 %v1105, %v1106
      %v1108 = vsel %vm953, %v847, -inf
      %v1109 = vrot.slane %v1108, 4
      %v1110 = vmax.f32 %v1108, %v1109
      %v1111 = vrot.slane %v1110, 2
      %v1112 = vmax.f32 %v1110, %v1111
      %v1113 = vrot.slane %v1112, 1
      %v1114 = vmax.f32 %v1112, %v1113
      %v1115 = vsel %vm953, %v848, -inf
      %v1116 = vrot.slane %v1115, 4
      %v1117 = vmax.f32 %v1115, %v1116
      %v1118 = vrot.slane %v1117, 2
      %v1119 = vmax.f32 %v1117, %v1118
      %v1120 = vrot.slane %v1119, 1
      %v1121 = vmax.f32 %v1119, %v1120
      %v1122 = vsel %vm953, %v849, -inf
      %v1123 = vrot.slane %v1122, 4
      %v1124 = vmax.f32 %v1122, %v1123
      %v1125 = vrot.slane %v1124, 2
      %v1126 = vmax.f32 %v1124, %v1125
      %v1127 = vrot.slane %v1126, 1
      %v1128 = vmax.f32 %v1126, %v1127
      %v1129 = vsel %vm953, %v850, -inf
      %v1130 = vrot.slane %v1129, 4
      %v1131 = vmax.f32 %v1129, %v1130
      %v1132 = vrot.slane %v1131, 2
      %v1133 = vmax.f32 %v1131, %v1132
      %v1134 = vrot.slane %v1133, 1
      %v1135 = vmax.f32 %v1133, %v1134
      %v1136 = vsel %vm953, %v851, -inf
      %v1137 = vrot.slane %v1136, 4
      %v1138 = vmax.f32 %v1136, %v1137
      %v1139 = vrot.slane %v1138, 2
      %v1140 = vmax.f32 %v1138, %v1139
      %v1141 = vrot.slane %v1140, 1
      %v1142 = vmax.f32 %v1140, %v1141
      %v1143 = vsel %vm953, %v852, -inf
      %v1144 = vrot.slane %v1143, 4
      %v1145 = vmax.f32 %v1143, %v1144
      %v1146 = vrot.slane %v1145, 2
      %v1147 = vmax.f32 %v1145, %v1146
      %v1148 = vrot.slane %v1147, 1
      %v1149 = vmax.f32 %v1147, %v1148
      %v1150 = vsel %vm953, %v853, -inf
      %v1151 = vrot.slane %v1150, 4
      %v1152 = vmax.f32 %v1150, %v1151
      %v1153 = vrot.slane %v1152, 2
      %v1154 = vmax.f32 %v1152, %v1153
      %v1155 = vrot.slane %v1154, 1
      %v1156 = vmax.f32 %v1154, %v1155
      %v1157 = vsel %vm953, %v854, -inf
      %v1158 = vrot.slane %v1157, 4
      %v1159 = vmax.f32 %v1157, %v1158
      %v1160 = vrot.slane %v1159, 2
      %v1161 = vmax.f32 %v1159, %v1160
      %v1162 = vrot.slane %v1161, 1
      %v1163 = vmax.f32 %v1161, %v1162
      %v1164 = vsel %vm953, %v855, -inf
      %v1165 = vrot.slane %v1164, 4
      %v1166 = vmax.f32 %v1164, %v1165
      %v1167 = vrot.slane %v1166, 2
      %v1168 = vmax.f32 %v1166, %v1167
      %v1169 = vrot.slane %v1168, 1
      %v1170 = vmax.f32 %v1168, %v1169
      %v1171 = vsel %vm953, %v856, -inf
      %v1172 = vrot.slane %v1171, 4
      %v1173 = vmax.f32 %v1171, %v1172
      %v1174 = vrot.slane %v1173, 2
      %v1175 = vmax.f32 %v1173, %v1174
      %v1176 = vrot.slane %v1175, 1
      %v1177 = vmax.f32 %v1175, %v1176
      %v1178 = vsel %vm953, %v857, -inf
      %v1179 = vrot.slane %v1178, 4
      %v1180 = vmax.f32 %v1178, %v1179
      %v1181 = vrot.slane %v1180, 2
      %v1182 = vmax.f32 %v1180, %v1181
      %v1183 = vrot.slane %v1182, 1
      %v1184 = vmax.f32 %v1182, %v1183
      %v1185 = vsel %vm953, %v858, -inf
      %v1186 = vrot.slane %v1185, 4
      %v1187 = vmax.f32 %v1185, %v1186
      %v1188 = vrot.slane %v1187, 2
      %v1189 = vmax.f32 %v1187, %v1188
      %v1190 = vrot.slane %v1189, 1
      %v1191 = vmax.f32 %v1189, %v1190
      %v1192 = vsel %vm953, %v859, -inf
      %v1193 = vrot.slane %v1192, 4
      %v1194 = vmax.f32 %v1192, %v1193
      %v1195 = vrot.slane %v1194, 2
      %v1196 = vmax.f32 %v1194, %v1195
      %v1197 = vrot.slane %v1196, 1
      %v1198 = vmax.f32 %v1196, %v1197
      %v1199 = vsel %vm953, %v860, -inf
      %v1200 = vrot.slane %v1199, 4
      %v1201 = vmax.f32 %v1199, %v1200
      %v1202 = vrot.slane %v1201, 2
      %v1203 = vmax.f32 %v1201, %v1202
      %v1204 = vrot.slane %v1203, 1
      %v1205 = vmax.f32 %v1203, %v1204
      %v1206 = vsel %vm953, %v861, -inf
      %v1207 = vrot.slane %v1206, 4
      %v1208 = vmax.f32 %v1206, %v1207
      %v1209 = vrot.slane %v1208, 2
      %v1210 = vmax.f32 %v1208, %v1209
      %v1211 = vrot.slane %v1210, 1
      %v1212 = vmax.f32 %v1210, %v1211
      %v1213 = vsel %vm953, %v862, -inf
      %v1214 = vrot.slane %v1213, 4
      %v1215 = vmax.f32 %v1213, %v1214
      %v1216 = vrot.slane %v1215, 2
      %v1217 = vmax.f32 %v1215, %v1216
      %v1218 = vrot.slane %v1217, 1
      %v1219 = vmax.f32 %v1217, %v1218
      %v1220 = vsel %vm953, %v863, -inf
      %v1221 = vrot.slane %v1220, 4
      %v1222 = vmax.f32 %v1220, %v1221
      %v1223 = vrot.slane %v1222, 2
      %v1224 = vmax.f32 %v1222, %v1223
      %v1225 = vrot.slane %v1224, 1
      %v1226 = vmax.f32 %v1224, %v1225
      %v1227 = vsel %vm953, %v864, -inf
      %v1228 = vrot.slane %v1227, 4
      %v1229 = vmax.f32 %v1227, %v1228
      %v1230 = vrot.slane %v1229, 2
      %v1231 = vmax.f32 %v1229, %v1230
      %v1232 = vrot.slane %v1231, 1
      %v1233 = vmax.f32 %v1231, %v1232
      %v1234 = vsel %vm953, %v865, -inf
      %v1235 = vrot.slane %v1234, 4
      %v1236 = vmax.f32 %v1234, %v1235
      %v1237 = vrot.slane %v1236, 2
      %v1238 = vmax.f32 %v1236, %v1237
      %v1239 = vrot.slane %v1238, 1
      %v1240 = vmax.f32 %v1238, %v1239
      %v1241 = vsel %vm953, %v866, -inf
      %v1242 = vrot.slane %v1241, 4
      %v1243 = vmax.f32 %v1241, %v1242
      %v1244 = vrot.slane %v1243, 2
      %v1245 = vmax.f32 %v1243, %v1244
      %v1246 = vrot.slane %v1245, 1
      %v1247 = vmax.f32 %v1245, %v1246
      %v1248 = vsel %vm953, %v867, -inf
      %v1249 = vrot.slane %v1248, 4
      %v1250 = vmax.f32 %v1248, %v1249
      %v1251 = vrot.slane %v1250, 2
      %v1252 = vmax.f32 %v1250, %v1251
      %v1253 = vrot.slane %v1252, 1
      %v1254 = vmax.f32 %v1252, %v1253
      %v1255 = vsel %vm953, %v868, -inf
      %v1256 = vrot.slane %v1255, 4
      %v1257 = vmax.f32 %v1255, %v1256
      %v1258 = vrot.slane %v1257, 2
      %v1259 = vmax.f32 %v1257, %v1258
      %v1260 = vrot.slane %v1259, 1
      %v1261 = vmax.f32 %v1259, %v1260
      %v1262 = vsel %vm953, %v869, -inf
      %v1263 = vrot.slane %v1262, 4
      %v1264 = vmax.f32 %v1262, %v1263
      %v1265 = vrot.slane %v1264, 2
      %v1266 = vmax.f32 %v1264, %v1265
      %v1267 = vrot.slane %v1266, 1
      %v1268 = vmax.f32 %v1266, %v1267
      %v1269 = vsel %vm953, %v870, -inf
      %v1270 = vrot.slane %v1269, 4
      %v1271 = vmax.f32 %v1269, %v1270
      %v1272 = vrot.slane %v1271, 2
      %v1273 = vmax.f32 %v1271, %v1272
      %v1274 = vrot.slane %v1273, 1
      %v1275 = vmax.f32 %v1273, %v1274
      %v1276 = vsel %vm953, %v871, -inf
      %v1277 = vrot.slane %v1276, 4
      %v1278 = vmax.f32 %v1276, %v1277
      %v1279 = vrot.slane %v1278, 2
      %v1280 = vmax.f32 %v1278, %v1279
      %v1281 = vrot.slane %v1280, 1
      %v1282 = vmax.f32 %v1280, %v1281
      %v1283 = vsel %vm953, %v872, -inf
      %v1284 = vrot.slane %v1283, 4
      %v1285 = vmax.f32 %v1283, %v1284
      %v1286 = vrot.slane %v1285, 2
      %v1287 = vmax.f32 %v1285, %v1286
      %v1288 = vrot.slane %v1287, 1
      %v1289 = vmax.f32 %v1287, %v1288
      %v1290 = vsel %vm953, %v873, -inf
      %v1291 = vrot.slane %v1290, 4
      %v1292 = vmax.f32 %v1290, %v1291
      %v1293 = vrot.slane %v1292, 2
      %v1294 = vmax.f32 %v1292, %v1293
      %v1295 = vrot.slane %v1294, 1
      %v1296 = vmax.f32 %v1294, %v1295
      %v1297 = vsel %vm953, %v874, -inf
      %v1298 = vrot.slane %v1297, 4
      %v1299 = vmax.f32 %v1297, %v1298
      %v1300 = vrot.slane %v1299, 2
      %v1301 = vmax.f32 %v1299, %v1300
      %v1302 = vrot.slane %v1301, 1
      %v1303 = vmax.f32 %v1301, %v1302
      %v1304 = vsel %vm953, %v875, -inf
      %v1305 = vrot.slane %v1304, 4
      %v1306 = vmax.f32 %v1304, %v1305
      %v1307 = vrot.slane %v1306, 2
      %v1308 = vmax.f32 %v1306, %v1307
      %v1309 = vrot.slane %v1308, 1
      %v1310 = vmax.f32 %v1308, %v1309
      %v1311 = vsel %vm953, %v876, -inf
      %v1312 = vrot.slane %v1311, 4
      %v1313 = vmax.f32 %v1311, %v1312
      %v1314 = vrot.slane %v1313, 2
      %v1315 = vmax.f32 %v1313, %v1314
      %v1316 = vrot.slane %v1315, 1
      %v1317 = vmax.f32 %v1315, %v1316
      %v1318 = vsel %vm953, %v877, -inf
      %v1319 = vrot.slane %v1318, 4
      %v1320 = vmax.f32 %v1318, %v1319
      %v1321 = vrot.slane %v1320, 2
      %v1322 = vmax.f32 %v1320, %v1321
      %v1323 = vrot.slane %v1322, 1
      %v1324 = vmax.f32 %v1322, %v1323
      %v1325 = vsel %vm953, %v878, -inf
      %v1326 = vrot.slane %v1325, 4
      %v1327 = vmax.f32 %v1325, %v1326
      %v1328 = vrot.slane %v1327, 2
      %v1329 = vmax.f32 %v1327, %v1328
      %v1330 = vrot.slane %v1329, 1
      %v1331 = vmax.f32 %v1329, %v1330
      %v1332 = vsel %vm953, %v879, -inf
      %v1333 = vrot.slane %v1332, 4
      %v1334 = vmax.f32 %v1332, %v1333
      %v1335 = vrot.slane %v1334, 2
      %v1336 = vmax.f32 %v1334, %v1335
      %v1337 = vrot.slane %v1336, 1
      %v1338 = vmax.f32 %v1336, %v1337
      %v1339 = vsel %vm953, %v880, -inf
      %v1340 = vrot.slane %v1339, 4
      %v1341 = vmax.f32 %v1339, %v1340
      %v1342 = vrot.slane %v1341, 2
      %v1343 = vmax.f32 %v1341, %v1342
      %v1344 = vrot.slane %v1343, 1
      %v1345 = vmax.f32 %v1343, %v1344
      %v1346 = vsel %vm953, %v881, -inf
      %v1347 = vrot.slane %v1346, 4
      %v1348 = vmax.f32 %v1346, %v1347
      %v1349 = vrot.slane %v1348, 2
      %v1350 = vmax.f32 %v1348, %v1349
      %v1351 = vrot.slane %v1350, 1
      %v1352 = vmax.f32 %v1350, %v1351
      %v1353 = vsel %vm953, %v882, -inf
      %v1354 = vrot.slane %v1353, 4
      %v1355 = vmax.f32 %v1353, %v1354
      %v1356 = vrot.slane %v1355, 2
      %v1357 = vmax.f32 %v1355, %v1356
      %v1358 = vrot.slane %v1357, 1
      %v1359 = vmax.f32 %v1357, %v1358
      %v1360 = vsel %vm953, %v883, -inf
      %v1361 = vrot.slane %v1360, 4
      %v1362 = vmax.f32 %v1360, %v1361
      %v1363 = vrot.slane %v1362, 2
      %v1364 = vmax.f32 %v1362, %v1363
      %v1365 = vrot.slane %v1364, 1
      %v1366 = vmax.f32 %v1364, %v1365
      %v1367 = vsel %vm953, %v884, -inf
      %v1368 = vrot.slane %v1367, 4
      %v1369 = vmax.f32 %v1367, %v1368
      %v1370 = vrot.slane %v1369, 2
      %v1371 = vmax.f32 %v1369, %v1370
      %v1372 = vrot.slane %v1371, 1
      %v1373 = vmax.f32 %v1371, %v1372
      %v1374 = vsel %vm953, %v885, -inf
      %v1375 = vrot.slane %v1374, 4
      %v1376 = vmax.f32 %v1374, %v1375
      %v1377 = vrot.slane %v1376, 2
      %v1378 = vmax.f32 %v1376, %v1377
      %v1379 = vrot.slane %v1378, 1
      %v1380 = vmax.f32 %v1378, %v1379
      %v1381 = vsel %vm953, %v886, -inf
      %v1382 = vrot.slane %v1381, 4
      %v1383 = vmax.f32 %v1381, %v1382
      %v1384 = vrot.slane %v1383, 2
      %v1385 = vmax.f32 %v1383, %v1384
      %v1386 = vrot.slane %v1385, 1
      %v1387 = vmax.f32 %v1385, %v1386
      %v1388 = vsel %vm953, %v887, -inf
      %v1389 = vrot.slane %v1388, 4
      %v1390 = vmax.f32 %v1388, %v1389
      %v1391 = vrot.slane %v1390, 2
      %v1392 = vmax.f32 %v1390, %v1391
      %v1393 = vrot.slane %v1392, 1
      %v1394 = vmax.f32 %v1392, %v1393
      %v1395 = vsel %vm953, %v888, -inf
      %v1396 = vrot.slane %v1395, 4
      %v1397 = vmax.f32 %v1395, %v1396
      %v1398 = vrot.slane %v1397, 2
      %v1399 = vmax.f32 %v1397, %v1398
      %v1400 = vrot.slane %v1399, 1
      %v1401 = vmax.f32 %v1399, %v1400
      %v1402 = vsel %vm953, %v889, -inf
      %v1403 = vrot.slane %v1402, 4
      %v1404 = vmax.f32 %v1402, %v1403
      %v1405 = vrot.slane %v1404, 2
      %v1406 = vmax.f32 %v1404, %v1405
      %v1407 = vrot.slane %v1406, 1
      %v1408 = vmax.f32 %v1406, %v1407
      %v1409 = vsel %vm953, %v890, -inf
      %v1410 = vrot.slane %v1409, 4
      %v1411 = vmax.f32 %v1409, %v1410
      %v1412 = vrot.slane %v1411, 2
      %v1413 = vmax.f32 %v1411, %v1412
      %v1414 = vrot.slane %v1413, 1
      %v1415 = vmax.f32 %v1413, %v1414
      %v1416 = vsel %vm953, %v891, -inf
      %v1417 = vrot.slane %v1416, 4
      %v1418 = vmax.f32 %v1416, %v1417
      %v1419 = vrot.slane %v1418, 2
      %v1420 = vmax.f32 %v1418, %v1419
      %v1421 = vrot.slane %v1420, 1
      %v1422 = vmax.f32 %v1420, %v1421
      %v1423 = vsel %vm953, %v892, -inf
      %v1424 = vrot.slane %v1423, 4
      %v1425 = vmax.f32 %v1423, %v1424
      %v1426 = vrot.slane %v1425, 2
      %v1427 = vmax.f32 %v1425, %v1426
      %v1428 = vrot.slane %v1427, 1
      %v1429 = vmax.f32 %v1427, %v1428
      %v1430 = vsel %vm953, %v893, -inf
      %v1431 = vrot.slane %v1430, 4
      %v1432 = vmax.f32 %v1430, %v1431
      %v1433 = vrot.slane %v1432, 2
      %v1434 = vmax.f32 %v1432, %v1433
      %v1435 = vrot.slane %v1434, 1
      %v1436 = vmax.f32 %v1434, %v1435
      %v1437 = vsel %vm953, %v894, -inf
      %v1438 = vrot.slane %v1437, 4
      %v1439 = vmax.f32 %v1437, %v1438
      %v1440 = vrot.slane %v1439, 2
      %v1441 = vmax.f32 %v1439, %v1440
      %v1442 = vrot.slane %v1441, 1
      %v1443 = vmax.f32 %v1441, %v1442
      %v1444 = vsel %vm953, %v895, -inf
      %v1445 = vrot.slane %v1444, 4
      %v1446 = vmax.f32 %v1444, %v1445
      %v1447 = vrot.slane %v1446, 2
      %v1448 = vmax.f32 %v1446, %v1447
      %v1449 = vrot.slane %v1448, 1
      %v1450 = vmax.f32 %v1448, %v1449
      %v1451 = vsel %vm953, %v896, -inf
      %v1452 = vrot.slane %v1451, 4
      %v1453 = vmax.f32 %v1451, %v1452
      %v1454 = vrot.slane %v1453, 2
      %v1455 = vmax.f32 %v1453, %v1454
      %v1456 = vrot.slane %v1455, 1
      %v1457 = vmax.f32 %v1455, %v1456
      %v1458 = vsel %vm953, %v897, -inf
      %v1459 = vrot.slane %v1458, 4
      %v1460 = vmax.f32 %v1458, %v1459
      %v1461 = vrot.slane %v1460, 2
      %v1462 = vmax.f32 %v1460, %v1461
      %v1463 = vrot.slane %v1462, 1
      %v1464 = vmax.f32 %v1462, %v1463
      %v1465 = vsel %vm953, %v898, -inf
      %v1466 = vrot.slane %v1465, 4
      %v1467 = vmax.f32 %v1465, %v1466
      %v1468 = vrot.slane %v1467, 2
      %v1469 = vmax.f32 %v1467, %v1468
      %v1470 = vrot.slane %v1469, 1
      %v1471 = vmax.f32 %v1469, %v1470
      %v1472 = vsel %vm953, %v899, -inf
      %v1473 = vrot.slane %v1472, 4
      %v1474 = vmax.f32 %v1472, %v1473
      %v1475 = vrot.slane %v1474, 2
      %v1476 = vmax.f32 %v1474, %v1475
      %v1477 = vrot.slane %v1476, 1
      %v1478 = vmax.f32 %v1476, %v1477
      %v1479 = vsel %vm953, %v900, -inf
      %v1480 = vrot.slane %v1479, 4
      %v1481 = vmax.f32 %v1479, %v1480
      %v1482 = vrot.slane %v1481, 2
      %v1483 = vmax.f32 %v1481, %v1482
      %v1484 = vrot.slane %v1483, 1
      %v1485 = vmax.f32 %v1483, %v1484
      %v1486 = vsel %vm953, %v901, -inf
      %v1487 = vrot.slane %v1486, 4
      %v1488 = vmax.f32 %v1486, %v1487
      %v1489 = vrot.slane %v1488, 2
      %v1490 = vmax.f32 %v1488, %v1489
      %v1491 = vrot.slane %v1490, 1
      %v1492 = vmax.f32 %v1490, %v1491
      %v1493 = vsel %vm953, %v902, -inf
      %v1494 = vrot.slane %v1493, 4
      %v1495 = vmax.f32 %v1493, %v1494
      %v1496 = vrot.slane %v1495, 2
      %v1497 = vmax.f32 %v1495, %v1496
      %v1498 = vrot.slane %v1497, 1
      %v1499 = vmax.f32 %v1497, %v1498
      %v1500 = vsel %vm953, %v903, -inf
      %v1501 = vrot.slane %v1500, 4
      %v1502 = vmax.f32 %v1500, %v1501
      %v1503 = vrot.slane %v1502, 2
      %v1504 = vmax.f32 %v1502, %v1503
      %v1505 = vrot.slane %v1504, 1
      %v1506 = vmax.f32 %v1504, %v1505
      %v1507 = vsel %vm953, %v904, -inf
      %v1508 = vrot.slane %v1507, 4
      %v1509 = vmax.f32 %v1507, %v1508
      %v1510 = vrot.slane %v1509, 2
      %v1511 = vmax.f32 %v1509, %v1510
      %v1512 = vrot.slane %v1511, 1
      %v1513 = vmax.f32 %v1511, %v1512
      %v1514 = vsel %vm953, %v905, -inf
      %v1515 = vrot.slane %v1514, 4
      %v1516 = vmax.f32 %v1514, %v1515
      %v1517 = vrot.slane %v1516, 2
      %v1518 = vmax.f32 %v1516, %v1517
      %v1519 = vrot.slane %v1518, 1
      %v1520 = vmax.f32 %v1518, %v1519
      %v1521 = vsel %vm953, %v906, -inf
      %v1522 = vrot.slane %v1521, 4
      %v1523 = vmax.f32 %v1521, %v1522
      %v1524 = vrot.slane %v1523, 2
      %v1525 = vmax.f32 %v1523, %v1524
      %v1526 = vrot.slane %v1525, 1
      %v1527 = vmax.f32 %v1525, %v1526
      %v1528 = vsel %vm953, %v907, -inf
      %v1529 = vrot.slane %v1528, 4
      %v1530 = vmax.f32 %v1528, %v1529
      %v1531 = vrot.slane %v1530, 2
      %v1532 = vmax.f32 %v1530, %v1531
      %v1533 = vrot.slane %v1532, 1
      %v1534 = vmax.f32 %v1532, %v1533
      %v1535 = vsel %vm953, %v908, -inf
      %v1536 = vrot.slane %v1535, 4
      %v1537 = vmax.f32 %v1535, %v1536
      %v1538 = vrot.slane %v1537, 2
      %v1539 = vmax.f32 %v1537, %v1538
      %v1540 = vrot.slane %v1539, 1
      %v1541 = vmax.f32 %v1539, %v1540
      %v1542 = vsel %vm953, %v909, -inf
      %v1543 = vrot.slane %v1542, 4
      %v1544 = vmax.f32 %v1542, %v1543
      %v1545 = vrot.slane %v1544, 2
      %v1546 = vmax.f32 %v1544, %v1545
      %v1547 = vrot.slane %v1546, 1
      %v1548 = vmax.f32 %v1546, %v1547
      %v1549 = vsel %vm953, %v910, -inf
      %v1550 = vrot.slane %v1549, 4
      %v1551 = vmax.f32 %v1549, %v1550
      %v1552 = vrot.slane %v1551, 2
      %v1553 = vmax.f32 %v1551, %v1552
      %v1554 = vrot.slane %v1553, 1
      %v1555 = vmax.f32 %v1553, %v1554
      %v1556 = vsel %vm953, %v911, -inf
      %v1557 = vrot.slane %v1556, 4
      %v1558 = vmax.f32 %v1556, %v1557
      %v1559 = vrot.slane %v1558, 2
      %v1560 = vmax.f32 %v1558, %v1559
      %v1561 = vrot.slane %v1560, 1
      %v1562 = vmax.f32 %v1560, %v1561
      %v1563 = vsel %vm953, %v912, -inf
      %v1564 = vrot.slane %v1563, 4
      %v1565 = vmax.f32 %v1563, %v1564
      %v1566 = vrot.slane %v1565, 2
      %v1567 = vmax.f32 %v1565, %v1566
      %v1568 = vrot.slane %v1567, 1
      %v1569 = vmax.f32 %v1567, %v1568
      %v1570 = vsel %vm953, %v913, -inf
      %v1571 = vrot.slane %v1570, 4
      %v1572 = vmax.f32 %v1570, %v1571
      %v1573 = vrot.slane %v1572, 2
      %v1574 = vmax.f32 %v1572, %v1573
      %v1575 = vrot.slane %v1574, 1
      %v1576 = vmax.f32 %v1574, %v1575
      %v1577 = vsel %vm953, %v914, -inf
      %v1578 = vrot.slane %v1577, 4
      %v1579 = vmax.f32 %v1577, %v1578
      %v1580 = vrot.slane %v1579, 2
      %v1581 = vmax.f32 %v1579, %v1580
      %v1582 = vrot.slane %v1581, 1
      %v1583 = vmax.f32 %v1581, %v1582
      %v1584 = vsel %vm953, %v915, -inf
      %v1585 = vrot.slane %v1584, 4
      %v1586 = vmax.f32 %v1584, %v1585
      %v1587 = vrot.slane %v1586, 2
      %v1588 = vmax.f32 %v1586, %v1587
      %v1589 = vrot.slane %v1588, 1
      %v1590 = vmax.f32 %v1588, %v1589
      %v1591 = vsel %vm953, %v916, -inf
      %v1592 = vrot.slane %v1591, 4
      %v1593 = vmax.f32 %v1591, %v1592
      %v1594 = vrot.slane %v1593, 2
      %v1595 = vmax.f32 %v1593, %v1594
      %v1596 = vrot.slane %v1595, 1
      %v1597 = vmax.f32 %v1595, %v1596
      %v1598 = vsel %vm953, %v917, -inf
      %v1599 = vrot.slane %v1598, 4
      %v1600 = vmax.f32 %v1598, %v1599
      %v1601 = vrot.slane %v1600, 2
      %v1602 = vmax.f32 %v1600, %v1601
      %v1603 = vrot.slane %v1602, 1
      %v1604 = vmax.f32 %v1602, %v1603
      %v1605 = vsel %vm953, %v918, -inf
      %v1606 = vrot.slane %v1605, 4
      %v1607 = vmax.f32 %v1605, %v1606
      %v1608 = vrot.slane %v1607, 2
      %v1609 = vmax.f32 %v1607, %v1608
      %v1610 = vrot.slane %v1609, 1
      %v1611 = vmax.f32 %v1609, %v1610
      %v1612 = vsel %vm953, %v919, -inf
      %v1613 = vrot.slane %v1612, 4
      %v1614 = vmax.f32 %v1612, %v1613
      %v1615 = vrot.slane %v1614, 2
      %v1616 = vmax.f32 %v1614, %v1615
      %v1617 = vrot.slane %v1616, 1
      %v1618 = vmax.f32 %v1616, %v1617
      %v1619 = vsel %vm953, %v920, -inf
      %v1620 = vrot.slane %v1619, 4
      %v1621 = vmax.f32 %v1619, %v1620
      %v1622 = vrot.slane %v1621, 2
      %v1623 = vmax.f32 %v1621, %v1622
      %v1624 = vrot.slane %v1623, 1
      %v1625 = vmax.f32 %v1623, %v1624
      %v1626 = vsel %vm953, %v921, -inf
      %v1627 = vrot.slane %v1626, 4
      %v1628 = vmax.f32 %v1626, %v1627
      %v1629 = vrot.slane %v1628, 2
      %v1630 = vmax.f32 %v1628, %v1629
      %v1631 = vrot.slane %v1630, 1
      %v1632 = vmax.f32 %v1630, %v1631
      %v1633 = vsel %vm953, %v922, -inf
      %v1634 = vrot.slane %v1633, 4
      %v1635 = vmax.f32 %v1633, %v1634
      %v1636 = vrot.slane %v1635, 2
      %v1637 = vmax.f32 %v1635, %v1636
      %v1638 = vrot.slane %v1637, 1
      %v1639 = vmax.f32 %v1637, %v1638
      %v1640 = vsel %vm953, %v923, -inf
      %v1641 = vrot.slane %v1640, 4
      %v1642 = vmax.f32 %v1640, %v1641
      %v1643 = vrot.slane %v1642, 2
      %v1644 = vmax.f32 %v1642, %v1643
      %v1645 = vrot.slane %v1644, 1
      %v1646 = vmax.f32 %v1644, %v1645
      %v1647 = vsel %vm953, %v924, -inf
      %v1648 = vrot.slane %v1647, 4
      %v1649 = vmax.f32 %v1647, %v1648
      %v1650 = vrot.slane %v1649, 2
      %v1651 = vmax.f32 %v1649, %v1650
      %v1652 = vrot.slane %v1651, 1
      %v1653 = vmax.f32 %v1651, %v1652
      %v1654 = vsel %vm953, %v925, -inf
      %v1655 = vrot.slane %v1654, 4
      %v1656 = vmax.f32 %v1654, %v1655
      %v1657 = vrot.slane %v1656, 2
      %v1658 = vmax.f32 %v1656, %v1657
      %v1659 = vrot.slane %v1658, 1
      %v1660 = vmax.f32 %v1658, %v1659
      %v1661 = vsel %vm953, %v926, -inf
      %v1662 = vrot.slane %v1661, 4
      %v1663 = vmax.f32 %v1661, %v1662
      %v1664 = vrot.slane %v1663, 2
      %v1665 = vmax.f32 %v1663, %v1664
      %v1666 = vrot.slane %v1665, 1
      %v1667 = vmax.f32 %v1665, %v1666
      %v1668 = vsel %vm953, %v927, -inf
      %v1669 = vrot.slane %v1668, 4
      %v1670 = vmax.f32 %v1668, %v1669
      %v1671 = vrot.slane %v1670, 2
      %v1672 = vmax.f32 %v1670, %v1671
      %v1673 = vrot.slane %v1672, 1
      %v1674 = vmax.f32 %v1672, %v1673
      %v1675 = vsel %vm953, %v928, -inf
      %v1676 = vrot.slane %v1675, 4
      %v1677 = vmax.f32 %v1675, %v1676
      %v1678 = vrot.slane %v1677, 2
      %v1679 = vmax.f32 %v1677, %v1678
      %v1680 = vrot.slane %v1679, 1
      %v1681 = vmax.f32 %v1679, %v1680
      %v1682 = vsel %vm953, %v929, -inf
      %v1683 = vrot.slane %v1682, 4
      %v1684 = vmax.f32 %v1682, %v1683
      %v1685 = vrot.slane %v1684, 2
      %v1686 = vmax.f32 %v1684, %v1685
      %v1687 = vrot.slane %v1686, 1
      %v1688 = vmax.f32 %v1686, %v1687
      %v1689 = vsel %vm953, %v930, -inf
      %v1690 = vrot.slane %v1689, 4
      %v1691 = vmax.f32 %v1689, %v1690
      %v1692 = vrot.slane %v1691, 2
      %v1693 = vmax.f32 %v1691, %v1692
      %v1694 = vrot.slane %v1693, 1
      %v1695 = vmax.f32 %v1693, %v1694
      %v1696 = vsel %vm953, %v931, -inf
      %v1697 = vrot.slane %v1696, 4
      %v1698 = vmax.f32 %v1696, %v1697
      %v1699 = vrot.slane %v1698, 2
      %v1700 = vmax.f32 %v1698, %v1699
      %v1701 = vrot.slane %v1700, 1
      %v1702 = vmax.f32 %v1700, %v1701
      %v1703 = vsel %vm953, %v932, -inf
      %v1704 = vrot.slane %v1703, 4
      %v1705 = vmax.f32 %v1703, %v1704
      %v1706 = vrot.slane %v1705, 2
      %v1707 = vmax.f32 %v1705, %v1706
      %v1708 = vrot.slane %v1707, 1
      %v1709 = vmax.f32 %v1707, %v1708
      %v1710 = vsel %vm953, %v933, -inf
      %v1711 = vrot.slane %v1710, 4
      %v1712 = vmax.f32 %v1710, %v1711
      %v1713 = vrot.slane %v1712, 2
      %v1714 = vmax.f32 %v1712, %v1713
      %v1715 = vrot.slane %v1714, 1
      %v1716 = vmax.f32 %v1714, %v1715
      %v1717 = vsel %vm953, %v934, -inf
      %v1718 = vrot.slane %v1717, 4
      %v1719 = vmax.f32 %v1717, %v1718
      %v1720 = vrot.slane %v1719, 2
      %v1721 = vmax.f32 %v1719, %v1720
      %v1722 = vrot.slane %v1721, 1
      %v1723 = vmax.f32 %v1721, %v1722
      %v1724 = vsel %vm953, %v935, -inf
      %v1725 = vrot.slane %v1724, 4
      %v1726 = vmax.f32 %v1724, %v1725
      %v1727 = vrot.slane %v1726, 2
      %v1728 = vmax.f32 %v1726, %v1727
      %v1729 = vrot.slane %v1728, 1
      %v1730 = vmax.f32 %v1728, %v1729
      %v1731 = vsel %vm953, %v936, -inf
      %v1732 = vrot.slane %v1731, 4
      %v1733 = vmax.f32 %v1731, %v1732
      %v1734 = vrot.slane %v1733, 2
      %v1735 = vmax.f32 %v1733, %v1734
      %v1736 = vrot.slane %v1735, 1
      %v1737 = vmax.f32 %v1735, %v1736
      %v1738 = vsel %vm953, %v937, -inf
      %v1739 = vrot.slane %v1738, 4
      %v1740 = vmax.f32 %v1738, %v1739
      %v1741 = vrot.slane %v1740, 2
      %v1742 = vmax.f32 %v1740, %v1741
      %v1743 = vrot.slane %v1742, 1
      %v1744 = vmax.f32 %v1742, %v1743
      %v1745 = vsel %vm953, %v938, -inf
      %v1746 = vrot.slane %v1745, 4
      %v1747 = vmax.f32 %v1745, %v1746
      %v1748 = vrot.slane %v1747, 2
      %v1749 = vmax.f32 %v1747, %v1748
      %v1750 = vrot.slane %v1749, 1
      %v1751 = vmax.f32 %v1749, %v1750
      %v1752 = vsel %vm953, %v939, -inf
      %v1753 = vrot.slane %v1752, 4
      %v1754 = vmax.f32 %v1752, %v1753
      %v1755 = vrot.slane %v1754, 2
      %v1756 = vmax.f32 %v1754, %v1755
      %v1757 = vrot.slane %v1756, 1
      %v1758 = vmax.f32 %v1756, %v1757
      %v1759 = vsel %vm953, %v940, -inf
      %v1760 = vrot.slane %v1759, 4
      %v1761 = vmax.f32 %v1759, %v1760
      %v1762 = vrot.slane %v1761, 2
      %v1763 = vmax.f32 %v1761, %v1762
      %v1764 = vrot.slane %v1763, 1
      %v1765 = vmax.f32 %v1763, %v1764
      %v1766 = vsel %vm953, %v941, -inf
      %v1767 = vrot.slane %v1766, 4
      %v1768 = vmax.f32 %v1766, %v1767
      %v1769 = vrot.slane %v1768, 2
      %v1770 = vmax.f32 %v1768, %v1769
      %v1771 = vrot.slane %v1770, 1
      %v1772 = vmax.f32 %v1770, %v1771
      %v1773 = vsel %vm953, %v942, -inf
      %v1774 = vrot.slane %v1773, 4
      %v1775 = vmax.f32 %v1773, %v1774
      %v1776 = vrot.slane %v1775, 2
      %v1777 = vmax.f32 %v1775, %v1776
      %v1778 = vrot.slane %v1777, 1
      %v1779 = vmax.f32 %v1777, %v1778
      %v1780 = vsel %vm953, %v943, -inf
      %v1781 = vrot.slane %v1780, 4
      %v1782 = vmax.f32 %v1780, %v1781
      %v1783 = vrot.slane %v1782, 2
      %v1784 = vmax.f32 %v1782, %v1783
      %v1785 = vrot.slane %v1784, 1
      %v1786 = vmax.f32 %v1784, %v1785
      %v1787 = vsel %vm953, %v944, -inf
      %v1788 = vrot.slane %v1787, 4
      %v1789 = vmax.f32 %v1787, %v1788
      %v1790 = vrot.slane %v1789, 2
      %v1791 = vmax.f32 %v1789, %v1790
      %v1792 = vrot.slane %v1791, 1
      %v1793 = vmax.f32 %v1791, %v1792
      %v1794 = vsel %vm953, %v945, -inf
      %v1795 = vrot.slane %v1794, 4
      %v1796 = vmax.f32 %v1794, %v1795
      %v1797 = vrot.slane %v1796, 2
      %v1798 = vmax.f32 %v1796, %v1797
      %v1799 = vrot.slane %v1798, 1
      %v1800 = vmax.f32 %v1798, %v1799
      %v1801 = vsel %vm953, %v946, -inf
      %v1802 = vrot.slane %v1801, 4
      %v1803 = vmax.f32 %v1801, %v1802
      %v1804 = vrot.slane %v1803, 2
      %v1805 = vmax.f32 %v1803, %v1804
      %v1806 = vrot.slane %v1805, 1
      %v1807 = vmax.f32 %v1805, %v1806
      %v1808 = vsel %vm953, %v947, -inf
      %v1809 = vrot.slane %v1808, 4
      %v1810 = vmax.f32 %v1808, %v1809
      %v1811 = vrot.slane %v1810, 2
      %v1812 = vmax.f32 %v1810, %v1811
      %v1813 = vrot.slane %v1812, 1
      %v1814 = vmax.f32 %v1812, %v1813
      %v1815 = vsel %vm953, %v948, -inf
      %v1816 = vrot.slane %v1815, 4
      %v1817 = vmax.f32 %v1815, %v1816
      %v1818 = vrot.slane %v1817, 2
      %v1819 = vmax.f32 %v1817, %v1818
      %v1820 = vrot.slane %v1819, 1
      %v1821 = vmax.f32 %v1819, %v1820
      %v1822 = vsel %vm953, %v949, -inf
      %v1823 = vrot.slane %v1822, 4
      %v1824 = vmax.f32 %v1822, %v1823
      %v1825 = vrot.slane %v1824, 2
      %v1826 = vmax.f32 %v1824, %v1825
      %v1827 = vrot.slane %v1826, 1
      %v1828 = vmax.f32 %v1826, %v1827
      %v1829 = vsel %vm953, %v950, -inf
      %v1830 = vrot.slane %v1829, 4
      %v1831 = vmax.f32 %v1829, %v1830
      %v1832 = vrot.slane %v1831, 2
      %v1833 = vmax.f32 %v1831, %v1832
      %v1834 = vrot.slane %v1833, 1
      %v1835 = vmax.f32 %v1833, %v1834
      %v1836 = vsel %vm953, %v951, -inf
      %v1837 = vrot.slane %v1836, 4
      %v1838 = vmax.f32 %v1836, %v1837
      %v1839 = vrot.slane %v1838, 2
      %v1840 = vmax.f32 %v1838, %v1839
      %v1841 = vrot.slane %v1840, 1
      %v1842 = vmax.f32 %v1840, %v1841
      %v1843 = vsel %vm953, %v952, -inf
      %v1844 = vrot.slane %v1843, 4
      %v1845 = vmax.f32 %v1843, %v1844
      %v1846 = vrot.slane %v1845, 2
      %v1847 = vmax.f32 %v1845, %v1846
      %v1848 = vrot.slane %v1847, 1
      %v1849 = vmax.f32 %v1847, %v1848
      %vm1850 = vcmask 64512
      %v1851 = vsel %vm1850, %v960, -inf
      %v1852 = vsel %vm1850, %v1016, -inf
      %v1853 = vmax.f32 %v1851, %v1852
      %v1854 = vsel %vm1850, %v967, -inf
      %v1855 = vsel %vm1850, %v1023, -inf
      %v1856 = vmax.f32 %v1854, %v1855
      %v1857 = vsel %vm1850, %v974, -inf
      %v1858 = vsel %vm1850, %v1030, -inf
      %v1859 = vmax.f32 %v1857, %v1858
      %v1860 = vsel %vm1850, %v981, -inf
      %v1861 = vsel %vm1850, %v1037, -inf
      %v1862 = vmax.f32 %v1860, %v1861
      %v1863 = vsel %vm1850, %v988, -inf
      %v1864 = vsel %vm1850, %v1044, -inf
      %v1865 = vmax.f32 %v1863, %v1864
      %v1866 = vsel %vm1850, %v995, -inf
      %v1867 = vsel %vm1850, %v1051, -inf
      %v1868 = vmax.f32 %v1866, %v1867
      %v1869 = vsel %vm1850, %v1002, -inf
      %v1870 = vsel %vm1850, %v1058, -inf
      %v1871 = vmax.f32 %v1869, %v1870
      %v1872 = vsel %vm1850, %v1009, -inf
      %v1873 = vsel %vm1850, %v1065, -inf
      %v1874 = vmax.f32 %v1872, %v1873
      %v1875 = vsel %vm1850, %v1072, -inf
      %v1876 = vsel %vm1850, %v1128, -inf
      %v1877 = vmax.f32 %v1875, %v1876
      %v1878 = vsel %vm1850, %v1079, -inf
      %v1879 = vsel %vm1850, %v1135, -inf
      %v1880 = vmax.f32 %v1878, %v1879
      %v1881 = vsel %vm1850, %v1086, -inf
      %v1882 = vsel %vm1850, %v1142, -inf
      %v1883 = vmax.f32 %v1881, %v1882
      %v1884 = vsel %vm1850, %v1093, -inf
      %v1885 = vsel %vm1850, %v1149, -inf
      %v1886 = vmax.f32 %v1884, %v1885
      %v1887 = vsel %vm1850, %v1100, -inf
      %v1888 = vsel %vm1850, %v1156, -inf
      %v1889 = vmax.f32 %v1887, %v1888
      %v1890 = vsel %vm1850, %v1107, -inf
      %v1891 = vsel %vm1850, %v1163, -inf
      %v1892 = vmax.f32 %v1890, %v1891
      %v1893 = vsel %vm1850, %v1114, -inf
      %v1894 = vsel %vm1850, %v1170, -inf
      %v1895 = vmax.f32 %v1893, %v1894
      %v1896 = vsel %vm1850, %v1121, -inf
      %v1897 = vsel %vm1850, %v1177, -inf
      %v1898 = vmax.f32 %v1896, %v1897
      %v1899 = vsel %vm1850, %v1184, -inf
      %v1900 = vsel %vm1850, %v1240, -inf
      %v1901 = vmax.f32 %v1899, %v1900
      %v1902 = vsel %vm1850, %v1191, -inf
      %v1903 = vsel %vm1850, %v1247, -inf
      %v1904 = vmax.f32 %v1902, %v1903
      %v1905 = vsel %vm1850, %v1198, -inf
      %v1906 = vsel %vm1850, %v1254, -inf
      %v1907 = vmax.f32 %v1905, %v1906
      %v1908 = vsel %vm1850, %v1205, -inf
      %v1909 = vsel %vm1850, %v1261, -inf
      %v1910 = vmax.f32 %v1908, %v1909
      %v1911 = vsel %vm1850, %v1212, -inf
      %v1912 = vsel %vm1850, %v1268, -inf
      %v1913 = vmax.f32 %v1911, %v1912
      %v1914 = vsel %vm1850, %v1219, -inf
      %v1915 = vsel %vm1850, %v1275, -inf
      %v1916 = vmax.f32 %v1914, %v1915
      %v1917 = vsel %vm1850, %v1226, -inf
      %v1918 = vsel %vm1850, %v1282, -inf
      %v1919 = vmax.f32 %v1917, %v1918
      %v1920 = vsel %vm1850, %v1233, -inf
      %v1921 = vsel %vm1850, %v1289, -inf
      %v1922 = vmax.f32 %v1920, %v1921
      %v1923 = vsel %vm1850, %v1296, -inf
      %v1924 = vsel %vm1850, %v1352, -inf
      %v1925 = vmax.f32 %v1923, %v1924
      %v1926 = vsel %vm1850, %v1303, -inf
      %v1927 = vsel %vm1850, %v1359, -inf
      %v1928 = vmax.f32 %v1926, %v1927
      %v1929 = vsel %vm1850, %v1310, -inf
      %v1930 = vsel %vm1850, %v1366, -inf
      %v1931 = vmax.f32 %v1929, %v1930
      %v1932 = vsel %vm1850, %v1317, -inf
      %v1933 = vsel %vm1850, %v1373, -inf
      %v1934 = vmax.f32 %v1932, %v1933
      %v1935 = vsel %vm1850, %v1324, -inf
      %v1936 = vsel %vm1850, %v1380, -inf
      %v1937 = vmax.f32 %v1935, %v1936
      %v1938 = vsel %vm1850, %v1331, -inf
      %v1939 = vsel %vm1850, %v1387, -inf
      %v1940 = vmax.f32 %v1938, %v1939
      %v1941 = vsel %vm1850, %v1338, -inf
      %v1942 = vsel %vm1850, %v1394, -inf
      %v1943 = vmax.f32 %v1941, %v1942
      %v1944 = vsel %vm1850, %v1345, -inf
      %v1945 = vsel %vm1850, %v1401, -inf
      %v1946 = vmax.f32 %v1944, %v1945
      %v1947 = vsel %vm1850, %v1408, -inf
      %v1948 = vsel %vm1850, %v1464, -inf
      %v1949 = vmax.f32 %v1947, %v1948
      %v1950 = vsel %vm1850, %v1415, -inf
      %v1951 = vsel %vm1850, %v1471, -inf
      %v1952 = vmax.f32 %v1950, %v1951
      %v1953 = vsel %vm1850, %v1422, -inf
      %v1954 = vsel %vm1850, %v1478, -inf
      %v1955 = vmax.f32 %v1953, %v1954
      %v1956 = vsel %vm1850, %v1429, -inf
      %v1957 = vsel %vm1850, %v1485, -inf
      %v1958 = vmax.f32 %v1956, %v1957
      %v1959 = vsel %vm1850, %v1436, -inf
      %v1960 = vsel %vm1850, %v1492, -inf
      %v1961 = vmax.f32 %v1959, %v1960
      %v1962 = vsel %vm1850, %v1443, -inf
      %v1963 = vsel %vm1850, %v1499, -inf
      %v1964 = vmax.f32 %v1962, %v1963
      %v1965 = vsel %vm1850, %v1450, -inf
      %v1966 = vsel %vm1850, %v1506, -inf
      %v1967 = vmax.f32 %v1965, %v1966
      %v1968 = vsel %vm1850, %v1457, -inf
      %v1969 = vsel %vm1850, %v1513, -inf
      %v1970 = vmax.f32 %v1968, %v1969
      %v1971 = vsel %vm1850, %v1520, -inf
      %v1972 = vsel %vm1850, %v1576, -inf
      %v1973 = vmax.f32 %v1971, %v1972
      %v1974 = vsel %vm1850, %v1527, -inf
      %v1975 = vsel %vm1850, %v1583, -inf
      %v1976 = vmax.f32 %v1974, %v1975
      %v1977 = vsel %vm1850, %v1534, -inf
      %v1978 = vsel %vm1850, %v1590, -inf
      %v1979 = vmax.f32 %v1977, %v1978
      %v1980 = vsel %vm1850, %v1541, -inf
      %v1981 = vsel %vm1850, %v1597, -inf
      %v1982 = vmax.f32 %v1980, %v1981
      %v1983 = vsel %vm1850, %v1548, -inf
      %v1984 = vsel %vm1850, %v1604, -inf
      %v1985 = vmax.f32 %v1983, %v1984
      %v1986 = vsel %vm1850, %v1555, -inf
      %v1987 = vsel %vm1850, %v1611, -inf
      %v1988 = vmax.f32 %v1986, %v1987
      %v1989 = vsel %vm1850, %v1562, -inf
      %v1990 = vsel %vm1850, %v1618, -inf
      %v1991 = vmax.f32 %v1989, %v1990
      %v1992 = vsel %vm1850, %v1569, -inf
      %v1993 = vsel %vm1850, %v1625, -inf
      %v1994 = vmax.f32 %v1992, %v1993
      %v1995 = vsel %vm1850, %v1632, -inf
      %v1996 = vsel %vm1850, %v1688, -inf
      %v1997 = vmax.f32 %v1995, %v1996
      %v1998 = vsel %vm1850, %v1639, -inf
      %v1999 = vsel %vm1850, %v1695, -inf
      %v2000 = vmax.f32 %v1998, %v1999
      %v2001 = vsel %vm1850, %v1646, -inf
      %v2002 = vsel %vm1850, %v1702, -inf
      %v2003 = vmax.f32 %v2001, %v2002
      %v2004 = vsel %vm1850, %v1653, -inf
      %v2005 = vsel %vm1850, %v1709, -inf
      %v2006 = vmax.f32 %v2004, %v2005
      %v2007 = vsel %vm1850, %v1660, -inf
      %v2008 = vsel %vm1850, %v1716, -inf
      %v2009 = vmax.f32 %v2007, %v2008
      %v2010 = vsel %vm1850, %v1667, -inf
      %v2011 = vsel %vm1850, %v1723, -inf
      %v2012 = vmax.f32 %v2010, %v2011
      %v2013 = vsel %vm1850, %v1674, -inf
      %v2014 = vsel %vm1850, %v1730, -inf
      %v2015 = vmax.f32 %v2013, %v2014
      %v2016 = vsel %vm1850, %v1681, -inf
      %v2017 = vsel %vm1850, %v1737, -inf
      %v2018 = vmax.f32 %v2016, %v2017
      %v2019 = vsel %vm1850, %v1744, -inf
      %v2020 = vsel %vm1850, %v1800, -inf
      %v2021 = vmax.f32 %v2019, %v2020
      %v2022 = vsel %vm1850, %v1751, -inf
      %v2023 = vsel %vm1850, %v1807, -inf
      %v2024 = vmax.f32 %v2022, %v2023
      %v2025 = vsel %vm1850, %v1758, -inf
      %v2026 = vsel %vm1850, %v1814, -inf
      %v2027 = vmax.f32 %v2025, %v2026
      %v2028 = vsel %vm1850, %v1765, -inf
      %v2029 = vsel %vm1850, %v1821, -inf
      %v2030 = vmax.f32 %v2028, %v2029
      %v2031 = vsel %vm1850, %v1772, -inf
      %v2032 = vsel %vm1850, %v1828, -inf
      %v2033 = vmax.f32 %v2031, %v2032
      %v2034 = vsel %vm1850, %v1779, -inf
      %v2035 = vsel %vm1850, %v1835, -inf
      %v2036 = vmax.f32 %v2034, %v2035
      %v2037 = vsel %vm1850, %v1786, -inf
      %v2038 = vsel %vm1850, %v1842, -inf
      %v2039 = vmax.f32 %v2037, %v2038
      %v2040 = vsel %vm1850, %v1793, -inf
      %v2041 = vsel %vm1850, %v1849, -inf
      %v2042 = vmax.f32 %v2040, %v2041
      %vm2107 = vcmask 1041409
      %v2108 = vsel %vm2107, %v1856, %v1853
      %vm2109 = vcmask 1042434
      %v2110 = vsel %vm2109, %v1859, %v2108
      %vm2111 = vcmask 1043459
      %v2112 = vsel %vm2111, %v1862, %v2110
      %vm2113 = vcmask 1044484
      %v2114 = vsel %vm2113, %v1865, %v2112
      %vm2115 = vcmask 1045509
      %v2116 = vsel %vm2115, %v1868, %v2114
      %vm2117 = vcmask 1046534
      %v2118 = vsel %vm2117, %v1871, %v2116
      %vm2119 = vcmask 1047559
      %v2120 = vsel %vm2119, %v1874, %v2118
      %v2121 = vsel %vm2107, %v1880, %v1877
      %v2122 = vsel %vm2109, %v1883, %v2121
      %v2123 = vsel %vm2111, %v1886, %v2122
      %v2124 = vsel %vm2113, %v1889, %v2123
      %v2125 = vsel %vm2115, %v1892, %v2124
      %v2126 = vsel %vm2117, %v1895, %v2125
      %v2127 = vsel %vm2119, %v1898, %v2126
      %v2128 = vsel %vm2107, %v1904, %v1901
      %v2129 = vsel %vm2109, %v1907, %v2128
      %v2130 = vsel %vm2111, %v1910, %v2129
      %v2131 = vsel %vm2113, %v1913, %v2130
      %v2132 = vsel %vm2115, %v1916, %v2131
      %v2133 = vsel %vm2117, %v1919, %v2132
      %v2134 = vsel %vm2119, %v1922, %v2133
      %v2135 = vsel %vm2107, %v1928, %v1925
      %v2136 = vsel %vm2109, %v1931, %v2135
      %v2137 = vsel %vm2111, %v1934, %v2136
      %v2138 = vsel %vm2113, %v1937, %v2137
      %v2139 = vsel %vm2115, %v1940, %v2138
      %v2140 = vsel %vm2117, %v1943, %v2139
      %v2141 = vsel %vm2119, %v1946, %v2140
      %v2142 = vsel %vm2107, %v1952, %v1949
      %v2143 = vsel %vm2109, %v1955, %v2142
      %v2144 = vsel %vm2111, %v1958, %v2143
      %v2145 = vsel %vm2113, %v1961, %v2144
      %v2146 = vsel %vm2115, %v1964, %v2145
      %v2147 = vsel %vm2117, %v1967, %v2146
      %v2148 = vsel %vm2119, %v1970, %v2147
      %v2149 = vsel %vm2107, %v1976, %v1973
      %v2150 = vsel %vm2109, %v1979, %v2149
      %v2151 = vsel %vm2111, %v1982, %v2150
      %v2152 = vsel %vm2113, %v1985, %v2151
      %v2153 = vsel %vm2115, %v1988, %v2152
      %v2154 = vsel %vm2117, %v1991, %v2153
      %v2155 = vsel %vm2119, %v1994, %v2154
      %v2156 = vsel %vm2107, %v2000, %v1997
      %v2157 = vsel %vm2109, %v2003, %v2156
      %v2158 = vsel %vm2111, %v2006, %v2157
      %v2159 = vsel %vm2113, %v2009, %v2158
      %v2160 = vsel %vm2115, %v2012, %v2159
      %v2161 = vsel %vm2117, %v2015, %v2160
      %v2162 = vsel %vm2119, %v2018, %v2161
      %v2163 = vsel %vm2107, %v2024, %v2021
      %v2164 = vsel %vm2109, %v2027, %v2163
      %v2165 = vsel %vm2111, %v2030, %v2164
      %v2166 = vsel %vm2113, %v2033, %v2165
      %v2167 = vsel %vm2115, %v2036, %v2166
      %v2168 = vsel %vm2117, %v2039, %v2167
      %v2169 = vsel %vm2119, %v2042, %v2168
      %2178 = vst.msk [vmem:[%s170] sm:$0xff] %vm1850, %v2120
      %2179 = vst.msk [vmem:[%s170 + $0x8] sm:$0xff] %vm1850, %v2127
      %2180 = vst.msk [vmem:[%s170 + $0x10] sm:$0xff] %vm1850, %v2134
      %2181 = vst.msk [vmem:[%s170 + $0x18] sm:$0xff] %vm1850, %v2141
      %2182 = vst.msk [vmem:[%s170 + $0x20] sm:$0xff] %vm1850, %v2148
      %2183 = vst.msk [vmem:[%s170 + $0x28] sm:$0xff] %vm1850, %v2155
      %2184 = vst.msk [vmem:[%s170 + $0x30] sm:$0xff] %vm1850, %v2162
      %2185 = vst.msk [vmem:[%s170 + $0x38] sm:$0xff] %vm1850, %v2169
      %p2186 = scmp.lt.s32.totalorder %s14, 1
      %s2187 = scalar_select %p2186, %s14, 1
      %s2188 = smul.addr %s2187, 8
      %s2189 = smul.addr %s2188, 8
      %s2190 = scalar_lea.vmem %s3, %s2189
      // Predicated region
      $region33: #{contracting_block_forward.5} parent=31 // pred_check
        %p2191 = pneg %p100
      $region34: #{contracting_block_forward.5} parent=31 // pred_check_branch
        %2193 = sbr.rel (%p2191) target = $region36
      $region35: #{contracting_block_forward.5} parent=31 // pred_region
        _
      $region36: #{contracting_block_forward.5} parent=31 // pred_fallthru
        _
    $region32: #{contracting_block_forward.5} parent=5 // pred_fallthru
      _
    %p2194 = scmp.le.s32.totalorder 2, %s9
    // Predicated region
    $region37: #{contracting_block_forward.5} parent=5 // pred_check
      %p2195 = pneg %p2194
    $region38: #{contracting_block_forward.5} parent=5 // pred_check_branch
      %2197 = sbr.rel (%p2195) target = $region40
    $region39: #{contracting_block_forward.5} parent=5 // pred_region
      %s2198 = ssub.s32 %s9, 2
      // Predicated region
      $region41: #{contracting_block_forward.5} parent=39 // pred_check
        %p2199 = pneg %p106
      $region42: #{contracting_block_forward.5} parent=39 // pred_check_branch
        %2201 = sbr.rel (%p2199) target = $region44
      $region43: #{contracting_block_forward.5} parent=39 // pred_region
        %p2202 = scmp.lt.s32.totalorder %s15, 1
        %s2203 = scalar_select %p2202, %s15, 1
        %s2204 = smul.addr %s2203, 8
        %s2205 = smul.addr %s2204, 8
        %s2206 = scalar_lea.vmem %s3, %s2205
      $region44: #{contracting_block_forward.5} parent=39 // pred_fallthru
        _
    $region40: #{contracting_block_forward.5} parent=5 // pred_fallthru
      _
  $region6: #{contracting_block_forward.5} parent=0 // loop_footer
    %s13 = sadd.s32 1, %s9
  $region7: #{contracting_block_forward.5} parent=0 // loop_footer_branch
    %8 = sbr.rel target = $region3
  $region8: #{contracting_block_forward.5} parent=0 // loop_exit
    _

// kernel: contracting_block_forward.3
$region0: #{contracting_block_forward.3}
  #allocation0 [shape = 'u32[]', space=smem, size = 0x4, offset = 0x4, fixed_abs, tag = 'smem constant byte address 0x4 - core index']
  #allocation1 [shape = 'u32[144,128]{1,0:T(1,128)}', space=vmem, size = 0x12000, scoped, tag = 'internal scratch']
  #allocation2 [shape = 'f32[18,18,4]{2,1,0:T(8,128)}', space=vmem, size = 0x36000, scoped, tag = 'scratch operand']
  #allocation3 [shape = 'f32[256,36]{1,0:T(8,128)}', space=vmem, size = 0x20000, scoped, tag = 'scratch operand']
  %s0 = inlined_call_operand.vmem [shape: f32[2,16,16,4], index: 0, kind: input, shape index: {}]
  %s1 = inlined_call_operand.vmem [shape: f32[36,8], index: 1, kind: input, shape index: {}]
  %s2 = inlined_call_operand.vmem [shape: f32[2,16,16,8], index: 2, kind: output, shape index: {0}]
  %s3 = inlined_call_operand.vmem [shape: f32[2,1,8], index: 3, kind: output, shape index: {1}]
  %s4 = inlined_call_operand.vmem [shape: f32[2,1,8], index: 4, kind: output, shape index: {2}]
  %5 = xla_tuple %s2, %s3, %s4
  %s6 = sld [smem:[#allocation0]]
  $region57: #{contracting_block_forward.3} parent=0
    _
  %s8 = ssub.s32 1, %s6
  %s9 = scalar_select 0, %s8, %s6
  loop: start=0, step=1, limit=4
  $region2: #{contracting_block_forward.3} parent=0 // loop_pre_header
    _
  $region3: #{contracting_block_forward.3} parent=0 // loop_header
    %s11 = sphi 0, %s15
    %p12 = scmp.ge.s32.totalorder %s11, 4
    %s21 = sphi 0, %s23
    %s24 = sphi 0, %s21
    %s25 = sphi 0, %s24
    %s41 = sphi 0, %s25
    %s45 = sphi 0, %s45
    %s47 = sphi 0, %s45
    %s48 = sphi 0, %s47
    %s62 = sphi 0, %s48
    %s68 = sphi 0, %s70
    %s71 = sphi 0, %s68
    %s72 = sphi 0, %s71
    %s88 = sphi 0, %s72
    %s94 = sphi 0, %s96
    %s97 = sphi 0, %s94
    %s98 = sphi 0, %s97
    %s114 = sphi 0, %s98
    %s120 = sphi 0, %s122
    %s123 = sphi 0, %s120
    %s124 = sphi 0, %s123
    %s140 = sphi 0, %s124
  $region4: #{contracting_block_forward.3} parent=0 // loop_header_branch
    %14 = sbr.rel (%p12) target = $region8
  $region5: #{contracting_block_forward.3} parent=0 // loop_body
    %s16 = ssub.s32 %s11, 1
    %s17 = ssub.s32 %s11, 2
    %s18 = sadd.s32 %s11, 1
    %s19 = ssub.s32 %s11, %s18
    %p20 = scmp.eq.s32.totalorder %s19, 0
    %s22 = sadd.s32 %s21, 1
    %s23 = scalar_select %p20, %s21, %s22
    %p26 = pneg %p20
    %p27 = scmp.eq.s32.totalorder %s11, 1
    %p28 = por %p26, %p27
    %p29 = scmp.ne.s32.totalorder %s21, %s24
    %p30 = scmp.eq.s32.totalorder %s11, 0
    %p31 = por %p29, %p30
    %p32 = scmp.ne.s32.totalorder %s21, %s24
    %p33 = scmp.eq.s32.totalorder %s16, 1
    %p34 = por %p32, %p33
    %p35 = scmp.ne.s32.totalorder %s24, %s25
    %p36 = scmp.eq.s32.totalorder %s16, 0
    %p37 = por %p35, %p36
    %p38 = scmp.ne.s32.totalorder %s24, %s25
    %p39 = scmp.eq.s32.totalorder %s17, 1
    %p40 = por %p38, %p39
    %p42 = scmp.ne.s32.totalorder %s25, %s41
    %p43 = scmp.eq.s32.totalorder %s17, 0
    %p44 = por %p42, %p43
    %s46 = sadd.s32 %s45, 1
    %p49 = scmp.eq.s32.totalorder %s11, 1
    %p50 = scmp.ne.s32.totalorder %s45, %s47
    %p51 = scmp.eq.s32.totalorder %s11, 0
    %p52 = por %p50, %p51
    %p53 = scmp.ne.s32.totalorder %s45, %s47
    %p54 = scmp.eq.s32.totalorder %s16, 1
    %p55 = por %p53, %p54
    %p56 = scmp.ne.s32.totalorder %s47, %s48
    %p57 = scmp.eq.s32.totalorder %s16, 0
    %p58 = por %p56, %p57
    %p59 = scmp.ne.s32.totalorder %s47, %s48
    %p60 = scmp.eq.s32.totalorder %s17, 1
    %p61 = por %p59, %p60
    %p63 = scmp.ne.s32.totalorder %s48, %s62
    %p64 = scmp.eq.s32.totalorder %s17, 0
    %p65 = por %p63, %p64
    %s66 = ssub.s32 %s11, %s18
    %p67 = scmp.eq.s32.totalorder %s66, 0
    %s69 = sadd.s32 %s68, 1
    %s70 = scalar_select %p67, %s68, %s69
    %p73 = pneg %p67
    %p74 = scmp.eq.s32.totalorder %s11, 1
    %p75 = por %p73, %p74
    %p76 = scmp.ne.s32.totalorder %s68, %s71
    %p77 = scmp.eq.s32.totalorder %s11, 0
    %p78 = por %p76, %p77
    %p79 = scmp.ne.s32.totalorder %s68, %s71
    %p80 = scmp.eq.s32.totalorder %s16, 1
    %p81 = por %p79, %p80
    %p82 = scmp.ne.s32.totalorder %s71, %s72
    %p83 = scmp.eq.s32.totalorder %s16, 0
    %p84 = por %p82, %p83
    %p85 = scmp.ne.s32.totalorder %s71, %s72
    %p86 = scmp.eq.s32.totalorder %s17, 1
    %p87 = por %p85, %p86
    %p89 = scmp.ne.s32.totalorder %s72, %s88
    %p90 = scmp.eq.s32.totalorder %s17, 0
    %p91 = por %p89, %p90
    %s92 = ssub.s32 %s11, %s18
    %p93 = scmp.eq.s32.totalorder %s92, 0
    %s95 = sadd.s32 %s94, 1
    %s96 = scalar_select %p93, %s94, %s95
    %p99 = pneg %p93
    %p100 = scmp.eq.s32.totalorder %s11, 1
    %p101 = por %p99, %p100
    %p102 = scmp.ne.s32.totalorder %s94, %s97
    %p103 = scmp.eq.s32.totalorder %s11, 0
    %p104 = por %p102, %p103
    %p105 = scmp.ne.s32.totalorder %s94, %s97
    %p106 = scmp.eq.s32.totalorder %s16, 1
    %p107 = por %p105, %p106
    %p108 = scmp.ne.s32.totalorder %s97, %s98
    %p109 = scmp.eq.s32.totalorder %s16, 0
    %p110 = por %p108, %p109
    %p111 = scmp.ne.s32.totalorder %s97, %s98
    %p112 = scmp.eq.s32.totalorder %s17, 1
    %p113 = por %p111, %p112
    %p115 = scmp.ne.s32.totalorder %s98, %s114
    %p116 = scmp.eq.s32.totalorder %s17, 0
    %p117 = por %p115, %p116
    %s118 = ssub.s32 %s11, %s18
    %p119 = scmp.eq.s32.totalorder %s118, 0
    %s121 = sadd.s32 %s120, 1
    %s122 = scalar_select %p119, %s120, %s121
    %p125 = pneg %p119
    %p126 = scmp.eq.s32.totalorder %s11, 1
    %p127 = por %p125, %p126
    %p128 = scmp.ne.s32.totalorder %s120, %s123
    %p129 = scmp.eq.s32.totalorder %s11, 0
    %p130 = por %p128, %p129
    %p131 = scmp.ne.s32.totalorder %s120, %s123
    %p132 = scmp.eq.s32.totalorder %s16, 1
    %p133 = por %p131, %p132
    %p134 = scmp.ne.s32.totalorder %s123, %s124
    %p135 = scmp.eq.s32.totalorder %s16, 0
    %p136 = por %p134, %p135
    %p137 = scmp.ne.s32.totalorder %s123, %s124
    %p138 = scmp.eq.s32.totalorder %s17, 1
    %p139 = por %p137, %p138
    %p141 = scmp.ne.s32.totalorder %s124, %s140
    %p142 = scmp.eq.s32.totalorder %s17, 0
    %p143 = por %p141, %p142
    %p144 = scmp.le.s32.totalorder 1, %s11
    %p145 = scmp.lt.s32.totalorder %s11, 3
    %p146 = pnand %p144, %p145
    %p147 = pneg %p146
    // Predicated region
    $region9: #{contracting_block_forward.3} parent=5 // pred_check
      _
    $region10: #{contracting_block_forward.3} parent=5 // pred_check_branch
      %149 = sbr.rel (%p146) target = $region12
    $region11: #{contracting_block_forward.3} parent=5 // pred_region
      %s150 = ssub.s32 %s11, 1
      // Predicated region
      $region13: #{contracting_block_forward.3} parent=11 // pred_check
        %p151 = pneg %p58
      $region14: #{contracting_block_forward.3} parent=11 // pred_check_branch
        %153 = sbr.rel (%p151) target = $region16
      $region15: #{contracting_block_forward.3} parent=11 // pred_region
        _
      $region16: #{contracting_block_forward.3} parent=11 // pred_fallthru
        _
    $region12: #{contracting_block_forward.3} parent=5 // pred_fallthru
      _
    %p154 = scmp.lt.s32.totalorder %s11, 2
    // Predicated region
    $region17: #{contracting_block_forward.3} parent=5 // pred_check
      %p155 = pneg %p154
    $region18: #{contracting_block_forward.3} parent=5 // pred_check_branch
      %157 = sbr.rel (%p155) target = $region20
    $region19: #{contracting_block_forward.3} parent=5 // pred_region
      // Predicated region
      $region21: #{contracting_block_forward.3} parent=19 // pred_check
        %p158 = pneg %p31
      $region22: #{contracting_block_forward.3} parent=19 // pred_check_branch
        %160 = sbr.rel (%p158) target = $region24
      $region23: #{contracting_block_forward.3} parent=19 // pred_region
        %p161 = scmp.lt.s32.totalorder %s11, 1
        %s162 = scalar_select %p161, %s11, 1
        %s163 = smul.addr %s162, 32
        %s164 = smul.addr %s163, 8
        %s165 = scalar_lea.vmem %s0, %s164
      $region24: #{contracting_block_forward.3} parent=19 // pred_fallthru
        _
    $region20: #{contracting_block_forward.3} parent=5 // pred_fallthru
      _
    %p166 = scmp.le.s32.totalorder 1, %s11
    %p167 = scmp.lt.s32.totalorder %s11, 3
    %p168 = pnand %p166, %p167
    %p169 = pneg %p168
    // Predicated region
    $region25: #{contracting_block_forward.3} parent=5 // pred_check
      _
    $region26: #{contracting_block_forward.3} parent=5 // pred_check_branch
      %171 = sbr.rel (%p168) target = $region28
    $region27: #{contracting_block_forward.3} parent=5 // pred_region
      %s172 = ssub.s32 %s11, 1
      %p173 = scmp.lt.s32.totalorder %s16, 1
      %s174 = scalar_select %p173, %s16, 1
      %s175 = smul.addr %s174, 32
      %s176 = smul.addr %s175, 8
      %s177 = scalar_lea.vmem %s0, %s176
      %p178 = pneg %p37
      %p179 = pneg %p34
      %p180 = pneg %p58
      %p181 = pneg %p55
      %p182 = pneg %p84
      %p183 = pneg %p81
      %p184 = scmp.lt.s32.totalorder %s16, 1
      %s185 = scalar_select %p184, %s16, 1
      %s186 = smul.addr %s185, 32
      %s187 = smul.addr %s186, 8
      %s188 = scalar_lea.vmem %s2, %s187
      %p189 = pneg %p110
      %p190 = pneg %p107
      %p191 = scmp.lt.s32.totalorder %s16, 1
      %s192 = scalar_select %p191, %s16, 1
      %s193 = scalar_lea.vmem %s3, %s192
      %p194 = pneg %p136
      %p195 = pneg %p133
      %p196 = scmp.lt.s32.totalorder %s16, 1
      %s197 = scalar_select %p196, %s16, 1
      %s198 = scalar_lea.vmem %s4, %s197
      %p199 = scmp.lt.s32.totalorder %s16, 1
      %s200 = scalar_select %p199, %s16, 1
      %s201 = smul.addr %s200, 32
      %s202 = smul.addr %s201, 8
      %s203 = scalar_lea.vmem %s0, %s202
      %p204 = scmp.lt.s32.totalorder %s16, 1
      %s205 = scalar_select %p204, %s16, 1
      %s206 = smul.addr %s205, 32
      %s207 = smul.addr %s206, 8
      %s208 = scalar_lea.vmem %s2, %s207
      %p209 = scmp.lt.s32.totalorder %s16, 1
      %s210 = scalar_select %p209, %s16, 1
      %s211 = scalar_lea.vmem %s3, %s210
      %p212 = scmp.lt.s32.totalorder %s16, 1
      %s213 = scalar_select %p212, %s16, 1
      %s214 = scalar_lea.vmem %s4, %s213
      %v215 = vld [vmem:[%s203] sm:$0xff]
      %v216 = vld [vmem:[%s203 + $0x8] sm:$0xff]
      %v217 = vld [vmem:[%s203 + $0x10] sm:$0xff]
      %v218 = vld [vmem:[%s203 + $0x18] sm:$0xff]
      %v219 = vld [vmem:[%s203 + $0x20] sm:$0xff]
      %v220 = vld [vmem:[%s203 + $0x28] sm:$0xff]
      %v221 = vld [vmem:[%s203 + $0x30] sm:$0xff]
      %v222 = vld [vmem:[%s203 + $0x38] sm:$0xff]
      %v223 = vld [vmem:[%s203 + $0x40] sm:$0xff]
      %v224 = vld [vmem:[%s203 + $0x48] sm:$0xff]
      %v225 = vld [vmem:[%s203 + $0x50] sm:$0xff]
      %v226 = vld [vmem:[%s203 + $0x58] sm:$0xff]
      %v227 = vld [vmem:[%s203 + $0x60] sm:$0xff]
      %v228 = vld [vmem:[%s203 + $0x68] sm:$0xff]
      %v229 = vld [vmem:[%s203 + $0x70] sm:$0xff]
      %v230 = vld [vmem:[%s203 + $0x78] sm:$0xff]
      %v231 = vld [vmem:[%s203 + $0x80] sm:$0xff]
      %v232 = vld [vmem:[%s203 + $0x88] sm:$0xff]
      %v233 = vld [vmem:[%s203 + $0x90] sm:$0xff]
      %v234 = vld [vmem:[%s203 + $0x98] sm:$0xff]
      %v235 = vld [vmem:[%s203 + $0xa0] sm:$0xff]
      %v236 = vld [vmem:[%s203 + $0xa8] sm:$0xff]
      %v237 = vld [vmem:[%s203 + $0xb0] sm:$0xff]
      %v238 = vld [vmem:[%s203 + $0xb8] sm:$0xff]
      %v239 = vld [vmem:[%s203 + $0xc0] sm:$0xff]
      %v240 = vld [vmem:[%s203 + $0xc8] sm:$0xff]
      %v241 = vld [vmem:[%s203 + $0xd0] sm:$0xff]
      %v242 = vld [vmem:[%s203 + $0xd8] sm:$0xff]
      %v243 = vld [vmem:[%s203 + $0xe0] sm:$0xff]
      %v244 = vld [vmem:[%s203 + $0xe8] sm:$0xff]
      %v245 = vld [vmem:[%s203 + $0xf0] sm:$0xff]
      %v246 = vld [vmem:[%s203 + $0xf8] sm:$0xff]
      %vm247 = vcmask 31744
      %248 = vst.msk [vmem:[#allocation2] sm:$0xff] %vm247, 0.0
      %249 = vst.msk [vmem:[#allocation2 + $0x8] sm:$0xff] %vm247, 0.0
      %vm250 = vcmask 25600
      %251 = vst.msk [vmem:[#allocation2 + $0x10] sm:$0x3] %vm250, 0.0
      %252 = vst.msk [vmem:[#allocation2 + $0x18] sm:$0xff] %vm247, 0.0
      %253 = vst.msk [vmem:[#allocation2 + $0x20] sm:$0xff] %vm247, 0.0
      %254 = vst.msk [vmem:[#allocation2 + $0x28] sm:$0x3] %vm250, 0.0
      %255 = vst.msk [vmem:[#allocation2 + $0x30] sm:$0xff] %vm247, 0.0
      %256 = vst.msk [vmem:[#allocation2 + $0x38] sm:$0xff] %vm247, 0.0
      %257 = vst.msk [vmem:[#allocation2 + $0x40] sm:$0x3] %vm250, 0.0
      %258 = vst.msk [vmem:[#allocation2 + $0x48] sm:$0xff] %vm247, 0.0
      %259 = vst.msk [vmem:[#allocation2 + $0x50] sm:$0xff] %vm247, 0.0
      %260 = vst.msk [vmem:[#allocation2 + $0x58] sm:$0x3] %vm250, 0.0
      %261 = vst.msk [vmem:[#allocation2 + $0x60] sm:$0xff] %vm247, 0.0
      %262 = vst.msk [vmem:[#allocation2 + $0x68] sm:$0xff] %vm247, 0.0
      %263 = vst.msk [vmem:[#allocation2 + $0x70] sm:$0x3] %vm250, 0.0
      %264 = vst.msk [vmem:[#allocation2 + $0x78] sm:$0xff] %vm247, 0.0
      %265 = vst.msk [vmem:[#allocation2 + $0x80] sm:$0xff] %vm247, 0.0
      %266 = vst.msk [vmem:[#allocation2 + $0x88] sm:$0x3] %vm250, 0.0
      %267 = vst.msk [vmem:[#allocation2 + $0x90] sm:$0xff] %vm247, 0.0
      %268 = vst.msk [vmem:[#allocation2 + $0x98] sm:$0xff] %vm247, 0.0
      %269 = vst.msk [vmem:[#allocation2 + $0xa0] sm:$0x3] %vm250, 0.0
      %270 = vst.msk [vmem:[#allocation2 + $0xa8] sm:$0xff] %vm247, 0.0
      %271 = vst.msk [vmem:[#allocation2 + $0xb0] sm:$0xff] %vm247, 0.0
      %272 = vst.msk [vmem:[#allocation2 + $0xb8] sm:$0x3] %vm250, 0.0
      %273 = vst.msk [vmem:[#allocation2 + $0xc0] sm:$0xff] %vm247, 0.0
      %274 = vst.msk [vmem:[#allocation2 + $0xc8] sm:$0xff] %vm247, 0.0
      %275 = vst.msk [vmem:[#allocation2 + $0xd0] sm:$0x3] %vm250, 0.0
      %276 = vst.msk [vmem:[#allocation2 + $0xd8] sm:$0xff] %vm247, 0.0
      %277 = vst.msk [vmem:[#allocation2 + $0xe0] sm:$0xff] %vm247, 0.0
      %278 = vst.msk [vmem:[#allocation2 + $0xe8] sm:$0x3] %vm250, 0.0
      %279 = vst.msk [vmem:[#allocation2 + $0xf0] sm:$0xff] %vm247, 0.0
      %280 = vst.msk [vmem:[#allocation2 + $0xf8] sm:$0xff] %vm247, 0.0
      %281 = vst.msk [vmem:[#allocation2 + $0x100] sm:$0x3] %vm250, 0.0
      %282 = vst.msk [vmem:[#allocation2 + $0x108] sm:$0xff] %vm247, 0.0
      %283 = vst.msk [vmem:[#allocation2 + $0x110] sm:$0xff] %vm247, 0.0
      %284 = vst.msk [vmem:[#allocation2 + $0x118] sm:$0x3] %vm250, 0.0
      %285 = vst.msk [vmem:[#allocation2 + $0x120] sm:$0xff] %vm247, 0.0
      %286 = vst.msk [vmem:[#allocation2 + $0x128] sm:$0xff] %vm247, 0.0
      %287 = vst.msk [vmem:[#allocation2 + $0x130] sm:$0x3] %vm250, 0.0
      %288 = vst.msk [vmem:[#allocation2 + $0x138] sm:$0xff] %vm247, 0.0
      %289 = vst.msk [vmem:[#allocation2 + $0x140] sm:$0xff] %vm247, 0.0
      %290 = vst.msk [vmem:[#allocation2 + $0x148] sm:$0x3] %vm250, 0.0
      %291 = vst.msk [vmem:[#allocation2 + $0x150] sm:$0xff] %vm247, 0.0
      %292 = vst.msk [vmem:[#allocation2 + $0x158] sm:$0xff] %vm247, 0.0
      %293 = vst.msk [vmem:[#allocation2 + $0x160] sm:$0x3] %vm250, 0.0
      %294 = vst.msk [vmem:[#allocation2 + $0x168] sm:$0xff] %vm247, 0.0
      %295 = vst.msk [vmem:[#allocation2 + $0x170] sm:$0xff] %vm247, 0.0
      %296 = vst.msk [vmem:[#allocation2 + $0x178] sm:$0x3] %vm250, 0.0
      %297 = vst.msk [vmem:[#allocation2 + $0x180] sm:$0xff] %vm247, 0.0
      %298 = vst.msk [vmem:[#allocation2 + $0x188] sm:$0xff] %vm247, 0.0
      %299 = vst.msk [vmem:[#allocation2 + $0x190] sm:$0x3] %vm250, 0.0
      %300 = vst.msk [vmem:[#allocation2 + $0x198] sm:$0xff] %vm247, 0.0
      %301 = vst.msk [vmem:[#allocation2 + $0x1a0] sm:$0xff] %vm247, 0.0
      %302 = vst.msk [vmem:[#allocation2 + $0x1a8] sm:$0x3] %vm250, 0.0
      %s303 = scalar_lea.vmem [#allocation2], 24
      %304 = vst.msk [vmem:[%s303 + $0x1] sm:$0xff] %vm247, %v215
      %305 = vst.msk [vmem:[%s303 + $0x9] sm:$0xff] %vm247, %v216
      %306 = vst.msk [vmem:[%s303 + $0x19] sm:$0xff] %vm247, %v217
      %307 = vst.msk [vmem:[%s303 + $0x21] sm:$0xff] %vm247, %v218
      %308 = vst.msk [vmem:[%s303 + $0x31] sm:$0xff] %vm247, %v219
      %309 = vst.msk [vmem:[%s303 + $0x39] sm:$0xff] %vm247, %v220
      %310 = vst.msk [vmem:[%s303 + $0x49] sm:$0xff] %vm247, %v221
      %311 = vst.msk [vmem:[%s303 + $0x51] sm:$0xff] %vm247, %v222
      %312 = vst.msk [vmem:[%s303 + $0x61] sm:$0xff] %vm247, %v223
      %313 = vst.msk [vmem:[%s303 + $0x69] sm:$0xff] %vm247, %v224
      %314 = vst.msk [vmem:[%s303 + $0x79] sm:$0xff] %vm247, %v225
      %315 = vst.msk [vmem:[%s303 + $0x81] sm:$0xff] %vm247, %v226
      %316 = vst.msk [vmem:[%s303 + $0x91] sm:$0xff] %vm247, %v227
      %317 = vst.msk [vmem:[%s303 + $0x99] sm:$0xff] %vm247, %v228
      %318 = vst.msk [vmem:[%s303 + $0xa9] sm:$0xff] %vm247, %v229
      %319 = vst.msk [vmem:[%s303 + $0xb1] sm:$0xff] %vm247, %v230
      %320 = vst.msk [vmem:[%s303 + $0xc1] sm:$0xff] %vm247, %v231
      %321 = vst.msk [vmem:[%s303 + $0xc9] sm:$0xff] %vm247, %v232
      %322 = vst.msk [vmem:[%s303 + $0xd9] sm:$0xff] %vm247, %v233
      %323 = vst.msk [vmem:[%s303 + $0xe1] sm:$0xff] %vm247, %v234
      %324 = vst.msk [vmem:[%s303 + $0xf1] sm:$0xff] %vm247, %v235
      %325 = vst.msk [vmem:[%s303 + $0xf9] sm:$0xff] %vm247, %v236
      %326 = vst.msk [vmem:[%s303 + $0x109] sm:$0xff] %vm247, %v237
      %327 = vst.msk [vmem:[%s303 + $0x111] sm:$0xff] %vm247, %v238
      %328 = vst.msk [vmem:[%s303 + $0x121] sm:$0xff] %vm247, %v239
      %329 = vst.msk [vmem:[%s303 + $0x129] sm:$0xff] %vm247, %v240
      %330 = vst.msk [vmem:[%s303 + $0x139] sm:$0xff] %vm247, %v241
      %331 = vst.msk [vmem:[%s303 + $0x141] sm:$0xff] %vm247, %v242
      %332 = vst.msk [vmem:[%s303 + $0x151] sm:$0xff] %vm247, %v243
      %333 = vst.msk [vmem:[%s303 + $0x159] sm:$0xff] %vm247, %v244
      %334 = vst.msk [vmem:[%s303 + $0x169] sm:$0xff] %vm247, %v245
      %335 = vst.msk [vmem:[%s303 + $0x171] sm:$0xff] %vm247, %v246
      %v336 = vld [vmem:[#allocation2] sm:$0xff]
      %v337 = vld [vmem:[#allocation2 + $0x8] sm:$0xff]
      %v338 = vld [vmem:[#allocation2 + $0x18] sm:$0xff]
      %v339 = vld [vmem:[#allocation2 + $0x20] sm:$0xff]
      %v340 = vld [vmem:[#allocation2 + $0x30] sm:$0xff]
      %v341 = vld [vmem:[#allocation2 + $0x38] sm:$0xff]
      %v342 = vld [vmem:[#allocation2 + $0x48] sm:$0xff]
      %v343 = vld [vmem:[#allocation2 + $0x50] sm:$0xff]
      %v344 = vld [vmem:[#allocation2 + $0x60] sm:$0xff]
      %v345 = vld [vmem:[#allocation2 + $0x68] sm:$0xff]
      %v346 = vld [vmem:[#allocation2 + $0x78] sm:$0xff]
      %v347 = vld [vmem:[#allocation2 + $0x80] sm:$0xff]
      %v348 = vld [vmem:[#allocation2 + $0x90] sm:$0xff]
      %v349 = vld [vmem:[#allocation2 + $0x98] sm:$0xff]
      %v350 = vld [vmem:[#allocation2 + $0xa8] sm:$0xff]
      %v351 = vld [vmem:[#allocation2 + $0xb0] sm:$0xff]
      %v352 = vld [vmem:[#allocation2 + $0xc0] sm:$0xff]
      %v353 = vld [vmem:[#allocation2 + $0xc8] sm:$0xff]
      %v354 = vld [vmem:[#allocation2 + $0xd8] sm:$0xff]
      %v355 = vld [vmem:[#allocation2 + $0xe0] sm:$0xff]
      %v356 = vld [vmem:[#allocation2 + $0xf0] sm:$0xff]
      %v357 = vld [vmem:[#allocation2 + $0xf8] sm:$0xff]
      %v358 = vld [vmem:[#allocation2 + $0x108] sm:$0xff]
      %v359 = vld [vmem:[#allocation2 + $0x110] sm:$0xff]
      %v360 = vld [vmem:[#allocation2 + $0x120] sm:$0xff]
      %v361 = vld [vmem:[#allocation2 + $0x128] sm:$0xff]
      %v362 = vld [vmem:[#allocation2 + $0x138] sm:$0xff]
      %v363 = vld [vmem:[#allocation2 + $0x140] sm:$0xff]
      %v364 = vld [vmem:[#allocation2 + $0x150] sm:$0xff]
      %v365 = vld [vmem:[#allocation2 + $0x158] sm:$0xff]
      %v366 = vld [vmem:[#allocation2 + $0x168] sm:$0xff]
      %v367 = vld [vmem:[#allocation2 + $0x170] sm:$0xff]
      %368 = vst.msk [vmem:[#allocation3] sm:$0xff] %vm247, %v336
      %369 = vst.msk [vmem:[#allocation3 + $0x8] sm:$0xff] %vm247, %v337
      %370 = vst.msk [vmem:[#allocation3 + $0x10] sm:$0xff] %vm247, %v338
      %371 = vst.msk [vmem:[#allocation3 + $0x18] sm:$0xff] %vm247, %v339
      %372 = vst.msk [vmem:[#allocation3 + $0x20] sm:$0xff] %vm247, %v340
      %373 = vst.msk [vmem:[#allocation3 + $0x28] sm:$0xff] %vm247, %v341
      %374 = vst.msk [vmem:[#allocation3 + $0x30] sm:$0xff] %vm247, %v342
      %375 = vst.msk [vmem:[#allocation3 + $0x38] sm:$0xff] %vm247, %v343
      %376 = vst.msk [vmem:[#allocation3 + $0x40] sm:$0xff] %vm247, %v344
      %377 = vst.msk [vmem:[#allocation3 + $0x48] sm:$0xff] %vm247, %v345
      %378 = vst.msk [vmem:[#allocation3 + $0x50] sm:$0xff] %vm247, %v346
      %379 = vst.msk [vmem:[#allocation3 + $0x58] sm:$0xff] %vm247, %v347
      %380 = vst.msk [vmem:[#allocation3 + $0x60] sm:$0xff] %vm247, %v348
      %381 = vst.msk [vmem:[#allocation3 + $0x68] sm:$0xff] %vm247, %v349
      %382 = vst.msk [vmem:[#allocation3 + $0x70] sm:$0xff] %vm247, %v350
      %383 = vst.msk [vmem:[#allocation3 + $0x78] sm:$0xff] %vm247, %v351
      %384 = vst.msk [vmem:[#allocation3 + $0x80] sm:$0xff] %vm247, %v352
      %385 = vst.msk [vmem:[#allocation3 + $0x88] sm:$0xff] %vm247, %v353
      %386 = vst.msk [vmem:[#allocation3 + $0x90] sm:$0xff] %vm247, %v354
      %387 = vst.msk [vmem:[#allocation3 + $0x98] sm:$0xff] %vm247, %v355
      %388 = vst.msk [vmem:[#allocation3 + $0xa0] sm:$0xff] %vm247, %v356
      %389 = vst.msk [vmem:[#allocation3 + $0xa8] sm:$0xff] %vm247, %v357
      %390 = vst.msk [vmem:[#allocation3 + $0xb0] sm:$0xff] %vm247, %v358
      %391 = vst.msk [vmem:[#allocation3 + $0xb8] sm:$0xff] %vm247, %v359
      %392 = vst.msk [vmem:[#allocation3 + $0xc0] sm:$0xff] %vm247, %v360
      %393 = vst.msk [vmem:[#allocation3 + $0xc8] sm:$0xff] %vm247, %v361
      %394 = vst.msk [vmem:[#allocation3 + $0xd0] sm:$0xff] %vm247, %v362
      %395 = vst.msk [vmem:[#allocation3 + $0xd8] sm:$0xff] %vm247, %v363
      %396 = vst.msk [vmem:[#allocation3 + $0xe0] sm:$0xff] %vm247, %v364
      %397 = vst.msk [vmem:[#allocation3 + $0xe8] sm:$0xff] %vm247, %v365
      %398 = vst.msk [vmem:[#allocation3 + $0xf0] sm:$0xff] %vm247, %v366
      %399 = vst.msk [vmem:[#allocation3 + $0xf8] sm:$0xff] %vm247, %v367
      %v400 = vld [vmem:[#allocation2 + $0x1] sm:$0xff]
      %v401 = vld [vmem:[#allocation2 + $0x9] sm:$0xff]
      %v402 = vld [vmem:[#allocation2 + $0x19] sm:$0xff]
      %v403 = vld [vmem:[#allocation2 + $0x21] sm:$0xff]
      %v404 = vld [vmem:[#allocation2 + $0x31] sm:$0xff]
      %v405 = vld [vmem:[#allocation2 + $0x39] sm:$0xff]
      %v406 = vld [vmem:[#allocation2 + $0x49] sm:$0xff]
      %v407 = vld [vmem:[#allocation2 + $0x51] sm:$0xff]
      %v408 = vld [vmem:[#allocation2 + $0x61] sm:$0xff]
      %v409 = vld [vmem:[#allocation2 + $0x69] sm:$0xff]
      %v410 = vld [vmem:[#allocation2 + $0x79] sm:$0xff]
      %v411 = vld [vmem:[#allocation2 + $0x81] sm:$0xff]
      %v412 = vld [vmem:[#allocation2 + $0x91] sm:$0xff]
      %v413 = vld [vmem:[#allocation2 + $0x99] sm:$0xff]
      %v414 = vld [vmem:[#allocation2 + $0xa9] sm:$0xff]
      %v415 = vld [vmem:[#allocation2 + $0xb1] sm:$0xff]
      %v416 = vld [vmem:[#allocation2 + $0xc1] sm:$0xff]
      %v417 = vld [vmem:[#allocation2 + $0xc9] sm:$0xff]
      %v418 = vld [vmem:[#allocation2 + $0xd9] sm:$0xff]
      %v419 = vld [vmem:[#allocation2 + $0xe1] sm:$0xff]
      %v420 = vld [vmem:[#allocation2 + $0xf1] sm:$0xff]
      %v421 = vld [vmem:[#allocation2 + $0xf9] sm:$0xff]
      %v422 = vld [vmem:[#allocation2 + $0x109] sm:$0xff]
      %v423 = vld [vmem:[#allocation2 + $0x111] sm:$0xff]
      %v424 = vld [vmem:[#allocation2 + $0x121] sm:$0xff]
      %v425 = vld [vmem:[#allocation2 + $0x129] sm:$0xff]
      %v426 = vld [vmem:[#allocation2 + $0x139] sm:$0xff]
      %v427 = vld [vmem:[#allocation2 + $0x141] sm:$0xff]
      %v428 = vld [vmem:[#allocation2 + $0x151] sm:$0xff]
      %v429 = vld [vmem:[#allocation2 + $0x159] sm:$0xff]
      %v430 = vld [vmem:[#allocation2 + $0x169] sm:$0xff]
      %v431 = vld [vmem:[#allocation2 + $0x171] sm:$0xff]
      %464 = vrot.lane.b32.xlu0 %v400, 4
      %v465 = vpop.permute.xlu0 %464
      %466 = vrot.lane.b32.xlu0 %v401, 4
      %v467 = vpop.permute.xlu0 %466
      %468 = vrot.lane.b32.xlu0 %v402, 4
      %v469 = vpop.permute.xlu0 %468
      %470 = vrot.lane.b32.xlu0 %v403, 4
      %v471 = vpop.permute.xlu0 %470
      %472 = vrot.lane.b32.xlu0 %v404, 4
      %v473 = vpop.permute.xlu0 %472
      %474 = vrot.lane.b32.xlu0 %v405, 4
      %v475 = vpop.permute.xlu0 %474
      %476 = vrot.lane.b32.xlu0 %v406, 4
      %v477 = vpop.permute.xlu0 %476
      %478 = vrot.lane.b32.xlu0 %v407, 4
      %v479 = vpop.permute.xlu0 %478
      %480 = vrot.lane.b32.xlu0 %v408, 4
      %v481 = vpop.permute.xlu0 %480
      %482 = vrot.lane.b32.xlu0 %v409, 4
      %v483 = vpop.permute.xlu0 %482
      %484 = vrot.lane.b32.xlu0 %v410, 4
      %v485 = vpop.permute.xlu0 %484
      %486 = vrot.lane.b32.xlu0 %v411, 4
      %v487 = vpop.permute.xlu0 %486
      %488 = vrot.lane.b32.xlu0 %v412, 4
      %v489 = vpop.permute.xlu0 %488
      %490 = vrot.lane.b32.xlu0 %v413, 4
      %v491 = vpop.permute.xlu0 %490
      %492 = vrot.lane.b32.xlu0 %v414, 4
      %v493 = vpop.permute.xlu0 %492
      %494 = vrot.lane.b32.xlu0 %v415, 4
      %v495 = vpop.permute.xlu0 %494
      %496 = vrot.lane.b32.xlu0 %v416, 4
      %v497 = vpop.permute.xlu0 %496
      %498 = vrot.lane.b32.xlu0 %v417, 4
      %v499 = vpop.permute.xlu0 %498
      %500 = vrot.lane.b32.xlu0 %v418, 4
      %v501 = vpop.permute.xlu0 %500
      %502 = vrot.lane.b32.xlu0 %v419, 4
      %v503 = vpop.permute.xlu0 %502
      %504 = vrot.lane.b32.xlu0 %v420, 4
      %v505 = vpop.permute.xlu0 %504
      %506 = vrot.lane.b32.xlu0 %v421, 4
      %v507 = vpop.permute.xlu0 %506
      %508 = vrot.lane.b32.xlu0 %v422, 4
      %v509 = vpop.permute.xlu0 %508
      %510 = vrot.lane.b32.xlu0 %v423, 4
      %v511 = vpop.permute.xlu0 %510
      %512 = vrot.lane.b32.xlu0 %v424, 4
      %v513 = vpop.permute.xlu0 %512
      %514 = vrot.lane.b32.xlu0 %v425, 4
      %v515 = vpop.permute.xlu0 %514
      %516 = vrot.lane.b32.xlu0 %v426, 4
      %v517 = vpop.permute.xlu0 %516
      %518 = vrot.lane.b32.xlu0 %v427, 4
      %v519 = vpop.permute.xlu0 %518
      %520 = vrot.lane.b32.xlu0 %v428, 4
      %v521 = vpop.permute.xlu0 %520
      %522 = vrot.lane.b32.xlu0 %v429, 4
      %v523 = vpop.permute.xlu0 %522
      %524 = vrot.lane.b32.xlu0 %v430, 4
      %v525 = vpop.permute.xlu0 %524
      %526 = vrot.lane.b32.xlu0 %v431, 4
      %v527 = vpop.permute.xlu0 %526
      %vm560 = vcmask 64544
      %561 = vst.msk [vmem:[#allocation3] sm:$0xff] %vm560, %v465
      %562 = vst.msk [vmem:[#allocation3 + $0x8] sm:$0xff] %vm560, %v467
      %563 = vst.msk [vmem:[#allocation3 + $0x10] sm:$0xff] %vm560, %v469
      %564 = vst.msk [vmem:[#allocation3 + $0x18] sm:$0xff] %vm560, %v471
      %565 = vst.msk [vmem:[#allocation3 + $0x20] sm:$0xff] %vm560, %v473
      %566 = vst.msk [vmem:[#allocation3 + $0x28] sm:$0xff] %vm560, %v475
      %567 = vst.msk [vmem:[#allocation3 + $0x30] sm:$0xff] %vm560, %v477
      %568 = vst.msk [vmem:[#allocation3 + $0x38] sm:$0xff] %vm560, %v479
      %569 = vst.msk [vmem:[#allocation3 + $0x40] sm:$0xff] %vm560, %v481
      %570 = vst.msk [vmem:[#allocation3 + $0x48] sm:$0xff] %vm560, %v483
      %571 = vst.msk [vmem:[#allocation3 + $0x50] sm:$0xff] %vm560, %v485
      %572 = vst.msk [vmem:[#allocation3 + $0x58] sm:$0xff] %vm560, %v487
      %573 = vst.msk [vmem:[#allocation3 + $0x60] sm:$0xff] %vm560, %v489
      %574 = vst.msk [vmem:[#allocation3 + $0x68] sm:$0xff] %vm560, %v491
      %575 = vst.msk [vmem:[#allocation3 + $0x70] sm:$0xff] %vm560, %v493
      %576 = vst.msk [vmem:[#allocation3 + $0x78] sm:$0xff] %vm560, %v495
      %577 = vst.msk [vmem:[#allocation3 + $0x80] sm:$0xff] %vm560, %v497
      %578 = vst.msk [vmem:[#allocation3 + $0x88] sm:$0xff] %vm560, %v499
      %579 = vst.msk [vmem:[#allocation3 + $0x90] sm:$0xff] %vm560, %v501
      %580 = vst.msk [vmem:[#allocation3 + $0x98] sm:$0xff] %vm560, %v503
      %581 = vst.msk [vmem:[#allocation3 + $0xa0] sm:$0xff] %vm560, %v505
      %582 = vst.msk [vmem:[#allocation3 + $0xa8] sm:$0xff] %vm560, %v507
      %583 = vst.msk [vmem:[#allocation3 + $0xb0] sm:$0xff] %vm560, %v509
      %584 = vst.msk [vmem:[#allocation3 + $0xb8] sm:$0xff] %vm560, %v511
      %585 = vst.msk [vmem:[#allocation3 + $0xc0] sm:$0xff] %vm560, %v513
      %586 = vst.msk [vmem:[#allocation3 + $0xc8] sm:$0xff] %vm560, %v515
      %587 = vst.msk [vmem:[#allocation3 + $0xd0] sm:$0xff] %vm560, %v517
      %588 = vst.msk [vmem:[#allocation3 + $0xd8] sm:$0xff] %vm560, %v519
      %589 = vst.msk [vmem:[#allocation3 + $0xe0] sm:$0xff] %vm560, %v521
      %590 = vst.msk [vmem:[#allocation3 + $0xe8] sm:$0xff] %vm560, %v523
      %591 = vst.msk [vmem:[#allocation3 + $0xf0] sm:$0xff] %vm560, %v525
      %592 = vst.msk [vmem:[#allocation3 + $0xf8] sm:$0xff] %vm560, %v527
      %v593 = vld [vmem:[#allocation2 + $0x2] sm:$0xff]
      %v594 = vld [vmem:[#allocation2 + $0xa] sm:$0xff]
      %v595 = vld [vmem:[#allocation2 + $0x1a] sm:$0xff]
      %v596 = vld [vmem:[#allocation2 + $0x22] sm:$0xff]
      %v597 = vld [vmem:[#allocation2 + $0x32] sm:$0xff]
      %v598 = vld [vmem:[#allocation2 + $0x3a] sm:$0xff]
      %v599 = vld [vmem:[#allocation2 + $0x4a] sm:$0xff]
      %v600 = vld [vmem:[#allocation2 + $0x52] sm:$0xff]
      %v601 = vld [vmem:[#allocation2 + $0x62] sm:$0xff]
      %v602 = vld [vmem:[#allocation2 + $0x6a] sm:$0xff]
      %v603 = vld [vmem:[#allocation2 + $0x7a] sm:$0xff]
      %v604 = vld [vmem:[#allocation2 + $0x82] sm:$0xff]
      %v605 = vld [vmem:[#allocation2 + $0x92] sm:$0xff]
      %v606 = vld [vmem:[#allocation2 + $0x9a] sm:$0xff]
      %v607 = vld [vmem:[#allocation2 + $0xaa] sm:$0xff]
      %v608 = vld [vmem:[#allocation2 + $0xb2] sm:$0xff]
      %v609 = vld [vmem:[#allocation2 + $0xc2] sm:$0xff]
      %v610 = vld [vmem:[#allocation2 + $0xca] sm:$0xff]
      %v611 = vld [vmem:[#allocation2 + $0xda] sm:$0xff]
      %v612 = vld [vmem:[#allocation2 + $0xe2] sm:$0xff]
      %v613 = vld [vmem:[#allocation2 + $0xf2] sm:$0xff]
      %v614 = vld [vmem:[#allocation2 + $0xfa] sm:$0xff]
      %v615 = vld [vmem:[#allocation2 + $0x10a] sm:$0xff]
      %v616 = vld [vmem:[#allocation2 + $0x112] sm:$0xff]
      %v617 = vld [vmem:[#allocation2 + $0x122] sm:$0xff]
      %v618 = vld [vmem:[#allocation2 + $0x12a] sm:$0xff]
      %v619 = vld [vmem:[#allocation2 + $0x13a] sm:$0xff]
      %v620 = vld [vmem:[#allocation2 + $0x142] sm:$0xff]
      %v621 = vld [vmem:[#allocation2 + $0x152] sm:$0xff]
      %v622 = vld [vmem:[#allocation2 + $0x15a] sm:$0xff]
      %v623 = vld [vmem:[#allocation2 + $0x16a] sm:$0xff]
      %v624 = vld [vmem:[#allocation2 + $0x172] sm:$0xff]
      %657 = vrot.lane.b32.xlu0 %v593, 8
      %v658 = vpop.permute.xlu0 %657
      %659 = vrot.lane.b32.xlu0 %v594, 8
      %v660 = vpop.permute.xlu0 %659
      %661 = vrot.lane.b32.xlu0 %v595, 8
      %v662 = vpop.permute.xlu0 %661
      %663 = vrot.lane.b32.xlu0 %v596, 8
      %v664 = vpop.permute.xlu0 %663
      %665 = vrot.lane.b32.xlu0 %v597, 8
      %v666 = vpop.permute.xlu0 %665
      %667 = vrot.lane.b32.xlu0 %v598, 8
      %v668 = vpop.permute.xlu0 %667
      %669 = vrot.lane.b32.xlu0 %v599, 8
      %v670 = vpop.permute.xlu0 %669
      %671 = vrot.lane.b32.xlu0 %v600, 8
      %v672 = vpop.permute.xlu0 %671
      %673 = vrot.lane.b32.xlu0 %v601, 8
      %v674 = vpop.permute.xlu0 %673
      %675 = vrot.lane.b32.xlu0 %v602, 8
      %v676 = vpop.permute.xlu0 %675
      %677 = vrot.lane.b32.xlu0 %v603, 8
      %v678 = vpop.permute.xlu0 %677
      %679 = vrot.lane.b32.xlu0 %v604, 8
      %v680 = vpop.permute.xlu0 %679
      %681 = vrot.lane.b32.xlu0 %v605, 8
      %v682 = vpop.permute.xlu0 %681
      %683 = vrot.lane.b32.xlu0 %v606, 8
      %v684 = vpop.permute.xlu0 %683
      %685 = vrot.lane.b32.xlu0 %v607, 8
      %v686 = vpop.permute.xlu0 %685
      %687 = vrot.lane.b32.xlu0 %v608, 8
      %v688 = vpop.permute.xlu0 %687
      %689 = vrot.lane.b32.xlu0 %v609, 8
      %v690 = vpop.permute.xlu0 %689
      %691 = vrot.lane.b32.xlu0 %v610, 8
      %v692 = vpop.permute.xlu0 %691
      %693 = vrot.lane.b32.xlu0 %v611, 8
      %v694 = vpop.permute.xlu0 %693
      %695 = vrot.lane.b32.xlu0 %v612, 8
      %v696 = vpop.permute.xlu0 %695
      %697 = vrot.lane.b32.xlu0 %v613, 8
      %v698 = vpop.permute.xlu0 %697
      %699 = vrot.lane.b32.xlu0 %v614, 8
      %v700 = vpop.permute.xlu0 %699
      %701 = vrot.lane.b32.xlu0 %v615, 8
      %v702 = vpop.permute.xlu0 %701
      %703 = vrot.lane.b32.xlu0 %v616, 8
      %v704 = vpop.permute.xlu0 %703
      %705 = vrot.lane.b32.xlu0 %v617, 8
      %v706 = vpop.permute.xlu0 %705
      %707 = vrot.lane.b32.xlu0 %v618, 8
      %v708 = vpop.permute.xlu0 %707
      %709 = vrot.lane.b32.xlu0 %v619, 8
      %v710 = vpop.permute.xlu0 %709
      %711 = vrot.lane.b32.xlu0 %v620, 8
      %v712 = vpop.permute.xlu0 %711
      %713 = vrot.lane.b32.xlu0 %v621, 8
      %v714 = vpop.permute.xlu0 %713
      %715 = vrot.lane.b32.xlu0 %v622, 8
      %v716 = vpop.permute.xlu0 %715
      %717 = vrot.lane.b32.xlu0 %v623, 8
      %v718 = vpop.permute.xlu0 %717
      %719 = vrot.lane.b32.xlu0 %v624, 8
      %v720 = vpop.permute.xlu0 %719
      %vm753 = vcmask 97344
      %754 = vst.msk [vmem:[#allocation3] sm:$0xff] %vm753, %v658
      %755 = vst.msk [vmem:[#allocation3 + $0x8] sm:$0xff] %vm753, %v660
      %756 = vst.msk [vmem:[#allocation3 + $0x10] sm:$0xff] %vm753, %v662
      %757 = vst.msk [vmem:[#allocation3 + $0x18] sm:$0xff] %vm753, %v664
      %758 = vst.msk [vmem:[#allocation3 + $0x20] sm:$0xff] %vm753, %v666
      %759 = vst.msk [vmem:[#allocation3 + $0x28] sm:$0xff] %vm753, %v668
      %760 = vst.msk [vmem:[#allocation3 + $0x30] sm:$0xff] %vm753, %v670
      %761 = vst.msk [vmem:[#allocation3 + $0x38] sm:$0xff] %vm753, %v672
      %762 = vst.msk [vmem:[#allocation3 + $0x40] sm:$0xff] %vm753, %v674
      %763 = vst.msk [vmem:[#allocation3 + $0x48] sm:$0xff] %vm753, %v676
      %764 = vst.msk [vmem:[#allocation3 + $0x50] sm:$0xff] %vm753, %v678
      %765 = vst.msk [vmem:[#allocation3 + $0x58] sm:$0xff] %vm753, %v680
      %766 = vst.msk [vmem:[#allocation3 + $0x60] sm:$0xff] %vm753, %v682
      %767 = vst.msk [vmem:[#allocation3 + $0x68] sm:$0xff] %vm753, %v684
      %768 = vst.msk [vmem:[#allocation3 + $0x70] sm:$0xff] %vm753, %v686
      %769 = vst.msk [vmem:[#allocation3 + $0x78] sm:$0xff] %vm753, %v688
      %770 = vst.msk [vmem:[#allocation3 + $0x80] sm:$0xff] %vm753, %v690
      %771 = vst.msk [vmem:[#allocation3 + $0x88] sm:$0xff] %vm753, %v692
      %772 = vst.msk [vmem:[#allocation3 + $0x90] sm:$0xff] %vm753, %v694
      %773 = vst.msk [vmem:[#allocation3 + $0x98] sm:$0xff] %vm753, %v696
      %774 = vst.msk [vmem:[#allocation3 + $0xa0] sm:$0xff] %vm753, %v698
      %775 = vst.msk [vmem:[#allocation3 + $0xa8] sm:$0xff] %vm753, %v700
      %776 = vst.msk [vmem:[#allocation3 + $0xb0] sm:$0xff] %vm753, %v702
      %777 = vst.msk [vmem:[#allocation3 + $0xb8] sm:$0xff] %vm753, %v704
      %778 = vst.msk [vmem:[#allocation3 + $0xc0] sm:$0xff] %vm753, %v706
      %779 = vst.msk [vmem:[#allocation3 + $0xc8] sm:$0xff] %vm753, %v708
      %780 = vst.msk [vmem:[#allocation3 + $0xd0] sm:$0xff] %vm753, %v710
      %781 = vst.msk [vmem:[#allocation3 + $0xd8] sm:$0xff] %vm753, %v712
      %782 = vst.msk [vmem:[#allocation3 + $0xe0] sm:$0xff] %vm753, %v714
      %783 = vst.msk [vmem:[#allocation3 + $0xe8] sm:$0xff] %vm753, %v716
      %784 = vst.msk [vmem:[#allocation3 + $0xf0] sm:$0xff] %vm753, %v718
      %785 = vst.msk [vmem:[#allocation3 + $0xf8] sm:$0xff] %vm753, %v720
      %v786 = vld [vmem:[%s303] sm:$0xff]
      %v787 = vld [vmem:[%s303 + $0x8] sm:$0xff]
      %v788 = vld [vmem:[%s303 + $0x18] sm:$0xff]
      %v789 = vld [vmem:[%s303 + $0x20] sm:$0xff]
      %v790 = vld [vmem:[%s303 + $0x30] sm:$0xff]
      %v791 = vld [vmem:[%s303 + $0x38] sm:$0xff]
      %v792 = vld [vmem:[%s303 + $0x48] sm:$0xff]
      %v793 = vld [vmem:[%s303 + $0x50] sm:$0xff]
      %v794 = vld [vmem:[%s303 + $0x60] sm:$0xff]
      %v795 = vld [vmem:[%s303 + $0x68] sm:$0xff]
      %v796 = vld [vmem:[%s303 + $0x78] sm:$0xff]
      %v797 = vld [vmem:[%s303 + $0x80] sm:$0xff]
      %v798 = vld [vmem:[%s303 + $0x90] sm:$0xff]
      %v799 = vld [vmem:[%s303 + $0x98] sm:$0xff]
      %v800 = vld [vmem:[%s303 + $0xa8] sm:$0xff]
      %v801 = vld [vmem:[%s303 + $0xb0] sm:$0xff]
      %v802 = vld [vmem:[%s303 + $0xc0] sm:$0xff]
      %v803 = vld [vmem:[%s303 + $0xc8] sm:$0xff]
      %v804 = vld [vmem:[%s303 + $0xd8] sm:$0xff]
      %v805 = vld [vmem:[%s303 + $0xe0] sm:$0xff]
      %v806 = vld [vmem:[%s303 + $0xf0] sm:$0xff]
      %v807 = vld [vmem:[%s303 + $0xf8] sm:$0xff]
      %v808 = vld [vmem:[%s303 + $0x108] sm:$0xff]
      %v809 = vld [vmem:[%s303 + $0x110] sm:$0xff]
      %v810 = vld [vmem:[%s303 + $0x120] sm:$0xff]
      %v811 = vld [vmem:[%s303 + $0x128] sm:$0xff]
      %v812 = vld [vmem:[%s303 + $0x138] sm:$0xff]
      %v813 = vld [vmem:[%s303 + $0x140] sm:$0xff]
      %v814 = vld [vmem:[%s303 + $0x150] sm:$0xff]
      %v815 = vld [vmem:[%s303 + $0x158] sm:$0xff]
      %v816 = vld [vmem:[%s303 + $0x168] sm:$0xff]
      %v817 = vld [vmem:[%s303 + $0x170] sm:$0xff]
      %850 = vrot.lane.b32.xlu0 %v786, 12
      %v851 = vpop.permute.xlu0 %850
      %852 = vrot.lane.b32.xlu0 %v787, 12
      %v853 = vpop.permute.xlu0 %852
      %854 = vrot.lane.b32.xlu0 %v788, 12
      %v855 = vpop.permute.xlu0 %854
      %856 = vrot.lane.b32.xlu0 %v789, 12
      %v857 = vpop.permute.xlu0 %856
      %858 = vrot.lane.b32.xlu0 %v790, 12
      %v859 = vpop.permute.xlu0 %858
      %860 = vrot.lane.b32.xlu0 %v791, 12
      %v861 = vpop.permute.xlu0 %860
      %862 = vrot.lane.b32.xlu0 %v792, 12
      %v863 = vpop.permute.xlu0 %862
      %864 = vrot.lane.b32.xlu0 %v793, 12
      %v865 = vpop.permute.xlu0 %864
      %866 = vrot.lane.b32.xlu0 %v794, 12
      %v867 = vpop.permute.xlu0 %866
      %868 = vrot.lane.b32.xlu0 %v795, 12
      %v869 = vpop.permute.xlu0 %868
      %870 = vrot.lane.b32.xlu0 %v796, 12
      %v871 = vpop.permute.xlu0 %870
      %872 = vrot.lane.b32.xlu0 %v797, 12
      %v873 = vpop.permute.xlu0 %872
      %874 = vrot.lane.b32.xlu0 %v798, 12
      %v875 = vpop.permute.xlu0 %874
      %876 = vrot.lane.b32.xlu0 %v799, 12
      %v877 = vpop.permute.xlu0 %876
      %878 = vrot.lane.b32.xlu0 %v800, 12
      %v879 = vpop.permute.xlu0 %878
      %880 = vrot.lane.b32.xlu0 %v801, 12
      %v881 = vpop.permute.xlu0 %880
      %882 = vrot.lane.b32.xlu0 %v802, 12
      %v883 = vpop.permute.xlu0 %882
      %884 = vrot.lane.b32.xlu0 %v803, 12
      %v885 = vpop.permute.xlu0 %884
      %886 = vrot.lane.b32.xlu0 %v804, 12
      %v887 = vpop.permute.xlu0 %886
      %888 = vrot.lane.b32.xlu0 %v805, 12
      %v889 = vpop.permute.xlu0 %888
      %890 = vrot.lane.b32.xlu0 %v806, 12
      %v891 = vpop.permute.xlu0 %890
      %892 = vrot.lane.b32.xlu0 %v807, 12
      %v893 = vpop.permute.xlu0 %892
      %894 = vrot.lane.b32.xlu0 %v808, 12
      %v895 = vpop.permute.xlu0 %894
      %896 = vrot.lane.b32.xlu0 %v809, 12
      %v897 = vpop.permute.xlu0 %896
      %898 = vrot.lane.b32.xlu0 %v810, 12
      %v899 = vpop.permute.xlu0 %898
      %900 = vrot.lane.b32.xlu0 %v811, 12
      %v901 = vpop.permute.xlu0 %900
      %902 = vrot.lane.b32.xlu0 %v812, 12
      %v903 = vpop.permute.xlu0 %902
      %904 = vrot.lane.b32.xlu0 %v813, 12
      %v905 = vpop.permute.xlu0 %904
      %906 = vrot.lane.b32.xlu0 %v814, 12
      %v907 = vpop.permute.xlu0 %906
      %908 = vrot.lane.b32.xlu0 %v815, 12
      %v909 = vpop.permute.xlu0 %908
      %910 = vrot.lane.b32.xlu0 %v816, 12
      %v911 = vpop.permute.xlu0 %910
      %912 = vrot.lane.b32.xlu0 %v817, 12
      %v913 = vpop.permute.xlu0 %912
      %vm946 = vcmask 130144
      %947 = vst.msk [vmem:[#allocation3] sm:$0xff] %vm946, %v851
      %948 = vst.msk [vmem:[#allocation3 + $0x8] sm:$0xff] %vm946, %v853
      %949 = vst.msk [vmem:[#allocation3 + $0x10] sm:$0xff] %vm946, %v855
      %950 = vst.msk [vmem:[#allocation3 + $0x18] sm:$0xff] %vm946, %v857
      %951 = vst.msk [vmem:[#allocation3 + $0x20] sm:$0xff] %vm946, %v859
      %952 = vst.msk [vmem:[#allocation3 + $0x28] sm:$0xff] %vm946, %v861
      %953 = vst.msk [vmem:[#allocation3 + $0x30] sm:$0xff] %vm946, %v863
      %954 = vst.msk [vmem:[#allocation3 + $0x38] sm:$0xff] %vm946, %v865
      %955 = vst.msk [vmem:[#allocation3 + $0x40] sm:$0xff] %vm946, %v867
      %956 = vst.msk [vmem:[#allocation3 + $0x48] sm:$0xff] %vm946, %v869
      %957 = vst.msk [vmem:[#allocation3 + $0x50] sm:$0xff] %vm946, %v871
      %958 = vst.msk [vmem:[#allocation3 + $0x58] sm:$0xff] %vm946, %v873
      %959 = vst.msk [vmem:[#allocation3 + $0x60] sm:$0xff] %vm946, %v875
      %960 = vst.msk [vmem:[#allocation3 + $0x68] sm:$0xff] %vm946, %v877
      %961 = vst.msk [vmem:[#allocation3 + $0x70] sm:$0xff] %vm946, %v879
      %962 = vst.msk [vmem:[#allocation3 + $0x78] sm:$0xff] %vm946, %v881
      %963 = vst.msk [vmem:[#allocation3 + $0x80] sm:$0xff] %vm946, %v883
      %964 = vst.msk [vmem:[#allocation3 + $0x88] sm:$0xff] %vm946, %v885
      %965 = vst.msk [vmem:[#allocation3 + $0x90] sm:$0xff] %vm946, %v887
      %966 = vst.msk [vmem:[#allocation3 + $0x98] sm:$0xff] %vm946, %v889
      %967 = vst.msk [vmem:[#allocation3 + $0xa0] sm:$0xff] %vm946, %v891
      %968 = vst.msk [vmem:[#allocation3 + $0xa8] sm:$0xff] %vm946, %v893
      %969 = vst.msk [vmem:[#allocation3 + $0xb0] sm:$0xff] %vm946, %v895
      %970 = vst.msk [vmem:[#allocation3 + $0xb8] sm:$0xff] %vm946, %v897
      %971 = vst.msk [vmem:[#allocation3 + $0xc0] sm:$0xff] %vm946, %v899
      %972 = vst.msk [vmem:[#allocation3 + $0xc8] sm:$0xff] %vm946, %v901
      %973 = vst.msk [vmem:[#allocation3 + $0xd0] sm:$0xff] %vm946, %v903
      %974 = vst.msk [vmem:[#allocation3 + $0xd8] sm:$0xff] %vm946, %v905
      %975 = vst.msk [vmem:[#allocation3 + $0xe0] sm:$0xff] %vm946, %v907
      %976 = vst.msk [vmem:[#allocation3 + $0xe8] sm:$0xff] %vm946, %v909
      %977 = vst.msk [vmem:[#allocation3 + $0xf0] sm:$0xff] %vm946, %v911
      %978 = vst.msk [vmem:[#allocation3 + $0xf8] sm:$0xff] %vm946, %v913
      %v979 = vld [vmem:[%s303 + $0x1] sm:$0xff]
      %v980 = vld [vmem:[%s303 + $0x9] sm:$0xff]
      %v981 = vld [vmem:[%s303 + $0x19] sm:$0xff]
      %v982 = vld [vmem:[%s303 + $0x21] sm:$0xff]
      %v983 = vld [vmem:[%s303 + $0x31] sm:$0xff]
      %v984 = vld [vmem:[%s303 + $0x39] sm:$0xff]
      %v985 = vld [vmem:[%s303 + $0x49] sm:$0xff]
      %v986 = vld [vmem:[%s303 + $0x51] sm:$0xff]
      %v987 = vld [vmem:[%s303 + $0x61] sm:$0xff]
      %v988 = vld [vmem:[%s303 + $0x69] sm:$0xff]
      %v989 = vld [vmem:[%s303 + $0x79] sm:$0xff]
      %v990 = vld [vmem:[%s303 + $0x81] sm:$0xff]
      %v991 = vld [vmem:[%s303 + $0x91] sm:$0xff]
      %v992 = vld [vmem:[%s303 + $0x99] sm:$0xff]
      %v993 = vld [vmem:[%s303 + $0xa9] sm:$0xff]
      %v994 = vld [vmem:[%s303 + $0xb1] sm:$0xff]
      %v995 = vld [vmem:[%s303 + $0xc1] sm:$0xff]
      %v996 = vld [vmem:[%s303 + $0xc9] sm:$0xff]
      %v997 = vld [vmem:[%s303 + $0xd9] sm:$0xff]
      %v998 = vld [vmem:[%s303 + $0xe1] sm:$0xff]
      %v999 = vld [vmem:[%s303 + $0xf1] sm:$0xff]
      %v1000 = vld [vmem:[%s303 + $0xf9] sm:$0xff]
      %v1001 = vld [vmem:[%s303 + $0x109] sm:$0xff]
      %v1002 = vld [vmem:[%s303 + $0x111] sm:$0xff]
      %v1003 = vld [vmem:[%s303 + $0x121] sm:$0xff]
      %v1004 = vld [vmem:[%s303 + $0x129] sm:$0xff]
      %v1005 = vld [vmem:[%s303 + $0x139] sm:$0xff]
      %v1006 = vld [vmem:[%s303 + $0x141] sm:$0xff]
      %v1007 = vld [vmem:[%s303 + $0x151] sm:$0xff]
      %v1008 = vld [vmem:[%s303 + $0x159] sm:$0xff]
      %v1009 = vld [vmem:[%s303 + $0x169] sm:$0xff]
      %v1010 = vld [vmem:[%s303 + $0x171] sm:$0xff]
      %1043 = vrot.lane.b32.xlu0 %v979, 16
      %v1044 = vpop.permute.xlu0 %1043
      %1045 = vrot.lane.b32.xlu0 %v980, 16
      %v1046 = vpop.permute.xlu0 %1045
      %1047 = vrot.lane.b32.xlu0 %v981, 16
      %v1048 = vpop.permute.xlu0 %1047
      %1049 = vrot.lane.b32.xlu0 %v982, 16
      %v1050 = vpop.permute.xlu0 %1049
      %1051 = vrot.lane.b32.xlu0 %v983, 16
      %v1052 = vpop.permute.xlu0 %1051
      %1053 = vrot.lane.b32.xlu0 %v984, 16
      %v1054 = vpop.permute.xlu0 %1053
      %1055 = vrot.lane.b32.xlu0 %v985, 16
      %v1056 = vpop.permute.xlu0 %1055
      %1057 = vrot.lane.b32.xlu0 %v986, 16
      %v1058 = vpop.permute.xlu0 %1057
      %1059 = vrot.lane.b32.xlu0 %v987, 16
      %v1060 = vpop.permute.xlu0 %1059
      %1061 = vrot.lane.b32.xlu0 %v988, 16
      %v1062 = vpop.permute.xlu0 %1061
      %1063 = vrot.lane.b32.xlu0 %v989, 16
      %v1064 = vpop.permute.xlu0 %1063
      %1065 = vrot.lane.b32.xlu0 %v990, 16
      %v1066 = vpop.permute.xlu0 %1065
      %1067 = vrot.lane.b32.xlu0 %v991, 16
      %v1068 = vpop.permute.xlu0 %1067
      %1069 = vrot.lane.b32.xlu0 %v992, 16
      %v1070 = vpop.permute.xlu0 %1069
      %1071 = vrot.lane.b32.xlu0 %v993, 16
      %v1072 = vpop.permute.xlu0 %1071
      %1073 = vrot.lane.b32.xlu0 %v994, 16
      %v1074 = vpop.permute.xlu0 %1073
      %1075 = vrot.lane.b32.xlu0 %v995, 16
      %v1076 = vpop.permute.xlu0 %1075
      %1077 = vrot.lane.b32.xlu0 %v996, 16
      %v1078 = vpop.permute.xlu0 %1077
      %1079 = vrot.lane.b32.xlu0 %v997, 16
      %v1080 = vpop.permute.xlu0 %1079
      %1081 = vrot.lane.b32.xlu0 %v998, 16
      %v1082 = vpop.permute.xlu0 %1081
      %1083 = vrot.lane.b32.xlu0 %v999, 16
      %v1084 = vpop.permute.xlu0 %1083
      %1085 = vrot.lane.b32.xlu0 %v1000, 16
      %v1086 = vpop.permute.xlu0 %1085
      %1087 = vrot.lane.b32.xlu0 %v1001, 16
      %v1088 = vpop.permute.xlu0 %1087
      %1089 = vrot.lane.b32.xlu0 %v1002, 16
      %v1090 = vpop.permute.xlu0 %1089
      %1091 = vrot.lane.b32.xlu0 %v1003, 16
      %v1092 = vpop.permute.xlu0 %1091
      %1093 = vrot.lane.b32.xlu0 %v1004, 16
      %v1094 = vpop.permute.xlu0 %1093
      %1095 = vrot.lane.b32.xlu0 %v1005, 16
      %v1096 = vpop.permute.xlu0 %1095
      %1097 = vrot.lane.b32.xlu0 %v1006, 16
      %v1098 = vpop.permute.xlu0 %1097
      %1099 = vrot.lane.b32.xlu0 %v1007, 16
      %v1100 = vpop.permute.xlu0 %1099
      %1101 = vrot.lane.b32.xlu0 %v1008, 16
      %v1102 = vpop.permute.xlu0 %1101
      %1103 = vrot.lane.b32.xlu0 %v1009, 16
      %v1104 = vpop.permute.xlu0 %1103
      %1105 = vrot.lane.b32.xlu0 %v1010, 16
      %v1106 = vpop.permute.xlu0 %1105
      %vm1139 = vcmask 162944
      %1140 = vst.msk [vmem:[#allocation3] sm:$0xff] %vm1139, %v1044
      %1141 = vst.msk [vmem:[#allocation3 + $0x8] sm:$0xff] %vm1139, %v1046
      %1142 = vst.msk [vmem:[#allocation3 + $0x10] sm:$0xff] %vm1139, %v1048
      %1143 = vst.msk [vmem:[#allocation3 + $0x18] sm:$0xff] %vm1139, %v1050
      %1144 = vst.msk [vmem:[#allocation3 + $0x20] sm:$0xff] %vm1139, %v1052
      %1145 = vst.msk [vmem:[#allocation3 + $0x28] sm:$0xff] %vm1139, %v1054
      %1146 = vst.msk [vmem:[#allocation3 + $0x30] sm:$0xff] %vm1139, %v1056
      %1147 = vst.msk [vmem:[#allocation3 + $0x38] sm:$0xff] %vm1139, %v1058
      %1148 = vst.msk [vmem:[#allocation3 + $0x40] sm:$0xff] %vm1139, %v1060
      %1149 = vst.msk [vmem:[#allocation3 + $0x48] sm:$0xff] %vm1139, %v1062
      %1150 = vst.msk [vmem:[#allocation3 + $0x50] sm:$0xff] %vm1139, %v1064
      %1151 = vst.msk [vmem:[#allocation3 + $0x58] sm:$0xff] %vm1139, %v1066
      %1152 = vst.msk [vmem:[#allocation3 + $0x60] sm:$0xff] %vm1139, %v1068
      %1153 = vst.msk [vmem:[#allocation3 + $0x68] sm:$0xff] %vm1139, %v1070
      %1154 = vst.msk [vmem:[#allocation3 + $0x70] sm:$0xff] %vm1139, %v1072
      %1155 = vst.msk [vmem:[#allocation3 + $0x78] sm:$0xff] %vm1139, %v1074
      %1156 = vst.msk [vmem:[#allocation3 + $0x80] sm:$0xff] %vm1139, %v1076
      %1157 = vst.msk [vmem:[#allocation3 + $0x88] sm:$0xff] %vm1139, %v1078
      %1158 = vst.msk [vmem:[#allocation3 + $0x90] sm:$0xff] %vm1139, %v1080
      %1159 = vst.msk [vmem:[#allocation3 + $0x98] sm:$0xff] %vm1139, %v1082
      %1160 = vst.msk [vmem:[#allocation3 + $0xa0] sm:$0xff] %vm1139, %v1084
      %1161 = vst.msk [vmem:[#allocation3 + $0xa8] sm:$0xff] %vm1139, %v1086
      %1162 = vst.msk [vmem:[#allocation3 + $0xb0] sm:$0xff] %vm1139, %v1088
      %1163 = vst.msk [vmem:[#allocation3 + $0xb8] sm:$0xff] %vm1139, %v1090
      %1164 = vst.msk [vmem:[#allocation3 + $0xc0] sm:$0xff] %vm1139, %v1092
      %1165 = vst.msk [vmem:[#allocation3 + $0xc8] sm:$0xff] %vm1139, %v1094
      %1166 = vst.msk [vmem:[#allocation3 + $0xd0] sm:$0xff] %vm1139, %v1096
      %1167 = vst.msk [vmem:[#allocation3 + $0xd8] sm:$0xff] %vm1139, %v1098
      %1168 = vst.msk [vmem:[#allocation3 + $0xe0] sm:$0xff] %vm1139, %v1100
      %1169 = vst.msk [vmem:[#allocation3 + $0xe8] sm:$0xff] %vm1139, %v1102
      %1170 = vst.msk [vmem:[#allocation3 + $0xf0] sm:$0xff] %vm1139, %v1104
      %1171 = vst.msk [vmem:[#allocation3 + $0xf8] sm:$0xff] %vm1139, %v1106
      %v1172 = vld [vmem:[%s303 + $0x2] sm:$0xff]
      %v1173 = vld [vmem:[%s303 + $0xa] sm:$0xff]
      %v1174 = vld [vmem:[%s303 + $0x1a] sm:$0xff]
      %v1175 = vld [vmem:[%s303 + $0x22] sm:$0xff]
      %v1176 = vld [vmem:[%s303 + $0x32] sm:$0xff]
      %v1177 = vld [vmem:[%s303 + $0x3a] sm:$0xff]
      %v1178 = vld [vmem:[%s303 + $0x4a] sm:$0xff]
      %v1179 = vld [vmem:[%s303 + $0x52] sm:$0xff]
      %v1180 = vld [vmem:[%s303 + $0x62] sm:$0xff]
      %v1181 = vld [vmem:[%s303 + $0x6a] sm:$0xff]
      %v1182 = vld [vmem:[%s303 + $0x7a] sm:$0xff]
      %v1183 = vld [vmem:[%s303 + $0x82] sm:$0xff]
      %v1184 = vld [vmem:[%s303 + $0x92] sm:$0xff]
      %v1185 = vld [vmem:[%s303 + $0x9a] sm:$0xff]
      %v1186 = vld [vmem:[%s303 + $0xaa] sm:$0xff]
      %v1187 = vld [vmem:[%s303 + $0xb2] sm:$0xff]
      %v1188 = vld [vmem:[%s303 + $0xc2] sm:$0xff]
      %v1189 = vld [vmem:[%s303 + $0xca] sm:$0xff]
      %v1190 = vld [vmem:[%s303 + $0xda] sm:$0xff]
      %v1191 = vld [vmem:[%s303 + $0xe2] sm:$0xff]
      %v1192 = vld [vmem:[%s303 + $0xf2] sm:$0xff]
      %v1193 = vld [vmem:[%s303 + $0xfa] sm:$0xff]
      %v1194 = vld [vmem:[%s303 + $0x10a] sm:$0xff]
      %v1195 = vld [vmem:[%s303 + $0x112] sm:$0xff]
      %v1196 = vld [vmem:[%s303 + $0x122] sm:$0xff]
      %v1197 = vld [vmem:[%s303 + $0x12a] sm:$0xff]
      %v1198 = vld [vmem:[%s303 + $0x13a] sm:$0xff]
      %v1199 = vld [vmem:[%s303 + $0x142] sm:$0xff]
      %v1200 = vld [vmem:[%s303 + $0x152] sm:$0xff]
      %v1201 = vld [vmem:[%s303 + $0x15a] sm:$0xff]
      %v1202 = vld [vmem:[%s303 + $0x16a] sm:$0xff]
      %v1203 = vld [vmem:[%s303 + $0x172] sm:$0xff]
      %1236 = vrot.lane.b32.xlu0 %v1172, 20
      %v1237 = vpop.permute.xlu0 %1236
      %1238 = vrot.lane.b32.xlu0 %v1173, 20
      %v1239 = vpop.permute.xlu0 %1238
      %1240 = vrot.lane.b32.xlu0 %v1174, 20
      %v1241 = vpop.permute.xlu0 %1240
      %1242 = vrot.lane.b32.xlu0 %v1175, 20
      %v1243 = vpop.permute.xlu0 %1242
      %1244 = vrot.lane.b32.xlu0 %v1176, 20
      %v1245 = vpop.permute.xlu0 %1244
      %1246 = vrot.lane.b32.xlu0 %v1177, 20
      %v1247 = vpop.permute.xlu0 %1246
      %1248 = vrot.lane.b32.xlu0 %v1178, 20
      %v1249 = vpop.permute.xlu0 %1248
      %1250 = vrot.lane.b32.xlu0 %v1179, 20
      %v1251 = vpop.permute.xlu0 %1250
      %1252 = vrot.lane.b32.xlu0 %v1180, 20
      %v1253 = vpop.permute.xlu0 %1252
      %1254 = vrot.lane.b32.xlu0 %v1181, 20
      %v1255 = vpop.permute.xlu0 %1254
      %1256 = vrot.lane.b32.xlu0 %v1182, 20
      %v1257 = vpop.permute.xlu0 %1256
      %1258 = vrot.lane.b32.xlu0 %v1183, 20
      %v1259 = vpop.permute.xlu0 %1258
      %1260 = vrot.lane.b32.xlu0 %v1184, 20
      %v1261 = vpop.permute.xlu0 %1260
      %1262 = vrot.lane.b32.xlu0 %v1185, 20
      %v1263 = vpop.permute.xlu0 %1262
      %1264 = vrot.lane.b32.xlu0 %v1186, 20
      %v1265 = vpop.permute.xlu0 %1264
      %1266 = vrot.lane.b32.xlu0 %v1187, 20
      %v1267 = vpop.permute.xlu0 %1266
      %1268 = vrot.lane.b32.xlu0 %v1188, 20
      %v1269 = vpop.permute.xlu0 %1268
      %1270 = vrot.lane.b32.xlu0 %v1189, 20
      %v1271 = vpop.permute.xlu0 %1270
      %1272 = vrot.lane.b32.xlu0 %v1190, 20
      %v1273 = vpop.permute.xlu0 %1272
      %1274 = vrot.lane.b32.xlu0 %v1191, 20
      %v1275 = vpop.permute.xlu0 %1274
      %1276 = vrot.lane.b32.xlu0 %v1192, 20
      %v1277 = vpop.permute.xlu0 %1276
      %1278 = vrot.lane.b32.xlu0 %v1193, 20
      %v1279 = vpop.permute.xlu0 %1278
      %1280 = vrot.lane.b32.xlu0 %v1194, 20
      %v1281 = vpop.permute.xlu0 %1280
      %1282 = vrot.lane.b32.xlu0 %v1195, 20
      %v1283 = vpop.permute.xlu0 %1282
      %1284 = vrot.lane.b32.xlu0 %v1196, 20
      %v1285 = vpop.permute.xlu0 %1284
      %1286 = vrot.lane.b32.xlu0 %v1197, 20
      %v1287 = vpop.permute.xlu0 %1286
      %1288 = vrot.lane.b32.xlu0 %v1198, 20
      %v1289 = vpop.permute.xlu0 %1288
      %1290 = vrot.lane.b32.xlu0 %v1199, 20
      %v1291 = vpop.permute.xlu0 %1290
      %1292 = vrot.lane.b32.xlu0 %v1200, 20
      %v1293 = vpop.permute.xlu0 %1292
      %1294 = vrot.lane.b32.xlu0 %v1201, 20
      %v1295 = vpop.permute.xlu0 %1294
      %1296 = vrot.lane.b32.xlu0 %v1202, 20
      %v1297 = vpop.permute.xlu0 %1296
      %1298 = vrot.lane.b32.xlu0 %v1203, 20
      %v1299 = vpop.permute.xlu0 %1298
      %vm1332 = vcmask 195744
      %1333 = vst.msk [vmem:[#allocation3] sm:$0xff] %vm1332, %v1237
      %1334 = vst.msk [vmem:[#allocation3 + $0x8] sm:$0xff] %vm1332, %v1239
      %1335 = vst.msk [vmem:[#allocation3 + $0x10] sm:$0xff] %vm1332, %v1241
      %1336 = vst.msk [vmem:[#allocation3 + $0x18] sm:$0xff] %vm1332, %v1243
      %1337 = vst.msk [vmem:[#allocation3 + $0x20] sm:$0xff] %vm1332, %v1245
      %1338 = vst.msk [vmem:[#allocation3 + $0x28] sm:$0xff] %vm1332, %v1247
      %1339 = vst.msk [vmem:[#allocation3 + $0x30] sm:$0xff] %vm1332, %v1249
      %1340 = vst.msk [vmem:[#allocation3 + $0x38] sm:$0xff] %vm1332, %v1251
      %1341 = vst.msk [vmem:[#allocation3 + $0x40] sm:$0xff] %vm1332, %v1253
      %1342 = vst.msk [vmem:[#allocation3 + $0x48] sm:$0xff] %vm1332, %v1255
      %1343 = vst.msk [vmem:[#allocation3 + $0x50] sm:$0xff] %vm1332, %v1257
      %1344 = vst.msk [vmem:[#allocation3 + $0x58] sm:$0xff] %vm1332, %v1259
      %1345 = vst.msk [vmem:[#allocation3 + $0x60] sm:$0xff] %vm1332, %v1261
      %1346 = vst.msk [vmem:[#allocation3 + $0x68] sm:$0xff] %vm1332, %v1263
      %1347 = vst.msk [vmem:[#allocation3 + $0x70] sm:$0xff] %vm1332, %v1265
      %1348 = vst.msk [vmem:[#allocation3 + $0x78] sm:$0xff] %vm1332, %v1267
      %1349 = vst.msk [vmem:[#allocation3 + $0x80] sm:$0xff] %vm1332, %v1269
      %1350 = vst.msk [vmem:[#allocation3 + $0x88] sm:$0xff] %vm1332, %v1271
      %1351 = vst.msk [vmem:[#allocation3 + $0x90] sm:$0xff] %vm1332, %v1273
      %1352 = vst.msk [vmem:[#allocation3 + $0x98] sm:$0xff] %vm1332, %v1275
      %1353 = vst.msk [vmem:[#allocation3 + $0xa0] sm:$0xff] %vm1332, %v1277
      %1354 = vst.msk [vmem:[#allocation3 + $0xa8] sm:$0xff] %vm1332, %v1279
      %1355 = vst.msk [vmem:[#allocation3 + $0xb0] sm:$0xff] %vm1332, %v1281
      %1356 = vst.msk [vmem:[#allocation3 + $0xb8] sm:$0xff] %vm1332, %v1283
      %1357 = vst.msk [vmem:[#allocation3 + $0xc0] sm:$0xff] %vm1332, %v1285
      %1358 = vst.msk [vmem:[#allocation3 + $0xc8] sm:$0xff] %vm1332, %v1287
      %1359 = vst.msk [vmem:[#allocation3 + $0xd0] sm:$0xff] %vm1332, %v1289
      %1360 = vst.msk [vmem:[#allocation3 + $0xd8] sm:$0xff] %vm1332, %v1291
      %1361 = vst.msk [vmem:[#allocation3 + $0xe0] sm:$0xff] %vm1332, %v1293
      %1362 = vst.msk [vmem:[#allocation3 + $0xe8] sm:$0xff] %vm1332, %v1295
      %1363 = vst.msk [vmem:[#allocation3 + $0xf0] sm:$0xff] %vm1332, %v1297
      %1364 = vst.msk [vmem:[#allocation3 + $0xf8] sm:$0xff] %vm1332, %v1299
      %s1365 = scalar_lea.vmem [#allocation2], 48
      %v1366 = vld [vmem:[%s1365] sm:$0xff]
      %v1367 = vld [vmem:[%s1365 + $0x8] sm:$0xff]
      %v1368 = vld [vmem:[%s1365 + $0x18] sm:$0xff]
      %v1369 = vld [vmem:[%s1365 + $0x20] sm:$0xff]
      %v1370 = vld [vmem:[%s1365 + $0x30] sm:$0xff]
      %v1371 = vld [vmem:[%s1365 + $0x38] sm:$0xff]
      %v1372 = vld [vmem:[%s1365 + $0x48] sm:$0xff]
      %v1373 = vld [vmem:[%s1365 + $0x50] sm:$0xff]
      %v1374 = vld [vmem:[%s1365 + $0x60] sm:$0xff]
      %v1375 = vld [vmem:[%s1365 + $0x68] sm:$0xff]
      %v1376 = vld [vmem:[%s1365 + $0x78] sm:$0xff]
      %v1377 = vld [vmem:[%s1365 + $0x80] sm:$0xff]
      %v1378 = vld [vmem:[%s1365 + $0x90] sm:$0xff]
      %v1379 = vld [vmem:[%s1365 + $0x98] sm:$0xff]
      %v1380 = vld [vmem:[%s1365 + $0xa8] sm:$0xff]
      %v1381 = vld [vmem:[%s1365 + $0xb0] sm:$0xff]
      %v1382 = vld [vmem:[%s1365 + $0xc0] sm:$0xff]
      %v1383 = vld [vmem:[%s1365 + $0xc8] sm:$0xff]
      %v1384 = vld [vmem:[%s1365 + $0xd8] sm:$0xff]
      %v1385 = vld [vmem:[%s1365 + $0xe0] sm:$0xff]
      %v1386 = vld [vmem:[%s1365 + $0xf0] sm:$0xff]
      %v1387 = vld [vmem:[%s1365 + $0xf8] sm:$0xff]
      %v1388 = vld [vmem:[%s1365 + $0x108] sm:$0xff]
      %v1389 = vld [vmem:[%s1365 + $0x110] sm:$0xff]
      %v1390 = vld [vmem:[%s1365 + $0x120] sm:$0xff]
      %v1391 = vld [vmem:[%s1365 + $0x128] sm:$0xff]
      %v1392 = vld [vmem:[%s1365 + $0x138] sm:$0xff]
      %v1393 = vld [vmem:[%s1365 + $0x140] sm:$0xff]
      %v1394 = vld [vmem:[%s1365 + $0x150] sm:$0xff]
      %v1395 = vld [vmem:[%s1365 + $0x158] sm:$0xff]
      %v1396 = vld [vmem:[%s1365 + $0x168] sm:$0xff]
      %v1397 = vld [vmem:[%s1365 + $0x170] sm:$0xff]
      %1430 = vrot.lane.b32.xlu0 %v1366, 24
      %v1431 = vpop.permute.xlu0 %1430
      %1432 = vrot.lane.b32.xlu0 %v1367, 24
      %v1433 = vpop.permute.xlu0 %1432
      %1434 = vrot.lane.b32.xlu0 %v1368, 24
      %v1435 = vpop.permute.xlu0 %1434
      %1436 = vrot.lane.b32.xlu0 %v1369, 24
      %v1437 = vpop.permute.xlu0 %1436
      %1438 = vrot.lane.b32.xlu0 %v1370, 24
      %v1439 = vpop.permute.xlu0 %1438
      %1440 = vrot.lane.b32.xlu0 %v1371, 24
      %v1441 = vpop.permute.xlu0 %1440
      %1442 = vrot.lane.b32.xlu0 %v1372, 24
      %v1443 = vpop.permute.xlu0 %1442
      %1444 = vrot.lane.b32.xlu0 %v1373, 24
      %v1445 = vpop.permute.xlu0 %1444
      %1446 = vrot.lane.b32.xlu0 %v1374, 24
      %v1447 = vpop.permute.xlu0 %1446
      %1448 = vrot.lane.b32.xlu0 %v1375, 24
      %v1449 = vpop.permute.xlu0 %1448
      %1450 = vrot.lane.b32.xlu0 %v1376, 24
      %v1451 = vpop.permute.xlu0 %1450
      %1452 = vrot.lane.b32.xlu0 %v1377, 24
      %v1453 = vpop.permute.xlu0 %1452
      %1454 = vrot.lane.b32.xlu0 %v1378, 24
      %v1455 = vpop.permute.xlu0 %1454
      %1456 = vrot.lane.b32.xlu0 %v1379, 24
      %v1457 = vpop.permute.xlu0 %1456
      %1458 = vrot.lane.b32.xlu0 %v1380, 24
      %v1459 = vpop.permute.xlu0 %1458
      %1460 = vrot.lane.b32.xlu0 %v1381, 24
      %v1461 = vpop.permute.xlu0 %1460
      %1462 = vrot.lane.b32.xlu0 %v1382, 24
      %v1463 = vpop.permute.xlu0 %1462
      %1464 = vrot.lane.b32.xlu0 %v1383, 24
      %v1465 = vpop.permute.xlu0 %1464
      %1466 = vrot.lane.b32.xlu0 %v1384, 24
      %v1467 = vpop.permute.xlu0 %1466
      %1468 = vrot.lane.b32.xlu0 %v1385, 24
      %v1469 = vpop.permute.xlu0 %1468
      %1470 = vrot.lane.b32.xlu0 %v1386, 24
      %v1471 = vpop.permute.xlu0 %1470
      %1472 = vrot.lane.b32.xlu0 %v1387, 24
      %v1473 = vpop.permute.xlu0 %1472
      %1474 = vrot.lane.b32.xlu0 %v1388, 24
      %v1475 = vpop.permute.xlu0 %1474
      %1476 = vrot.lane.b32.xlu0 %v1389, 24
      %v1477 = vpop.permute.xlu0 %1476
      %1478 = vrot.lane.b32.xlu0 %v1390, 24
      %v1479 = vpop.permute.xlu0 %1478
      %1480 = vrot.lane.b32.xlu0 %v1391, 24
      %v1481 = vpop.permute.xlu0 %1480
      %1482 = vrot.lane.b32.xlu0 %v1392, 24
      %v1483 = vpop.permute.xlu0 %1482
      %1484 = vrot.lane.b32.xlu0 %v1393, 24
      %v1485 = vpop.permute.xlu0 %1484
      %1486 = vrot.lane.b32.xlu0 %v1394, 24
      %v1487 = vpop.permute.xlu0 %1486
      %1488 = vrot.lane.b32.xlu0 %v1395, 24
      %v1489 = vpop.permute.xlu0 %1488
      %1490 = vrot.lane.b32.xlu0 %v1396, 24
      %v1491 = vpop.permute.xlu0 %1490
      %1492 = vrot.lane.b32.xlu0 %v1397, 24
      %v1493 = vpop.permute.xlu0 %1492
      %vm1526 = vcmask 228544
      %1527 = vst.msk [vmem:[#allocation3] sm:$0xff] %vm1526, %v1431
      %1528 = vst.msk [vmem:[#allocation3 + $0x8] sm:$0xff] %vm1526, %v1433
      %1529 = vst.msk [vmem:[#allocation3 + $0x10] sm:$0xff] %vm1526, %v1435
      %1530 = vst.msk [vmem:[#allocation3 + $0x18] sm:$0xff] %vm1526, %v1437
      %1531 = vst.msk [vmem:[#allocation3 + $0x20] sm:$0xff] %vm1526, %v1439
      %1532 = vst.msk [vmem:[#allocation3 + $0x28] sm:$0xff] %vm1526, %v1441
      %1533 = vst.msk [vmem:[#allocation3 + $0x30] sm:$0xff] %vm1526, %v1443
      %1534 = vst.msk [vmem:[#allocation3 + $0x38] sm:$0xff] %vm1526, %v1445
      %1535 = vst.msk [vmem:[#allocation3 + $0x40] sm:$0xff] %vm1526, %v1447
      %1536 = vst.msk [vmem:[#allocation3 + $0x48] sm:$0xff] %vm1526, %v1449
      %1537 = vst.msk [vmem:[#allocation3 + $0x50] sm:$0xff] %vm1526, %v1451
      %1538 = vst.msk [vmem:[#allocation3 + $0x58] sm:$0xff] %vm1526, %v1453
      %1539 = vst.msk [vmem:[#allocation3 + $0x60] sm:$0xff] %vm1526, %v1455
      %1540 = vst.msk [vmem:[#allocation3 + $0x68] sm:$0xff] %vm1526, %v1457
      %1541 = vst.msk [vmem:[#allocation3 + $0x70] sm:$0xff] %vm1526, %v1459
      %1542 = vst.msk [vmem:[#allocation3 + $0x78] sm:$0xff] %vm1526, %v1461
      %1543 = vst.msk [vmem:[#allocation3 + $0x80] sm:$0xff] %vm1526, %v1463
      %1544 = vst.msk [vmem:[#allocation3 + $0x88] sm:$0xff] %vm1526, %v1465
      %1545 = vst.msk [vmem:[#allocation3 + $0x90] sm:$0xff] %vm1526, %v1467
      %1546 = vst.msk [vmem:[#allocation3 + $0x98] sm:$0xff] %vm1526, %v1469
      %1547 = vst.msk [vmem:[#allocation3 + $0xa0] sm:$0xff] %vm1526, %v1471
      %1548 = vst.msk [vmem:[#allocation3 + $0xa8] sm:$0xff] %vm1526, %v1473
      %1549 = vst.msk [vmem:[#allocation3 + $0xb0] sm:$0xff] %vm1526, %v1475
      %1550 = vst.msk [vmem:[#allocation3 + $0xb8] sm:$0xff] %vm1526, %v1477
      %1551 = vst.msk [vmem:[#allocation3 + $0xc0] sm:$0xff] %vm1526, %v1479
      %1552 = vst.msk [vmem:[#allocation3 + $0xc8] sm:$0xff] %vm1526, %v1481
      %1553 = vst.msk [vmem:[#allocation3 + $0xd0] sm:$0xff] %vm1526, %v1483
      %1554 = vst.msk [vmem:[#allocation3 + $0xd8] sm:$0xff] %vm1526, %v1485
      %1555 = vst.msk [vmem:[#allocation3 + $0xe0] sm:$0xff] %vm1526, %v1487
      %1556 = vst.msk [vmem:[#allocation3 + $0xe8] sm:$0xff] %vm1526, %v1489
      %1557 = vst.msk [vmem:[#allocation3 + $0xf0] sm:$0xff] %vm1526, %v1491
      %1558 = vst.msk [vmem:[#allocation3 + $0xf8] sm:$0xff] %vm1526, %v1493
      %v1559 = vld [vmem:[%s1365 + $0x1] sm:$0xff]
      %v1560 = vld [vmem:[%s1365 + $0x9] sm:$0xff]
      %v1561 = vld [vmem:[%s1365 + $0x19] sm:$0xff]
      %v1562 = vld [vmem:[%s1365 + $0x21] sm:$0xff]
      %v1563 = vld [vmem:[%s1365 + $0x31] sm:$0xff]
      %v1564 = vld [vmem:[%s1365 + $0x39] sm:$0xff]
      %v1565 = vld [vmem:[%s1365 + $0x49] sm:$0xff]
      %v1566 = vld [vmem:[%s1365 + $0x51] sm:$0xff]
      %v1567 = vld [vmem:[%s1365 + $0x61] sm:$0xff]
      %v1568 = vld [vmem:[%s1365 + $0x69] sm:$0xff]
      %v1569 = vld [vmem:[%s1365 + $0x79] sm:$0xff]
      %v1570 = vld [vmem:[%s1365 + $0x81] sm:$0xff]
      %v1571 = vld [vmem:[%s1365 + $0x91] sm:$0xff]
      %v1572 = vld [vmem:[%s1365 + $0x99] sm:$0xff]
      %v1573 = vld [vmem:[%s1365 + $0xa9] sm:$0xff]
      %v1574 = vld [vmem:[%s1365 + $0xb1] sm:$0xff]
      %v1575 = vld [vmem:[%s1365 + $0xc1] sm:$0xff]
      %v1576 = vld [vmem:[%s1365 + $0xc9] sm:$0xff]
      %v1577 = vld [vmem:[%s1365 + $0xd9] sm:$0xff]
      %v1578 = vld [vmem:[%s1365 + $0xe1] sm:$0xff]
      %v1579 = vld [vmem:[%s1365 + $0xf1] sm:$0xff]
      %v1580 = vld [vmem:[%s1365 + $0xf9] sm:$0xff]
      %v1581 = vld [vmem:[%s1365 + $0x109] sm:$0xff]
      %v1582 = vld [vmem:[%s1365 + $0x111] sm:$0xff]
      %v1583 = vld [vmem:[%s1365 + $0x121] sm:$0xff]
      %v1584 = vld [vmem:[%s1365 + $0x129] sm:$0xff]
      %v1585 = vld [vmem:[%s1365 + $0x139] sm:$0xff]
      %v1586 = vld [vmem:[%s1365 + $0x141] sm:$0xff]
      %v1587 = vld [vmem:[%s1365 + $0x151] sm:$0xff]
      %v1588 = vld [vmem:[%s1365 + $0x159] sm:$0xff]
      %v1589 = vld [vmem:[%s1365 + $0x169] sm:$0xff]
      %v1590 = vld [vmem:[%s1365 + $0x171] sm:$0xff]
      %1623 = vrot.lane.b32.xlu0 %v1559, 28
      %v1624 = vpop.permute.xlu0 %1623
      %1625 = vrot.lane.b32.xlu0 %v1560, 28
      %v1626 = vpop.permute.xlu0 %1625
      %1627 = vrot.lane.b32.xlu0 %v1561, 28
      %v1628 = vpop.permute.xlu0 %1627
      %1629 = vrot.lane.b32.xlu0 %v1562, 28
      %v1630 = vpop.permute.xlu0 %1629
      %1631 = vrot.lane.b32.xlu0 %v1563, 28
      %v1632 = vpop.permute.xlu0 %1631
      %1633 = vrot.lane.b32.xlu0 %v1564, 28
      %v1634 = vpop.permute.xlu0 %1633
      %1635 = vrot.lane.b32.xlu0 %v1565, 28
      %v1636 = vpop.permute.xlu0 %1635
      %1637 = vrot.lane.b32.xlu0 %v1566, 28
      %v1638 = vpop.permute.xlu0 %1637
      %1639 = vrot.lane.b32.xlu0 %v1567, 28
      %v1640 = vpop.permute.xlu0 %1639
      %1641 = vrot.lane.b32.xlu0 %v1568, 28
      %v1642 = vpop.permute.xlu0 %1641
      %1643 = vrot.lane.b32.xlu0 %v1569, 28
      %v1644 = vpop.permute.xlu0 %1643
      %1645 = vrot.lane.b32.xlu0 %v1570, 28
      %v1646 = vpop.permute.xlu0 %1645
      %1647 = vrot.lane.b32.xlu0 %v1571, 28
      %v1648 = vpop.permute.xlu0 %1647
      %1649 = vrot.lane.b32.xlu0 %v1572, 28
      %v1650 = vpop.permute.xlu0 %1649
      %1651 = vrot.lane.b32.xlu0 %v1573, 28
      %v1652 = vpop.permute.xlu0 %1651
      %1653 = vrot.lane.b32.xlu0 %v1574, 28
      %v1654 = vpop.permute.xlu0 %1653
      %1655 = vrot.lane.b32.xlu0 %v1575, 28
      %v1656 = vpop.permute.xlu0 %1655
      %1657 = vrot.lane.b32.xlu0 %v1576, 28
      %v1658 = vpop.permute.xlu0 %1657
      %1659 = vrot.lane.b32.xlu0 %v1577, 28
      %v1660 = vpop.permute.xlu0 %1659
      %1661 = vrot.lane.b32.xlu0 %v1578, 28
      %v1662 = vpop.permute.xlu0 %1661
      %1663 = vrot.lane.b32.xlu0 %v1579, 28
      %v1664 = vpop.permute.xlu0 %1663
      %1665 = vrot.lane.b32.xlu0 %v1580, 28
      %v1666 = vpop.permute.xlu0 %1665
      %1667 = vrot.lane.b32.xlu0 %v1581, 28
      %v1668 = vpop.permute.xlu0 %1667
      %1669 = vrot.lane.b32.xlu0 %v1582, 28
      %v1670 = vpop.permute.xlu0 %1669
      %1671 = vrot.lane.b32.xlu0 %v1583, 28
      %v1672 = vpop.permute.xlu0 %1671
      %1673 = vrot.lane.b32.xlu0 %v1584, 28
      %v1674 = vpop.permute.xlu0 %1673
      %1675 = vrot.lane.b32.xlu0 %v1585, 28
      %v1676 = vpop.permute.xlu0 %1675
      %1677 = vrot.lane.b32.xlu0 %v1586, 28
      %v1678 = vpop.permute.xlu0 %1677
      %1679 = vrot.lane.b32.xlu0 %v1587, 28
      %v1680 = vpop.permute.xlu0 %1679
      %1681 = vrot.lane.b32.xlu0 %v1588, 28
      %v1682 = vpop.permute.xlu0 %1681
      %1683 = vrot.lane.b32.xlu0 %v1589, 28
      %v1684 = vpop.permute.xlu0 %1683
      %1685 = vrot.lane.b32.xlu0 %v1590, 28
      %v1686 = vpop.permute.xlu0 %1685
      %vm1719 = vcmask 261344
      %1720 = vst.msk [vmem:[#allocation3] sm:$0xff] %vm1719, %v1624
      %1721 = vst.msk [vmem:[#allocation3 + $0x8] sm:$0xff] %vm1719, %v1626
      %1722 = vst.msk [vmem:[#allocation3 + $0x10] sm:$0xff] %vm1719, %v1628
      %1723 = vst.msk [vmem:[#allocation3 + $0x18] sm:$0xff] %vm1719, %v1630
      %1724 = vst.msk [vmem:[#allocation3 + $0x20] sm:$0xff] %vm1719, %v1632
      %1725 = vst.msk [vmem:[#allocation3 + $0x28] sm:$0xff] %vm1719, %v1634
      %1726 = vst.msk [vmem:[#allocation3 + $0x30] sm:$0xff] %vm1719, %v1636
      %1727 = vst.msk [vmem:[#allocation3 + $0x38] sm:$0xff] %vm1719, %v1638
      %1728 = vst.msk [vmem:[#allocation3 + $0x40] sm:$0xff] %vm1719, %v1640
      %1729 = vst.msk [vmem:[#allocation3 + $0x48] sm:$0xff] %vm1719, %v1642
      %1730 = vst.msk [vmem:[#allocation3 + $0x50] sm:$0xff] %vm1719, %v1644
      %1731 = vst.msk [vmem:[#allocation3 + $0x58] sm:$0xff] %vm1719, %v1646
      %1732 = vst.msk [vmem:[#allocation3 + $0x60] sm:$0xff] %vm1719, %v1648
      %1733 = vst.msk [vmem:[#allocation3 + $0x68] sm:$0xff] %vm1719, %v1650
      %1734 = vst.msk [vmem:[#allocation3 + $0x70] sm:$0xff] %vm1719, %v1652
      %1735 = vst.msk [vmem:[#allocation3 + $0x78] sm:$0xff] %vm1719, %v1654
      %1736 = vst.msk [vmem:[#allocation3 + $0x80] sm:$0xff] %vm1719, %v1656
      %1737 = vst.msk [vmem:[#allocation3 + $0x88] sm:$0xff] %vm1719, %v1658
      %1738 = vst.msk [vmem:[#allocation3 + $0x90] sm:$0xff] %vm1719, %v1660
      %1739 = vst.msk [vmem:[#allocation3 + $0x98] sm:$0xff] %vm1719, %v1662
      %1740 = vst.msk [vmem:[#allocation3 + $0xa0] sm:$0xff] %vm1719, %v1664
      %1741 = vst.msk [vmem:[#allocation3 + $0xa8] sm:$0xff] %vm1719, %v1666
      %1742 = vst.msk [vmem:[#allocation3 + $0xb0] sm:$0xff] %vm1719, %v1668
      %1743 = vst.msk [vmem:[#allocation3 + $0xb8] sm:$0xff] %vm1719, %v1670
      %1744 = vst.msk [vmem:[#allocation3 + $0xc0] sm:$0xff] %vm1719, %v1672
      %1745 = vst.msk [vmem:[#allocation3 + $0xc8] sm:$0xff] %vm1719, %v1674
      %1746 = vst.msk [vmem:[#allocation3 + $0xd0] sm:$0xff] %vm1719, %v1676
      %1747 = vst.msk [vmem:[#allocation3 + $0xd8] sm:$0xff] %vm1719, %v1678
      %1748 = vst.msk [vmem:[#allocation3 + $0xe0] sm:$0xff] %vm1719, %v1680
      %1749 = vst.msk [vmem:[#allocation3 + $0xe8] sm:$0xff] %vm1719, %v1682
      %1750 = vst.msk [vmem:[#allocation3 + $0xf0] sm:$0xff] %vm1719, %v1684
      %1751 = vst.msk [vmem:[#allocation3 + $0xf8] sm:$0xff] %vm1719, %v1686
      %v1752 = vld [vmem:[%s1365 + $0x2] sm:$0xff]
      %v1753 = vld [vmem:[%s1365 + $0xa] sm:$0xff]
      %v1754 = vld [vmem:[%s1365 + $0x1a] sm:$0xff]
      %v1755 = vld [vmem:[%s1365 + $0x22] sm:$0xff]
      %v1756 = vld [vmem:[%s1365 + $0x32] sm:$0xff]
      %v1757 = vld [vmem:[%s1365 + $0x3a] sm:$0xff]
      %v1758 = vld [vmem:[%s1365 + $0x4a] sm:$0xff]
      %v1759 = vld [vmem:[%s1365 + $0x52] sm:$0xff]
      %v1760 = vld [vmem:[%s1365 + $0x62] sm:$0xff]
      %v1761 = vld [vmem:[%s1365 + $0x6a] sm:$0xff]
      %v1762 = vld [vmem:[%s1365 + $0x7a] sm:$0xff]
      %v1763 = vld [vmem:[%s1365 + $0x82] sm:$0xff]
      %v1764 = vld [vmem:[%s1365 + $0x92] sm:$0xff]
      %v1765 = vld [vmem:[%s1365 + $0x9a] sm:$0xff]
      %v1766 = vld [vmem:[%s1365 + $0xaa] sm:$0xff]
      %v1767 = vld [vmem:[%s1365 + $0xb2] sm:$0xff]
      %v1768 = vld [vmem:[%s1365 + $0xc2] sm:$0xff]
      %v1769 = vld [vmem:[%s1365 + $0xca] sm:$0xff]
      %v1770 = vld [vmem:[%s1365 + $0xda] sm:$0xff]
      %v1771 = vld [vmem:[%s1365 + $0xe2] sm:$0xff]
      %v1772 = vld [vmem:[%s1365 + $0xf2] sm:$0xff]
      %v1773 = vld [vmem:[%s1365 + $0xfa] sm:$0xff]
      %v1774 = vld [vmem:[%s1365 + $0x10a] sm:$0xff]
      %v1775 = vld [vmem:[%s1365 + $0x112] sm:$0xff]
      %v1776 = vld [vmem:[%s1365 + $0x122] sm:$0xff]
      %v1777 = vld [vmem:[%s1365 + $0x12a] sm:$0xff]
      %v1778 = vld [vmem:[%s1365 + $0x13a] sm:$0xff]
      %v1779 = vld [vmem:[%s1365 + $0x142] sm:$0xff]
      %v1780 = vld [vmem:[%s1365 + $0x152] sm:$0xff]
      %v1781 = vld [vmem:[%s1365 + $0x15a] sm:$0xff]
      %v1782 = vld [vmem:[%s1365 + $0x16a] sm:$0xff]
      %v1783 = vld [vmem:[%s1365 + $0x172] sm:$0xff]
      %1816 = vrot.lane.b32.xlu0 %v1752, 32
      %v1817 = vpop.permute.xlu0 %1816
      %1818 = vrot.lane.b32.xlu0 %v1753, 32
      %v1819 = vpop.permute.xlu0 %1818
      %1820 = vrot.lane.b32.xlu0 %v1754, 32
      %v1821 = vpop.permute.xlu0 %1820
      %1822 = vrot.lane.b32.xlu0 %v1755, 32
      %v1823 = vpop.permute.xlu0 %1822
      %1824 = vrot.lane.b32.xlu0 %v1756, 32
      %v1825 = vpop.permute.xlu0 %1824
      %1826 = vrot.lane.b32.xlu0 %v1757, 32
      %v1827 = vpop.permute.xlu0 %1826
      %1828 = vrot.lane.b32.xlu0 %v1758, 32
      %v1829 = vpop.permute.xlu0 %1828
      %1830 = vrot.lane.b32.xlu0 %v1759, 32
      %v1831 = vpop.permute.xlu0 %1830
      %1832 = vrot.lane.b32.xlu0 %v1760, 32
      %v1833 = vpop.permute.xlu0 %1832
      %1834 = vrot.lane.b32.xlu0 %v1761, 32
      %v1835 = vpop.permute.xlu0 %1834
      %1836 = vrot.lane.b32.xlu0 %v1762, 32
      %v1837 = vpop.permute.xlu0 %1836
      %1838 = vrot.lane.b32.xlu0 %v1763, 32
      %v1839 = vpop.permute.xlu0 %1838
      %1840 = vrot.lane.b32.xlu0 %v1764, 32
      %v1841 = vpop.permute.xlu0 %1840
      %1842 = vrot.lane.b32.xlu0 %v1765, 32
      %v1843 = vpop.permute.xlu0 %1842
      %1844 = vrot.lane.b32.xlu0 %v1766, 32
      %v1845 = vpop.permute.xlu0 %1844
      %1846 = vrot.lane.b32.xlu0 %v1767, 32
      %v1847 = vpop.permute.xlu0 %1846
      %1848 = vrot.lane.b32.xlu0 %v1768, 32
      %v1849 = vpop.permute.xlu0 %1848
      %1850 = vrot.lane.b32.xlu0 %v1769, 32
      %v1851 = vpop.permute.xlu0 %1850
      %1852 = vrot.lane.b32.xlu0 %v1770, 32
      %v1853 = vpop.permute.xlu0 %1852
      %1854 = vrot.lane.b32.xlu0 %v1771, 32
      %v1855 = vpop.permute.xlu0 %1854
      %1856 = vrot.lane.b32.xlu0 %v1772, 32
      %v1857 = vpop.permute.xlu0 %1856
      %1858 = vrot.lane.b32.xlu0 %v1773, 32
      %v1859 = vpop.permute.xlu0 %1858
      %1860 = vrot.lane.b32.xlu0 %v1774, 32
      %v1861 = vpop.permute.xlu0 %1860
      %1862 = vrot.lane.b32.xlu0 %v1775, 32
      %v1863 = vpop.permute.xlu0 %1862
      %1864 = vrot.lane.b32.xlu0 %v1776, 32
      %v1865 = vpop.permute.xlu0 %1864
      %1866 = vrot.lane.b32.xlu0 %v1777, 32
      %v1867 = vpop.permute.xlu0 %1866
      %1868 = vrot.lane.b32.xlu0 %v1778, 32
      %v1869 = vpop.permute.xlu0 %1868
      %1870 = vrot.lane.b32.xlu0 %v1779, 32
      %v1871 = vpop.permute.xlu0 %1870
      %1872 = vrot.lane.b32.xlu0 %v1780, 32
      %v1873 = vpop.permute.xlu0 %1872
      %1874 = vrot.lane.b32.xlu0 %v1781, 32
      %v1875 = vpop.permute.xlu0 %1874
      %1876 = vrot.lane.b32.xlu0 %v1782, 32
      %v1877 = vpop.permute.xlu0 %1876
      %1878 = vrot.lane.b32.xlu0 %v1783, 32
      %v1879 = vpop.permute.xlu0 %1878
      %vm1912 = vcmask 294144
      %1913 = vst.msk [vmem:[#allocation3] sm:$0xff] %vm1912, %v1817
      %1914 = vst.msk [vmem:[#allocation3 + $0x8] sm:$0xff] %vm1912, %v1819
      %1915 = vst.msk [vmem:[#allocation3 + $0x10] sm:$0xff] %vm1912, %v1821
      %1916 = vst.msk [vmem:[#allocation3 + $0x18] sm:$0xff] %vm1912, %v1823
      %1917 = vst.msk [vmem:[#allocation3 + $0x20] sm:$0xff] %vm1912, %v1825
      %1918 = vst.msk [vmem:[#allocation3 + $0x28] sm:$0xff] %vm1912, %v1827
      %1919 = vst.msk [vmem:[#allocation3 + $0x30] sm:$0xff] %vm1912, %v1829
      %1920 = vst.msk [vmem:[#allocation3 + $0x38] sm:$0xff] %vm1912, %v1831
      %1921 = vst.msk [vmem:[#allocation3 + $0x40] sm:$0xff] %vm1912, %v1833
      %1922 = vst.msk [vmem:[#allocation3 + $0x48] sm:$0xff] %vm1912, %v1835
      %1923 = vst.msk [vmem:[#allocation3 + $0x50] sm:$0xff] %vm1912, %v1837
      %1924 = vst.msk [vmem:[#allocation3 + $0x58] sm:$0xff] %vm1912, %v1839
      %1925 = vst.msk [vmem:[#allocation3 + $0x60] sm:$0xff] %vm1912, %v1841
      %1926 = vst.msk [vmem:[#allocation3 + $0x68] sm:$0xff] %vm1912, %v1843
      %1927 = vst.msk [vmem:[#allocation3 + $0x70] sm:$0xff] %vm1912, %v1845
      %1928 = vst.msk [vmem:[#allocation3 + $0x78] sm:$0xff] %vm1912, %v1847
      %1929 = vst.msk [vmem:[#allocation3 + $0x80] sm:$0xff] %vm1912, %v1849
      %1930 = vst.msk [vmem:[#allocation3 + $0x88] sm:$0xff] %vm1912, %v1851
      %1931 = vst.msk [vmem:[#allocation3 + $0x90] sm:$0xff] %vm1912, %v1853
      %1932 = vst.msk [vmem:[#allocation3 + $0x98] sm:$0xff] %vm1912, %v1855
      %1933 = vst.msk [vmem:[#allocation3 + $0xa0] sm:$0xff] %vm1912, %v1857
      %1934 = vst.msk [vmem:[#allocation3 + $0xa8] sm:$0xff] %vm1912, %v1859
      %1935 = vst.msk [vmem:[#allocation3 + $0xb0] sm:$0xff] %vm1912, %v1861
      %1936 = vst.msk [vmem:[#allocation3 + $0xb8] sm:$0xff] %vm1912, %v1863
      %1937 = vst.msk [vmem:[#allocation3 + $0xc0] sm:$0xff] %vm1912, %v1865
      %1938 = vst.msk [vmem:[#allocation3 + $0xc8] sm:$0xff] %vm1912, %v1867
      %1939 = vst.msk [vmem:[#allocation3 + $0xd0] sm:$0xff] %vm1912, %v1869
      %1940 = vst.msk [vmem:[#allocation3 + $0xd8] sm:$0xff] %vm1912, %v1871
      %1941 = vst.msk [vmem:[#allocation3 + $0xe0] sm:$0xff] %vm1912, %v1873
      %1942 = vst.msk [vmem:[#allocation3 + $0xe8] sm:$0xff] %vm1912, %v1875
      %1943 = vst.msk [vmem:[#allocation3 + $0xf0] sm:$0xff] %vm1912, %v1877
      %1944 = vst.msk [vmem:[#allocation3 + $0xf8] sm:$0xff] %vm1912, %v1879
      %v1945 = vld [vmem:[#allocation3] sm:$0xff]
      %v1946 = vld [vmem:[#allocation3 + $0x8] sm:$0xff]
      %v1947 = vld [vmem:[#allocation3 + $0x10] sm:$0xff]
      %v1948 = vld [vmem:[#allocation3 + $0x18] sm:$0xff]
      %v1949 = vld [vmem:[#allocation3 + $0x20] sm:$0xff]
      %v1950 = vld [vmem:[#allocation3 + $0x28] sm:$0xff]
      %v1951 = vld [vmem:[#allocation3 + $0x30] sm:$0xff]
      %v1952 = vld [vmem:[#allocation3 + $0x38] sm:$0xff]
      %v1953 = vld [vmem:[#allocation3 + $0x40] sm:$0xff]
      %v1954 = vld [vmem:[#allocation3 + $0x48] sm:$0xff]
      %v1955 = vld [vmem:[#allocation3 + $0x50] sm:$0xff]
      %v1956 = vld [vmem:[#allocation3 + $0x58] sm:$0xff]
      %v1957 = vld [vmem:[#allocation3 + $0x60] sm:$0xff]
      %v1958 = vld [vmem:[#allocation3 + $0x68] sm:$0xff]
      %v1959 = vld [vmem:[#allocation3 + $0x70] sm:$0xff]
      %v1960 = vld [vmem:[#allocation3 + $0x78] sm:$0xff]
      %v1961 = vld [vmem:[#allocation3 + $0x80] sm:$0xff]
      %v1962 = vld [vmem:[#allocation3 + $0x88] sm:$0xff]
      %v1963 = vld [vmem:[#allocation3 + $0x90] sm:$0xff]
      %v1964 = vld [vmem:[#allocation3 + $0x98] sm:$0xff]
      %v1965 = vld [vmem:[#allocation3 + $0xa0] sm:$0xff]
      %v1966 = vld [vmem:[#allocation3 + $0xa8] sm:$0xff]
      %v1967 = vld [vmem:[#allocation3 + $0xb0] sm:$0xff]
      %v1968 = vld [vmem:[#allocation3 + $0xb8] sm:$0xff]
      %v1969 = vld [vmem:[#allocation3 + $0xc0] sm:$0xff]
      %v1970 = vld [vmem:[#allocation3 + $0xc8] sm:$0xff]
      %v1971 = vld [vmem:[#allocation3 + $0xd0] sm:$0xff]
      %v1972 = vld [vmem:[#allocation3 + $0xd8] sm:$0xff]
      %v1973 = vld [vmem:[#allocation3 + $0xe0] sm:$0xff]
      %v1974 = vld [vmem:[#allocation3 + $0xe8] sm:$0xff]
      %v1975 = vld [vmem:[#allocation3 + $0xf0] sm:$0xff]
      %v1976 = vld [vmem:[#allocation3 + $0xf8] sm:$0xff]
      %v1977 = vld [vmem:[%s1] sm:$0xff]
      %v1978 = vld [vmem:[%s1 + $0x8] sm:$0xff]
      %v1979 = vld [vmem:[%s1 + $0x10] sm:$0xff]
      %v1980 = vld [vmem:[%s1 + $0x18] sm:$0xff]
      %v1981 = vld [vmem:[%s1 + $0x20] sm:$0xf]
      %vm1982 = vcmask 293888
      %v1984 = vsel %vm1982, %v1945, 0
      %v1987 = vsel %vm1982, %v1946, 0
      %v1990 = vsel %vm1982, %v1947, 0
      %v1993 = vsel %vm1982, %v1948, 0
      %v1996 = vsel %vm1982, %v1949, 0
      %v1999 = vsel %vm1982, %v1950, 0
      %v2002 = vsel %vm1982, %v1951, 0
      %v2005 = vsel %vm1982, %v1952, 0
      %v2008 = vsel %vm1982, %v1953, 0
      %v2011 = vsel %vm1982, %v1954, 0
      %v2014 = vsel %vm1982, %v1955, 0
      %v2017 = vsel %vm1982, %v1956, 0
      %v2020 = vsel %vm1982, %v1957, 0
      %v2023 = vsel %vm1982, %v1958, 0
      %v2026 = vsel %vm1982, %v1959, 0
      %v2029 = vsel %vm1982, %v1960, 0
      %v2032 = vsel %vm1982, %v1961, 0
      %v2035 = vsel %vm1982, %v1962, 0
      %v2038 = vsel %vm1982, %v1963, 0
      %v2041 = vsel %vm1982, %v1964, 0
      %v2044 = vsel %vm1982, %v1965, 0
      %v2047 = vsel %vm1982, %v1966, 0
      %v2050 = vsel %vm1982, %v1967, 0
      %v2053 = vsel %vm1982, %v1968, 0
      %v2056 = vsel %vm1982, %v1969, 0
      %v2059 = vsel %vm1982, %v1970, 0
      %v2062 = vsel %vm1982, %v1971, 0
      %v2065 = vsel %vm1982, %v1972, 0
      %v2068 = vsel %vm1982, %v1973, 0
      %v2071 = vsel %vm1982, %v1974, 0
      %v2074 = vsel %vm1982, %v1975, 0
      %v2077 = vsel %vm1982, %v1976, 0
      %vm2079 = vcmask 1043456
      %v2081 = vsel %vm2079, %v1981, 0
      %2083 = vmatprep.subr.mxu0 0.0
      %2084 = vmatpush1.msra.mxu0 %v1977
      %2085 = vmatprep.subr.mxu0 0.0
      %2086 = vmatpush1.msra.mxu0 %v1978
      %2087 = vmatprep.subr.mxu0 0.0
      %2088 = vmatpush1.msra.mxu0 %v1979
      %2089 = vmatprep.subr.mxu0 0.0
      %2090 = vmatpush1.msra.mxu0 %v1980
      %2091 = vmatprep.subr.mxu0 0.0
      %2092 = vmatpush1.msra.mxu0 %v2081
      %2093 = vmatprep.subr.mxu0 0.0
      %2094 = vmatpush1.msra.mxu0 0.0
      %2095 = vmatprep.subr.mxu0 0.0
      %2096 = vmatpush1.msra.mxu0 0.0
      %2097 = vmatprep.subr.mxu0 0.0
      %2098 = vmatpush1.msra.mxu0 0.0
      %2099 = vmatprep.subr.mxu0 0.0
      %2100 = vmatpush1.msra.mxu0 0.0
      %2101 = vmatprep.subr.mxu0 0.0
      %2102 = vmatpush1.msra.mxu0 0.0
      %2103 = vmatprep.subr.mxu0 0.0
      %2104 = vmatpush1.msra.mxu0 0.0
      %2105 = vmatprep.subr.mxu0 0.0
      %2106 = vmatpush1.msra.mxu0 0.0
      %2107 = vmatprep.subr.mxu0 0.0
      %2108 = vmatpush1.msra.mxu0 0.0
      %2109 = vmatprep.subr.mxu0 0.0
      %2110 = vmatpush1.msra.mxu0 0.0
      %2111 = vmatprep.subr.mxu0 0.0
      %2112 = vmatpush1.msra.mxu0 0.0
      %2113 = vmatprep.subr.mxu0 0.0
      %2114 = vmatpush1.msra.mxu0 0.0
      %2115 = vmatprep.subr.mxu0 0.0
      %2116 = vmatpush1.msra.mxu0 0.0
      %2117 = vmatprep.subr.mxu0 0.0
      %2118 = vmatpush1.msra.mxu0 0.0
      %2119 = vmatprep.subr.mxu0 0.0
      %2120 = vmatpush1.msra.mxu0 0.0
      %2121 = vmatprep.subr.mxu0 0.0
      %2122 = vmatpush1.msra.mxu0 0.0
      %2123 = vmatprep.subr.mxu0 0.0
      %2124 = vmatpush1.msra.mxu0 0.0
      %2125 = vmatprep.subr.mxu0 0.0
      %2126 = vmatpush1.msra.mxu0 0.0
      %2127 = vmatprep.subr.mxu0 0.0
      %2128 = vmatpush1.msra.mxu0 0.0
      %2129 = vmatprep.subr.mxu0 0.0
      %2130 = vmatpush1.msra.mxu0 0.0
      %2131 = vmatprep.subr.mxu0 0.0
      %2132 = vmatpush1.msra.mxu0 0.0
      %2133 = vmatprep.subr.mxu0 0.0
      %2134 = vmatpush1.msra.mxu0 0.0
      %2135 = vmatprep.subr.mxu0 0.0
      %2136 = vmatpush1.msra.mxu0 0.0
      %2137 = vmatprep.subr.mxu0 0.0
      %2138 = vmatpush1.msra.mxu0 0.0
      %2139 = vmatprep.subr.mxu0 0.0
      %2140 = vmatpush1.msra.mxu0 0.0
      %2141 = vmatprep.subr.mxu0 0.0
      %2142 = vmatpush1.msra.mxu0 0.0
      %2143 = vmatprep.subr.mxu0 0.0
      %2144 = vmatpush1.msra.mxu0 0.0
      %2145 = vmatprep.subr.mxu0 0.0
      %2146 = vmatpush1.msra.mxu0 0.0
      %2147 = vmatprep.mubr.f32.mxu0 0.0
      %2148 = vmatmul.mubr.f32.gmra.mrb[0].mxu0 %v1984
      %v2149 = vpop.f32.mrb[0].mxu0
      %v2150 = vadd.f32 0.0, %v2149
      %v2151 = vpop.f32.mrb[0].mxu0
      %2152 = vmatprep.mubr.f32.mxu0 0.0
      %2153 = vmatmul.mubr.f32.gmra.mrb[0].mxu0 %v1987
      %v2154 = vpop.f32.mrb[0].mxu0
      %v2155 = vadd.f32 0.0, %v2154
      %v2156 = vpop.f32.mrb[0].mxu0
      %2157 = vmatprep.mubr.f32.mxu0 0.0
      %2158 = vmatmul.mubr.f32.gmra.mrb[0].mxu0 %v1990
      %v2159 = vpop.f32.mrb[0].mxu0
      %v2160 = vadd.f32 0.0, %v2159
      %v2161 = vpop.f32.mrb[0].mxu0
      %2162 = vmatprep.mubr.f32.mxu0 0.0
      %2163 = vmatmul.mubr.f32.gmra.mrb[0].mxu0 %v1993
      %v2164 = vpop.f32.mrb[0].mxu0
      %v2165 = vadd.f32 0.0, %v2164
      %v2166 = vpop.f32.mrb[0].mxu0
      %2167 = vmatprep.mubr.f32.mxu0 0.0
      %2168 = vmatmul.mubr.f32.gmra.mrb[0].mxu0 %v1996
      %v2169 = vpop.f32.mrb[0].mxu0
      %v2170 = vadd.f32 0.0, %v2169
      %v2171 = vpop.f32.mrb[0].mxu0
      %2172 = vmatprep.mubr.f32.mxu0 0.0
      %2173 = vmatmul.mubr.f32.gmra.mrb[0].mxu0 %v1999
      %v2174 = vpop.f32.mrb[0].mxu0
      %v2175 = vadd.f32 0.0, %v2174
      %v2176 = vpop.f32.mrb[0].mxu0
      %2177 = vmatprep.mubr.f32.mxu0 0.0
      %2178 = vmatmul.mubr.f32.gmra.mrb[0].mxu0 %v2002
      %v2179 = vpop.f32.mrb[0].mxu0
      %v2180 = vadd.f32 0.0, %v2179
      %v2181 = vpop.f32.mrb[0].mxu0
      %2182 = vmatprep.mubr.f32.mxu0 0.0
      %2183 = vmatmul.mubr.f32.gmra.mrb[0].mxu0 %v2005
      %v2184 = vpop.f32.mrb[0].mxu0
      %v2185 = vadd.f32 0.0, %v2184
      %v2186 = vpop.f32.mrb[0].mxu0
      %2187 = vmatprep.mubr.f32.mxu0 0.0
      %2188 = vmatmul.mubr.f32.gmra.mrb[0].mxu0 %v2008
      %v2189 = vpop.f32.mrb[0].mxu0
      %v2190 = vadd.f32 0.0, %v2189
      %v2191 = vpop.f32.mrb[0].mxu0
      %2192 = vmatprep.mubr.f32.mxu0 0.0
      %2193 = vmatmul.mubr.f32.gmra.mrb[0].mxu0 %v2011
      %v2194 = vpop.f32.mrb[0].mxu0
      %v2195 = vadd.f32 0.0, %v2194
      %v2196 = vpop.f32.mrb[0].mxu0
      %2197 = vmatprep.mubr.f32.mxu0 0.0
      %2198 = vmatmul.mubr.f32.gmra.mrb[0].mxu0 %v2014
      %v2199 = vpop.f32.mrb[0].mxu0
      %v2200 = vadd.f32 0.0, %v2199
      %v2201 = vpop.f32.mrb[0].mxu0
      %2202 = vmatprep.mubr.f32.mxu0 0.0
      %2203 = vmatmul.mubr.f32.gmra.mrb[0].mxu0 %v2017
      %v2204 = vpop.f32.mrb[0].mxu0
      %v2205 = vadd.f32 0.0, %v2204
      %v2206 = vpop.f32.mrb[0].mxu0
      %2207 = vmatprep.mubr.f32.mxu0 0.0
      %2208 = vmatmul.mubr.f32.gmra.mrb[0].mxu0 %v2020
      %v2209 = vpop.f32.mrb[0].mxu0
      %v2210 = vadd.f32 0.0, %v2209
      %v2211 = vpop.f32.mrb[0].mxu0
      %2212 = vmatprep.mubr.f32.mxu0 0.0
      %2213 = vmatmul.mubr.f32.gmra.mrb[0].mxu0 %v2023
      %v2214 = vpop.f32.mrb[0].mxu0
      %v2215 = vadd.f32 0.0, %v2214
      %v2216 = vpop.f32.mrb[0].mxu0
      %2217 = vmatprep.mubr.f32.mxu0 0.0
      %2218 = vmatmul.mubr.f32.gmra.mrb[0].mxu0 %v2026
      %v2219 = vpop.f32.mrb[0].mxu0
      %v2220 = vadd.f32 0.0, %v2219
      %v2221 = vpop.f32.mrb[0].mxu0
      %2222 = vmatprep.mubr.f32.mxu0 0.0
      %2223 = vmatmul.mubr.f32.gmra.mrb[0].mxu0 %v2029
      %v2224 = vpop.f32.mrb[0].mxu0
      %v2225 = vadd.f32 0.0, %v2224
      %v2226 = vpop.f32.mrb[0].mxu0
      %2227 = vmatprep.mubr.f32.mxu0 0.0
      %2228 = vmatmul.mubr.f32.gmra.mrb[0].mxu0 %v2032
      %v2229 = vpop.f32.mrb[0].mxu0
      %v2230 = vadd.f32 0.0, %v2229
      %v2231 = vpop.f32.mrb[0].mxu0
      %2232 = vmatprep.mubr.f32.mxu0 0.0
      %2233 = vmatmul.mubr.f32.gmra.mrb[0].mxu0 %v2035
      %v2234 = vpop.f32.mrb[0].mxu0
      %v2235 = vadd.f32 0.0, %v2234
      %v2236 = vpop.f32.mrb[0].mxu0
      %2237 = vmatprep.mubr.f32.mxu0 0.0
      %2238 = vmatmul.mubr.f32.gmra.mrb[0].mxu0 %v2038
      %v2239 = vpop.f32.mrb[0].mxu0
      %v2240 = vadd.f32 0.0, %v2239
      %v2241 = vpop.f32.mrb[0].mxu0
      %2242 = vmatprep.mubr.f32.mxu0 0.0
      %2243 = vmatmul.mubr.f32.gmra.mrb[0].mxu0 %v2041
      %v2244 = vpop.f32.mrb[0].mxu0
      %v2245 = vadd.f32 0.0, %v2244
      %v2246 = vpop.f32.mrb[0].mxu0
      %2247 = vmatprep.mubr.f32.mxu0 0.0
      %2248 = vmatmul.mubr.f32.gmra.mrb[0].mxu0 %v2044
      %v2249 = vpop.f32.mrb[0].mxu0
      %v2250 = vadd.f32 0.0, %v2249
      %v2251 = vpop.f32.mrb[0].mxu0
      %2252 = vmatprep.mubr.f32.mxu0 0.0
      %2253 = vmatmul.mubr.f32.gmra.mrb[0].mxu0 %v2047
      %v2254 = vpop.f32.mrb[0].mxu0
      %v2255 = vadd.f32 0.0, %v2254
      %v2256 = vpop.f32.mrb[0].mxu0
      %2257 = vmatprep.mubr.f32.mxu0 0.0
      %2258 = vmatmul.mubr.f32.gmra.mrb[0].mxu0 %v2050
      %v2259 = vpop.f32.mrb[0].mxu0
      %v2260 = vadd.f32 0.0, %v2259
      %v2261 = vpop.f32.mrb[0].mxu0
      %2262 = vmatprep.mubr.f32.mxu0 0.0
      %2263 = vmatmul.mubr.f32.gmra.mrb[0].mxu0 %v2053
      %v2264 = vpop.f32.mrb[0].mxu0
      %v2265 = vadd.f32 0.0, %v2264
      %v2266 = vpop.f32.mrb[0].mxu0
      %2267 = vmatprep.mubr.f32.mxu0 0.0
      %2268 = vmatmul.mubr.f32.gmra.mrb[0].mxu0 %v2056
      %v2269 = vpop.f32.mrb[0].mxu0
      %v2270 = vadd.f32 0.0, %v2269
      %v2271 = vpop.f32.mrb[0].mxu0
      %2272 = vmatprep.mubr.f32.mxu0 0.0
      %2273 = vmatmul.mubr.f32.gmra.mrb[0].mxu0 %v2059
      %v2274 = vpop.f32.mrb[0].mxu0
      %v2275 = vadd.f32 0.0, %v2274
      %v2276 = vpop.f32.mrb[0].mxu0
      %2277 = vmatprep.mubr.f32.mxu0 0.0
      %2278 = vmatmul.mubr.f32.gmra.mrb[0].mxu0 %v2062
      %v2279 = vpop.f32.mrb[0].mxu0
      %v2280 = vadd.f32 0.0, %v2279
      %v2281 = vpop.f32.mrb[0].mxu0
      %2282 = vmatprep.mubr.f32.mxu0 0.0
      %2283 = vmatmul.mubr.f32.gmra.mrb[0].mxu0 %v2065
      %v2284 = vpop.f32.mrb[0].mxu0
      %v2285 = vadd.f32 0.0, %v2284
      %v2286 = vpop.f32.mrb[0].mxu0
      %2287 = vmatprep.mubr.f32.mxu0 0.0
      %2288 = vmatmul.mubr.f32.gmra.mrb[0].mxu0 %v2068
      %v2289 = vpop.f32.mrb[0].mxu0
      %v2290 = vadd.f32 0.0, %v2289
      %v2291 = vpop.f32.mrb[0].mxu0
      %2292 = vmatprep.mubr.f32.mxu0 0.0
      %2293 = vmatmul.mubr.f32.gmra.mrb[0].mxu0 %v2071
      %v2294 = vpop.f32.mrb[0].mxu0
      %v2295 = vadd.f32 0.0, %v2294
      %v2296 = vpop.f32.mrb[0].mxu0
      %2297 = vmatprep.mubr.f32.mxu0 0.0
      %2298 = vmatmul.mubr.f32.gmra.mrb[0].mxu0 %v2074
      %v2299 = vpop.f32.mrb[0].mxu0
      %v2300 = vadd.f32 0.0, %v2299
      %v2301 = vpop.f32.mrb[0].mxu0
      %2302 = vmatprep.mubr.f32.mxu0 0.0
      %2303 = vmatmul.mubr.f32.gmra.mrb[0].mxu0 %v2077
      %v2304 = vpop.f32.mrb[0].mxu0
      %v2305 = vadd.f32 0.0, %v2304
      %v2306 = vpop.f32.mrb[0].mxu0
      %2307 = vdwg.mxu0
      %vm2308 = vcmask 64512
      %v2309 = vsel %vm2308, %v2150, 0.0
      %v2310 = vsel %vm2308, %v2155, 0.0
      %v2311 = vadd.f32 %v2309, %v2310
      %v2312 = vsel %vm2308, %v2160, 0.0
      %v2313 = vadd.f32 %v2311, %v2312
      %v2314 = vsel %vm2308, %v2165, 0.0
      %v2315 = vadd.f32 %v2313, %v2314
      %v2316 = vsel %vm2308, %v2170, 0.0
      %v2317 = vadd.f32 %v2315, %v2316
      %v2318 = vsel %vm2308, %v2175, 0.0
      %v2319 = vadd.f32 %v2317, %v2318
      %v2320 = vsel %vm2308, %v2180, 0.0
      %v2321 = vadd.f32 %v2319, %v2320
      %v2322 = vsel %vm2308, %v2185, 0.0
      %v2323 = vadd.f32 %v2321, %v2322
      %v2324 = vsel %vm2308, %v2190, 0.0
      %v2325 = vadd.f32 %v2323, %v2324
      %v2326 = vsel %vm2308, %v2195, 0.0
      %v2327 = vadd.f32 %v2325, %v2326
      %v2328 = vsel %vm2308, %v2200, 0.0
      %v2329 = vadd.f32 %v2327, %v2328
      %v2330 = vsel %vm2308, %v2205, 0.0
      %v2331 = vadd.f32 %v2329, %v2330
      %v2332 = vsel %vm2308, %v2210, 0.0
      %v2333 = vadd.f32 %v2331, %v2332
      %v2334 = vsel %vm2308, %v2215, 0.0
      %v2335 = vadd.f32 %v2333, %v2334
      %v2336 = vsel %vm2308, %v2220, 0.0
      %v2337 = vadd.f32 %v2335, %v2336
      %v2338 = vsel %vm2308, %v2225, 0.0
      %v2339 = vadd.f32 %v2337, %v2338
      %v2340 = vsel %vm2308, %v2230, 0.0
      %v2341 = vadd.f32 %v2339, %v2340
      %v2342 = vsel %vm2308, %v2235, 0.0
      %v2343 = vadd.f32 %v2341, %v2342
      %v2344 = vsel %vm2308, %v2240, 0.0
      %v2345 = vadd.f32 %v2343, %v2344
      %v2346 = vsel %vm2308, %v2245, 0.0
      %v2347 = vadd.f32 %v2345, %v2346
      %v2348 = vsel %vm2308, %v2250, 0.0
      %v2349 = vadd.f32 %v2347, %v2348
      %v2350 = vsel %vm2308, %v2255, 0.0
      %v2351 = vadd.f32 %v2349, %v2350
      %v2352 = vsel %vm2308, %v2260, 0.0
      %v2353 = vadd.f32 %v2351, %v2352
      %v2354 = vsel %vm2308, %v2265, 0.0
      %v2355 = vadd.f32 %v2353, %v2354
      %v2356 = vsel %vm2308, %v2270, 0.0
      %v2357 = vadd.f32 %v2355, %v2356
      %v2358 = vsel %vm2308, %v2275, 0.0
      %v2359 = vadd.f32 %v2357, %v2358
      %v2360 = vsel %vm2308, %v2280, 0.0
      %v2361 = vadd.f32 %v2359, %v2360
      %v2362 = vsel %vm2308, %v2285, 0.0
      %v2363 = vadd.f32 %v2361, %v2362
      %v2364 = vsel %vm2308, %v2290, 0.0
      %v2365 = vadd.f32 %v2363, %v2364
      %v2366 = vsel %vm2308, %v2295, 0.0
      %v2367 = vadd.f32 %v2365, %v2366
      %v2368 = vsel %vm2308, %v2300, 0.0
      %v2369 = vadd.f32 %v2367, %v2368
      %v2370 = vsel %vm2308, %v2305, 0.0
      %v2371 = vadd.f32 %v2369, %v2370
      %v2372 = vrot.slane %v2371, 4
      %v2373 = vadd.f32 %v2371, %v2372
      %v2374 = vrot.slane %v2373, 2
      %v2375 = vadd.f32 %v2373, %v2374
      %v2376 = vrot.slane %v2375, 1
      %v2377 = vadd.f32 %v2375, %v2376
      %vm2378 = vcmask 57344
      %2379 = vst.msk [vmem:[%s211] sm:$0x1] %vm2378, %v2377
      %v2380 = vmul.f32 %v2150, %v2150
      %v2381 = vmul.f32 %v2155, %v2155
      %v2382 = vmul.f32 %v2160, %v2160
      %v2383 = vmul.f32 %v2165, %v2165
      %v2384 = vmul.f32 %v2170, %v2170
      %v2385 = vmul.f32 %v2175, %v2175
      %v2386 = vmul.f32 %v2180, %v2180
      %v2387 = vmul.f32 %v2185, %v2185
      %v2388 = vmul.f32 %v2190, %v2190
      %v2389 = vmul.f32 %v2195, %v2195
      %v2390 = vmul.f32 %v2200, %v2200
      %v2391 = vmul.f32 %v2205, %v2205
      %v2392 = vmul.f32 %v2210, %v2210
      %v2393 = vmul.f32 %v2215, %v2215
      %v2394 = vmul.f32 %v2220, %v2220
      %v2395 = vmul.f32 %v2225, %v2225
      %v2396 = vmul.f32 %v2230, %v2230
      %v2397 = vmul.f32 %v2235, %v2235
      %v2398 = vmul.f32 %v2240, %v2240
      %v2399 = vmul.f32 %v2245, %v2245
      %v2400 = vmul.f32 %v2250, %v2250
      %v2401 = vmul.f32 %v2255, %v2255
      %v2402 = vmul.f32 %v2260, %v2260
      %v2403 = vmul.f32 %v2265, %v2265
      %v2404 = vmul.f32 %v2270, %v2270
      %v2405 = vmul.f32 %v2275, %v2275
      %v2406 = vmul.f32 %v2280, %v2280
      %v2407 = vmul.f32 %v2285, %v2285
      %v2408 = vmul.f32 %v2290, %v2290
      %v2409 = vmul.f32 %v2295, %v2295
      %v2410 = vmul.f32 %v2300, %v2300
      %v2411 = vmul.f32 %v2305, %v2305
      %v2412 = vsel %vm2308, %v2380, 0.0
      %v2413 = vsel %vm2308, %v2381, 0.0
      %v2414 = vadd.f32 %v2412, %v2413
      %v2415 = vsel %vm2308, %v2382, 0.0
      %v2416 = vadd.f32 %v2414, %v2415
      %v2417 = vsel %vm2308, %v2383, 0.0
      %v2418 = vadd.f32 %v2416, %v2417
      %v2419 = vsel %vm2308, %v2384, 0.0
      %v2420 = vadd.f32 %v2418, %v2419
      %v2421 = vsel %vm2308, %v2385, 0.0
      %v2422 = vadd.f32 %v2420, %v2421
      %v2423 = vsel %vm2308, %v2386, 0.0
      %v2424 = vadd.f32 %v2422, %v2423
      %v2425 = vsel %vm2308, %v2387, 0.0
      %v2426 = vadd.f32 %v2424, %v2425
      %v2427 = vsel %vm2308, %v2388, 0.0
      %v2428 = vadd.f32 %v2426, %v2427
      %v2429 = vsel %vm2308, %v2389, 0.0
      %v2430 = vadd.f32 %v2428, %v2429
      %v2431 = vsel %vm2308, %v2390, 0.0
      %v2432 = vadd.f32 %v2430, %v2431
      %v2433 = vsel %vm2308, %v2391, 0.0
      %v2434 = vadd.f32 %v2432, %v2433
      %v2435 = vsel %vm2308, %v2392, 0.0
      %v2436 = vadd.f32 %v2434, %v2435
      %v2437 = vsel %vm2308, %v2393, 0.0
      %v2438 = vadd.f32 %v2436, %v2437
      %v2439 = vsel %vm2308, %v2394, 0.0
      %v2440 = vadd.f32 %v2438, %v2439
      %v2441 = vsel %vm2308, %v2395, 0.0
      %v2442 = vadd.f32 %v2440, %v2441
      %v2443 = vsel %vm2308, %v2396, 0.0
      %v2444 = vadd.f32 %v2442, %v2443
      %v2445 = vsel %vm2308, %v2397, 0.0
      %v2446 = vadd.f32 %v2444, %v2445
      %v2447 = vsel %vm2308, %v2398, 0.0
      %v2448 = vadd.f32 %v2446, %v2447
      %v2449 = vsel %vm2308, %v2399, 0.0
      %v2450 = vadd.f32 %v2448, %v2449
      %v2451 = vsel %vm2308, %v2400, 0.0
      %v2452 = vadd.f32 %v2450, %v2451
      %v2453 = vsel %vm2308, %v2401, 0.0
      %v2454 = vadd.f32 %v2452, %v2453
      %v2455 = vsel %vm2308, %v2402, 0.0
      %v2456 = vadd.f32 %v2454, %v2455
      %v2457 = vsel %vm2308, %v2403, 0.0
      %v2458 = vadd.f32 %v2456, %v2457
      %v2459 = vsel %vm2308, %v2404, 0.0
      %v2460 = vadd.f32 %v2458, %v2459
      %v2461 = vsel %vm2308, %v2405, 0.0
      %v2462 = vadd.f32 %v2460, %v2461
      %v2463 = vsel %vm2308, %v2406, 0.0
      %v2464 = vadd.f32 %v2462, %v2463
      %v2465 = vsel %vm2308, %v2407, 0.0
      %v2466 = vadd.f32 %v2464, %v2465
      %v2467 = vsel %vm2308, %v2408, 0.0
      %v2468 = vadd.f32 %v2466, %v2467
      %v2469 = vsel %vm2308, %v2409, 0.0
      %v2470 = vadd.f32 %v2468, %v2469
      %v2471 = vsel %vm2308, %v2410, 0.0
      %v2472 = vadd.f32 %v2470, %v2471
      %v2473 = vsel %vm2308, %v2411, 0.0
      %v2474 = vadd.f32 %v2472, %v2473
      %v2475 = vrot.slane %v2474, 4
      %v2476 = vadd.f32 %v2474, %v2475
      %v2477 = vrot.slane %v2476, 2
      %v2478 = vadd.f32 %v2476, %v2477
      %v2479 = vrot.slane %v2478, 1
      %v2480 = vadd.f32 %v2478, %v2479
      %2481 = vst.msk [vmem:[%s214] sm:$0x1] %vm2378, %v2480
      %2482 = vst.msk [vmem:[%s208] sm:$0xff] %vm2308, %v2150
      %2483 = vst.msk [vmem:[%s208 + $0x8] sm:$0xff] %vm2308, %v2155
      %2484 = vst.msk [vmem:[%s208 + $0x10] sm:$0xff] %vm2308, %v2160
      %2485 = vst.msk [vmem:[%s208 + $0x18] sm:$0xff] %vm2308, %v2165
      %2486 = vst.msk [vmem:[%s208 + $0x20] sm:$0xff] %vm2308, %v2170
      %2487 = vst.msk [vmem:[%s208 + $0x28] sm:$0xff] %vm2308, %v2175
      %2488 = vst.msk [vmem:[%s208 + $0x30] sm:$0xff] %vm2308, %v2180
      %2489 = vst.msk [vmem:[%s208 + $0x38] sm:$0xff] %vm2308, %v2185
      %2490 = vst.msk [vmem:[%s208 + $0x40] sm:$0xff] %vm2308, %v2190
      %2491 = vst.msk [vmem:[%s208 + $0x48] sm:$0xff] %vm2308, %v2195
      %2492 = vst.msk [vmem:[%s208 + $0x50] sm:$0xff] %vm2308, %v2200
      %2493 = vst.msk [vmem:[%s208 + $0x58] sm:$0xff] %vm2308, %v2205
      %2494 = vst.msk [vmem:[%s208 + $0x60] sm:$0xff] %vm2308, %v2210
      %2495 = vst.msk [vmem:[%s208 + $0x68] sm:$0xff] %vm2308, %v2215
      %2496 = vst.msk [vmem:[%s208 + $0x70] sm:$0xff] %vm2308, %v2220
      %2497 = vst.msk [vmem:[%s208 + $0x78] sm:$0xff] %vm2308, %v2225
      %2498 = vst.msk [vmem:[%s208 + $0x80] sm:$0xff] %vm2308, %v2230
      %2499 = vst.msk [vmem:[%s208 + $0x88] sm:$0xff] %vm2308, %v2235
      %2500 = vst.msk [vmem:[%s208 + $0x90] sm:$0xff] %vm2308, %v2240
      %2501 = vst.msk [vmem:[%s208 + $0x98] sm:$0xff] %vm2308, %v2245
      %2502 = vst.msk [vmem:[%s208 + $0xa0] sm:$0xff] %vm2308, %v2250
      %2503 = vst.msk [vmem:[%s208 + $0xa8] sm:$0xff] %vm2308, %v2255
      %2504 = vst.msk [vmem:[%s208 + $0xb0] sm:$0xff] %vm2308, %v2260
      %2505 = vst.msk [vmem:[%s208 + $0xb8] sm:$0xff] %vm2308, %v2265
      %2506 = vst.msk [vmem:[%s208 + $0xc0] sm:$0xff] %vm2308, %v2270
      %2507 = vst.msk [vmem:[%s208 + $0xc8] sm:$0xff] %vm2308, %v2275
      %2508 = vst.msk [vmem:[%s208 + $0xd0] sm:$0xff] %vm2308, %v2280
      %2509 = vst.msk [vmem:[%s208 + $0xd8] sm:$0xff] %vm2308, %v2285
      %2510 = vst.msk [vmem:[%s208 + $0xe0] sm:$0xff] %vm2308, %v2290
      %2511 = vst.msk [vmem:[%s208 + $0xe8] sm:$0xff] %vm2308, %v2295
      %2512 = vst.msk [vmem:[%s208 + $0xf0] sm:$0xff] %vm2308, %v2300
      %2513 = vst.msk [vmem:[%s208 + $0xf8] sm:$0xff] %vm2308, %v2305
      %p2514 = scmp.lt.s32.totalorder %s16, 1
      %s2515 = scalar_select %p2514, %s16, 1
      %s2516 = smul.addr %s2515, 32
      %s2517 = smul.addr %s2516, 8
      %s2518 = scalar_lea.vmem %s2, %s2517
      %p2519 = scmp.lt.s32.totalorder %s16, 1
      %s2520 = scalar_select %p2519, %s16, 1
      %s2521 = scalar_lea.vmem %s3, %s2520
      %p2522 = scmp.lt.s32.totalorder %s16, 1
      %s2523 = scalar_select %p2522, %s16, 1
      %s2524 = scalar_lea.vmem %s4, %s2523
      // Predicated region
      $region29: #{contracting_block_forward.3} parent=27 // pred_check
        %p2525 = pneg %p81
      $region30: #{contracting_block_forward.3} parent=27 // pred_check_branch
        %2527 = sbr.rel (%p2525) target = $region32
      $region31: #{contracting_block_forward.3} parent=27 // pred_region
        _
      $region32: #{contracting_block_forward.3} parent=27 // pred_fallthru
        _
      // Predicated region
      $region33: #{contracting_block_forward.3} parent=27 // pred_check
        %p2528 = pneg %p107
      $region34: #{contracting_block_forward.3} parent=27 // pred_check_branch
        %2530 = sbr.rel (%p2528) target = $region36
      $region35: #{contracting_block_forward.3} parent=27 // pred_region
        _
      $region36: #{contracting_block_forward.3} parent=27 // pred_fallthru
        _
      // Predicated region
      $region37: #{contracting_block_forward.3} parent=27 // pred_check
        %p2531 = pneg %p133
      $region38: #{contracting_block_forward.3} parent=27 // pred_check_branch
        %2533 = sbr.rel (%p2531) target = $region40
      $region39: #{contracting_block_forward.3} parent=27 // pred_region
        _
      $region40: #{contracting_block_forward.3} parent=27 // pred_fallthru
        _
    $region28: #{contracting_block_forward.3} parent=5 // pred_fallthru
      _
    %p2534 = scmp.le.s32.totalorder 2, %s11
    // Predicated region
    $region41: #{contracting_block_forward.3} parent=5 // pred_check
      %p2535 = pneg %p2534
    $region42: #{contracting_block_forward.3} parent=5 // pred_check_branch
      %2537 = sbr.rel (%p2535) target = $region44
    $region43: #{contracting_block_forward.3} parent=5 // pred_region
      %s2538 = ssub.s32 %s11, 2
      // Predicated region
      $region45: #{contracting_block_forward.3} parent=43 // pred_check
        %p2539 = pneg %p87
      $region46: #{contracting_block_forward.3} parent=43 // pred_check_branch
        %2541 = sbr.rel (%p2539) target = $region48
      $region47: #{contracting_block_forward.3} parent=43 // pred_region
        %p2542 = scmp.lt.s32.totalorder %s17, 1
        %s2543 = scalar_select %p2542, %s17, 1
        %s2544 = smul.addr %s2543, 32
        %s2545 = smul.addr %s2544, 8
        %s2546 = scalar_lea.vmem %s2, %s2545
      $region48: #{contracting_block_forward.3} parent=43 // pred_fallthru
        _
      // Predicated region
      $region49: #{contracting_block_forward.3} parent=43 // pred_check
        %p2547 = pneg %p113
      $region50: #{contracting_block_forward.3} parent=43 // pred_check_branch
        %2549 = sbr.rel (%p2547) target = $region52
      $region51: #{contracting_block_forward.3} parent=43 // pred_region
        %p2550 = scmp.lt.s32.totalorder %s17, 1
        %s2551 = scalar_select %p2550, %s17, 1
        %s2552 = scalar_lea.vmem %s3, %s2551
      $region52: #{contracting_block_forward.3} parent=43 // pred_fallthru
        _
      // Predicated region
      $region53: #{contracting_block_forward.3} parent=43 // pred_check
        %p2553 = pneg %p139
      $region54: #{contracting_block_forward.3} parent=43 // pred_check_branch
        %2555 = sbr.rel (%p2553) target = $region56
      $region55: #{contracting_block_forward.3} parent=43 // pred_region
        %p2556 = scmp.lt.s32.totalorder %s17, 1
        %s2557 = scalar_select %p2556, %s17, 1
        %s2558 = scalar_lea.vmem %s4, %s2557
      $region56: #{contracting_block_forward.3} parent=43 // pred_fallthru
        _
    $region44: #{contracting_block_forward.3} parent=5 // pred_fallthru
      _
  $region6: #{contracting_block_forward.3} parent=0 // loop_footer
    %s15 = sadd.s32 1, %s11
  $region7: #{contracting_block_forward.3} parent=0 // loop_footer_branch
    %10 = sbr.rel target = $region3
  $region8: #{contracting_block_forward.3} parent=0 // loop_exit
    _

// kernel: contracting_block_forward.4
$region0: #{contracting_block_forward.4}
  #allocation0 [shape = 'u32[]', space=smem, size = 0x4, offset = 0x4, fixed_abs, tag = 'smem constant byte address 0x4 - core index']
  #allocation1 [shape = 'u32[144,128]{1,0:T(1,128)}', space=vmem, size = 0x12000, scoped, tag = 'internal scratch']
  #allocation2 [shape = 'f32[18,18,8]{2,1,0:T(8,128)}', space=vmem, size = 0x36000, scoped, tag = 'scratch operand']
  #allocation3 [shape = 'f32[256,72]{1,0:T(8,128)}', space=vmem, size = 0x20000, scoped, tag = 'scratch operand']
  %s0 = inlined_call_operand.vmem [shape: f32[2,16,16,8], index: 0, kind: input, shape index: {}]
  %s1 = inlined_call_operand.vmem [shape: f32[1,8], index: 1, kind: input, shape index: {}]
  %s2 = inlined_call_operand.vmem [shape: f32[1,8], index: 2, kind: input, shape index: {}]
  %s3 = inlined_call_operand.vmem [shape: f32[72,8], index: 3, kind: input, shape index: {}]
  %s4 = inlined_call_operand.vmem [shape: f32[2,16,16,8], index: 4, kind: output, shape index: {0}]
  %s5 = inlined_call_operand.vmem [shape: f32[2,1,8], index: 5, kind: output, shape index: {1}]
  %s6 = inlined_call_operand.vmem [shape: f32[2,1,8], index: 6, kind: output, shape index: {2}]
  %7 = xla_tuple %s4, %s5, %s6
  %s8 = sld [smem:[#allocation0]]
  $region65: #{contracting_block_forward.4} parent=0
    _
  %s10 = ssub.s32 1, %s8
  %s11 = scalar_select 0, %s10, %s8
  loop: start=0, step=1, limit=4
  $region2: #{contracting_block_forward.4} parent=0 // loop_pre_header
    _
  $region3: #{contracting_block_forward.4} parent=0 // loop_header
    %s13 = sphi 0, %s17
    %p14 = scmp.ge.s32.totalorder %s13, 4
    %s23 = sphi 0, %s25
    %s26 = sphi 0, %s23
    %s27 = sphi 0, %s26
    %s43 = sphi 0, %s27
    %s47 = sphi 0, %s47
    %s49 = sphi 0, %s47
    %s50 = sphi 0, %s49
    %s64 = sphi 0, %s50
    %s68 = sphi 0, %s68
    %s70 = sphi 0, %s68
    %s71 = sphi 0, %s70
    %s85 = sphi 0, %s71
    %s89 = sphi 0, %s89
    %s91 = sphi 0, %s89
    %s92 = sphi 0, %s91
    %s106 = sphi 0, %s92
    %s112 = sphi 0, %s114
    %s115 = sphi 0, %s112
    %s116 = sphi 0, %s115
    %s132 = sphi 0, %s116
    %s138 = sphi 0, %s140
    %s141 = sphi 0, %s138
    %s142 = sphi 0, %s141
    %s158 = sphi 0, %s142
    %s164 = sphi 0, %s166
    %s167 = sphi 0, %s164
    %s168 = sphi 0, %s167
    %s184 = sphi 0, %s168
  $region4: #{contracting_block_forward.4} parent=0 // loop_header_branch
    %16 = sbr.rel (%p14) target = $region8
  $region5: #{contracting_block_forward.4} parent=0 // loop_body
    %s18 = ssub.s32 %s13, 1
    %s19 = ssub.s32 %s13, 2
    %s20 = sadd.s32 %s13, 1
    %s21 = ssub.s32 %s13, %s20
    %p22 = scmp.eq.s32.totalorder %s21, 0
    %s24 = sadd.s32 %s23, 1
    %s25 = scalar_select %p22, %s23, %s24
    %p28 = pneg %p22
    %p29 = scmp.eq.s32.totalorder %s13, 1
    %p30 = por %p28, %p29
    %p31 = scmp.ne.s32.totalorder %s23, %s26
    %p32 = scmp.eq.s32.totalorder %s13, 0
    %p33 = por %p31, %p32
    %p34 = scmp.ne.s32.totalorder %s23, %s26
    %p35 = scmp.eq.s32.totalorder %s18, 1
    %p36 = por %p34, %p35
    %p37 = scmp.ne.s32.totalorder %s26, %s27
    %p38 = scmp.eq.s32.totalorder %s18, 0
    %p39 = por %p37, %p38
    %p40 = scmp.ne.s32.totalorder %s26, %s27
    %p41 = scmp.eq.s32.totalorder %s19, 1
    %p42 = por %p40, %p41
    %p44 = scmp.ne.s32.totalorder %s27, %s43
    %p45 = scmp.eq.s32.totalorder %s19, 0
    %p46 = por %p44, %p45
    %s48 = sadd.s32 %s47, 1
    %p51 = scmp.eq.s32.totalorder %s13, 1
    %p52 = scmp.ne.s32.totalorder %s47, %s49
    %p53 = scmp.eq.s32.totalorder %s13, 0
    %p54 = por %p52, %p53
    %p55 = scmp.ne.s32.totalorder %s47, %s49
    %p56 = scmp.eq.s32.totalorder %s18, 1
    %p57 = por %p55, %p56
    %p58 = scmp.ne.s32.totalorder %s49, %s50
    %p59 = scmp.eq.s32.totalorder %s18, 0
    %p60 = por %p58, %p59
    %p61 = scmp.ne.s32.totalorder %s49, %s50
    %p62 = scmp.eq.s32.totalorder %s19, 1
    %p63 = por %p61, %p62
    %p65 = scmp.ne.s32.totalorder %s50, %s64
    %p66 = scmp.eq.s32.totalorder %s19, 0
    %p67 = por %p65, %p66
    %s69 = sadd.s32 %s68, 1
    %p72 = scmp.eq.s32.totalorder %s13, 1
    %p73 = scmp.ne.s32.totalorder %s68, %s70
    %p74 = scmp.eq.s32.totalorder %s13, 0
    %p75 = por %p73, %p74
    %p76 = scmp.ne.s32.totalorder %s68, %s70
    %p77 = scmp.eq.s32.totalorder %s18, 1
    %p78 = por %p76, %p77
    %p79 = scmp.ne.s32.totalorder %s70, %s71
    %p80 = scmp.eq.s32.totalorder %s18, 0
    %p81 = por %p79, %p80
    %p82 = scmp.ne.s32.totalorder %s70, %s71
    %p83 = scmp.eq.s32.totalorder %s19, 1
    %p84 = por %p82, %p83
    %p86 = scmp.ne.s32.totalorder %s71, %s85
    %p87 = scmp.eq.s32.totalorder %s19, 0
    %p88 = por %p86, %p87
    %s90 = sadd.s32 %s89, 1
    %p93 = scmp.eq.s32.totalorder %s13, 1
    %p94 = scmp.ne.s32.totalorder %s89, %s91
    %p95 = scmp.eq.s32.totalorder %s13, 0
    %p96 = por %p94, %p95
    %p97 = scmp.ne.s32.totalorder %s89, %s91
    %p98 = scmp.eq.s32.totalorder %s18, 1
    %p99 = por %p97, %p98
    %p100 = scmp.ne.s32.totalorder %s91, %s92
    %p101 = scmp.eq.s32.totalorder %s18, 0
    %p102 = por %p100, %p101
    %p103 = scmp.ne.s32.totalorder %s91, %s92
    %p104 = scmp.eq.s32.totalorder %s19, 1
    %p105 = por %p103, %p104
    %p107 = scmp.ne.s32.totalorder %s92, %s106
    %p108 = scmp.eq.s32.totalorder %s19, 0
    %p109 = por %p107, %p108
    %s110 = ssub.s32 %s13, %s20
    %p111 = scmp.eq.s32.totalorder %s110, 0
    %s113 = sadd.s32 %s112, 1
    %s114 = scalar_select %p111, %s112, %s113
    %p117 = pneg %p111
    %p118 = scmp.eq.s32.totalorder %s13, 1
    %p119 = por %p117, %p118
    %p120 = scmp.ne.s32.totalorder %s112, %s115
    %p121 = scmp.eq.s32.totalorder %s13, 0
    %p122 = por %p120, %p121
    %p123 = scmp.ne.s32.totalorder %s112, %s115
    %p124 = scmp.eq.s32.totalorder %s18, 1
    %p125 = por %p123, %p124
    %p126 = scmp.ne.s32.totalorder %s115, %s116
    %p127 = scmp.eq.s32.totalorder %s18, 0
    %p128 = por %p126, %p127
    %p129 = scmp.ne.s32.totalorder %s115, %s116
    %p130 = scmp.eq.s32.totalorder %s19, 1
    %p131 = por %p129, %p130
    %p133 = scmp.ne.s32.totalorder %s116, %s132
    %p134 = scmp.eq.s32.totalorder %s19, 0
    %p135 = por %p133, %p134
    %s136 = ssub.s32 %s13, %s20
    %p137 = scmp.eq.s32.totalorder %s136, 0
    %s139 = sadd.s32 %s138, 1
    %s140 = scalar_select %p137, %s138, %s139
    %p143 = pneg %p137
    %p144 = scmp.eq.s32.totalorder %s13, 1
    %p145 = por %p143, %p144
    %p146 = scmp.ne.s32.totalorder %s138, %s141
    %p147 = scmp.eq.s32.totalorder %s13, 0
    %p148 = por %p146, %p147
    %p149 = scmp.ne.s32.totalorder %s138, %s141
    %p150 = scmp.eq.s32.totalorder %s18, 1
    %p151 = por %p149, %p150
    %p152 = scmp.ne.s32.totalorder %s141, %s142
    %p153 = scmp.eq.s32.totalorder %s18, 0
    %p154 = por %p152, %p153
    %p155 = scmp.ne.s32.totalorder %s141, %s142
    %p156 = scmp.eq.s32.totalorder %s19, 1
    %p157 = por %p155, %p156
    %p159 = scmp.ne.s32.totalorder %s142, %s158
    %p160 = scmp.eq.s32.totalorder %s19, 0
    %p161 = por %p159, %p160
    %s162 = ssub.s32 %s13, %s20
    %p163 = scmp.eq.s32.totalorder %s162, 0
    %s165 = sadd.s32 %s164, 1
    %s166 = scalar_select %p163, %s164, %s165
    %p169 = pneg %p163
    %p170 = scmp.eq.s32.totalorder %s13, 1
    %p171 = por %p169, %p170
    %p172 = scmp.ne.s32.totalorder %s164, %s167
    %p173 = scmp.eq.s32.totalorder %s13, 0
    %p174 = por %p172, %p173
    %p175 = scmp.ne.s32.totalorder %s164, %s167
    %p176 = scmp.eq.s32.totalorder %s18, 1
    %p177 = por %p175, %p176
    %p178 = scmp.ne.s32.totalorder %s167, %s168
    %p179 = scmp.eq.s32.totalorder %s18, 0
    %p180 = por %p178, %p179
    %p181 = scmp.ne.s32.totalorder %s167, %s168
    %p182 = scmp.eq.s32.totalorder %s19, 1
    %p183 = por %p181, %p182
    %p185 = scmp.ne.s32.totalorder %s168, %s184
    %p186 = scmp.eq.s32.totalorder %s19, 0
    %p187 = por %p185, %p186
    %p188 = scmp.le.s32.totalorder 1, %s13
    %p189 = scmp.lt.s32.totalorder %s13, 3
    %p190 = pnand %p188, %p189
    %p191 = pneg %p190
    // Predicated region
    $region9: #{contracting_block_forward.4} parent=5 // pred_check
      _
    $region10: #{contracting_block_forward.4} parent=5 // pred_check_branch
      %193 = sbr.rel (%p190) target = $region12
    $region11: #{contracting_block_forward.4} parent=5 // pred_region
      %s194 = ssub.s32 %s13, 1
      // Predicated region
      $region13: #{contracting_block_forward.4} parent=11 // pred_check
        %p195 = pneg %p60
      $region14: #{contracting_block_forward.4} parent=11 // pred_check_branch
        %197 = sbr.rel (%p195) target = $region16
      $region15: #{contracting_block_forward.4} parent=11 // pred_region
        _
      $region16: #{contracting_block_forward.4} parent=11 // pred_fallthru
        _
      // Predicated region
      $region17: #{contracting_block_forward.4} parent=11 // pred_check
        %p198 = pneg %p81
      $region18: #{contracting_block_forward.4} parent=11 // pred_check_branch
        %200 = sbr.rel (%p198) target = $region20
      $region19: #{contracting_block_forward.4} parent=11 // pred_region
        _
      $region20: #{contracting_block_forward.4} parent=11 // pred_fallthru
        _
      // Predicated region
      $region21: #{contracting_block_forward.4} parent=11 // pred_check
        %p201 = pneg %p102
      $region22: #{contracting_block_forward.4} parent=11 // pred_check_branch
        %203 = sbr.rel (%p201) target = $region24
      $region23: #{contracting_block_forward.4} parent=11 // pred_region
        _
      $region24: #{contracting_block_forward.4} parent=11 // pred_fallthru
        _
    $region12: #{contracting_block_forward.4} parent=5 // pred_fallthru
      _
    %p204 = scmp.lt.s32.totalorder %s13, 2
    // Predicated region
    $region25: #{contracting_block_forward.4} parent=5 // pred_check
      %p205 = pneg %p204
    $region26: #{contracting_block_forward.4} parent=5 // pred_check_branch
      %207 = sbr.rel (%p205) target = $region28
    $region27: #{contracting_block_forward.4} parent=5 // pred_region
      // Predicated region
      $region29: #{contracting_block_forward.4} parent=27 // pred_check
        %p208 = pneg %p33
      $region30: #{contracting_block_forward.4} parent=27 // pred_check_branch
        %210 = sbr.rel (%p208) target = $region32
      $region31: #{contracting_block_forward.4} parent=27 // pred_region
        %p211 = scmp.lt.s32.totalorder %s13, 1
        %s212 = scalar_select %p211, %s13, 1
        %s213 = smul.addr %s212, 32
        %s214 = smul.addr %s213, 8
        %s215 = scalar_lea.vmem %s0, %s214
      $region32: #{contracting_block_forward.4} parent=27 // pred_fallthru
        _
    $region28: #{contracting_block_forward.4} parent=5 // pred_fallthru
      _
    %p216 = scmp.le.s32.totalorder 1, %s13
    %p217 = scmp.lt.s32.totalorder %s13, 3
    %p218 = pnand %p216, %p217
    %p219 = pneg %p218
    // Predicated region
    $region33: #{contracting_block_forward.4} parent=5 // pred_check
      _
    $region34: #{contracting_block_forward.4} parent=5 // pred_check_branch
      %221 = sbr.rel (%p218) target = $region36
    $region35: #{contracting_block_forward.4} parent=5 // pred_region
      %s222 = ssub.s32 %s13, 1
      %p223 = scmp.lt.s32.totalorder %s18, 1
      %s224 = scalar_select %p223, %s18, 1
      %s225 = smul.addr %s224, 32
      %s226 = smul.addr %s225, 8
      %s227 = scalar_lea.vmem %s0, %s226
      %p228 = pneg %p39
      %p229 = pneg %p36
      %p230 = pneg %p60
      %p231 = pneg %p57
      %p232 = pneg %p81
      %p233 = pneg %p78
      %p234 = pneg %p102
      %p235 = pneg %p99
      %p236 = pneg %p128
      %p237 = pneg %p125
      %p238 = scmp.lt.s32.totalorder %s18, 1
      %s239 = scalar_select %p238, %s18, 1
      %s240 = smul.addr %s239, 32
      %s241 = smul.addr %s240, 8
      %s242 = scalar_lea.vmem %s4, %s241
      %p243 = pneg %p154
      %p244 = pneg %p151
      %p245 = scmp.lt.s32.totalorder %s18, 1
      %s246 = scalar_select %p245, %s18, 1
      %s247 = scalar_lea.vmem %s5, %s246
      %p248 = pneg %p180
      %p249 = pneg %p177
      %p250 = scmp.lt.s32.totalorder %s18, 1
      %s251 = scalar_select %p250, %s18, 1
      %s252 = scalar_lea.vmem %s6, %s251
      %p253 = scmp.lt.s32.totalorder %s18, 1
      %s254 = scalar_select %p253, %s18, 1
      %s255 = smul.addr %s254, 32
      %s256 = smul.addr %s255, 8
      %s257 = scalar_lea.vmem %s0, %s256
      %p258 = scmp.lt.s32.totalorder %s18, 1
      %s259 = scalar_select %p258, %s18, 1
      %s260 = smul.addr %s259, 32
      %s261 = smul.addr %s260, 8
      %s262 = scalar_lea.vmem %s4, %s261
      %p263 = scmp.lt.s32.totalorder %s18, 1
      %s264 = scalar_select %p263, %s18, 1
      %s265 = scalar_lea.vmem %s5, %s264
      %p266 = scmp.lt.s32.totalorder %s18, 1
      %s267 = scalar_select %p266, %s18, 1
      %s268 = scalar_lea.vmem %s6, %s267
      %v269 = vld [vmem:[%s257] sm:$0xff]
      %v270 = vld [vmem:[%s257 + $0x8] sm:$0xff]
      %v271 = vld [vmem:[%s257 + $0x10] sm:$0xff]
      %v272 = vld [vmem:[%s257 + $0x18] sm:$0xff]
      %v273 = vld [vmem:[%s257 + $0x20] sm:$0xff]
      %v274 = vld [vmem:[%s257 + $0x28] sm:$0xff]
      %v275 = vld [vmem:[%s257 + $0x30] sm:$0xff]
      %v276 = vld [vmem:[%s257 + $0x38] sm:$0xff]
      %v277 = vld [vmem:[%s257 + $0x40] sm:$0xff]
      %v278 = vld [vmem:[%s257 + $0x48] sm:$0xff]
      %v279 = vld [vmem:[%s257 + $0x50] sm:$0xff]
      %v280 = vld [vmem:[%s257 + $0x58] sm:$0xff]
      %v281 = vld [vmem:[%s257 + $0x60] sm:$0xff]
      %v282 = vld [vmem:[%s257 + $0x68] sm:$0xff]
      %v283 = vld [vmem:[%s257 + $0x70] sm:$0xff]
      %v284 = vld [vmem:[%s257 + $0x78] sm:$0xff]
      %v285 = vld [vmem:[%s257 + $0x80] sm:$0xff]
      %v286 = vld [vmem:[%s257 + $0x88] sm:$0xff]
      %v287 = vld [vmem:[%s257 + $0x90] sm:$0xff]
      %v288 = vld [vmem:[%s257 + $0x98] sm:$0xff]
      %v289 = vld [vmem:[%s257 + $0xa0] sm:$0xff]
      %v290 = vld [vmem:[%s257 + $0xa8] sm:$0xff]
      %v291 = vld [vmem:[%s257 + $0xb0] sm:$0xff]
      %v292 = vld [vmem:[%s257 + $0xb8] sm:$0xff]
      %v293 = vld [vmem:[%s257 + $0xc0] sm:$0xff]
      %v294 = vld [vmem:[%s257 + $0xc8] sm:$0xff]
      %v295 = vld [vmem:[%s257 + $0xd0] sm:$0xff]
      %v296 = vld [vmem:[%s257 + $0xd8] sm:$0xff]
      %v297 = vld [vmem:[%s257 + $0xe0] sm:$0xff]
      %v298 = vld [vmem:[%s257 + $0xe8] sm:$0xff]
      %v299 = vld [vmem:[%s257 + $0xf0] sm:$0xff]
      %v300 = vld [vmem:[%s257 + $0xf8] sm:$0xff]
      %v301 = vld [vmem:[%s1] sm:$0x1]
      %v303 = vlaneseq
      %v304 = vshrl.u32 %v303, 7
      %v305 = vsub.s32 0, %v304
      %v306 = vrot.slane %v301, %v305
      %v308 = vmul.f32 %v269, %v306
      %v309 = vmul.f32 %v270, %v306
      %v310 = vmul.f32 %v271, %v306
      %v311 = vmul.f32 %v272, %v306
      %v312 = vmul.f32 %v273, %v306
      %v313 = vmul.f32 %v274, %v306
      %v314 = vmul.f32 %v275, %v306
      %v315 = vmul.f32 %v276, %v306
      %v316 = vmul.f32 %v277, %v306
      %v317 = vmul.f32 %v278, %v306
      %v318 = vmul.f32 %v279, %v306
      %v319 = vmul.f32 %v280, %v306
      %v320 = vmul.f32 %v281, %v306
      %v321 = vmul.f32 %v282, %v306
      %v322 = vmul.f32 %v283, %v306
      %v323 = vmul.f32 %v284, %v306
      %v324 = vmul.f32 %v285, %v306
      %v325 = vmul.f32 %v286, %v306
      %v326 = vmul.f32 %v287, %v306
      %v327 = vmul.f32 %v288, %v306
      %v328 = vmul.f32 %v289, %v306
      %v329 = vmul.f32 %v290, %v306
      %v330 = vmul.f32 %v291, %v306
      %v331 = vmul.f32 %v292, %v306
      %v332 = vmul.f32 %v293, %v306
      %v333 = vmul.f32 %v294, %v306
      %v334 = vmul.f32 %v295, %v306
      %v335 = vmul.f32 %v296, %v306
      %v336 = vmul.f32 %v297, %v306
      %v337 = vmul.f32 %v298, %v306
      %v338 = vmul.f32 %v299, %v306
      %v339 = vmul.f32 %v300, %v306
      %v340 = vld [vmem:[%s2] sm:$0x1]
      %v342 = vlaneseq
      %v343 = vshrl.u32 %v342, 7
      %v344 = vsub.s32 0, %v343
      %v345 = vrot.slane %v340, %v344
      %v347 = vadd.f32 %v308, %v345
      %v348 = vadd.f32 %v309, %v345
      %v349 = vadd.f32 %v310, %v345
      %v350 = vadd.f32 %v311, %v345
      %v351 = vadd.f32 %v312, %v345
      %v352 = vadd.f32 %v313, %v345
      %v353 = vadd.f32 %v314, %v345
      %v354 = vadd.f32 %v315, %v345
      %v355 = vadd.f32 %v316, %v345
      %v356 = vadd.f32 %v317, %v345
      %v357 = vadd.f32 %v318, %v345
      %v358 = vadd.f32 %v319, %v345
      %v359 = vadd.f32 %v320, %v345
      %v360 = vadd.f32 %v321, %v345
      %v361 = vadd.f32 %v322, %v345
      %v362 = vadd.f32 %v323, %v345
      %v363 = vadd.f32 %v324, %v345
      %v364 = vadd.f32 %v325, %v345
      %v365 = vadd.f32 %v326, %v345
      %v366 = vadd.f32 %v327, %v345
      %v367 = vadd.f32 %v328, %v345
      %v368 = vadd.f32 %v329, %v345
      %v369 = vadd.f32 %v330, %v345
      %v370 = vadd.f32 %v331, %v345
      %v371 = vadd.f32 %v332, %v345
      %v372 = vadd.f32 %v333, %v345
      %v373 = vadd.f32 %v334, %v345
      %v374 = vadd.f32 %v335, %v345
      %v375 = vadd.f32 %v336, %v345
      %v376 = vadd.f32 %v337, %v345
      %v377 = vadd.f32 %v338, %v345
      %v378 = vadd.f32 %v339, %v345
      %vm379 = vcmp.ge.f32.partialorder %v347, 0.0
      %vm380 = vcmp.ge.f32.partialorder %v348, 0.0
      %vm381 = vcmp.ge.f32.partialorder %v349, 0.0
      %vm382 = vcmp.ge.f32.partialorder %v350, 0.0
      %vm383 = vcmp.ge.f32.partialorder %v351, 0.0
      %vm384 = vcmp.ge.f32.partialorder %v352, 0.0
      %vm385 = vcmp.ge.f32.partialorder %v353, 0.0
      %vm386 = vcmp.ge.f32.partialorder %v354, 0.0
      %vm387 = vcmp.ge.f32.partialorder %v355, 0.0
      %vm388 = vcmp.ge.f32.partialorder %v356, 0.0
      %vm389 = vcmp.ge.f32.partialorder %v357, 0.0
      %vm390 = vcmp.ge.f32.partialorder %v358, 0.0
      %vm391 = vcmp.ge.f32.partialorder %v359, 0.0
      %vm392 = vcmp.ge.f32.partialorder %v360, 0.0
      %vm393 = vcmp.ge.f32.partialorder %v361, 0.0
      %vm394 = vcmp.ge.f32.partialorder %v362, 0.0
      %vm395 = vcmp.ge.f32.partialorder %v363, 0.0
      %vm396 = vcmp.ge.f32.partialorder %v364, 0.0
      %vm397 = vcmp.ge.f32.partialorder %v365, 0.0
      %vm398 = vcmp.ge.f32.partialorder %v366, 0.0
      %vm399 = vcmp.ge.f32.partialorder %v367, 0.0
      %vm400 = vcmp.ge.f32.partialorder %v368, 0.0
      %vm401 = vcmp.ge.f32.partialorder %v369, 0.0
      %vm402 = vcmp.ge.f32.partialorder %v370, 0.0
      %vm403 = vcmp.ge.f32.partialorder %v371, 0.0
      %vm404 = vcmp.ge.f32.partialorder %v372, 0.0
      %vm405 = vcmp.ge.f32.partialorder %v373, 0.0
      %vm406 = vcmp.ge.f32.partialorder %v374, 0.0
      %vm407 = vcmp.ge.f32.partialorder %v375, 0.0
      %vm408 = vcmp.ge.f32.partialorder %v376, 0.0
      %vm409 = vcmp.ge.f32.partialorder %v377, 0.0
      %vm410 = vcmp.ge.f32.partialorder %v378, 0.0
      %v411 = vmul.f32 %v347, 0.2
      %v412 = vmul.f32 %v348, 0.2
      %v413 = vmul.f32 %v349, 0.2
      %v414 = vmul.f32 %v350, 0.2
      %v415 = vmul.f32 %v351, 0.2
      %v416 = vmul.f32 %v352, 0.2
      %v417 = vmul.f32 %v353, 0.2
      %v418 = vmul.f32 %v354, 0.2
      %v419 = vmul.f32 %v355, 0.2
      %v420 = vmul.f32 %v356, 0.2
      %v421 = vmul.f32 %v357, 0.2
      %v422 = vmul.f32 %v358, 0.2
      %v423 = vmul.f32 %v359, 0.2
      %v424 = vmul.f32 %v360, 0.2
      %v425 = vmul.f32 %v361, 0.2
      %v426 = vmul.f32 %v362, 0.2
      %v427 = vmul.f32 %v363, 0.2
      %v428 = vmul.f32 %v364, 0.2
      %v429 = vmul.f32 %v365, 0.2
      %v430 = vmul.f32 %v366, 0.2
      %v431 = vmul.f32 %v367, 0.2
      %v432 = vmul.f32 %v368, 0.2
      %v433 = vmul.f32 %v369, 0.2
      %v434 = vmul.f32 %v370, 0.2
      %v435 = vmul.f32 %v371, 0.2
      %v436 = vmul.f32 %v372, 0.2
      %v437 = vmul.f32 %v373, 0.2
      %v438 = vmul.f32 %v374, 0.2
      %v439 = vmul.f32 %v375, 0.2
      %v440 = vmul.f32 %v376, 0.2
      %v441 = vmul.f32 %v377, 0.2
      %v442 = vmul.f32 %v378, 0.2
      %v443 = vsel %vm379, %v347, %v411
      %v444 = vsel %vm380, %v348, %v412
      %v445 = vsel %vm381, %v349, %v413
      %v446 = vsel %vm382, %v350, %v414
      %v447 = vsel %vm383, %v351, %v415
      %v448 = vsel %vm384, %v352, %v416
      %v449 = vsel %vm385, %v353, %v417
      %v450 = vsel %vm386, %v354, %v418
      %v451 = vsel %vm387, %v355, %v419
      %v452 = vsel %vm388, %v356, %v420
      %v453 = vsel %vm389, %v357, %v421
      %v454 = vsel %vm390, %v358, %v422
      %v455 = vsel %vm391, %v359, %v423
      %v456 = vsel %vm392, %v360, %v424
      %v457 = vsel %vm393, %v361, %v425
      %v458 = vsel %vm394, %v362, %v426
      %v459 = vsel %vm395, %v363, %v427
      %v460 = vsel %vm396, %v364, %v428
      %v461 = vsel %vm397, %v365, %v429
      %v462 = vsel %vm398, %v366, %v430
      %v463 = vsel %vm399, %v367, %v431
      %v464 = vsel %vm400, %v368, %v432
      %v465 = vsel %vm401, %v369, %v433
      %v466 = vsel %vm402, %v370, %v434
      %v467 = vsel %vm403, %v371, %v435
      %v468 = vsel %vm404, %v372, %v436
      %v469 = vsel %vm405, %v373, %v437
      %v470 = vsel %vm406, %v374, %v438
      %v471 = vsel %vm407, %v375, %v439
      %v472 = vsel %vm408, %v376, %v440
      %v473 = vsel %vm409, %v377, %v441
      %v474 = vsel %vm410, %v378, %v442
      %vm475 = vcmask 64512
      %476 = vst.msk [vmem:[#allocation2] sm:$0xff] %vm475, 0.0
      %477 = vst.msk [vmem:[#allocation2 + $0x8] sm:$0xff] %vm475, 0.0
      %vm478 = vcmask 58368
      %479 = vst.msk [vmem:[#allocation2 + $0x10] sm:$0x3] %vm478, 0.0
      %480 = vst.msk [vmem:[#allocation2 + $0x18] sm:$0xff] %vm475, 0.0
      %481 = vst.msk [vmem:[#allocation2 + $0x20] sm:$0xff] %vm475, 0.0
      %482 = vst.msk [vmem:[#allocation2 + $0x28] sm:$0x3] %vm478, 0.0
      %483 = vst.msk [vmem:[#allocation2 + $0x30] sm:$0xff] %vm475, 0.0
      %484 = vst.msk [vmem:[#allocation2 + $0x38] sm:$0xff] %vm475, 0.0
      %485 = vst.msk [vmem:[#allocation2 + $0x40] sm:$0x3] %vm478, 0.0
      %486 = vst.msk [vmem:[#allocation2 + $0x48] sm:$0xff] %vm475, 0.0
      %487 = vst.msk [vmem:[#allocation2 + $0x50] sm:$0xff] %vm475, 0.0
      %488 = vst.msk [vmem:[#allocation2 + $0x58] sm:$0x3] %vm478, 0.0
      %489 = vst.msk [vmem:[#allocation2 + $0x60] sm:$0xff] %vm475, 0.0
      %490 = vst.msk [vmem:[#allocation2 + $0x68] sm:$0xff] %vm475, 0.0
      %491 = vst.msk [vmem:[#allocation2 + $0x70] sm:$0x3] %vm478, 0.0
      %492 = vst.msk [vmem:[#allocation2 + $0x78] sm:$0xff] %vm475, 0.0
      %493 = vst.msk [vmem:[#allocation2 + $0x80] sm:$0xff] %vm475, 0.0
      %494 = vst.msk [vmem:[#allocation2 + $0x88] sm:$0x3] %vm478, 0.0
      %495 = vst.msk [vmem:[#allocation2 + $0x90] sm:$0xff] %vm475, 0.0
      %496 = vst.msk [vmem:[#allocation2 + $0x98] sm:$0xff] %vm475, 0.0
      %497 = vst.msk [vmem:[#allocation2 + $0xa0] sm:$0x3] %vm478, 0.0
      %498 = vst.msk [vmem:[#allocation2 + $0xa8] sm:$0xff] %vm475, 0.0
      %499 = vst.msk [vmem:[#allocation2 + $0xb0] sm:$0xff] %vm475, 0.0
      %500 = vst.msk [vmem:[#allocation2 + $0xb8] sm:$0x3] %vm478, 0.0
      %501 = vst.msk [vmem:[#allocation2 + $0xc0] sm:$0xff] %vm475, 0.0
      %502 = vst.msk [vmem:[#allocation2 + $0xc8] sm:$0xff] %vm475, 0.0
      %503 = vst.msk [vmem:[#allocation2 + $0xd0] sm:$0x3] %vm478, 0.0
      %504 = vst.msk [vmem:[#allocation2 + $0xd8] sm:$0xff] %vm475, 0.0
      %505 = vst.msk [vmem:[#allocation2 + $0xe0] sm:$0xff] %vm475, 0.0
      %506 = vst.msk [vmem:[#allocation2 + $0xe8] sm:$0x3] %vm478, 0.0
      %507 = vst.msk [vmem:[#allocation2 + $0xf0] sm:$0xff] %vm475, 0.0
      %508 = vst.msk [vmem:[#allocation2 + $0xf8] sm:$0xff] %vm475, 0.0
      %509 = vst.msk [vmem:[#allocation2 + $0x100] sm:$0x3] %vm478, 0.0
      %510 = vst.msk [vmem:[#allocation2 + $0x108] sm:$0xff] %vm475, 0.0
      %511 = vst.msk [vmem:[#allocation2 + $0x110] sm:$0xff] %vm475, 0.0
      %512 = vst.msk [vmem:[#allocation2 + $0x118] sm:$0x3] %vm478, 0.0
      %513 = vst.msk [vmem:[#allocation2 + $0x120] sm:$0xff] %vm475, 0.0
      %514 = vst.msk [vmem:[#allocation2 + $0x128] sm:$0xff] %vm475, 0.0
      %515 = vst.msk [vmem:[#allocation2 + $0x130] sm:$0x3] %vm478, 0.0
      %516 = vst.msk [vmem:[#allocation2 + $0x138] sm:$0xff] %vm475, 0.0
      %517 = vst.msk [vmem:[#allocation2 + $0x140] sm:$0xff] %vm475, 0.0
      %518 = vst.msk [vmem:[#allocation2 + $0x148] sm:$0x3] %vm478, 0.0
      %519 = vst.msk [vmem:[#allocation2 + $0x150] sm:$0xff] %vm475, 0.0
      %520 = vst.msk [vmem:[#allocation2 + $0x158] sm:$0xff] %vm475, 0.0
      %521 = vst.msk [vmem:[#allocation2 + $0x160] sm:$0x3] %vm478, 0.0
      %522 = vst.msk [vmem:[#allocation2 + $0x168] sm:$0xff] %vm475, 0.0
      %523 = vst.msk [vmem:[#allocation2 + $0x170] sm:$0xff] %vm475, 0.0
      %524 = vst.msk [vmem:[#allocation2 + $0x178] sm:$0x3] %vm478, 0.0
      %525 = vst.msk [vmem:[#allocation2 + $0x180] sm:$0xff] %vm475, 0.0
      %526 = vst.msk [vmem:[#allocation2 + $0x188] sm:$0xff] %vm475, 0.0
      %527 = vst.msk [vmem:[#allocation2 + $0x190] sm:$0x3] %vm478, 0.0
      %528 = vst.msk [vmem:[#allocation2 + $0x198] sm:$0xff] %vm475, 0.0
      %529 = vst.msk [vmem:[#allocation2 + $0x1a0] sm:$0xff] %vm475, 0.0
      %530 = vst.msk [vmem:[#allocation2 + $0x1a8] sm:$0x3] %vm478, 0.0
      %s531 = scalar_lea.vmem [#allocation2], 24
      %532 = vst.msk [vmem:[%s531 + $0x1] sm:$0xff] %vm475, %v443
      %533 = vst.msk [vmem:[%s531 + $0x9] sm:$0xff] %vm475, %v444
      %534 = vst.msk [vmem:[%s531 + $0x19] sm:$0xff] %vm475, %v445
      %535 = vst.msk [vmem:[%s531 + $0x21] sm:$0xff] %vm475, %v446
      %536 = vst.msk [vmem:[%s531 + $0x31] sm:$0xff] %vm475, %v447
      %537 = vst.msk [vmem:[%s531 + $0x39] sm:$0xff] %vm475, %v448
      %538 = vst.msk [vmem:[%s531 + $0x49] sm:$0xff] %vm475, %v449
      %539 = vst.msk [vmem:[%s531 + $0x51] sm:$0xff] %vm475, %v450
      %540 = vst.msk [vmem:[%s531 + $0x61] sm:$0xff] %vm475, %v451
      %541 = vst.msk [vmem:[%s531 + $0x69] sm:$0xff] %vm475, %v452
      %542 = vst.msk [vmem:[%s531 + $0x79] sm:$0xff] %vm475, %v453
      %543 = vst.msk [vmem:[%s531 + $0x81] sm:$0xff] %vm475, %v454
      %544 = vst.msk [vmem:[%s531 + $0x91] sm:$0xff] %vm475, %v455
      %545 = vst.msk [vmem:[%s531 + $0x99] sm:$0xff] %vm475, %v456
      %546 = vst.msk [vmem:[%s531 + $0xa9] sm:$0xff] %vm475, %v457
      %547 = vst.msk [vmem:[%s531 + $0xb1] sm:$0xff] %vm475, %v458
      %548 = vst.msk [vmem:[%s531 + $0xc1] sm:$0xff] %vm475, %v459
      %549 = vst.msk [vmem:[%s531 + $0xc9] sm:$0xff] %vm475, %v460
      %550 = vst.msk [vmem:[%s531 + $0xd9] sm:$0xff] %vm475, %v461
      %551 = vst.msk [vmem:[%s531 + $0xe1] sm:$0xff] %vm475, %v462
      %552 = vst.msk [vmem:[%s531 + $0xf1] sm:$0xff] %vm475, %v463
      %553 = vst.msk [vmem:[%s531 + $0xf9] sm:$0xff] %vm475, %v464
      %554 = vst.msk [vmem:[%s531 + $0x109] sm:$0xff] %vm475, %v465
      %555 = vst.msk [vmem:[%s531 + $0x111] sm:$0xff] %vm475, %v466
      %556 = vst.msk [vmem:[%s531 + $0x121] sm:$0xff] %vm475, %v467
      %557 = vst.msk [vmem:[%s531 + $0x129] sm:$0xff] %vm475, %v468
      %558 = vst.msk [vmem:[%s531 + $0x139] sm:$0xff] %vm475, %v469
      %559 = vst.msk [vmem:[%s531 + $0x141] sm:$0xff] %vm475, %v470
      %560 = vst.msk [vmem:[%s531 + $0x151] sm:$0xff] %vm475, %v471
      %561 = vst.msk [vmem:[%s531 + $0x159] sm:$0xff] %vm475, %v472
      %562 = vst.msk [vmem:[%s531 + $0x169] sm:$0xff] %vm475, %v473
      %563 = vst.msk [vmem:[%s531 + $0x171] sm:$0xff] %vm475, %v474
      %v564 = vld [vmem:[#allocation2] sm:$0xff]
      %v565 = vld [vmem:[#allocation2 + $0x8] sm:$0xff]
      %v566 = vld [vmem:[#allocation2 + $0x18] sm:$0xff]
      %v567 = vld [vmem:[#allocation2 + $0x20] sm:$0xff]
      %v568 = vld [vmem:[#allocation2 + $0x30] sm:$0xff]
      %v569 = vld [vmem:[#allocation2 + $0x38] sm:$0xff]
      %v570 = vld [vmem:[#allocation2 + $0x48] sm:$0xff]
      %v571 = vld [vmem:[#allocation2 + $0x50] sm:$0xff]
      %v572 = vld [vmem:[#allocation2 + $0x60] sm:$0xff]
      %v573 = vld [vmem:[#allocation2 + $0x68] sm:$0xff]
      %v574 = vld [vmem:[#allocation2 + $0x78] sm:$0xff]
      %v575 = vld [vmem:[#allocation2 + $0x80] sm:$0xff]
      %v576 = vld [vmem:[#allocation2 + $0x90] sm:$0xff]
      %v577 = vld [vmem:[#allocation2 + $0x98] sm:$0xff]
      %v578 = vld [vmem:[#allocation2 + $0xa8] sm:$0xff]
      %v579 = vld [vmem:[#allocation2 + $0xb0] sm:$0xff]
      %v580 = vld [vmem:[#allocation2 + $0xc0] sm:$0xff]
      %v581 = vld [vmem:[#allocation2 + $0xc8] sm:$0xff]
      %v582 = vld [vmem:[#allocation2 + $0xd8] sm:$0xff]
      %v583 = vld [vmem:[#allocation2 + $0xe0] sm:$0xff]
      %v584 = vld [vmem:[#allocation2 + $0xf0] sm:$0xff]
      %v585 = vld [vmem:[#allocation2 + $0xf8] sm:$0xff]
      %v586 = vld [vmem:[#allocation2 + $0x108] sm:$0xff]
      %v587 = vld [vmem:[#allocation2 + $0x110] sm:$0xff]
      %v588 = vld [vmem:[#allocation2 + $0x120] sm:$0xff]
      %v589 = vld [vmem:[#allocation2 + $0x128] sm:$0xff]
      %v590 = vld [vmem:[#allocation2 + $0x138] sm:$0xff]
      %v591 = vld [vmem:[#allocation2 + $0x140] sm:$0xff]
      %v592 = vld [vmem:[#allocation2 + $0x150] sm:$0xff]
      %v593 = vld [vmem:[#allocation2 + $0x158] sm:$0xff]
      %v594 = vld [vmem:[#allocation2 + $0x168] sm:$0xff]
      %v595 = vld [vmem:[#allocation2 + $0x170] sm:$0xff]
      %596 = vst.msk [vmem:[#allocation3] sm:$0xff] %vm475, %v564
      %597 = vst.msk [vmem:[#allocation3 + $0x8] sm:$0xff] %vm475, %v565
      %598 = vst.msk [vmem:[#allocation3 + $0x10] sm:$0xff] %vm475, %v566
      %599 = vst.msk [vmem:[#allocation3 + $0x18] sm:$0xff] %vm475, %v567
      %600 = vst.msk [vmem:[#allocation3 + $0x20] sm:$0xff] %vm475, %v568
      %601 = vst.msk [vmem:[#allocation3 + $0x28] sm:$0xff] %vm475, %v569
      %602 = vst.msk [vmem:[#allocation3 + $0x30] sm:$0xff] %vm475, %v570
      %603 = vst.msk [vmem:[#allocation3 + $0x38] sm:$0xff] %vm475, %v571
      %604 = vst.msk [vmem:[#allocation3 + $0x40] sm:$0xff] %vm475, %v572
      %605 = vst.msk [vmem:[#allocation3 + $0x48] sm:$0xff] %vm475, %v573
      %606 = vst.msk [vmem:[#allocation3 + $0x50] sm:$0xff] %vm475, %v574
      %607 = vst.msk [vmem:[#allocation3 + $0x58] sm:$0xff] %vm475, %v575
      %608 = vst.msk [vmem:[#allocation3 + $0x60] sm:$0xff] %vm475, %v576
      %609 = vst.msk [vmem:[#allocation3 + $0x68] sm:$0xff] %vm475, %v577
      %610 = vst.msk [vmem:[#allocation3 + $0x70] sm:$0xff] %vm475, %v578
      %611 = vst.msk [vmem:[#allocation3 + $0x78] sm:$0xff] %vm475, %v579
      %612 = vst.msk [vmem:[#allocation3 + $0x80] sm:$0xff] %vm475, %v580
      %613 = vst.msk [vmem:[#allocation3 + $0x88] sm:$0xff] %vm475, %v581
      %614 = vst.msk [vmem:[#allocation3 + $0x90] sm:$0xff] %vm475, %v582
      %615 = vst.msk [vmem:[#allocation3 + $0x98] sm:$0xff] %vm475, %v583
      %616 = vst.msk [vmem:[#allocation3 + $0xa0] sm:$0xff] %vm475, %v584
      %617 = vst.msk [vmem:[#allocation3 + $0xa8] sm:$0xff] %vm475, %v585
      %618 = vst.msk [vmem:[#allocation3 + $0xb0] sm:$0xff] %vm475, %v586
      %619 = vst.msk [vmem:[#allocation3 + $0xb8] sm:$0xff] %vm475, %v587
      %620 = vst.msk [vmem:[#allocation3 + $0xc0] sm:$0xff] %vm475, %v588
      %621 = vst.msk [vmem:[#allocation3 + $0xc8] sm:$0xff] %vm475, %v589
      %622 = vst.msk [vmem:[#allocation3 + $0xd0] sm:$0xff] %vm475, %v590
      %623 = vst.msk [vmem:[#allocation3 + $0xd8] sm:$0xff] %vm475, %v591
      %624 = vst.msk [vmem:[#allocation3 + $0xe0] sm:$0xff] %vm475, %v592
      %625 = vst.msk [vmem:[#allocation3 + $0xe8] sm:$0xff] %vm475, %v593
      %626 = vst.msk [vmem:[#allocation3 + $0xf0] sm:$0xff] %vm475, %v594
      %627 = vst.msk [vmem:[#allocation3 + $0xf8] sm:$0xff] %vm475, %v595
      %v628 = vld [vmem:[#allocation2 + $0x1] sm:$0xff]
      %v629 = vld [vmem:[#allocation2 + $0x9] sm:$0xff]
      %v630 = vld [vmem:[#allocation2 + $0x19] sm:$0xff]
      %v631 = vld [vmem:[#allocation2 + $0x21] sm:$0xff]
      %v632 = vld [vmem:[#allocation2 + $0x31] sm:$0xff]
      %v633 = vld [vmem:[#allocation2 + $0x39] sm:$0xff]
      %v634 = vld [vmem:[#allocation2 + $0x49] sm:$0xff]
      %v635 = vld [vmem:[#allocation2 + $0x51] sm:$0xff]
      %v636 = vld [vmem:[#allocation2 + $0x61] sm:$0xff]
      %v637 = vld [vmem:[#allocation2 + $0x69] sm:$0xff]
      %v638 = vld [vmem:[#allocation2 + $0x79] sm:$0xff]
      %v639 = vld [vmem:[#allocation2 + $0x81] sm:$0xff]
      %v640 = vld [vmem:[#allocation2 + $0x91] sm:$0xff]
      %v641 = vld [vmem:[#allocation2 + $0x99] sm:$0xff]
      %v642 = vld [vmem:[#allocation2 + $0xa9] sm:$0xff]
      %v643 = vld [vmem:[#allocation2 + $0xb1] sm:$0xff]
      %v644 = vld [vmem:[#allocation2 + $0xc1] sm:$0xff]
      %v645 = vld [vmem:[#allocation2 + $0xc9] sm:$0xff]
      %v646 = vld [vmem:[#allocation2 + $0xd9] sm:$0xff]
      %v647 = vld [vmem:[#allocation2 + $0xe1] sm:$0xff]
      %v648 = vld [vmem:[#allocation2 + $0xf1] sm:$0xff]
      %v649 = vld [vmem:[#allocation2 + $0xf9] sm:$0xff]
      %v650 = vld [vmem:[#allocation2 + $0x109] sm:$0xff]
      %v651 = vld [vmem:[#allocation2 + $0x111] sm:$0xff]
      %v652 = vld [vmem:[#allocation2 + $0x121] sm:$0xff]
      %v653 = vld [vmem:[#allocation2 + $0x129] sm:$0xff]
      %v654 = vld [vmem:[#allocation2 + $0x139] sm:$0xff]
      %v655 = vld [vmem:[#allocation2 + $0x141] sm:$0xff]
      %v656 = vld [vmem:[#allocation2 + $0x151] sm:$0xff]
      %v657 = vld [vmem:[#allocation2 + $0x159] sm:$0xff]
      %v658 = vld [vmem:[#allocation2 + $0x169] sm:$0xff]
      %v659 = vld [vmem:[#allocation2 + $0x171] sm:$0xff]
      %692 = vrot.lane.b32.xlu0 %v628, 8
      %v693 = vpop.permute.xlu0 %692
      %694 = vrot.lane.b32.xlu0 %v629, 8
      %v695 = vpop.permute.xlu0 %694
      %696 = vrot.lane.b32.xlu0 %v630, 8
      %v697 = vpop.permute.xlu0 %696
      %698 = vrot.lane.b32.xlu0 %v631, 8
      %v699 = vpop.permute.xlu0 %698
      %700 = vrot.lane.b32.xlu0 %v632, 8
      %v701 = vpop.permute.xlu0 %700
      %702 = vrot.lane.b32.xlu0 %v633, 8
      %v703 = vpop.permute.xlu0 %702
      %704 = vrot.lane.b32.xlu0 %v634, 8
      %v705 = vpop.permute.xlu0 %704
      %706 = vrot.lane.b32.xlu0 %v635, 8
      %v707 = vpop.permute.xlu0 %706
      %708 = vrot.lane.b32.xlu0 %v636, 8
      %v709 = vpop.permute.xlu0 %708
      %710 = vrot.lane.b32.xlu0 %v637, 8
      %v711 = vpop.permute.xlu0 %710
      %712 = vrot.lane.b32.xlu0 %v638, 8
      %v713 = vpop.permute.xlu0 %712
      %714 = vrot.lane.b32.xlu0 %v639, 8
      %v715 = vpop.permute.xlu0 %714
      %716 = vrot.lane.b32.xlu0 %v640, 8
      %v717 = vpop.permute.xlu0 %716
      %718 = vrot.lane.b32.xlu0 %v641, 8
      %v719 = vpop.permute.xlu0 %718
      %720 = vrot.lane.b32.xlu0 %v642, 8
      %v721 = vpop.permute.xlu0 %720
      %722 = vrot.lane.b32.xlu0 %v643, 8
      %v723 = vpop.permute.xlu0 %722
      %724 = vrot.lane.b32.xlu0 %v644, 8
      %v725 = vpop.permute.xlu0 %724
      %726 = vrot.lane.b32.xlu0 %v645, 8
      %v727 = vpop.permute.xlu0 %726
      %728 = vrot.lane.b32.xlu0 %v646, 8
      %v729 = vpop.permute.xlu0 %728
      %730 = vrot.lane.b32.xlu0 %v647, 8
      %v731 = vpop.permute.xlu0 %730
      %732 = vrot.lane.b32.xlu0 %v648, 8
      %v733 = vpop.permute.xlu0 %732
      %734 = vrot.lane.b32.xlu0 %v649, 8
      %v735 = vpop.permute.xlu0 %734
      %736 = vrot.lane.b32.xlu0 %v650, 8
      %v737 = vpop.permute.xlu0 %736
      %738 = vrot.lane.b32.xlu0 %v651, 8
      %v739 = vpop.permute.xlu0 %738
      %740 = vrot.lane.b32.xlu0 %v652, 8
      %v741 = vpop.permute.xlu0 %740
      %742 = vrot.lane.b32.xlu0 %v653, 8
      %v743 = vpop.permute.xlu0 %742
      %744 = vrot.lane.b32.xlu0 %v654, 8
      %v745 = vpop.permute.xlu0 %744
      %746 = vrot.lane.b32.xlu0 %v655, 8
      %v747 = vpop.permute.xlu0 %746
      %748 = vrot.lane.b32.xlu0 %v656, 8
      %v749 = vpop.permute.xlu0 %748
      %750 = vrot.lane.b32.xlu0 %v657, 8
      %v751 = vpop.permute.xlu0 %750
      %752 = vrot.lane.b32.xlu0 %v658, 8
      %v753 = vpop.permute.xlu0 %752
      %754 = vrot.lane.b32.xlu0 %v659, 8
      %v755 = vpop.permute.xlu0 %754
      %vm788 = vcmask 130112
      %789 = vst.msk [vmem:[#allocation3] sm:$0xff] %vm788, %v693
      %790 = vst.msk [vmem:[#allocation3 + $0x8] sm:$0xff] %vm788, %v695
      %791 = vst.msk [vmem:[#allocation3 + $0x10] sm:$0xff] %vm788, %v697
      %792 = vst.msk [vmem:[#allocation3 + $0x18] sm:$0xff] %vm788, %v699
      %793 = vst.msk [vmem:[#allocation3 + $0x20] sm:$0xff] %vm788, %v701
      %794 = vst.msk [vmem:[#allocation3 + $0x28] sm:$0xff] %vm788, %v703
      %795 = vst.msk [vmem:[#allocation3 + $0x30] sm:$0xff] %vm788, %v705
      %796 = vst.msk [vmem:[#allocation3 + $0x38] sm:$0xff] %vm788, %v707
      %797 = vst.msk [vmem:[#allocation3 + $0x40] sm:$0xff] %vm788, %v709
      %798 = vst.msk [vmem:[#allocation3 + $0x48] sm:$0xff] %vm788, %v711
      %799 = vst.msk [vmem:[#allocation3 + $0x50] sm:$0xff] %vm788, %v713
      %800 = vst.msk [vmem:[#allocation3 + $0x58] sm:$0xff] %vm788, %v715
      %801 = vst.msk [vmem:[#allocation3 + $0x60] sm:$0xff] %vm788, %v717
      %802 = vst.msk [vmem:[#allocation3 + $0x68] sm:$0xff] %vm788, %v719
      %803 = vst.msk [vmem:[#allocation3 + $0x70] sm:$0xff] %vm788, %v721
      %804 = vst.msk [vmem:[#allocation3 + $0x78] sm:$0xff] %vm788, %v723
      %805 = vst.msk [vmem:[#allocation3 + $0x80] sm:$0xff] %vm788, %v725
      %806 = vst.msk [vmem:[#allocation3 + $0x88] sm:$0xff] %vm788, %v727
      %807 = vst.msk [vmem:[#allocation3 + $0x90] sm:$0xff] %vm788, %v729
      %808 = vst.msk [vmem:[#allocation3 + $0x98] sm:$0xff] %vm788, %v731
      %809 = vst.msk [vmem:[#allocation3 + $0xa0] sm:$0xff] %vm788, %v733
      %810 = vst.msk [vmem:[#allocation3 + $0xa8] sm:$0xff] %vm788, %v735
      %811 = vst.msk [vmem:[#allocation3 + $0xb0] sm:$0xff] %vm788, %v737
      %812 = vst.msk [vmem:[#allocation3 + $0xb8] sm:$0xff] %vm788, %v739
      %813 = vst.msk [vmem:[#allocation3 + $0xc0] sm:$0xff] %vm788, %v741
      %814 = vst.msk [vmem:[#allocation3 + $0xc8] sm:$0xff] %vm788, %v743
      %815 = vst.msk [vmem:[#allocation3 + $0xd0] sm:$0xff] %vm788, %v745
      %816 = vst.msk [vmem:[#allocation3 + $0xd8] sm:$0xff] %vm788, %v747
      %817 = vst.msk [vmem:[#allocation3 + $0xe0] sm:$0xff] %vm788, %v749
      %818 = vst.msk [vmem:[#allocation3 + $0xe8] sm:$0xff] %vm788, %v751
      %819 = vst.msk [vmem:[#allocation3 + $0xf0] sm:$0xff] %vm788, %v753
      %820 = vst.msk [vmem:[#allocation3 + $0xf8] sm:$0xff] %vm788, %v755
      %v821 = vld [vmem:[#allocation2 + $0x2] sm:$0xff]
      %v822 = vld [vmem:[#allocation2 + $0xa] sm:$0xff]
      %v823 = vld [vmem:[#allocation2 + $0x1a] sm:$0xff]
      %v824 = vld [vmem:[#allocation2 + $0x22] sm:$0xff]
      %v825 = vld [vmem:[#allocation2 + $0x32] sm:$0xff]
      %v826 = vld [vmem:[#allocation2 + $0x3a] sm:$0xff]
      %v827 = vld [vmem:[#allocation2 + $0x4a] sm:$0xff]
      %v828 = vld [vmem:[#allocation2 + $0x52] sm:$0xff]
      %v829 = vld [vmem:[#allocation2 + $0x62] sm:$0xff]
      %v830 = vld [vmem:[#allocation2 + $0x6a] sm:$0xff]
      %v831 = vld [vmem:[#allocation2 + $0x7a] sm:$0xff]
      %v832 = vld [vmem:[#allocation2 + $0x82] sm:$0xff]
      %v833 = vld [vmem:[#allocation2 + $0x92] sm:$0xff]
      %v834 = vld [vmem:[#allocation2 + $0x9a] sm:$0xff]
      %v835 = vld [vmem:[#allocation2 + $0xaa] sm:$0xff]
      %v836 = vld [vmem:[#allocation2 + $0xb2] sm:$0xff]
      %v837 = vld [vmem:[#allocation2 + $0xc2] sm:$0xff]
      %v838 = vld [vmem:[#allocation2 + $0xca] sm:$0xff]
      %v839 = vld [vmem:[#allocation2 + $0xda] sm:$0xff]
      %v840 = vld [vmem:[#allocation2 + $0xe2] sm:$0xff]
      %v841 = vld [vmem:[#allocation2 + $0xf2] sm:$0xff]
      %v842 = vld [vmem:[#allocation2 + $0xfa] sm:$0xff]
      %v843 = vld [vmem:[#allocation2 + $0x10a] sm:$0xff]
      %v844 = vld [vmem:[#allocation2 + $0x112] sm:$0xff]
      %v845 = vld [vmem:[#allocation2 + $0x122] sm:$0xff]
      %v846 = vld [vmem:[#allocation2 + $0x12a] sm:$0xff]
      %v847 = vld [vmem:[#allocation2 + $0x13a] sm:$0xff]
      %v848 = vld [vmem:[#allocation2 + $0x142] sm:$0xff]
      %v849 = vld [vmem:[#allocation2 + $0x152] sm:$0xff]
      %v850 = vld [vmem:[#allocation2 + $0x15a] sm:$0xff]
      %v851 = vld [vmem:[#allocation2 + $0x16a] sm:$0xff]
      %v852 = vld [vmem:[#allocation2 + $0x172] sm:$0xff]
      %885 = vrot.lane.b32.xlu0 %v821, 16
      %v886 = vpop.permute.xlu0 %885
      %887 = vrot.lane.b32.xlu0 %v822, 16
      %v888 = vpop.permute.xlu0 %887
      %889 = vrot.lane.b32.xlu0 %v823, 16
      %v890 = vpop.permute.xlu0 %889
      %891 = vrot.lane.b32.xlu0 %v824, 16
      %v892 = vpop.permute.xlu0 %891
      %893 = vrot.lane.b32.xlu0 %v825, 16
      %v894 = vpop.permute.xlu0 %893
      %895 = vrot.lane.b32.xlu0 %v826, 16
      %v896 = vpop.permute.xlu0 %895
      %897 = vrot.lane.b32.xlu0 %v827, 16
      %v898 = vpop.permute.xlu0 %897
      %899 = vrot.lane.b32.xlu0 %v828, 16
      %v900 = vpop.permute.xlu0 %899
      %901 = vrot.lane.b32.xlu0 %v829, 16
      %v902 = vpop.permute.xlu0 %901
      %903 = vrot.lane.b32.xlu0 %v830, 16
      %v904 = vpop.permute.xlu0 %903
      %905 = vrot.lane.b32.xlu0 %v831, 16
      %v906 = vpop.permute.xlu0 %905
      %907 = vrot.lane.b32.xlu0 %v832, 16
      %v908 = vpop.permute.xlu0 %907
      %909 = vrot.lane.b32.xlu0 %v833, 16
      %v910 = vpop.permute.xlu0 %909
      %911 = vrot.lane.b32.xlu0 %v834, 16
      %v912 = vpop.permute.xlu0 %911
      %913 = vrot.lane.b32.xlu0 %v835, 16
      %v914 = vpop.permute.xlu0 %913
      %915 = vrot.lane.b32.xlu0 %v836, 16
      %v916 = vpop.permute.xlu0 %915
      %917 = vrot.lane.b32.xlu0 %v837, 16
      %v918 = vpop.permute.xlu0 %917
      %919 = vrot.lane.b32.xlu0 %v838, 16
      %v920 = vpop.permute.xlu0 %919
      %921 = vrot.lane.b32.xlu0 %v839, 16
      %v922 = vpop.permute.xlu0 %921
      %923 = vrot.lane.b32.xlu0 %v840, 16
      %v924 = vpop.permute.xlu0 %923
      %925 = vrot.lane.b32.xlu0 %v841, 16
      %v926 = vpop.permute.xlu0 %925
      %927 = vrot.lane.b32.xlu0 %v842, 16
      %v928 = vpop.permute.xlu0 %927
      %929 = vrot.lane.b32.xlu0 %v843, 16
      %v930 = vpop.permute.xlu0 %929
      %931 = vrot.lane.b32.xlu0 %v844, 16
      %v932 = vpop.permute.xlu0 %931
      %933 = vrot.lane.b32.xlu0 %v845, 16
      %v934 = vpop.permute.xlu0 %933
      %935 = vrot.lane.b32.xlu0 %v846, 16
      %v936 = vpop.permute.xlu0 %935
      %937 = vrot.lane.b32.xlu0 %v847, 16
      %v938 = vpop.permute.xlu0 %937
      %939 = vrot.lane.b32.xlu0 %v848, 16
      %v940 = vpop.permute.xlu0 %939
      %941 = vrot.lane.b32.xlu0 %v849, 16
      %v942 = vpop.permute.xlu0 %941
      %943 = vrot.lane.b32.xlu0 %v850, 16
      %v944 = vpop.permute.xlu0 %943
      %945 = vrot.lane.b32.xlu0 %v851, 16
      %v946 = vpop.permute.xlu0 %945
      %947 = vrot.lane.b32.xlu0 %v852, 16
      %v948 = vpop.permute.xlu0 %947
      %vm981 = vcmask 195712
      %982 = vst.msk [vmem:[#allocation3] sm:$0xff] %vm981, %v886
      %983 = vst.msk [vmem:[#allocation3 + $0x8] sm:$0xff] %vm981, %v888
      %984 = vst.msk [vmem:[#allocation3 + $0x10] sm:$0xff] %vm981, %v890
      %985 = vst.msk [vmem:[#allocation3 + $0x18] sm:$0xff] %vm981, %v892
      %986 = vst.msk [vmem:[#allocation3 + $0x20] sm:$0xff] %vm981, %v894
      %987 = vst.msk [vmem:[#allocation3 + $0x28] sm:$0xff] %vm981, %v896
      %988 = vst.msk [vmem:[#allocation3 + $0x30] sm:$0xff] %vm981, %v898
      %989 = vst.msk [vmem:[#allocation3 + $0x38] sm:$0xff] %vm981, %v900
      %990 = vst.msk [vmem:[#allocation3 + $0x40] sm:$0xff] %vm981, %v902
      %991 = vst.msk [vmem:[#allocation3 + $0x48] sm:$0xff] %vm981, %v904
      %992 = vst.msk [vmem:[#allocation3 + $0x50] sm:$0xff] %vm981, %v906
      %993 = vst.msk [vmem:[#allocation3 + $0x58] sm:$0xff] %vm981, %v908
      %994 = vst.msk [vmem:[#allocation3 + $0x60] sm:$0xff] %vm981, %v910
      %995 = vst.msk [vmem:[#allocation3 + $0x68] sm:$0xff] %vm981, %v912
      %996 = vst.msk [vmem:[#allocation3 + $0x70] sm:$0xff] %vm981, %v914
      %997 = vst.msk [vmem:[#allocation3 + $0x78] sm:$0xff] %vm981, %v916
      %998 = vst.msk [vmem:[#allocation3 + $0x80] sm:$0xff] %vm981, %v918
      %999 = vst.msk [vmem:[#allocation3 + $0x88] sm:$0xff] %vm981, %v920
      %1000 = vst.msk [vmem:[#allocation3 + $0x90] sm:$0xff] %vm981, %v922
      %1001 = vst.msk [vmem:[#allocation3 + $0x98] sm:$0xff] %vm981, %v924
      %1002 = vst.msk [vmem:[#allocation3 + $0xa0] sm:$0xff] %vm981, %v926
      %1003 = vst.msk [vmem:[#allocation3 + $0xa8] sm:$0xff] %vm981, %v928
      %1004 = vst.msk [vmem:[#allocation3 + $0xb0] sm:$0xff] %vm981, %v930
      %1005 = vst.msk [vmem:[#allocation3 + $0xb8] sm:$0xff] %vm981, %v932
      %1006 = vst.msk [vmem:[#allocation3 + $0xc0] sm:$0xff] %vm981, %v934
      %1007 = vst.msk [vmem:[#allocation3 + $0xc8] sm:$0xff] %vm981, %v936
      %1008 = vst.msk [vmem:[#allocation3 + $0xd0] sm:$0xff] %vm981, %v938
      %1009 = vst.msk [vmem:[#allocation3 + $0xd8] sm:$0xff] %vm981, %v940
      %1010 = vst.msk [vmem:[#allocation3 + $0xe0] sm:$0xff] %vm981, %v942
      %1011 = vst.msk [vmem:[#allocation3 + $0xe8] sm:$0xff] %vm981, %v944
      %1012 = vst.msk [vmem:[#allocation3 + $0xf0] sm:$0xff] %vm981, %v946
      %1013 = vst.msk [vmem:[#allocation3 + $0xf8] sm:$0xff] %vm981, %v948
      %v1014 = vld [vmem:[%s531] sm:$0xff]
      %v1015 = vld [vmem:[%s531 + $0x8] sm:$0xff]
      %v1016 = vld [vmem:[%s531 + $0x18] sm:$0xff]
      %v1017 = vld [vmem:[%s531 + $0x20] sm:$0xff]
      %v1018 = vld [vmem:[%s531 + $0x30] sm:$0xff]
      %v1019 = vld [vmem:[%s531 + $0x38] sm:$0xff]
      %v1020 = vld [vmem:[%s531 + $0x48] sm:$0xff]
      %v1021 = vld [vmem:[%s531 + $0x50] sm:$0xff]
      %v1022 = vld [vmem:[%s531 + $0x60] sm:$0xff]
      %v1023 = vld [vmem:[%s531 + $0x68] sm:$0xff]
      %v1024 = vld [vmem:[%s531 + $0x78] sm:$0xff]
      %v1025 = vld [vmem:[%s531 + $0x80] sm:$0xff]
      %v1026 = vld [vmem:[%s531 + $0x90] sm:$0xff]
      %v1027 = vld [vmem:[%s531 + $0x98] sm:$0xff]
      %v1028 = vld [vmem:[%s531 + $0xa8] sm:$0xff]
      %v1029 = vld [vmem:[%s531 + $0xb0] sm:$0xff]
      %v1030 = vld [vmem:[%s531 + $0xc0] sm:$0xff]
      %v1031 = vld [vmem:[%s531 + $0xc8] sm:$0xff]
      %v1032 = vld [vmem:[%s531 + $0xd8] sm:$0xff]
      %v1033 = vld [vmem:[%s531 + $0xe0] sm:$0xff]
      %v1034 = vld [vmem:[%s531 + $0xf0] sm:$0xff]
      %v1035 = vld [vmem:[%s531 + $0xf8] sm:$0xff]
      %v1036 = vld [vmem:[%s531 + $0x108] sm:$0xff]
      %v1037 = vld [vmem:[%s531 + $0x110] sm:$0xff]
      %v1038 = vld [vmem:[%s531 + $0x120] sm:$0xff]
      %v1039 = vld [vmem:[%s531 + $0x128] sm:$0xff]
      %v1040 = vld [vmem:[%s531 + $0x138] sm:$0xff]
      %v1041 = vld [vmem:[%s531 + $0x140] sm:$0xff]
      %v1042 = vld [vmem:[%s531 + $0x150] sm:$0xff]
      %v1043 = vld [vmem:[%s531 + $0x158] sm:$0xff]
      %v1044 = vld [vmem:[%s531 + $0x168] sm:$0xff]
      %v1045 = vld [vmem:[%s531 + $0x170] sm:$0xff]
      %1078 = vrot.lane.b32.xlu0 %v1014, 24
      %v1079 = vpop.permute.xlu0 %1078
      %1080 = vrot.lane.b32.xlu0 %v1015, 24
      %v1081 = vpop.permute.xlu0 %1080
      %1082 = vrot.lane.b32.xlu0 %v1016, 24
      %v1083 = vpop.permute.xlu0 %1082
      %1084 = vrot.lane.b32.xlu0 %v1017, 24
      %v1085 = vpop.permute.xlu0 %1084
      %1086 = vrot.lane.b32.xlu0 %v1018, 24
      %v1087 = vpop.permute.xlu0 %1086
      %1088 = vrot.lane.b32.xlu0 %v1019, 24
      %v1089 = vpop.permute.xlu0 %1088
      %1090 = vrot.lane.b32.xlu0 %v1020, 24
      %v1091 = vpop.permute.xlu0 %1090
      %1092 = vrot.lane.b32.xlu0 %v1021, 24
      %v1093 = vpop.permute.xlu0 %1092
      %1094 = vrot.lane.b32.xlu0 %v1022, 24
      %v1095 = vpop.permute.xlu0 %1094
      %1096 = vrot.lane.b32.xlu0 %v1023, 24
      %v1097 = vpop.permute.xlu0 %1096
      %1098 = vrot.lane.b32.xlu0 %v1024, 24
      %v1099 = vpop.permute.xlu0 %1098
      %1100 = vrot.lane.b32.xlu0 %v1025, 24
      %v1101 = vpop.permute.xlu0 %1100
      %1102 = vrot.lane.b32.xlu0 %v1026, 24
      %v1103 = vpop.permute.xlu0 %1102
      %1104 = vrot.lane.b32.xlu0 %v1027, 24
      %v1105 = vpop.permute.xlu0 %1104
      %1106 = vrot.lane.b32.xlu0 %v1028, 24
      %v1107 = vpop.permute.xlu0 %1106
      %1108 = vrot.lane.b32.xlu0 %v1029, 24
      %v1109 = vpop.permute.xlu0 %1108
      %1110 = vrot.lane.b32.xlu0 %v1030, 24
      %v1111 = vpop.permute.xlu0 %1110
      %1112 = vrot.lane.b32.xlu0 %v1031, 24
      %v1113 = vpop.permute.xlu0 %1112
      %1114 = vrot.lane.b32.xlu0 %v1032, 24
      %v1115 = vpop.permute.xlu0 %1114
      %1116 = vrot.lane.b32.xlu0 %v1033, 24
      %v1117 = vpop.permute.xlu0 %1116
      %1118 = vrot.lane.b32.xlu0 %v1034, 24
      %v1119 = vpop.permute.xlu0 %1118
      %1120 = vrot.lane.b32.xlu0 %v1035, 24
      %v1121 = vpop.permute.xlu0 %1120
      %1122 = vrot.lane.b32.xlu0 %v1036, 24
      %v1123 = vpop.permute.xlu0 %1122
      %1124 = vrot.lane.b32.xlu0 %v1037, 24
      %v1125 = vpop.permute.xlu0 %1124
      %1126 = vrot.lane.b32.xlu0 %v1038, 24
      %v1127 = vpop.permute.xlu0 %1126
      %1128 = vrot.lane.b32.xlu0 %v1039, 24
      %v1129 = vpop.permute.xlu0 %1128
      %1130 = vrot.lane.b32.xlu0 %v1040, 24
      %v1131 = vpop.permute.xlu0 %1130
      %1132 = vrot.lane.b32.xlu0 %v1041, 24
      %v1133 = vpop.permute.xlu0 %1132
      %1134 = vrot.lane.b32.xlu0 %v1042, 24
      %v1135 = vpop.permute.xlu0 %1134
      %1136 = vrot.lane.b32.xlu0 %v1043, 24
      %v1137 = vpop.permute.xlu0 %1136
      %1138 = vrot.lane.b32.xlu0 %v1044, 24
      %v1139 = vpop.permute.xlu0 %1138
      %1140 = vrot.lane.b32.xlu0 %v1045, 24
      %v1141 = vpop.permute.xlu0 %1140
      %vm1174 = vcmask 261312
      %1175 = vst.msk [vmem:[#allocation3] sm:$0xff] %vm1174, %v1079
      %1176 = vst.msk [vmem:[#allocation3 + $0x8] sm:$0xff] %vm1174, %v1081
      %1177 = vst.msk [vmem:[#allocation3 + $0x10] sm:$0xff] %vm1174, %v1083
      %1178 = vst.msk [vmem:[#allocation3 + $0x18] sm:$0xff] %vm1174, %v1085
      %1179 = vst.msk [vmem:[#allocation3 + $0x20] sm:$0xff] %vm1174, %v1087
      %1180 = vst.msk [vmem:[#allocation3 + $0x28] sm:$0xff] %vm1174, %v1089
      %1181 = vst.msk [vmem:[#allocation3 + $0x30] sm:$0xff] %vm1174, %v1091
      %1182 = vst.msk [vmem:[#allocation3 + $0x38] sm:$0xff] %vm1174, %v1093
      %1183 = vst.msk [vmem:[#allocation3 + $0x40] sm:$0xff] %vm1174, %v1095
      %1184 = vst.msk [vmem:[#allocation3 + $0x48] sm:$0xff] %vm1174, %v1097
      %1185 = vst.msk [vmem:[#allocation3 + $0x50] sm:$0xff] %vm1174, %v1099
      %1186 = vst.msk [vmem:[#allocation3 + $0x58] sm:$0xff] %vm1174, %v1101
      %1187 = vst.msk [vmem:[#allocation3 + $0x60] sm:$0xff] %vm1174, %v1103
      %1188 = vst.msk [vmem:[#allocation3 + $0x68] sm:$0xff] %vm1174, %v1105
      %1189 = vst.msk [vmem:[#allocation3 + $0x70] sm:$0xff] %vm1174, %v1107
      %1190 = vst.msk [vmem:[#allocation3 + $0x78] sm:$0xff] %vm1174, %v1109
      %1191 = vst.msk [vmem:[#allocation3 + $0x80] sm:$0xff] %vm1174, %v1111
      %1192 = vst.msk [vmem:[#allocation3 + $0x88] sm:$0xff] %vm1174, %v1113
      %1193 = vst.msk [vmem:[#allocation3 + $0x90] sm:$0xff] %vm1174, %v1115
      %1194 = vst.msk [vmem:[#allocation3 + $0x98] sm:$0xff] %vm1174, %v1117
      %1195 = vst.msk [vmem:[#allocation3 + $0xa0] sm:$0xff] %vm1174, %v1119
      %1196 = vst.msk [vmem:[#allocation3 + $0xa8] sm:$0xff] %vm1174, %v1121
      %1197 = vst.msk [vmem:[#allocation3 + $0xb0] sm:$0xff] %vm1174, %v1123
      %1198 = vst.msk [vmem:[#allocation3 + $0xb8] sm:$0xff] %vm1174, %v1125
      %1199 = vst.msk [vmem:[#allocation3 + $0xc0] sm:$0xff] %vm1174, %v1127
      %1200 = vst.msk [vmem:[#allocation3 + $0xc8] sm:$0xff] %vm1174, %v1129
      %1201 = vst.msk [vmem:[#allocation3 + $0xd0] sm:$0xff] %vm1174, %v1131
      %1202 = vst.msk [vmem:[#allocation3 + $0xd8] sm:$0xff] %vm1174, %v1133
      %1203 = vst.msk [vmem:[#allocation3 + $0xe0] sm:$0xff] %vm1174, %v1135
      %1204 = vst.msk [vmem:[#allocation3 + $0xe8] sm:$0xff] %vm1174, %v1137
      %1205 = vst.msk [vmem:[#allocation3 + $0xf0] sm:$0xff] %vm1174, %v1139
      %1206 = vst.msk [vmem:[#allocation3 + $0xf8] sm:$0xff] %vm1174, %v1141
      %v1207 = vld [vmem:[%s531 + $0x1] sm:$0xff]
      %v1208 = vld [vmem:[%s531 + $0x9] sm:$0xff]
      %v1209 = vld [vmem:[%s531 + $0x19] sm:$0xff]
      %v1210 = vld [vmem:[%s531 + $0x21] sm:$0xff]
      %v1211 = vld [vmem:[%s531 + $0x31] sm:$0xff]
      %v1212 = vld [vmem:[%s531 + $0x39] sm:$0xff]
      %v1213 = vld [vmem:[%s531 + $0x49] sm:$0xff]
      %v1214 = vld [vmem:[%s531 + $0x51] sm:$0xff]
      %v1215 = vld [vmem:[%s531 + $0x61] sm:$0xff]
      %v1216 = vld [vmem:[%s531 + $0x69] sm:$0xff]
      %v1217 = vld [vmem:[%s531 + $0x79] sm:$0xff]
      %v1218 = vld [vmem:[%s531 + $0x81] sm:$0xff]
      %v1219 = vld [vmem:[%s531 + $0x91] sm:$0xff]
      %v1220 = vld [vmem:[%s531 + $0x99] sm:$0xff]
      %v1221 = vld [vmem:[%s531 + $0xa9] sm:$0xff]
      %v1222 = vld [vmem:[%s531 + $0xb1] sm:$0xff]
      %v1223 = vld [vmem:[%s531 + $0xc1] sm:$0xff]
      %v1224 = vld [vmem:[%s531 + $0xc9] sm:$0xff]
      %v1225 = vld [vmem:[%s531 + $0xd9] sm:$0xff]
      %v1226 = vld [vmem:[%s531 + $0xe1] sm:$0xff]
      %v1227 = vld [vmem:[%s531 + $0xf1] sm:$0xff]
      %v1228 = vld [vmem:[%s531 + $0xf9] sm:$0xff]
      %v1229 = vld [vmem:[%s531 + $0x109] sm:$0xff]
      %v1230 = vld [vmem:[%s531 + $0x111] sm:$0xff]
      %v1231 = vld [vmem:[%s531 + $0x121] sm:$0xff]
      %v1232 = vld [vmem:[%s531 + $0x129] sm:$0xff]
      %v1233 = vld [vmem:[%s531 + $0x139] sm:$0xff]
      %v1234 = vld [vmem:[%s531 + $0x141] sm:$0xff]
      %v1235 = vld [vmem:[%s531 + $0x151] sm:$0xff]
      %v1236 = vld [vmem:[%s531 + $0x159] sm:$0xff]
      %v1237 = vld [vmem:[%s531 + $0x169] sm:$0xff]
      %v1238 = vld [vmem:[%s531 + $0x171] sm:$0xff]
      %1271 = vrot.lane.b32.xlu0 %v1207, 32
      %v1272 = vpop.permute.xlu0 %1271
      %1273 = vrot.lane.b32.xlu0 %v1208, 32
      %v1274 = vpop.permute.xlu0 %1273
      %1275 = vrot.lane.b32.xlu0 %v1209, 32
      %v1276 = vpop.permute.xlu0 %1275
      %1277 = vrot.lane.b32.xlu0 %v1210, 32
      %v1278 = vpop.permute.xlu0 %1277
      %1279 = vrot.lane.b32.xlu0 %v1211, 32
      %v1280 = vpop.permute.xlu0 %1279
      %1281 = vrot.lane.b32.xlu0 %v1212, 32
      %v1282 = vpop.permute.xlu0 %1281
      %1283 = vrot.lane.b32.xlu0 %v1213, 32
      %v1284 = vpop.permute.xlu0 %1283
      %1285 = vrot.lane.b32.xlu0 %v1214, 32
      %v1286 = vpop.permute.xlu0 %1285
      %1287 = vrot.lane.b32.xlu0 %v1215, 32
      %v1288 = vpop.permute.xlu0 %1287
      %1289 = vrot.lane.b32.xlu0 %v1216, 32
      %v1290 = vpop.permute.xlu0 %1289
      %1291 = vrot.lane.b32.xlu0 %v1217, 32
      %v1292 = vpop.permute.xlu0 %1291
      %1293 = vrot.lane.b32.xlu0 %v1218, 32
      %v1294 = vpop.permute.xlu0 %1293
      %1295 = vrot.lane.b32.xlu0 %v1219, 32
      %v1296 = vpop.permute.xlu0 %1295
      %1297 = vrot.lane.b32.xlu0 %v1220, 32
      %v1298 = vpop.permute.xlu0 %1297
      %1299 = vrot.lane.b32.xlu0 %v1221, 32
      %v1300 = vpop.permute.xlu0 %1299
      %1301 = vrot.lane.b32.xlu0 %v1222, 32
      %v1302 = vpop.permute.xlu0 %1301
      %1303 = vrot.lane.b32.xlu0 %v1223, 32
      %v1304 = vpop.permute.xlu0 %1303
      %1305 = vrot.lane.b32.xlu0 %v1224, 32
      %v1306 = vpop.permute.xlu0 %1305
      %1307 = vrot.lane.b32.xlu0 %v1225, 32
      %v1308 = vpop.permute.xlu0 %1307
      %1309 = vrot.lane.b32.xlu0 %v1226, 32
      %v1310 = vpop.permute.xlu0 %1309
      %1311 = vrot.lane.b32.xlu0 %v1227, 32
      %v1312 = vpop.permute.xlu0 %1311
      %1313 = vrot.lane.b32.xlu0 %v1228, 32
      %v1314 = vpop.permute.xlu0 %1313
      %1315 = vrot.lane.b32.xlu0 %v1229, 32
      %v1316 = vpop.permute.xlu0 %1315
      %1317 = vrot.lane.b32.xlu0 %v1230, 32
      %v1318 = vpop.permute.xlu0 %1317
      %1319 = vrot.lane.b32.xlu0 %v1231, 32
      %v1320 = vpop.permute.xlu0 %1319
      %1321 = vrot.lane.b32.xlu0 %v1232, 32
      %v1322 = vpop.permute.xlu0 %1321
      %1323 = vrot.lane.b32.xlu0 %v1233, 32
      %v1324 = vpop.permute.xlu0 %1323
      %1325 = vrot.lane.b32.xlu0 %v1234, 32
      %v1326 = vpop.permute.xlu0 %1325
      %1327 = vrot.lane.b32.xlu0 %v1235, 32
      %v1328 = vpop.permute.xlu0 %1327
      %1329 = vrot.lane.b32.xlu0 %v1236, 32
      %v1330 = vpop.permute.xlu0 %1329
      %1331 = vrot.lane.b32.xlu0 %v1237, 32
      %v1332 = vpop.permute.xlu0 %1331
      %1333 = vrot.lane.b32.xlu0 %v1238, 32
      %v1334 = vpop.permute.xlu0 %1333
      %vm1367 = vcmask 326912
      %1368 = vst.msk [vmem:[#allocation3] sm:$0xff] %vm1367, %v1272
      %1369 = vst.msk [vmem:[#allocation3 + $0x8] sm:$0xff] %vm1367, %v1274
      %1370 = vst.msk [vmem:[#allocation3 + $0x10] sm:$0xff] %vm1367, %v1276
      %1371 = vst.msk [vmem:[#allocation3 + $0x18] sm:$0xff] %vm1367, %v1278
      %1372 = vst.msk [vmem:[#allocation3 + $0x20] sm:$0xff] %vm1367, %v1280
      %1373 = vst.msk [vmem:[#allocation3 + $0x28] sm:$0xff] %vm1367, %v1282
      %1374 = vst.msk [vmem:[#allocation3 + $0x30] sm:$0xff] %vm1367, %v1284
      %1375 = vst.msk [vmem:[#allocation3 + $0x38] sm:$0xff] %vm1367, %v1286
      %1376 = vst.msk [vmem:[#allocation3 + $0x40] sm:$0xff] %vm1367, %v1288
      %1377 = vst.msk [vmem:[#allocation3 + $0x48] sm:$0xff] %vm1367, %v1290
      %1378 = vst.msk [vmem:[#allocation3 + $0x50] sm:$0xff] %vm1367, %v1292
      %1379 = vst.msk [vmem:[#allocation3 + $0x58] sm:$0xff] %vm1367, %v1294
      %1380 = vst.msk [vmem:[#allocation3 + $0x60] sm:$0xff] %vm1367, %v1296
      %1381 = vst.msk [vmem:[#allocation3 + $0x68] sm:$0xff] %vm1367, %v1298
      %1382 = vst.msk [vmem:[#allocation3 + $0x70] sm:$0xff] %vm1367, %v1300
      %1383 = vst.msk [vmem:[#allocation3 + $0x78] sm:$0xff] %vm1367, %v1302
      %1384 = vst.msk [vmem:[#allocation3 + $0x80] sm:$0xff] %vm1367, %v1304
      %1385 = vst.msk [vmem:[#allocation3 + $0x88] sm:$0xff] %vm1367, %v1306
      %1386 = vst.msk [vmem:[#allocation3 + $0x90] sm:$0xff] %vm1367, %v1308
      %1387 = vst.msk [vmem:[#allocation3 + $0x98] sm:$0xff] %vm1367, %v1310
      %1388 = vst.msk [vmem:[#allocation3 + $0xa0] sm:$0xff] %vm1367, %v1312
      %1389 = vst.msk [vmem:[#allocation3 + $0xa8] sm:$0xff] %vm1367, %v1314
      %1390 = vst.msk [vmem:[#allocation3 + $0xb0] sm:$0xff] %vm1367, %v1316
      %1391 = vst.msk [vmem:[#allocation3 + $0xb8] sm:$0xff] %vm1367, %v1318
      %1392 = vst.msk [vmem:[#allocation3 + $0xc0] sm:$0xff] %vm1367, %v1320
      %1393 = vst.msk [vmem:[#allocation3 + $0xc8] sm:$0xff] %vm1367, %v1322
      %1394 = vst.msk [vmem:[#allocation3 + $0xd0] sm:$0xff] %vm1367, %v1324
      %1395 = vst.msk [vmem:[#allocation3 + $0xd8] sm:$0xff] %vm1367, %v1326
      %1396 = vst.msk [vmem:[#allocation3 + $0xe0] sm:$0xff] %vm1367, %v1328
      %1397 = vst.msk [vmem:[#allocation3 + $0xe8] sm:$0xff] %vm1367, %v1330
      %1398 = vst.msk [vmem:[#allocation3 + $0xf0] sm:$0xff] %vm1367, %v1332
      %1399 = vst.msk [vmem:[#allocation3 + $0xf8] sm:$0xff] %vm1367, %v1334
      %v1400 = vld [vmem:[%s531 + $0x2] sm:$0xff]
      %v1401 = vld [vmem:[%s531 + $0xa] sm:$0xff]
      %v1402 = vld [vmem:[%s531 + $0x1a] sm:$0xff]
      %v1403 = vld [vmem:[%s531 + $0x22] sm:$0xff]
      %v1404 = vld [vmem:[%s531 + $0x32] sm:$0xff]
      %v1405 = vld [vmem:[%s531 + $0x3a] sm:$0xff]
      %v1406 = vld [vmem:[%s531 + $0x4a] sm:$0xff]
      %v1407 = vld [vmem:[%s531 + $0x52] sm:$0xff]
      %v1408 = vld [vmem:[%s531 + $0x62] sm:$0xff]
      %v1409 = vld [vmem:[%s531 + $0x6a] sm:$0xff]
      %v1410 = vld [vmem:[%s531 + $0x7a] sm:$0xff]
      %v1411 = vld [vmem:[%s531 + $0x82] sm:$0xff]
      %v1412 = vld [vmem:[%s531 + $0x92] sm:$0xff]
      %v1413 = vld [vmem:[%s531 + $0x9a] sm:$0xff]
      %v1414 = vld [vmem:[%s531 + $0xaa] sm:$0xff]
      %v1415 = vld [vmem:[%s531 + $0xb2] sm:$0xff]
      %v1416 = vld [vmem:[%s531 + $0xc2] sm:$0xff]
      %v1417 = vld [vmem:[%s531 + $0xca] sm:$0xff]
      %v1418 = vld [vmem:[%s531 + $0xda] sm:$0xff]
      %v1419 = vld [vmem:[%s531 + $0xe2] sm:$0xff]
      %v1420 = vld [vmem:[%s531 + $0xf2] sm:$0xff]
      %v1421 = vld [vmem:[%s531 + $0xfa] sm:$0xff]
      %v1422 = vld [vmem:[%s531 + $0x10a] sm:$0xff]
      %v1423 = vld [vmem:[%s531 + $0x112] sm:$0xff]
      %v1424 = vld [vmem:[%s531 + $0x122] sm:$0xff]
      %v1425 = vld [vmem:[%s531 + $0x12a] sm:$0xff]
      %v1426 = vld [vmem:[%s531 + $0x13a] sm:$0xff]
      %v1427 = vld [vmem:[%s531 + $0x142] sm:$0xff]
      %v1428 = vld [vmem:[%s531 + $0x152] sm:$0xff]
      %v1429 = vld [vmem:[%s531 + $0x15a] sm:$0xff]
      %v1430 = vld [vmem:[%s531 + $0x16a] sm:$0xff]
      %v1431 = vld [vmem:[%s531 + $0x172] sm:$0xff]
      %1464 = vrot.lane.b32.xlu0 %v1400, 40
      %v1465 = vpop.permute.xlu0 %1464
      %1466 = vrot.lane.b32.xlu0 %v1401, 40
      %v1467 = vpop.permute.xlu0 %1466
      %1468 = vrot.lane.b32.xlu0 %v1402, 40
      %v1469 = vpop.permute.xlu0 %1468
      %1470 = vrot.lane.b32.xlu0 %v1403, 40
      %v1471 = vpop.permute.xlu0 %1470
      %1472 = vrot.lane.b32.xlu0 %v1404, 40
      %v1473 = vpop.permute.xlu0 %1472
      %1474 = vrot.lane.b32.xlu0 %v1405, 40
      %v1475 = vpop.permute.xlu0 %1474
      %1476 = vrot.lane.b32.xlu0 %v1406, 40
      %v1477 = vpop.permute.xlu0 %1476
      %1478 = vrot.lane.b32.xlu0 %v1407, 40
      %v1479 = vpop.permute.xlu0 %1478
      %1480 = vrot.lane.b32.xlu0 %v1408, 40
      %v1481 = vpop.permute.xlu0 %1480
      %1482 = vrot.lane.b32.xlu0 %v1409, 40
      %v1483 = vpop.permute.xlu0 %1482
      %1484 = vrot.lane.b32.xlu0 %v1410, 40
      %v1485 = vpop.permute.xlu0 %1484
      %1486 = vrot.lane.b32.xlu0 %v1411, 40
      %v1487 = vpop.permute.xlu0 %1486
      %1488 = vrot.lane.b32.xlu0 %v1412, 40
      %v1489 = vpop.permute.xlu0 %1488
      %1490 = vrot.lane.b32.xlu0 %v1413, 40
      %v1491 = vpop.permute.xlu0 %1490
      %1492 = vrot.lane.b32.xlu0 %v1414, 40
      %v1493 = vpop.permute.xlu0 %1492
      %1494 = vrot.lane.b32.xlu0 %v1415, 40
      %v1495 = vpop.permute.xlu0 %1494
      %1496 = vrot.lane.b32.xlu0 %v1416, 40
      %v1497 = vpop.permute.xlu0 %1496
      %1498 = vrot.lane.b32.xlu0 %v1417, 40
      %v1499 = vpop.permute.xlu0 %1498
      %1500 = vrot.lane.b32.xlu0 %v1418, 40
      %v1501 = vpop.permute.xlu0 %1500
      %1502 = vrot.lane.b32.xlu0 %v1419, 40
      %v1503 = vpop.permute.xlu0 %1502
      %1504 = vrot.lane.b32.xlu0 %v1420, 40
      %v1505 = vpop.permute.xlu0 %1504
      %1506 = vrot.lane.b32.xlu0 %v1421, 40
      %v1507 = vpop.permute.xlu0 %1506
      %1508 = vrot.lane.b32.xlu0 %v1422, 40
      %v1509 = vpop.permute.xlu0 %1508
      %1510 = vrot.lane.b32.xlu0 %v1423, 40
      %v1511 = vpop.permute.xlu0 %1510
      %1512 = vrot.lane.b32.xlu0 %v1424, 40
      %v1513 = vpop.permute.xlu0 %1512
      %1514 = vrot.lane.b32.xlu0 %v1425, 40
      %v1515 = vpop.permute.xlu0 %1514
      %1516 = vrot.lane.b32.xlu0 %v1426, 40
      %v1517 = vpop.permute.xlu0 %1516
      %1518 = vrot.lane.b32.xlu0 %v1427, 40
      %v1519 = vpop.permute.xlu0 %1518
      %1520 = vrot.lane.b32.xlu0 %v1428, 40
      %v1521 = vpop.permute.xlu0 %1520
      %1522 = vrot.lane.b32.xlu0 %v1429, 40
      %v1523 = vpop.permute.xlu0 %1522
      %1524 = vrot.lane.b32.xlu0 %v1430, 40
      %v1525 = vpop.permute.xlu0 %1524
      %1526 = vrot.lane.b32.xlu0 %v1431, 40
      %v1527 = vpop.permute.xlu0 %1526
      %vm1560 = vcmask 392512
      %1561 = vst.msk [vmem:[#allocation3] sm:$0xff] %vm1560, %v1465
      %1562 = vst.msk [vmem:[#allocation3 + $0x8] sm:$0xff] %vm1560, %v1467
      %1563 = vst.msk [vmem:[#allocation3 + $0x10] sm:$0xff] %vm1560, %v1469
      %1564 = vst.msk [vmem:[#allocation3 + $0x18] sm:$0xff] %vm1560, %v1471
      %1565 = vst.msk [vmem:[#allocation3 + $0x20] sm:$0xff] %vm1560, %v1473
      %1566 = vst.msk [vmem:[#allocation3 + $0x28] sm:$0xff] %vm1560, %v1475
      %1567 = vst.msk [vmem:[#allocation3 + $0x30] sm:$0xff] %vm1560, %v1477
      %1568 = vst.msk [vmem:[#allocation3 + $0x38] sm:$0xff] %vm1560, %v1479
      %1569 = vst.msk [vmem:[#allocation3 + $0x40] sm:$0xff] %vm1560, %v1481
      %1570 = vst.msk [vmem:[#allocation3 + $0x48] sm:$0xff] %vm1560, %v1483
      %1571 = vst.msk [vmem:[#allocation3 + $0x50] sm:$0xff] %vm1560, %v1485
      %1572 = vst.msk [vmem:[#allocation3 + $0x58] sm:$0xff] %vm1560, %v1487
      %1573 = vst.msk [vmem:[#allocation3 + $0x60] sm:$0xff] %vm1560, %v1489
      %1574 = vst.msk [vmem:[#allocation3 + $0x68] sm:$0xff] %vm1560, %v1491
      %1575 = vst.msk [vmem:[#allocation3 + $0x70] sm:$0xff] %vm1560, %v1493
      %1576 = vst.msk [vmem:[#allocation3 + $0x78] sm:$0xff] %vm1560, %v1495
      %1577 = vst.msk [vmem:[#allocation3 + $0x80] sm:$0xff] %vm1560, %v1497
      %1578 = vst.msk [vmem:[#allocation3 + $0x88] sm:$0xff] %vm1560, %v1499
      %1579 = vst.msk [vmem:[#allocation3 + $0x90] sm:$0xff] %vm1560, %v1501
      %1580 = vst.msk [vmem:[#allocation3 + $0x98] sm:$0xff] %vm1560, %v1503
      %1581 = vst.msk [vmem:[#allocation3 + $0xa0] sm:$0xff] %vm1560, %v1505
      %1582 = vst.msk [vmem:[#allocation3 + $0xa8] sm:$0xff] %vm1560, %v1507
      %1583 = vst.msk [vmem:[#allocation3 + $0xb0] sm:$0xff] %vm1560, %v1509
      %1584 = vst.msk [vmem:[#allocation3 + $0xb8] sm:$0xff] %vm1560, %v1511
      %1585 = vst.msk [vmem:[#allocation3 + $0xc0] sm:$0xff] %vm1560, %v1513
      %1586 = vst.msk [vmem:[#allocation3 + $0xc8] sm:$0xff] %vm1560, %v1515
      %1587 = vst.msk [vmem:[#allocation3 + $0xd0] sm:$0xff] %vm1560, %v1517
      %1588 = vst.msk [vmem:[#allocation3 + $0xd8] sm:$0xff] %vm1560, %v1519
      %1589 = vst.msk [vmem:[#allocation3 + $0xe0] sm:$0xff] %vm1560, %v1521
      %1590 = vst.msk [vmem:[#allocation3 + $0xe8] sm:$0xff] %vm1560, %v1523
      %1591 = vst.msk [vmem:[#allocation3 + $0xf0] sm:$0xff] %vm1560, %v1525
      %1592 = vst.msk [vmem:[#allocation3 + $0xf8] sm:$0xff] %vm1560, %v1527
      %s1593 = scalar_lea.vmem [#allocation2], 48
      %v1594 = vld [vmem:[%s1593] sm:$0xff]
      %v1595 = vld [vmem:[%s1593 + $0x8] sm:$0xff]
      %v1596 = vld [vmem:[%s1593 + $0x18] sm:$0xff]
      %v1597 = vld [vmem:[%s1593 + $0x20] sm:$0xff]
      %v1598 = vld [vmem:[%s1593 + $0x30] sm:$0xff]
      %v1599 = vld [vmem:[%s1593 + $0x38] sm:$0xff]
      %v1600 = vld [vmem:[%s1593 + $0x48] sm:$0xff]
      %v1601 = vld [vmem:[%s1593 + $0x50] sm:$0xff]
      %v1602 = vld [vmem:[%s1593 + $0x60] sm:$0xff]
      %v1603 = vld [vmem:[%s1593 + $0x68] sm:$0xff]
      %v1604 = vld [vmem:[%s1593 + $0x78] sm:$0xff]
      %v1605 = vld [vmem:[%s1593 + $0x80] sm:$0xff]
      %v1606 = vld [vmem:[%s1593 + $0x90] sm:$0xff]
      %v1607 = vld [vmem:[%s1593 + $0x98] sm:$0xff]
      %v1608 = vld [vmem:[%s1593 + $0xa8] sm:$0xff]
      %v1609 = vld [vmem:[%s1593 + $0xb0] sm:$0xff]
      %v1610 = vld [vmem:[%s1593 + $0xc0] sm:$0xff]
      %v1611 = vld [vmem:[%s1593 + $0xc8] sm:$0xff]
      %v1612 = vld [vmem:[%s1593 + $0xd8] sm:$0xff]
      %v1613 = vld [vmem:[%s1593 + $0xe0] sm:$0xff]
      %v1614 = vld [vmem:[%s1593 + $0xf0] sm:$0xff]
      %v1615 = vld [vmem:[%s1593 + $0xf8] sm:$0xff]
      %v1616 = vld [vmem:[%s1593 + $0x108] sm:$0xff]
      %v1617 = vld [vmem:[%s1593 + $0x110] sm:$0xff]
      %v1618 = vld [vmem:[%s1593 + $0x120] sm:$0xff]
      %v1619 = vld [vmem:[%s1593 + $0x128] sm:$0xff]
      %v1620 = vld [vmem:[%s1593 + $0x138] sm:$0xff]
      %v1621 = vld [vmem:[%s1593 + $0x140] sm:$0xff]
      %v1622 = vld [vmem:[%s1593 + $0x150] sm:$0xff]
      %v1623 = vld [vmem:[%s1593 + $0x158] sm:$0xff]
      %v1624 = vld [vmem:[%s1593 + $0x168] sm:$0xff]
      %v1625 = vld [vmem:[%s1593 + $0x170] sm:$0xff]
      %1658 = vrot.lane.b32.xlu0 %v1594, 48
      %v1659 = vpop.permute.xlu0 %1658
      %1660 = vrot.lane.b32.xlu0 %v1595, 48
      %v1661 = vpop.permute.xlu0 %1660
      %1662 = vrot.lane.b32.xlu0 %v1596, 48
      %v1663 = vpop.permute.xlu0 %1662
      %1664 = vrot.lane.b32.xlu0 %v1597, 48
      %v1665 = vpop.permute.xlu0 %1664
      %1666 = vrot.lane.b32.xlu0 %v1598, 48
      %v1667 = vpop.permute.xlu0 %1666
      %1668 = vrot.lane.b32.xlu0 %v1599, 48
      %v1669 = vpop.permute.xlu0 %1668
      %1670 = vrot.lane.b32.xlu0 %v1600, 48
      %v1671 = vpop.permute.xlu0 %1670
      %1672 = vrot.lane.b32.xlu0 %v1601, 48
      %v1673 = vpop.permute.xlu0 %1672
      %1674 = vrot.lane.b32.xlu0 %v1602, 48
      %v1675 = vpop.permute.xlu0 %1674
      %1676 = vrot.lane.b32.xlu0 %v1603, 48
      %v1677 = vpop.permute.xlu0 %1676
      %1678 = vrot.lane.b32.xlu0 %v1604, 48
      %v1679 = vpop.permute.xlu0 %1678
      %1680 = vrot.lane.b32.xlu0 %v1605, 48
      %v1681 = vpop.permute.xlu0 %1680
      %1682 = vrot.lane.b32.xlu0 %v1606, 48
      %v1683 = vpop.permute.xlu0 %1682
      %1684 = vrot.lane.b32.xlu0 %v1607, 48
      %v1685 = vpop.permute.xlu0 %1684
      %1686 = vrot.lane.b32.xlu0 %v1608, 48
      %v1687 = vpop.permute.xlu0 %1686
      %1688 = vrot.lane.b32.xlu0 %v1609, 48
      %v1689 = vpop.permute.xlu0 %1688
      %1690 = vrot.lane.b32.xlu0 %v1610, 48
      %v1691 = vpop.permute.xlu0 %1690
      %1692 = vrot.lane.b32.xlu0 %v1611, 48
      %v1693 = vpop.permute.xlu0 %1692
      %1694 = vrot.lane.b32.xlu0 %v1612, 48
      %v1695 = vpop.permute.xlu0 %1694
      %1696 = vrot.lane.b32.xlu0 %v1613, 48
      %v1697 = vpop.permute.xlu0 %1696
      %1698 = vrot.lane.b32.xlu0 %v1614, 48
      %v1699 = vpop.permute.xlu0 %1698
      %1700 = vrot.lane.b32.xlu0 %v1615, 48
      %v1701 = vpop.permute.xlu0 %1700
      %1702 = vrot.lane.b32.xlu0 %v1616, 48
      %v1703 = vpop.permute.xlu0 %1702
      %1704 = vrot.lane.b32.xlu0 %v1617, 48
      %v1705 = vpop.permute.xlu0 %1704
      %1706 = vrot.lane.b32.xlu0 %v1618, 48
      %v1707 = vpop.permute.xlu0 %1706
      %1708 = vrot.lane.b32.xlu0 %v1619, 48
      %v1709 = vpop.permute.xlu0 %1708
      %1710 = vrot.lane.b32.xlu0 %v1620, 48
      %v1711 = vpop.permute.xlu0 %1710
      %1712 = vrot.lane.b32.xlu0 %v1621, 48
      %v1713 = vpop.permute.xlu0 %1712
      %1714 = vrot.lane.b32.xlu0 %v1622, 48
      %v1715 = vpop.permute.xlu0 %1714
      %1716 = vrot.lane.b32.xlu0 %v1623, 48
      %v1717 = vpop.permute.xlu0 %1716
      %1718 = vrot.lane.b32.xlu0 %v1624, 48
      %v1719 = vpop.permute.xlu0 %1718
      %1720 = vrot.lane.b32.xlu0 %v1625, 48
      %v1721 = vpop.permute.xlu0 %1720
      %vm1754 = vcmask 458112
      %1755 = vst.msk [vmem:[#allocation3] sm:$0xff] %vm1754, %v1659
      %1756 = vst.msk [vmem:[#allocation3 + $0x8] sm:$0xff] %vm1754, %v1661
      %1757 = vst.msk [vmem:[#allocation3 + $0x10] sm:$0xff] %vm1754, %v1663
      %1758 = vst.msk [vmem:[#allocation3 + $0x18] sm:$0xff] %vm1754, %v1665
      %1759 = vst.msk [vmem:[#allocation3 + $0x20] sm:$0xff] %vm1754, %v1667
      %1760 = vst.msk [vmem:[#allocation3 + $0x28] sm:$0xff] %vm1754, %v1669
      %1761 = vst.msk [vmem:[#allocation3 + $0x30] sm:$0xff] %vm1754, %v1671
      %1762 = vst.msk [vmem:[#allocation3 + $0x38] sm:$0xff] %vm1754, %v1673
      %1763 = vst.msk [vmem:[#allocation3 + $0x40] sm:$0xff] %vm1754, %v1675
      %1764 = vst.msk [vmem:[#allocation3 + $0x48] sm:$0xff] %vm1754, %v1677
      %1765 = vst.msk [vmem:[#allocation3 + $0x50] sm:$0xff] %vm1754, %v1679
      %1766 = vst.msk [vmem:[#allocation3 + $0x58] sm:$0xff] %vm1754, %v1681
      %1767 = vst.msk [vmem:[#allocation3 + $0x60] sm:$0xff] %vm1754, %v1683
      %1768 = vst.msk [vmem:[#allocation3 + $0x68] sm:$0xff] %vm1754, %v1685
      %1769 = vst.msk [vmem:[#allocation3 + $0x70] sm:$0xff] %vm1754, %v1687
      %1770 = vst.msk [vmem:[#allocation3 + $0x78] sm:$0xff] %vm1754, %v1689
      %1771 = vst.msk [vmem:[#allocation3 + $0x80] sm:$0xff] %vm1754, %v1691
      %1772 = vst.msk [vmem:[#allocation3 + $0x88] sm:$0xff] %vm1754, %v1693
      %1773 = vst.msk [vmem:[#allocation3 + $0x90] sm:$0xff] %vm1754, %v1695
      %1774 = vst.msk [vmem:[#allocation3 + $0x98] sm:$0xff] %vm1754, %v1697
      %1775 = vst.msk [vmem:[#allocation3 + $0xa0] sm:$0xff] %vm1754, %v1699
      %1776 = vst.msk [vmem:[#allocation3 + $0xa8] sm:$0xff] %vm1754, %v1701
      %1777 = vst.msk [vmem:[#allocation3 + $0xb0] sm:$0xff] %vm1754, %v1703
      %1778 = vst.msk [vmem:[#allocation3 + $0xb8] sm:$0xff] %vm1754, %v1705
      %1779 = vst.msk [vmem:[#allocation3 + $0xc0] sm:$0xff] %vm1754, %v1707
      %1780 = vst.msk [vmem:[#allocation3 + $0xc8] sm:$0xff] %vm1754, %v1709
      %1781 = vst.msk [vmem:[#allocation3 + $0xd0] sm:$0xff] %vm1754, %v1711
      %1782 = vst.msk [vmem:[#allocation3 + $0xd8] sm:$0xff] %vm1754, %v1713
      %1783 = vst.msk [vmem:[#allocation3 + $0xe0] sm:$0xff] %vm1754, %v1715
      %1784 = vst.msk [vmem:[#allocation3 + $0xe8] sm:$0xff] %vm1754, %v1717
      %1785 = vst.msk [vmem:[#allocation3 + $0xf0] sm:$0xff] %vm1754, %v1719
      %1786 = vst.msk [vmem:[#allocation3 + $0xf8] sm:$0xff] %vm1754, %v1721
      %v1787 = vld [vmem:[%s1593 + $0x1] sm:$0xff]
      %v1788 = vld [vmem:[%s1593 + $0x9] sm:$0xff]
      %v1789 = vld [vmem:[%s1593 + $0x19] sm:$0xff]
      %v1790 = vld [vmem:[%s1593 + $0x21] sm:$0xff]
      %v1791 = vld [vmem:[%s1593 + $0x31] sm:$0xff]
      %v1792 = vld [vmem:[%s1593 + $0x39] sm:$0xff]
      %v1793 = vld [vmem:[%s1593 + $0x49] sm:$0xff]
      %v1794 = vld [vmem:[%s1593 + $0x51] sm:$0xff]
      %v1795 = vld [vmem:[%s1593 + $0x61] sm:$0xff]
      %v1796 = vld [vmem:[%s1593 + $0x69] sm:$0xff]
      %v1797 = vld [vmem:[%s1593 + $0x79] sm:$0xff]
      %v1798 = vld [vmem:[%s1593 + $0x81] sm:$0xff]
      %v1799 = vld [vmem:[%s1593 + $0x91] sm:$0xff]
      %v1800 = vld [vmem:[%s1593 + $0x99] sm:$0xff]
      %v1801 = vld [vmem:[%s1593 + $0xa9] sm:$0xff]
      %v1802 = vld [vmem:[%s1593 + $0xb1] sm:$0xff]
      %v1803 = vld [vmem:[%s1593 + $0xc1] sm:$0xff]
      %v1804 = vld [vmem:[%s1593 + $0xc9] sm:$0xff]
      %v1805 = vld [vmem:[%s1593 + $0xd9] sm:$0xff]
      %v1806 = vld [vmem:[%s1593 + $0xe1] sm:$0xff]
      %v1807 = vld [vmem:[%s1593 + $0xf1] sm:$0xff]
      %v1808 = vld [vmem:[%s1593 + $0xf9] sm:$0xff]
      %v1809 = vld [vmem:[%s1593 + $0x109] sm:$0xff]
      %v1810 = vld [vmem:[%s1593 + $0x111] sm:$0xff]
      %v1811 = vld [vmem:[%s1593 + $0x121] sm:$0xff]
      %v1812 = vld [vmem:[%s1593 + $0x129] sm:$0xff]
      %v1813 = vld [vmem:[%s1593 + $0x139] sm:$0xff]
      %v1814 = vld [vmem:[%s1593 + $0x141] sm:$0xff]
      %v1815 = vld [vmem:[%s1593 + $0x151] sm:$0xff]
      %v1816 = vld [vmem:[%s1593 + $0x159] sm:$0xff]
      %v1817 = vld [vmem:[%s1593 + $0x169] sm:$0xff]
      %v1818 = vld [vmem:[%s1593 + $0x171] sm:$0xff]
      %1851 = vrot.lane.b32.xlu0 %v1787, 56
      %v1852 = vpop.permute.xlu0 %1851
      %1853 = vrot.lane.b32.xlu0 %v1788, 56
      %v1854 = vpop.permute.xlu0 %1853
      %1855 = vrot.lane.b32.xlu0 %v1789, 56
      %v1856 = vpop.permute.xlu0 %1855
      %1857 = vrot.lane.b32.xlu0 %v1790, 56
      %v1858 = vpop.permute.xlu0 %1857
      %1859 = vrot.lane.b32.xlu0 %v1791, 56
      %v1860 = vpop.permute.xlu0 %1859
      %1861 = vrot.lane.b32.xlu0 %v1792, 56
      %v1862 = vpop.permute.xlu0 %1861
      %1863 = vrot.lane.b32.xlu0 %v1793, 56
      %v1864 = vpop.permute.xlu0 %1863
      %1865 = vrot.lane.b32.xlu0 %v1794, 56
      %v1866 = vpop.permute.xlu0 %1865
      %1867 = vrot.lane.b32.xlu0 %v1795, 56
      %v1868 = vpop.permute.xlu0 %1867
      %1869 = vrot.lane.b32.xlu0 %v1796, 56
      %v1870 = vpop.permute.xlu0 %1869
      %1871 = vrot.lane.b32.xlu0 %v1797, 56
      %v1872 = vpop.permute.xlu0 %1871
      %1873 = vrot.lane.b32.xlu0 %v1798, 56
      %v1874 = vpop.permute.xlu0 %1873
      %1875 = vrot.lane.b32.xlu0 %v1799, 56
      %v1876 = vpop.permute.xlu0 %1875
      %1877 = vrot.lane.b32.xlu0 %v1800, 56
      %v1878 = vpop.permute.xlu0 %1877
      %1879 = vrot.lane.b32.xlu0 %v1801, 56
      %v1880 = vpop.permute.xlu0 %1879
      %1881 = vrot.lane.b32.xlu0 %v1802, 56
      %v1882 = vpop.permute.xlu0 %1881
      %1883 = vrot.lane.b32.xlu0 %v1803, 56
      %v1884 = vpop.permute.xlu0 %1883
      %1885 = vrot.lane.b32.xlu0 %v1804, 56
      %v1886 = vpop.permute.xlu0 %1885
      %1887 = vrot.lane.b32.xlu0 %v1805, 56
      %v1888 = vpop.permute.xlu0 %1887
      %1889 = vrot.lane.b32.xlu0 %v1806, 56
      %v1890 = vpop.permute.xlu0 %1889
      %1891 = vrot.lane.b32.xlu0 %v1807, 56
      %v1892 = vpop.permute.xlu0 %1891
      %1893 = vrot.lane.b32.xlu0 %v1808, 56
      %v1894 = vpop.permute.xlu0 %1893
      %1895 = vrot.lane.b32.xlu0 %v1809, 56
      %v1896 = vpop.permute.xlu0 %1895
      %1897 = vrot.lane.b32.xlu0 %v1810, 56
      %v1898 = vpop.permute.xlu0 %1897
      %1899 = vrot.lane.b32.xlu0 %v1811, 56
      %v1900 = vpop.permute.xlu0 %1899
      %1901 = vrot.lane.b32.xlu0 %v1812, 56
      %v1902 = vpop.permute.xlu0 %1901
      %1903 = vrot.lane.b32.xlu0 %v1813, 56
      %v1904 = vpop.permute.xlu0 %1903
      %1905 = vrot.lane.b32.xlu0 %v1814, 56
      %v1906 = vpop.permute.xlu0 %1905
      %1907 = vrot.lane.b32.xlu0 %v1815, 56
      %v1908 = vpop.permute.xlu0 %1907
      %1909 = vrot.lane.b32.xlu0 %v1816, 56
      %v1910 = vpop.permute.xlu0 %1909
      %1911 = vrot.lane.b32.xlu0 %v1817, 56
      %v1912 = vpop.permute.xlu0 %1911
      %1913 = vrot.lane.b32.xlu0 %v1818, 56
      %v1914 = vpop.permute.xlu0 %1913
      %vm1947 = vcmask 523712
      %1948 = vst.msk [vmem:[#allocation3] sm:$0xff] %vm1947, %v1852
      %1949 = vst.msk [vmem:[#allocation3 + $0x8] sm:$0xff] %vm1947, %v1854
      %1950 = vst.msk [vmem:[#allocation3 + $0x10] sm:$0xff] %vm1947, %v1856
      %1951 = vst.msk [vmem:[#allocation3 + $0x18] sm:$0xff] %vm1947, %v1858
      %1952 = vst.msk [vmem:[#allocation3 + $0x20] sm:$0xff] %vm1947, %v1860
      %1953 = vst.msk [vmem:[#allocation3 + $0x28] sm:$0xff] %vm1947, %v1862
      %1954 = vst.msk [vmem:[#allocation3 + $0x30] sm:$0xff] %vm1947, %v1864
      %1955 = vst.msk [vmem:[#allocation3 + $0x38] sm:$0xff] %vm1947, %v1866
      %1956 = vst.msk [vmem:[#allocation3 + $0x40] sm:$0xff] %vm1947, %v1868
      %1957 = vst.msk [vmem:[#allocation3 + $0x48] sm:$0xff] %vm1947, %v1870
      %1958 = vst.msk [vmem:[#allocation3 + $0x50] sm:$0xff] %vm1947, %v1872
      %1959 = vst.msk [vmem:[#allocation3 + $0x58] sm:$0xff] %vm1947, %v1874
      %1960 = vst.msk [vmem:[#allocation3 + $0x60] sm:$0xff] %vm1947, %v1876
      %1961 = vst.msk [vmem:[#allocation3 + $0x68] sm:$0xff] %vm1947, %v1878
      %1962 = vst.msk [vmem:[#allocation3 + $0x70] sm:$0xff] %vm1947, %v1880
      %1963 = vst.msk [vmem:[#allocation3 + $0x78] sm:$0xff] %vm1947, %v1882
      %1964 = vst.msk [vmem:[#allocation3 + $0x80] sm:$0xff] %vm1947, %v1884
      %1965 = vst.msk [vmem:[#allocation3 + $0x88] sm:$0xff] %vm1947, %v1886
      %1966 = vst.msk [vmem:[#allocation3 + $0x90] sm:$0xff] %vm1947, %v1888
      %1967 = vst.msk [vmem:[#allocation3 + $0x98] sm:$0xff] %vm1947, %v1890
      %1968 = vst.msk [vmem:[#allocation3 + $0xa0] sm:$0xff] %vm1947, %v1892
      %1969 = vst.msk [vmem:[#allocation3 + $0xa8] sm:$0xff] %vm1947, %v1894
      %1970 = vst.msk [vmem:[#allocation3 + $0xb0] sm:$0xff] %vm1947, %v1896
      %1971 = vst.msk [vmem:[#allocation3 + $0xb8] sm:$0xff] %vm1947, %v1898
      %1972 = vst.msk [vmem:[#allocation3 + $0xc0] sm:$0xff] %vm1947, %v1900
      %1973 = vst.msk [vmem:[#allocation3 + $0xc8] sm:$0xff] %vm1947, %v1902
      %1974 = vst.msk [vmem:[#allocation3 + $0xd0] sm:$0xff] %vm1947, %v1904
      %1975 = vst.msk [vmem:[#allocation3 + $0xd8] sm:$0xff] %vm1947, %v1906
      %1976 = vst.msk [vmem:[#allocation3 + $0xe0] sm:$0xff] %vm1947, %v1908
      %1977 = vst.msk [vmem:[#allocation3 + $0xe8] sm:$0xff] %vm1947, %v1910
      %1978 = vst.msk [vmem:[#allocation3 + $0xf0] sm:$0xff] %vm1947, %v1912
      %1979 = vst.msk [vmem:[#allocation3 + $0xf8] sm:$0xff] %vm1947, %v1914
      %v1980 = vld [vmem:[%s1593 + $0x2] sm:$0xff]
      %v1981 = vld [vmem:[%s1593 + $0xa] sm:$0xff]
      %v1982 = vld [vmem:[%s1593 + $0x1a] sm:$0xff]
      %v1983 = vld [vmem:[%s1593 + $0x22] sm:$0xff]
      %v1984 = vld [vmem:[%s1593 + $0x32] sm:$0xff]
      %v1985 = vld [vmem:[%s1593 + $0x3a] sm:$0xff]
      %v1986 = vld [vmem:[%s1593 + $0x4a] sm:$0xff]
      %v1987 = vld [vmem:[%s1593 + $0x52] sm:$0xff]
      %v1988 = vld [vmem:[%s1593 + $0x62] sm:$0xff]
      %v1989 = vld [vmem:[%s1593 + $0x6a] sm:$0xff]
      %v1990 = vld [vmem:[%s1593 + $0x7a] sm:$0xff]
      %v1991 = vld [vmem:[%s1593 + $0x82] sm:$0xff]
      %v1992 = vld [vmem:[%s1593 + $0x92] sm:$0xff]
      %v1993 = vld [vmem:[%s1593 + $0x9a] sm:$0xff]
      %v1994 = vld [vmem:[%s1593 + $0xaa] sm:$0xff]
      %v1995 = vld [vmem:[%s1593 + $0xb2] sm:$0xff]
      %v1996 = vld [vmem:[%s1593 + $0xc2] sm:$0xff]
      %v1997 = vld [vmem:[%s1593 + $0xca] sm:$0xff]
      %v1998 = vld [vmem:[%s1593 + $0xda] sm:$0xff]
      %v1999 = vld [vmem:[%s1593 + $0xe2] sm:$0xff]
      %v2000 = vld [vmem:[%s1593 + $0xf2] sm:$0xff]
      %v2001 = vld [vmem:[%s1593 + $0xfa] sm:$0xff]
      %v2002 = vld [vmem:[%s1593 + $0x10a] sm:$0xff]
      %v2003 = vld [vmem:[%s1593 + $0x112] sm:$0xff]
      %v2004 = vld [vmem:[%s1593 + $0x122] sm:$0xff]
      %v2005 = vld [vmem:[%s1593 + $0x12a] sm:$0xff]
      %v2006 = vld [vmem:[%s1593 + $0x13a] sm:$0xff]
      %v2007 = vld [vmem:[%s1593 + $0x142] sm:$0xff]
      %v2008 = vld [vmem:[%s1593 + $0x152] sm:$0xff]
      %v2009 = vld [vmem:[%s1593 + $0x15a] sm:$0xff]
      %v2010 = vld [vmem:[%s1593 + $0x16a] sm:$0xff]
      %v2011 = vld [vmem:[%s1593 + $0x172] sm:$0xff]
      %2044 = vrot.lane.b32.xlu0 %v1980, 64
      %v2045 = vpop.permute.xlu0 %2044
      %2046 = vrot.lane.b32.xlu0 %v1981, 64
      %v2047 = vpop.permute.xlu0 %2046
      %2048 = vrot.lane.b32.xlu0 %v1982, 64
      %v2049 = vpop.permute.xlu0 %2048
      %2050 = vrot.lane.b32.xlu0 %v1983, 64
      %v2051 = vpop.permute.xlu0 %2050
      %2052 = vrot.lane.b32.xlu0 %v1984, 64
      %v2053 = vpop.permute.xlu0 %2052
      %2054 = vrot.lane.b32.xlu0 %v1985, 64
      %v2055 = vpop.permute.xlu0 %2054
      %2056 = vrot.lane.b32.xlu0 %v1986, 64
      %v2057 = vpop.permute.xlu0 %2056
      %2058 = vrot.lane.b32.xlu0 %v1987, 64
      %v2059 = vpop.permute.xlu0 %2058
      %2060 = vrot.lane.b32.xlu0 %v1988, 64
      %v2061 = vpop.permute.xlu0 %2060
      %2062 = vrot.lane.b32.xlu0 %v1989, 64
      %v2063 = vpop.permute.xlu0 %2062
      %2064 = vrot.lane.b32.xlu0 %v1990, 64
      %v2065 = vpop.permute.xlu0 %2064
      %2066 = vrot.lane.b32.xlu0 %v1991, 64
      %v2067 = vpop.permute.xlu0 %2066
      %2068 = vrot.lane.b32.xlu0 %v1992, 64
      %v2069 = vpop.permute.xlu0 %2068
      %2070 = vrot.lane.b32.xlu0 %v1993, 64
      %v2071 = vpop.permute.xlu0 %2070
      %2072 = vrot.lane.b32.xlu0 %v1994, 64
      %v2073 = vpop.permute.xlu0 %2072
      %2074 = vrot.lane.b32.xlu0 %v1995, 64
      %v2075 = vpop.permute.xlu0 %2074
      %2076 = vrot.lane.b32.xlu0 %v1996, 64
      %v2077 = vpop.permute.xlu0 %2076
      %2078 = vrot.lane.b32.xlu0 %v1997, 64
      %v2079 = vpop.permute.xlu0 %2078
      %2080 = vrot.lane.b32.xlu0 %v1998, 64
      %v2081 = vpop.permute.xlu0 %2080
      %2082 = vrot.lane.b32.xlu0 %v1999, 64
      %v2083 = vpop.permute.xlu0 %2082
      %2084 = vrot.lane.b32.xlu0 %v2000, 64
      %v2085 = vpop.permute.xlu0 %2084
      %2086 = vrot.lane.b32.xlu0 %v2001, 64
      %v2087 = vpop.permute.xlu0 %2086
      %2088 = vrot.lane.b32.xlu0 %v2002, 64
      %v2089 = vpop.permute.xlu0 %2088
      %2090 = vrot.lane.b32.xlu0 %v2003, 64
      %v2091 = vpop.permute.xlu0 %2090
      %2092 = vrot.lane.b32.xlu0 %v2004, 64
      %v2093 = vpop.permute.xlu0 %2092
      %2094 = vrot.lane.b32.xlu0 %v2005, 64
      %v2095 = vpop.permute.xlu0 %2094
      %2096 = vrot.lane.b32.xlu0 %v2006, 64
      %v2097 = vpop.permute.xlu0 %2096
      %2098 = vrot.lane.b32.xlu0 %v2007, 64
      %v2099 = vpop.permute.xlu0 %2098
      %2100 = vrot.lane.b32.xlu0 %v2008, 64
      %v2101 = vpop.permute.xlu0 %2100
      %2102 = vrot.lane.b32.xlu0 %v2009, 64
      %v2103 = vpop.permute.xlu0 %2102
      %2104 = vrot.lane.b32.xlu0 %v2010, 64
      %v2105 = vpop.permute.xlu0 %2104
      %2106 = vrot.lane.b32.xlu0 %v2011, 64
      %v2107 = vpop.permute.xlu0 %2106
      %vm2140 = vcmask 589312
      %2141 = vst.msk [vmem:[#allocation3] sm:$0xff] %vm2140, %v2045
      %2142 = vst.msk [vmem:[#allocation3 + $0x8] sm:$0xff] %vm2140, %v2047
      %2143 = vst.msk [vmem:[#allocation3 + $0x10] sm:$0xff] %vm2140, %v2049
      %2144 = vst.msk [vmem:[#allocation3 + $0x18] sm:$0xff] %vm2140, %v2051
      %2145 = vst.msk [vmem:[#allocation3 + $0x20] sm:$0xff] %vm2140, %v2053
      %2146 = vst.msk [vmem:[#allocation3 + $0x28] sm:$0xff] %vm2140, %v2055
      %2147 = vst.msk [vmem:[#allocation3 + $0x30] sm:$0xff] %vm2140, %v2057
      %2148 = vst.msk [vmem:[#allocation3 + $0x38] sm:$0xff] %vm2140, %v2059
      %2149 = vst.msk [vmem:[#allocation3 + $0x40] sm:$0xff] %vm2140, %v2061
      %2150 = vst.msk [vmem:[#allocation3 + $0x48] sm:$0xff] %vm2140, %v2063
      %2151 = vst.msk [vmem:[#allocation3 + $0x50] sm:$0xff] %vm2140, %v2065
      %2152 = vst.msk [vmem:[#allocation3 + $0x58] sm:$0xff] %vm2140, %v2067
      %2153 = vst.msk [vmem:[#allocation3 + $0x60] sm:$0xff] %vm2140, %v2069
      %2154 = vst.msk [vmem:[#allocation3 + $0x68] sm:$0xff] %vm2140, %v2071
      %2155 = vst.msk [vmem:[#allocation3 + $0x70] sm:$0xff] %vm2140, %v2073
      %2156 = vst.msk [vmem:[#allocation3 + $0x78] sm:$0xff] %vm2140, %v2075
      %2157 = vst.msk [vmem:[#allocation3 + $0x80] sm:$0xff] %vm2140, %v2077
      %2158 = vst.msk [vmem:[#allocation3 + $0x88] sm:$0xff] %vm2140, %v2079
      %2159 = vst.msk [vmem:[#allocation3 + $0x90] sm:$0xff] %vm2140, %v2081
      %2160 = vst.msk [vmem:[#allocation3 + $0x98] sm:$0xff] %vm2140, %v2083
      %2161 = vst.msk [vmem:[#allocation3 + $0xa0] sm:$0xff] %vm2140, %v2085
      %2162 = vst.msk [vmem:[#allocation3 + $0xa8] sm:$0xff] %vm2140, %v2087
      %2163 = vst.msk [vmem:[#allocation3 + $0xb0] sm:$0xff] %vm2140, %v2089
      %2164 = vst.msk [vmem:[#allocation3 + $0xb8] sm:$0xff] %vm2140, %v2091
      %2165 = vst.msk [vmem:[#allocation3 + $0xc0] sm:$0xff] %vm2140, %v2093
      %2166 = vst.msk [vmem:[#allocation3 + $0xc8] sm:$0xff] %vm2140, %v2095
      %2167 = vst.msk [vmem:[#allocation3 + $0xd0] sm:$0xff] %vm2140, %v2097
      %2168 = vst.msk [vmem:[#allocation3 + $0xd8] sm:$0xff] %vm2140, %v2099
      %2169 = vst.msk [vmem:[#allocation3 + $0xe0] sm:$0xff] %vm2140, %v2101
      %2170 = vst.msk [vmem:[#allocation3 + $0xe8] sm:$0xff] %vm2140, %v2103
      %2171 = vst.msk [vmem:[#allocation3 + $0xf0] sm:$0xff] %vm2140, %v2105
      %2172 = vst.msk [vmem:[#allocation3 + $0xf8] sm:$0xff] %vm2140, %v2107
      %v2173 = vld [vmem:[#allocation3] sm:$0xff]
      %v2174 = vld [vmem:[#allocation3 + $0x8] sm:$0xff]
      %v2175 = vld [vmem:[#allocation3 + $0x10] sm:$0xff]
      %v2176 = vld [vmem:[#allocation3 + $0x18] sm:$0xff]
      %v2177 = vld [vmem:[#allocation3 + $0x20] sm:$0xff]
      %v2178 = vld [vmem:[#allocation3 + $0x28] sm:$0xff]
      %v2179 = vld [vmem:[#allocation3 + $0x30] sm:$0xff]
      %v2180 = vld [vmem:[#allocation3 + $0x38] sm:$0xff]
      %v2181 = vld [vmem:[#allocation3 + $0x40] sm:$0xff]
      %v2182 = vld [vmem:[#allocation3 + $0x48] sm:$0xff]
      %v2183 = vld [vmem:[#allocation3 + $0x50] sm:$0xff]
      %v2184 = vld [vmem:[#allocation3 + $0x58] sm:$0xff]
      %v2185 = vld [vmem:[#allocation3 + $0x60] sm:$0xff]
      %v2186 = vld [vmem:[#allocation3 + $0x68] sm:$0xff]
      %v2187 = vld [vmem:[#allocation3 + $0x70] sm:$0xff]
      %v2188 = vld [vmem:[#allocation3 + $0x78] sm:$0xff]
      %v2189 = vld [vmem:[#allocation3 + $0x80] sm:$0xff]
      %v2190 = vld [vmem:[#allocation3 + $0x88] sm:$0xff]
      %v2191 = vld [vmem:[#allocation3 + $0x90] sm:$0xff]
      %v2192 = vld [vmem:[#allocation3 + $0x98] sm:$0xff]
      %v2193 = vld [vmem:[#allocation3 + $0xa0] sm:$0xff]
      %v2194 = vld [vmem:[#allocation3 + $0xa8] sm:$0xff]
      %v2195 = vld [vmem:[#allocation3 + $0xb0] sm:$0xff]
      %v2196 = vld [vmem:[#allocation3 + $0xb8] sm:$0xff]
      %v2197 = vld [vmem:[#allocation3 + $0xc0] sm:$0xff]
      %v2198 = vld [vmem:[#allocation3 + $0xc8] sm:$0xff]
      %v2199 = vld [vmem:[#allocation3 + $0xd0] sm:$0xff]
      %v2200 = vld [vmem:[#allocation3 + $0xd8] sm:$0xff]
      %v2201 = vld [vmem:[#allocation3 + $0xe0] sm:$0xff]
      %v2202 = vld [vmem:[#allocation3 + $0xe8] sm:$0xff]
      %v2203 = vld [vmem:[#allocation3 + $0xf0] sm:$0xff]
      %v2204 = vld [vmem:[#allocation3 + $0xf8] sm:$0xff]
      %v2205 = vld [vmem:[%s3] sm:$0xff]
      %v2206 = vld [vmem:[%s3 + $0x8] sm:$0xff]
      %v2207 = vld [vmem:[%s3 + $0x10] sm:$0xff]
      %v2208 = vld [vmem:[%s3 + $0x18] sm:$0xff]
      %v2209 = vld [vmem:[%s3 + $0x20] sm:$0xff]
      %v2210 = vld [vmem:[%s3 + $0x28] sm:$0xff]
      %v2211 = vld [vmem:[%s3 + $0x30] sm:$0xff]
      %v2212 = vld [vmem:[%s3 + $0x38] sm:$0xff]
      %v2213 = vld [vmem:[%s3 + $0x40] sm:$0xff]
      %vm2214 = vcmask 588800
      %v2216 = vsel %vm2214, %v2173, 0
      %v2219 = vsel %vm2214, %v2174, 0
      %v2222 = vsel %vm2214, %v2175, 0
      %v2225 = vsel %vm2214, %v2176, 0
      %v2228 = vsel %vm2214, %v2177, 0
      %v2231 = vsel %vm2214, %v2178, 0
      %v2234 = vsel %vm2214, %v2179, 0
      %v2237 = vsel %vm2214, %v2180, 0
      %v2240 = vsel %vm2214, %v2181, 0
      %v2243 = vsel %vm2214, %v2182, 0
      %v2246 = vsel %vm2214, %v2183, 0
      %v2249 = vsel %vm2214, %v2184, 0
      %v2252 = vsel %vm2214, %v2185, 0
      %v2255 = vsel %vm2214, %v2186, 0
      %v2258 = vsel %vm2214, %v2187, 0
      %v2261 = vsel %vm2214, %v2188, 0
      %v2264 = vsel %vm2214, %v2189, 0
      %v2267 = vsel %vm2214, %v2190, 0
      %v2270 = vsel %vm2214, %v2191, 0
      %v2273 = vsel %vm2214, %v2192, 0
      %v2276 = vsel %vm2214, %v2193, 0
      %v2279 = vsel %vm2214, %v2194, 0
      %v2282 = vsel %vm2214, %v2195, 0
      %v2285 = vsel %vm2214, %v2196, 0
      %v2288 = vsel %vm2214, %v2197, 0
      %v2291 = vsel %vm2214, %v2198, 0
      %v2294 = vsel %vm2214, %v2199, 0
      %v2297 = vsel %vm2214, %v2200, 0
      %v2300 = vsel %vm2214, %v2201, 0
      %v2303 = vsel %vm2214, %v2202, 0
      %v2306 = vsel %vm2214, %v2203, 0
      %v2309 = vsel %vm2214, %v2204, 0
      %2311 = vmatprep.subr.mxu0 0.0
      %2312 = vmatpush1.msra.mxu0 %v2205
      %2313 = vmatprep.subr.mxu0 0.0
      %2314 = vmatpush1.msra.mxu0 %v2206
      %2315 = vmatprep.subr.mxu0 0.0
      %2316 = vmatpush1.msra.mxu0 %v2207
      %2317 = vmatprep.subr.mxu0 0.0
      %2318 = vmatpush1.msra.mxu0 %v2208
      %2319 = vmatprep.subr.mxu0 0.0
      %2320 = vmatpush1.msra.mxu0 %v2209
      %2321 = vmatprep.subr.mxu0 0.0
      %2322 = vmatpush1.msra.mxu0 %v2210
      %2323 = vmatprep.subr.mxu0 0.0
      %2324 = vmatpush1.msra.mxu0 %v2211
      %2325 = vmatprep.subr.mxu0 0.0
      %2326 = vmatpush1.msra.mxu0 %v2212
      %2327 = vmatprep.subr.mxu0 0.0
      %2328 = vmatpush1.msra.mxu0 %v2213
      %2329 = vmatprep.subr.mxu0 0.0
      %2330 = vmatpush1.msra.mxu0 0.0
      %2331 = vmatprep.subr.mxu0 0.0
      %2332 = vmatpush1.msra.mxu0 0.0
      %2333 = vmatprep.subr.mxu0 0.0
      %2334 = vmatpush1.msra.mxu0 0.0
      %2335 = vmatprep.subr.mxu0 0.0
      %2336 = vmatpush1.msra.mxu0 0.0
      %2337 = vmatprep.subr.mxu0 0.0
      %2338 = vmatpush1.msra.mxu0 0.0
      %2339 = vmatprep.subr.mxu0 0.0
      %2340 = vmatpush1.msra.mxu0 0.0
      %2341 = vmatprep.subr.mxu0 0.0
      %2342 = vmatpush1.msra.mxu0 0.0
      %2343 = vmatprep.subr.mxu0 0.0
      %2344 = vmatpush1.msra.mxu0 0.0
      %2345 = vmatprep.subr.mxu0 0.0
      %2346 = vmatpush1.msra.mxu0 0.0
      %2347 = vmatprep.subr.mxu0 0.0
      %2348 = vmatpush1.msra.mxu0 0.0
      %2349 = vmatprep.subr.mxu0 0.0
      %2350 = vmatpush1.msra.mxu0 0.0
      %2351 = vmatprep.subr.mxu0 0.0
      %2352 = vmatpush1.msra.mxu0 0.0
      %2353 = vmatprep.subr.mxu0 0.0
      %2354 = vmatpush1.msra.mxu0 0.0
      %2355 = vmatprep.subr.mxu0 0.0
      %2356 = vmatpush1.msra.mxu0 0.0
      %2357 = vmatprep.subr.mxu0 0.0
      %2358 = vmatpush1.msra.mxu0 0.0
      %2359 = vmatprep.subr.mxu0 0.0
      %2360 = vmatpush1.msra.mxu0 0.0
      %2361 = vmatprep.subr.mxu0 0.0
      %2362 = vmatpush1.msra.mxu0 0.0
      %2363 = vmatprep.subr.mxu0 0.0
      %2364 = vmatpush1.msra.mxu0 0.0
      %2365 = vmatprep.subr.mxu0 0.0
      %2366 = vmatpush1.msra.mxu0 0.0
      %2367 = vmatprep.subr.mxu0 0.0
      %2368 = vmatpush1.msra.mxu0 0.0
      %2369 = vmatprep.subr.mxu0 0.0
      %2370 = vmatpush1.msra.mxu0 0.0
      %2371 = vmatprep.subr.mxu0 0.0
      %2372 = vmatpush1.msra.mxu0 0.0
      %2373 = vmatprep.subr.mxu0 0.0
      %2374 = vmatpush1.msra.mxu0 0.0
      %2375 = vmatprep.mubr.f32.mxu0 0.0
      %2376 = vmatmul.mubr.f32.gmra.mrb[0].mxu0 %v2216
      %v2377 = vpop.f32.mrb[0].mxu0
      %v2378 = vadd.f32 0.0, %v2377
      %v2379 = vpop.f32.mrb[0].mxu0
      %2380 = vmatprep.mubr.f32.mxu0 0.0
      %2381 = vmatmul.mubr.f32.gmra.mrb[0].mxu0 %v2219
      %v2382 = vpop.f32.mrb[0].mxu0
      %v2383 = vadd.f32 0.0, %v2382
      %v2384 = vpop.f32.mrb[0].mxu0
      %2385 = vmatprep.mubr.f32.mxu0 0.0
      %2386 = vmatmul.mubr.f32.gmra.mrb[0].mxu0 %v2222
      %v2387 = vpop.f32.mrb[0].mxu0
      %v2388 = vadd.f32 0.0, %v2387
      %v2389 = vpop.f32.mrb[0].mxu0
      %2390 = vmatprep.mubr.f32.mxu0 0.0
      %2391 = vmatmul.mubr.f32.gmra.mrb[0].mxu0 %v2225
      %v2392 = vpop.f32.mrb[0].mxu0
      %v2393 = vadd.f32 0.0, %v2392
      %v2394 = vpop.f32.mrb[0].mxu0
      %2395 = vmatprep.mubr.f32.mxu0 0.0
      %2396 = vmatmul.mubr.f32.gmra.mrb[0].mxu0 %v2228
      %v2397 = vpop.f32.mrb[0].mxu0
      %v2398 = vadd.f32 0.0, %v2397
      %v2399 = vpop.f32.mrb[0].mxu0
      %2400 = vmatprep.mubr.f32.mxu0 0.0
      %2401 = vmatmul.mubr.f32.gmra.mrb[0].mxu0 %v2231
      %v2402 = vpop.f32.mrb[0].mxu0
      %v2403 = vadd.f32 0.0, %v2402
      %v2404 = vpop.f32.mrb[0].mxu0
      %2405 = vmatprep.mubr.f32.mxu0 0.0
      %2406 = vmatmul.mubr.f32.gmra.mrb[0].mxu0 %v2234
      %v2407 = vpop.f32.mrb[0].mxu0
      %v2408 = vadd.f32 0.0, %v2407
      %v2409 = vpop.f32.mrb[0].mxu0
      %2410 = vmatprep.mubr.f32.mxu0 0.0
      %2411 = vmatmul.mubr.f32.gmra.mrb[0].mxu0 %v2237
      %v2412 = vpop.f32.mrb[0].mxu0
      %v2413 = vadd.f32 0.0, %v2412
      %v2414 = vpop.f32.mrb[0].mxu0
      %2415 = vmatprep.mubr.f32.mxu0 0.0
      %2416 = vmatmul.mubr.f32.gmra.mrb[0].mxu0 %v2240
      %v2417 = vpop.f32.mrb[0].mxu0
      %v2418 = vadd.f32 0.0, %v2417
      %v2419 = vpop.f32.mrb[0].mxu0
      %2420 = vmatprep.mubr.f32.mxu0 0.0
      %2421 = vmatmul.mubr.f32.gmra.mrb[0].mxu0 %v2243
      %v2422 = vpop.f32.mrb[0].mxu0
      %v2423 = vadd.f32 0.0, %v2422
      %v2424 = vpop.f32.mrb[0].mxu0
      %2425 = vmatprep.mubr.f32.mxu0 0.0
      %2426 = vmatmul.mubr.f32.gmra.mrb[0].mxu0 %v2246
      %v2427 = vpop.f32.mrb[0].mxu0
      %v2428 = vadd.f32 0.0, %v2427
      %v2429 = vpop.f32.mrb[0].mxu0
      %2430 = vmatprep.mubr.f32.mxu0 0.0
      %2431 = vmatmul.mubr.f32.gmra.mrb[0].mxu0 %v2249
      %v2432 = vpop.f32.mrb[0].mxu0
      %v2433 = vadd.f32 0.0, %v2432
      %v2434 = vpop.f32.mrb[0].mxu0
      %2435 = vmatprep.mubr.f32.mxu0 0.0
      %2436 = vmatmul.mubr.f32.gmra.mrb[0].mxu0 %v2252
      %v2437 = vpop.f32.mrb[0].mxu0
      %v2438 = vadd.f32 0.0, %v2437
      %v2439 = vpop.f32.mrb[0].mxu0
      %2440 = vmatprep.mubr.f32.mxu0 0.0
      %2441 = vmatmul.mubr.f32.gmra.mrb[0].mxu0 %v2255
      %v2442 = vpop.f32.mrb[0].mxu0
      %v2443 = vadd.f32 0.0, %v2442
      %v2444 = vpop.f32.mrb[0].mxu0
      %2445 = vmatprep.mubr.f32.mxu0 0.0
      %2446 = vmatmul.mubr.f32.gmra.mrb[0].mxu0 %v2258
      %v2447 = vpop.f32.mrb[0].mxu0
      %v2448 = vadd.f32 0.0, %v2447
      %v2449 = vpop.f32.mrb[0].mxu0
      %2450 = vmatprep.mubr.f32.mxu0 0.0
      %2451 = vmatmul.mubr.f32.gmra.mrb[0].mxu0 %v2261
      %v2452 = vpop.f32.mrb[0].mxu0
      %v2453 = vadd.f32 0.0, %v2452
      %v2454 = vpop.f32.mrb[0].mxu0
      %2455 = vmatprep.mubr.f32.mxu0 0.0
      %2456 = vmatmul.mubr.f32.gmra.mrb[0].mxu0 %v2264
      %v2457 = vpop.f32.mrb[0].mxu0
      %v2458 = vadd.f32 0.0, %v2457
      %v2459 = vpop.f32.mrb[0].mxu0
      %2460 = vmatprep.mubr.f32.mxu0 0.0
      %2461 = vmatmul.mubr.f32.gmra.mrb[0].mxu0 %v2267
      %v2462 = vpop.f32.mrb[0].mxu0
      %v2463 = vadd.f32 0.0, %v2462
      %v2464 = vpop.f32.mrb[0].mxu0
      %2465 = vmatprep.mubr.f32.mxu0 0.0
      %2466 = vmatmul.mubr.f32.gmra.mrb[0].mxu0 %v2270
      %v2467 = vpop.f32.mrb[0].mxu0
      %v2468 = vadd.f32 0.0, %v2467
      %v2469 = vpop.f32.mrb[0].mxu0
      %2470 = vmatprep.mubr.f32.mxu0 0.0
      %2471 = vmatmul.mubr.f32.gmra.mrb[0].mxu0 %v2273
      %v2472 = vpop.f32.mrb[0].mxu0
      %v2473 = vadd.f32 0.0, %v2472
      %v2474 = vpop.f32.mrb[0].mxu0
      %2475 = vmatprep.mubr.f32.mxu0 0.0
      %2476 = vmatmul.mubr.f32.gmra.mrb[0].mxu0 %v2276
      %v2477 = vpop.f32.mrb[0].mxu0
      %v2478 = vadd.f32 0.0, %v2477
      %v2479 = vpop.f32.mrb[0].mxu0
      %2480 = vmatprep.mubr.f32.mxu0 0.0
      %2481 = vmatmul.mubr.f32.gmra.mrb[0].mxu0 %v2279
      %v2482 = vpop.f32.mrb[0].mxu0
      %v2483 = vadd.f32 0.0, %v2482
      %v2484 = vpop.f32.mrb[0].mxu0
      %2485 = vmatprep.mubr.f32.mxu0 0.0
      %2486 = vmatmul.mubr.f32.gmra.mrb[0].mxu0 %v2282
      %v2487 = vpop.f32.mrb[0].mxu0
      %v2488 = vadd.f32 0.0, %v2487
      %v2489 = vpop.f32.mrb[0].mxu0
      %2490 = vmatprep.mubr.f32.mxu0 0.0
      %2491 = vmatmul.mubr.f32.gmra.mrb[0].mxu0 %v2285
      %v2492 = vpop.f32.mrb[0].mxu0
      %v2493 = vadd.f32 0.0, %v2492
      %v2494 = vpop.f32.mrb[0].mxu0
      %2495 = vmatprep.mubr.f32.mxu0 0.0
      %2496 = vmatmul.mubr.f32.gmra.mrb[0].mxu0 %v2288
      %v2497 = vpop.f32.mrb[0].mxu0
      %v2498 = vadd.f32 0.0, %v2497
      %v2499 = vpop.f32.mrb[0].mxu0
      %2500 = vmatprep.mubr.f32.mxu0 0.0
      %2501 = vmatmul.mubr.f32.gmra.mrb[0].mxu0 %v2291
      %v2502 = vpop.f32.mrb[0].mxu0
      %v2503 = vadd.f32 0.0, %v2502
      %v2504 = vpop.f32.mrb[0].mxu0
      %2505 = vmatprep.mubr.f32.mxu0 0.0
      %2506 = vmatmul.mubr.f32.gmra.mrb[0].mxu0 %v2294
      %v2507 = vpop.f32.mrb[0].mxu0
      %v2508 = vadd.f32 0.0, %v2507
      %v2509 = vpop.f32.mrb[0].mxu0
      %2510 = vmatprep.mubr.f32.mxu0 0.0
      %2511 = vmatmul.mubr.f32.gmra.mrb[0].mxu0 %v2297
      %v2512 = vpop.f32.mrb[0].mxu0
      %v2513 = vadd.f32 0.0, %v2512
      %v2514 = vpop.f32.mrb[0].mxu0
      %2515 = vmatprep.mubr.f32.mxu0 0.0
      %2516 = vmatmul.mubr.f32.gmra.mrb[0].mxu0 %v2300
      %v2517 = vpop.f32.mrb[0].mxu0
      %v2518 = vadd.f32 0.0, %v2517
      %v2519 = vpop.f32.mrb[0].mxu0
      %2520 = vmatprep.mubr.f32.mxu0 0.0
      %2521 = vmatmul.mubr.f32.gmra.mrb[0].mxu0 %v2303
      %v2522 = vpop.f32.mrb[0].mxu0
      %v2523 = vadd.f32 0.0, %v2522
      %v2524 = vpop.f32.mrb[0].mxu0
      %2525 = vmatprep.mubr.f32.mxu0 0.0
      %2526 = vmatmul.mubr.f32.gmra.mrb[0].mxu0 %v2306
      %v2527 = vpop.f32.mrb[0].mxu0
      %v2528 = vadd.f32 0.0, %v2527
      %v2529 = vpop.f32.mrb[0].mxu0
      %2530 = vmatprep.mubr.f32.mxu0 0.0
      %2531 = vmatmul.mubr.f32.gmra.mrb[0].mxu0 %v2309
      %v2532 = vpop.f32.mrb[0].mxu0
      %v2533 = vadd.f32 0.0, %v2532
      %v2534 = vpop.f32.mrb[0].mxu0
      %2535 = vdwg.mxu0
      %v2536 = vsel %vm475, %v2378, 0.0
      %v2537 = vsel %vm475, %v2383, 0.0
      %v2538 = vadd.f32 %v2536, %v2537
      %v2539 = vsel %vm475, %v2388, 0.0
      %v2540 = vadd.f32 %v2538, %v2539
      %v2541 = vsel %vm475, %v2393, 0.0
      %v2542 = vadd.f32 %v2540, %v2541
      %v2543 = vsel %vm475, %v2398, 0.0
      %v2544 = vadd.f32 %v2542, %v2543
      %v2545 = vsel %vm475, %v2403, 0.0
      %v2546 = vadd.f32 %v2544, %v2545
      %v2547 = vsel %vm475, %v2408, 0.0
      %v2548 = vadd.f32 %v2546, %v2547
      %v2549 = vsel %vm475, %v2413, 0.0
      %v2550 = vadd.f32 %v2548, %v2549
      %v2551 = vsel %vm475, %v2418, 0.0
      %v2552 = vadd.f32 %v2550, %v2551
      %v2553 = vsel %vm475, %v2423, 0.0
      %v2554 = vadd.f32 %v2552, %v2553
      %v2555 = vsel %vm475, %v2428, 0.0
      %v2556 = vadd.f32 %v2554, %v2555
      %v2557 = vsel %vm475, %v2433, 0.0
      %v2558 = vadd.f32 %v2556, %v2557
      %v2559 = vsel %vm475, %v2438, 0.0
      %v2560 = vadd.f32 %v2558, %v2559
      %v2561 = vsel %vm475, %v2443, 0.0
      %v2562 = vadd.f32 %v2560, %v2561
      %v2563 = vsel %vm475, %v2448, 0.0
      %v2564 = vadd.f32 %v2562, %v2563
      %v2565 = vsel %vm475, %v2453, 0.0
      %v2566 = vadd.f32 %v2564, %v2565
      %v2567 = vsel %vm475, %v2458, 0.0
      %v2568 = vadd.f32 %v2566, %v2567
      %v2569 = vsel %vm475, %v2463, 0.0
      %v2570 = vadd.f32 %v2568, %v2569
      %v2571 = vsel %vm475, %v2468, 0.0
      %v2572 = vadd.f32 %v2570, %v2571
      %v2573 = vsel %vm475, %v2473, 0.0
      %v2574 = vadd.f32 %v2572, %v2573
      %v2575 = vsel %vm475, %v2478, 0.0
      %v2576 = vadd.f32 %v2574, %v2575
      %v2577 = vsel %vm475, %v2483, 0.0
      %v2578 = vadd.f32 %v2576, %v2577
      %v2579 = vsel %vm475, %v2488, 0.0
      %v2580 = vadd.f32 %v2578, %v2579
      %v2581 = vsel %vm475, %v2493, 0.0
      %v2582 = vadd.f32 %v2580, %v2581
      %v2583 = vsel %vm475, %v2498, 0.0
      %v2584 = vadd.f32 %v2582, %v2583
      %v2585 = vsel %vm475, %v2503, 0.0
      %v2586 = vadd.f32 %v2584, %v2585
      %v2587 = vsel %vm475, %v2508, 0.0
      %v2588 = vadd.f32 %v2586, %v2587
      %v2589 = vsel %vm475, %v2513, 0.0
      %v2590 = vadd.f32 %v2588, %v2589
      %v2591 = vsel %vm475, %v2518, 0.0
      %v2592 = vadd.f32 %v2590, %v2591
      %v2593 = vsel %vm475, %v2523, 0.0
      %v2594 = vadd.f32 %v2592, %v2593
      %v2595 = vsel %vm475, %v2528, 0.0
      %v2596 = vadd.f32 %v2594, %v2595
      %v2597 = vsel %vm475, %v2533, 0.0
      %v2598 = vadd.f32 %v2596, %v2597
      %v2599 = vrot.slane %v2598, 4
      %v2600 = vadd.f32 %v2598, %v2599
      %v2601 = vrot.slane %v2600, 2
      %v2602 = vadd.f32 %v2600, %v2601
      %v2603 = vrot.slane %v2602, 1
      %v2604 = vadd.f32 %v2602, %v2603
      %vm2605 = vcmask 57344
      %2606 = vst.msk [vmem:[%s265] sm:$0x1] %vm2605, %v2604
      %v2607 = vmul.f32 %v2378, %v2378
      %v2608 = vmul.f32 %v2383, %v2383
      %v2609 = vmul.f32 %v2388, %v2388
      %v2610 = vmul.f32 %v2393, %v2393
      %v2611 = vmul.f32 %v2398, %v2398
      %v2612 = vmul.f32 %v2403, %v2403
      %v2613 = vmul.f32 %v2408, %v2408
      %v2614 = vmul.f32 %v2413, %v2413
      %v2615 = vmul.f32 %v2418, %v2418
      %v2616 = vmul.f32 %v2423, %v2423
      %v2617 = vmul.f32 %v2428, %v2428
      %v2618 = vmul.f32 %v2433, %v2433
      %v2619 = vmul.f32 %v2438, %v2438
      %v2620 = vmul.f32 %v2443, %v2443
      %v2621 = vmul.f32 %v2448, %v2448
      %v2622 = vmul.f32 %v2453, %v2453
      %v2623 = vmul.f32 %v2458, %v2458
      %v2624 = vmul.f32 %v2463, %v2463
      %v2625 = vmul.f32 %v2468, %v2468
      %v2626 = vmul.f32 %v2473, %v2473
      %v2627 = vmul.f32 %v2478, %v2478
      %v2628 = vmul.f32 %v2483, %v2483
      %v2629 = vmul.f32 %v2488, %v2488
      %v2630 = vmul.f32 %v2493, %v2493
      %v2631 = vmul.f32 %v2498, %v2498
      %v2632 = vmul.f32 %v2503, %v2503
      %v2633 = vmul.f32 %v2508, %v2508
      %v2634 = vmul.f32 %v2513, %v2513
      %v2635 = vmul.f32 %v2518, %v2518
      %v2636 = vmul.f32 %v2523, %v2523
      %v2637 = vmul.f32 %v2528, %v2528
      %v2638 = vmul.f32 %v2533, %v2533
      %v2639 = vsel %vm475, %v2607, 0.0
      %v2640 = vsel %vm475, %v2608, 0.0
      %v2641 = vadd.f32 %v2639, %v2640
      %v2642 = vsel %vm475, %v2609, 0.0
      %v2643 = vadd.f32 %v2641, %v2642
      %v2644 = vsel %vm475, %v2610, 0.0
      %v2645 = vadd.f32 %v2643, %v2644
      %v2646 = vsel %vm475, %v2611, 0.0
      %v2647 = vadd.f32 %v2645, %v2646
      %v2648 = vsel %vm475, %v2612, 0.0
      %v2649 = vadd.f32 %v2647, %v2648
      %v2650 = vsel %vm475, %v2613, 0.0
      %v2651 = vadd.f32 %v2649, %v2650
      %v2652 = vsel %vm475, %v2614, 0.0
      %v2653 = vadd.f32 %v2651, %v2652
      %v2654 = vsel %vm475, %v2615, 0.0
      %v2655 = vadd.f32 %v2653, %v2654
      %v2656 = vsel %vm475, %v2616, 0.0
      %v2657 = vadd.f32 %v2655, %v2656
      %v2658 = vsel %vm475, %v2617, 0.0
      %v2659 = vadd.f32 %v2657, %v2658
      %v2660 = vsel %vm475, %v2618, 0.0
      %v2661 = vadd.f32 %v2659, %v2660
      %v2662 = vsel %vm475, %v2619, 0.0
      %v2663 = vadd.f32 %v2661, %v2662
      %v2664 = vsel %vm475, %v2620, 0.0
      %v2665 = vadd.f32 %v2663, %v2664
      %v2666 = vsel %vm475, %v2621, 0.0
      %v2667 = vadd.f32 %v2665, %v2666
      %v2668 = vsel %vm475, %v2622, 0.0
      %v2669 = vadd.f32 %v2667, %v2668
      %v2670 = vsel %vm475, %v2623, 0.0
      %v2671 = vadd.f32 %v2669, %v2670
      %v2672 = vsel %vm475, %v2624, 0.0
      %v2673 = vadd.f32 %v2671, %v2672
      %v2674 = vsel %vm475, %v2625, 0.0
      %v2675 = vadd.f32 %v2673, %v2674
      %v2676 = vsel %vm475, %v2626, 0.0
      %v2677 = vadd.f32 %v2675, %v2676
      %v2678 = vsel %vm475, %v2627, 0.0
      %v2679 = vadd.f32 %v2677, %v2678
      %v2680 = vsel %vm475, %v2628, 0.0
      %v2681 = vadd.f32 %v2679, %v2680
      %v2682 = vsel %vm475, %v2629, 0.0
      %v2683 = vadd.f32 %v2681, %v2682
      %v2684 = vsel %vm475, %v2630, 0.0
      %v2685 = vadd.f32 %v2683, %v2684
      %v2686 = vsel %vm475, %v2631, 0.0
      %v2687 = vadd.f32 %v2685, %v2686
      %v2688 = vsel %vm475, %v2632, 0.0
      %v2689 = vadd.f32 %v2687, %v2688
      %v2690 = vsel %vm475, %v2633, 0.0
      %v2691 = vadd.f32 %v2689, %v2690
      %v2692 = vsel %vm475, %v2634, 0.0
      %v2693 = vadd.f32 %v2691, %v2692
      %v2694 = vsel %vm475, %v2635, 0.0
      %v2695 = vadd.f32 %v2693, %v2694
      %v2696 = vsel %vm475, %v2636, 0.0
      %v2697 = vadd.f32 %v2695, %v2696
      %v2698 = vsel %vm475, %v2637, 0.0
      %v2699 = vadd.f32 %v2697, %v2698
      %v2700 = vsel %vm475, %v2638, 0.0
      %v2701 = vadd.f32 %v2699, %v2700
      %v2702 = vrot.slane %v2701, 4
      %v2703 = vadd.f32 %v2701, %v2702
      %v2704 = vrot.slane %v2703, 2
      %v2705 = vadd.f32 %v2703, %v2704
      %v2706 = vrot.slane %v2705, 1
      %v2707 = vadd.f32 %v2705, %v2706
      %2708 = vst.msk [vmem:[%s268] sm:$0x1] %vm2605, %v2707
      %2709 = vst.msk [vmem:[%s262] sm:$0xff] %vm475, %v2378
      %2710 = vst.msk [vmem:[%s262 + $0x8] sm:$0xff] %vm475, %v2383
      %2711 = vst.msk [vmem:[%s262 + $0x10] sm:$0xff] %vm475, %v2388
      %2712 = vst.msk [vmem:[%s262 + $0x18] sm:$0xff] %vm475, %v2393
      %2713 = vst.msk [vmem:[%s262 + $0x20] sm:$0xff] %vm475, %v2398
      %2714 = vst.msk [vmem:[%s262 + $0x28] sm:$0xff] %vm475, %v2403
      %2715 = vst.msk [vmem:[%s262 + $0x30] sm:$0xff] %vm475, %v2408
      %2716 = vst.msk [vmem:[%s262 + $0x38] sm:$0xff] %vm475, %v2413
      %2717 = vst.msk [vmem:[%s262 + $0x40] sm:$0xff] %vm475, %v2418
      %2718 = vst.msk [vmem:[%s262 + $0x48] sm:$0xff] %vm475, %v2423
      %2719 = vst.msk [vmem:[%s262 + $0x50] sm:$0xff] %vm475, %v2428
      %2720 = vst.msk [vmem:[%s262 + $0x58] sm:$0xff] %vm475, %v2433
      %2721 = vst.msk [vmem:[%s262 + $0x60] sm:$0xff] %vm475, %v2438
      %2722 = vst.msk [vmem:[%s262 + $0x68] sm:$0xff] %vm475, %v2443
      %2723 = vst.msk [vmem:[%s262 + $0x70] sm:$0xff] %vm475, %v2448
      %2724 = vst.msk [vmem:[%s262 + $0x78] sm:$0xff] %vm475, %v2453
      %2725 = vst.msk [vmem:[%s262 + $0x80] sm:$0xff] %vm475, %v2458
      %2726 = vst.msk [vmem:[%s262 + $0x88] sm:$0xff] %vm475, %v2463
      %2727 = vst.msk [vmem:[%s262 + $0x90] sm:$0xff] %vm475, %v2468
      %2728 = vst.msk [vmem:[%s262 + $0x98] sm:$0xff] %vm475, %v2473
      %2729 = vst.msk [vmem:[%s262 + $0xa0] sm:$0xff] %vm475, %v2478
      %2730 = vst.msk [vmem:[%s262 + $0xa8] sm:$0xff] %vm475, %v2483
      %2731 = vst.msk [vmem:[%s262 + $0xb0] sm:$0xff] %vm475, %v2488
      %2732 = vst.msk [vmem:[%s262 + $0xb8] sm:$0xff] %vm475, %v2493
      %2733 = vst.msk [vmem:[%s262 + $0xc0] sm:$0xff] %vm475, %v2498
      %2734 = vst.msk [vmem:[%s262 + $0xc8] sm:$0xff] %vm475, %v2503
      %2735 = vst.msk [vmem:[%s262 + $0xd0] sm:$0xff] %vm475, %v2508
      %2736 = vst.msk [vmem:[%s262 + $0xd8] sm:$0xff] %vm475, %v2513
      %2737 = vst.msk [vmem:[%s262 + $0xe0] sm:$0xff] %vm475, %v2518
      %2738 = vst.msk [vmem:[%s262 + $0xe8] sm:$0xff] %vm475, %v2523
      %2739 = vst.msk [vmem:[%s262 + $0xf0] sm:$0xff] %vm475, %v2528
      %2740 = vst.msk [vmem:[%s262 + $0xf8] sm:$0xff] %vm475, %v2533
      %p2741 = scmp.lt.s32.totalorder %s18, 1
      %s2742 = scalar_select %p2741, %s18, 1
      %s2743 = smul.addr %s2742, 32
      %s2744 = smul.addr %s2743, 8
      %s2745 = scalar_lea.vmem %s4, %s2744
      %p2746 = scmp.lt.s32.totalorder %s18, 1
      %s2747 = scalar_select %p2746, %s18, 1
      %s2748 = scalar_lea.vmem %s5, %s2747
      %p2749 = scmp.lt.s32.totalorder %s18, 1
      %s2750 = scalar_select %p2749, %s18, 1
      %s2751 = scalar_lea.vmem %s6, %s2750
      // Predicated region
      $region37: #{contracting_block_forward.4} parent=35 // pred_check
        %p2752 = pneg %p125
      $region38: #{contracting_block_forward.4} parent=35 // pred_check_branch
        %2754 = sbr.rel (%p2752) target = $region40
      $region39: #{contracting_block_forward.4} parent=35 // pred_region
        _
      $region40: #{contracting_block_forward.4} parent=35 // pred_fallthru
        _
      // Predicated region
      $region41: #{contracting_block_forward.4} parent=35 // pred_check
        %p2755 = pneg %p151
      $region42: #{contracting_block_forward.4} parent=35 // pred_check_branch
        %2757 = sbr.rel (%p2755) target = $region44
      $region43: #{contracting_block_forward.4} parent=35 // pred_region
        _
      $region44: #{contracting_block_forward.4} parent=35 // pred_fallthru
        _
      // Predicated region
      $region45: #{contracting_block_forward.4} parent=35 // pred_check
        %p2758 = pneg %p177
      $region46: #{contracting_block_forward.4} parent=35 // pred_check_branch
        %2760 = sbr.rel (%p2758) target = $region48
      $region47: #{contracting_block_forward.4} parent=35 // pred_region
        _
      $region48: #{contracting_block_forward.4} parent=35 // pred_fallthru
        _
    $region36: #{contracting_block_forward.4} parent=5 // pred_fallthru
      _
    %p2761 = scmp.le.s32.totalorder 2, %s13
    // Predicated region
    $region49: #{contracting_block_forward.4} parent=5 // pred_check
      %p2762 = pneg %p2761
    $region50: #{contracting_block_forward.4} parent=5 // pred_check_branch
      %2764 = sbr.rel (%p2762) target = $region52
    $region51: #{contracting_block_forward.4} parent=5 // pred_region
      %s2765 = ssub.s32 %s13, 2
      // Predicated region
      $region53: #{contracting_block_forward.4} parent=51 // pred_check
        %p2766 = pneg %p131
      $region54: #{contracting_block_forward.4} parent=51 // pred_check_branch
        %2768 = sbr.rel (%p2766) target = $region56
      $region55: #{contracting_block_forward.4} parent=51 // pred_region
        %p2769 = scmp.lt.s32.totalorder %s19, 1
        %s2770 = scalar_select %p2769, %s19, 1
        %s2771 = smul.addr %s2770, 32
        %s2772 = smul.addr %s2771, 8
        %s2773 = scalar_lea.vmem %s4, %s2772
      $region56: #{contracting_block_forward.4} parent=51 // pred_fallthru
        _
      // Predicated region
      $region57: #{contracting_block_forward.4} parent=51 // pred_check
        %p2774 = pneg %p157
      $region58: #{contracting_block_forward.4} parent=51 // pred_check_branch
        %2776 = sbr.rel (%p2774) target = $region60
      $region59: #{contracting_block_forward.4} parent=51 // pred_region
        %p2777 = scmp.lt.s32.totalorder %s19, 1
        %s2778 = scalar_select %p2777, %s19, 1
        %s2779 = scalar_lea.vmem %s5, %s2778
      $region60: #{contracting_block_forward.4} parent=51 // pred_fallthru
        _
      // Predicated region
      $region61: #{contracting_block_forward.4} parent=51 // pred_check
        %p2780 = pneg %p183
      $region62: #{contracting_block_forward.4} parent=51 // pred_check_branch
        %2782 = sbr.rel (%p2780) target = $region64
      $region63: #{contracting_block_forward.4} parent=51 // pred_region
        %p2783 = scmp.lt.s32.totalorder %s19, 1
        %s2784 = scalar_select %p2783, %s19, 1
        %s2785 = scalar_lea.vmem %s6, %s2784
      $region64: #{contracting_block_forward.4} parent=51 // pred_fallthru
        _
    $region52: #{contracting_block_forward.4} parent=5 // pred_fallthru
      _
  $region6: #{contracting_block_forward.4} parent=0 // loop_footer
    %s17 = sadd.s32 1, %s13
  $region7: #{contracting_block_forward.4} parent=0 // loop_footer_branch
    %12 = sbr.rel target = $region3
  $region8: #{contracting_block_forward.4} parent=0 // loop_exit
    _

</llo_original>
